<compile_context>
chip_gen: v5e
topology: v5e:2x2
jax: 0.10.0
libtpu: 0.0.40
codegen_flags: <defaults>
</compile_context>

<pallas_src>
import functools

import jax
import jax.numpy as jnp
from jax import lax
from jax.experimental import pallas as pl
from jax.experimental.pallas import tpu as pltpu

LRN_KS = 15
LRN_PAD = LRN_KS // 2
LRN_EPS = 1e-10
BN_EPS = 1e-5
MATMUL_DTYPE = jnp.bfloat16   # MXU operand dtype (accumulation is always f32)
VMEM_LIMIT = 32 * 1024 * 1024


# ----------------------------------------------------------------------------
# LocalNorm2d(15): 15x15 box mean / mean-of-squares over the reflect-padded
# input (pad done in glue; single-channel, tiny), then
# clamp((x - mean) / (sqrt(|E[x^2]-mean^2|) + eps), -6, 6).
# ----------------------------------------------------------------------------
def _lrn_kernel(xp_ref, o_ref):
    # xp_ref: (1, H+14, W+14)   o_ref: (1, H, W)
    H, W = o_ref.shape[1], o_ref.shape[2]
    Wp = xp_ref.shape[2]
    xp = xp_ref[0]
    xp2 = xp * xp

    # separable 15x15 box sum: rows first, then columns
    rs = jnp.zeros((H, Wp), jnp.float32)
    rs2 = jnp.zeros((H, Wp), jnp.float32)
    for dy in range(LRN_KS):
        rs = rs + xp[dy:dy + H, :]
        rs2 = rs2 + xp2[dy:dy + H, :]
    s = jnp.zeros((H, W), jnp.float32)
    s2 = jnp.zeros((H, W), jnp.float32)
    for dx in range(LRN_KS):
        s = s + rs[:, dx:dx + W]
        s2 = s2 + rs2[:, dx:dx + W]

    inv_area = 1.0 / float(LRN_KS * LRN_KS)
    mean = s * inv_area
    meansq = s2 * inv_area
    x = xp[LRN_PAD:LRN_PAD + H, LRN_PAD:LRN_PAD + W]
    std = jnp.sqrt(jnp.abs(meansq - mean * mean))
    o_ref[...] = jnp.clip((x - mean) / (std + LRN_EPS), -6.0, 6.0).reshape(1, H, W)


def local_norm2d(x):
    # x: (N, H, W) float32
    N, H, W = x.shape
    xp = jnp.pad(x, ((0, 0), (LRN_PAD, LRN_PAD), (LRN_PAD, LRN_PAD)),
                 mode="reflect")
    Hp, Wp = H + 2 * LRN_PAD, W + 2 * LRN_PAD
    return pl.pallas_call(
        _lrn_kernel,
        out_shape=jax.ShapeDtypeStruct((N, H, W), jnp.float32),
        grid=(N,),
        in_specs=[pl.BlockSpec((1, Hp, Wp), lambda n: (n, 0, 0))],
        out_specs=pl.BlockSpec((1, H, W), lambda n: (n, 0, 0)),
        compiler_params=pltpu.CompilerParams(
            dimension_semantics=("parallel",),
            vmem_limit_bytes=VMEM_LIMIT),
    )(xp)


# ----------------------------------------------------------------------------
# Fused layer kernel: [optional BN+ReLU of the input] -> zero-pad in VMEM ->
# 3x3 conv (single im2col matmul on the MXU, or 9 VPU MACs when Cin==1) ->
# per-item per-channel sum / sum-of-squares for the *next* BatchNorm.
# ----------------------------------------------------------------------------
def _bn_relu_conv3x3_kernel(x_ref, mean_ref, invstd_ref, w_ref,
                            y_ref, s_ref, ss_ref, pad_ref,
                            *, apply_bn_relu, even_stats):
    # x_ref   : (1, H, W, Cin)   previous conv output (pre-BN) or LRN output
    # mean_ref/invstd_ref: (1, Cin) batch statistics of x (unused if !apply_bn_relu)
    # w_ref   : (9*Cin, Cout)    conv weights, rows ordered (ky, kx, cin)
    # y_ref   : (1, H, W, Cout)  stride-1 conv output (pre-BN)
    # s_ref/ss_ref: (1, 1, Cout) per-item channel sum / sum-of-squares
    # pad_ref : VMEM scratch (H+2, W+2, Cin) f32  (zero-padded activation)
    H, W, Cin = x_ref.shape[1], x_ref.shape[2], x_ref.shape[3]
    Cout = y_ref.shape[3]

    x = x_ref[0]                                            # (H, W, Cin) f32
    if apply_bn_relu:
        mean = mean_ref[...].reshape(1, 1, Cin)
        invstd = invstd_ref[...].reshape(1, 1, Cin)
        act = jnp.maximum((x - mean) * invstd, 0.0)
    else:
        act = x

    # zero-pad (conv padding=1) once into VMEM; all 9 taps read from here.
    pad_ref[...] = jnp.zeros(pad_ref.shape, pad_ref.dtype)
    pad_ref[pl.ds(1, H), pl.ds(1, W), :] = act

    if Cin == 1:
        # single input channel: K=9 would underfill the MXU -> 9 VPU outer-product MACs.
        out = jnp.zeros((H * W, Cout), jnp.float32)
        for ky in range(3):
            for kx in range(3):
                patch = pad_ref[pl.ds(ky, H), pl.ds(kx, W), :].reshape(H * W, 1)
                wk = w_ref[pl.ds(ky * 3 + kx, 1), :].astype(jnp.float32)  # (1, Cout)
                out = out + patch * wk
    else:
        # im2col: one (H*W, 9*Cin) x (9*Cin, Cout) matmul, f32 accumulation.
        patches = []
        for ky in range(3):
            for kx in range(3):
                patches.append(
                    pad_ref[pl.ds(ky, H), pl.ds(kx, W), :].reshape(H * W, Cin))
        col = jnp.concatenate(patches, axis=1)              # (H*W, 9*Cin)
        out = jnp.dot(col.astype(w_ref.dtype), w_ref[...],
                      preferred_element_type=jnp.float32)   # (H*W, Cout)

    # BatchNorm partial statistics of this layer's output.
    if even_stats:
        # stride-2 layer: statistics over the even-even (kept) positions only.
        ri = lax.broadcasted_iota(jnp.int32, (H, W, 1), 0)
        ci = lax.broadcasted_iota(jnp.int32, (H, W, 1), 1)
        keep = jnp.logical_and((ri & 1) == 0, (ci & 1) == 0)
        keep = keep.astype(jnp.float32).reshape(H * W, 1)
        kept = out * keep
        s_ref[...] = jnp.sum(kept, axis=0).reshape(1, 1, Cout)
        ss_ref[...] = jnp.sum(kept * kept, axis=0).reshape(1, 1, Cout)
    else:
        s_ref[...] = jnp.sum(out, axis=0).reshape(1, 1, Cout)
        ss_ref[...] = jnp.sum(out * out, axis=0).reshape(1, 1, Cout)

    y_ref[...] = out.reshape(1, H, W, Cout)


def conv3x3_bn_fused(x, mean, invstd, w, *, apply_bn_relu=True, even_stats=False):
    # x: (N, H, W, Cin) f32; mean/invstd: (1, Cin); w: (3, 3, Cin, Cout) f32
    N, H, W, Cin = x.shape
    Cout = w.shape[3]
    wr = w.reshape(9 * Cin, Cout)
    if Cin > 1:
        wr = wr.astype(MATMUL_DTYPE)
    kernel = functools.partial(_bn_relu_conv3x3_kernel,
                               apply_bn_relu=apply_bn_relu,
                               even_stats=even_stats)
    y, s, ss = pl.pallas_call(
        kernel,
        out_shape=(jax.ShapeDtypeStruct((N, H, W, Cout), jnp.float32),
                   jax.ShapeDtypeStruct((N, 1, Cout), jnp.float32),
                   jax.ShapeDtypeStruct((N, 1, Cout), jnp.float32)),
        grid=(N,),
        in_specs=[
            pl.BlockSpec((1, H, W, Cin), lambda n: (n, 0, 0, 0)),
            pl.BlockSpec((1, Cin), lambda n: (0, 0)),
            pl.BlockSpec((1, Cin), lambda n: (0, 0)),
            pl.BlockSpec((9 * Cin, Cout), lambda n: (0, 0)),
        ],
        out_specs=(
            pl.BlockSpec((1, H, W, Cout), lambda n: (n, 0, 0, 0)),
            pl.BlockSpec((1, 1, Cout), lambda n: (n, 0, 0)),
            pl.BlockSpec((1, 1, Cout), lambda n: (n, 0, 0)),
        ),
        scratch_shapes=[pltpu.VMEM((H + 2, W + 2, Cin), jnp.float32)],
        compiler_params=pltpu.CompilerParams(
            dimension_semantics=("parallel",),
            vmem_limit_bytes=VMEM_LIMIT),
    )(x, mean, invstd, wr)
    return y, s, ss


# ----------------------------------------------------------------------------
# Final BatchNorm(affine=False) + ReLU (no following conv to fuse into).
# ----------------------------------------------------------------------------
def _bn_relu_kernel(x_ref, mean_ref, invstd_ref, o_ref):
    C = x_ref.shape[3]
    mean = mean_ref[...].reshape(1, 1, 1, C)
    invstd = invstd_ref[...].reshape(1, 1, 1, C)
    o_ref[...] = jnp.maximum((x_ref[...] - mean) * invstd, 0.0)


def bn_relu(x, mean, invstd):
    N, H, W, C = x.shape
    return pl.pallas_call(
        _bn_relu_kernel,
        out_shape=jax.ShapeDtypeStruct((N, H, W, C), jnp.float32),
        grid=(N,),
        in_specs=[pl.BlockSpec((1, H, W, C), lambda n: (n, 0, 0, 0)),
                  pl.BlockSpec((1, C), lambda n: (0, 0)),
                  pl.BlockSpec((1, C), lambda n: (0, 0))],
        out_specs=pl.BlockSpec((1, H, W, C), lambda n: (n, 0, 0, 0)),
        compiler_params=pltpu.CompilerParams(
            dimension_semantics=("parallel",),
            vmem_limit_bytes=VMEM_LIMIT),
    )(x, mean, invstd)


def _stats_to_mean_invstd(s, ss, count):
    # s, ss: (N, 1, C) per-item channel sums.  Biased variance, like PyTorch
    # train-mode BatchNorm; this reduction is over tiny (N, 1, C) partials only.
    mean = jnp.sum(s, axis=0) / float(count)           # (1, C)
    ex2 = jnp.sum(ss, axis=0) / float(count)
    var = jnp.maximum(ex2 - mean * mean, 0.0)
    invstd = 1.0 / jnp.sqrt(var + BN_EPS)
    return mean, invstd


# ----------------------------------------------------------------------------
# Full HardNetConvCrop forward.
# ----------------------------------------------------------------------------
def hardnet_conv_crop_forward(x_nchw, params):
    # x_nchw: (N, 1, H, W) float32
    N, cin0, H, W = x_nchw.shape
    assert cin0 == 1 and H % 2 == 0 and W % 2 == 0
    H2, W2 = H // 2, W // 2

    x = x_nchw[:, 0, :, :]                               # (N, H, W)
    lrn = local_norm2d(x)                                # LocalNorm2d(15)
    lrn = lrn.reshape(N, H, W, 1)                        # NHWC, 1 channel

    zero = jnp.zeros((1, 1), jnp.float32)
    one = jnp.ones((1, 1), jnp.float32)

    # conv1 1->32 (no BN/ReLU before it) + BN1 partial stats
    y1, s1, ss1 = conv3x3_bn_fused(lrn, zero, one, params["w1"],
                                   apply_bn_relu=False)
    m1, i1 = _stats_to_mean_invstd(s1, ss1, N * H * W)

    # BN1+ReLU fused into conv2 32->32
    y2, s2, ss2 = conv3x3_bn_fused(y1, m1, i1, params["w2"])
    m2, i2 = _stats_to_mean_invstd(s2, ss2, N * H * W)

    # BN2+ReLU fused into conv3 32->64 (stride 2).  Conv is stride-1 in-kernel
    # with BN3 stats over the even-even positions; the subsample is a strided
    # slice of a tiny array between kernels.
    y3f, s3, ss3 = conv3x3_bn_fused(y2, m2, i2, params["w3"], even_stats=True)
    y3 = y3f[:, ::2, ::2, :]
    # TODO(synk): fold this subsample into the kernel once Mosaic supports the
    #             required strided/second-minor value selection cleanly.
    m3, i3 = _stats_to_mean_invstd(s3, ss3, N * H2 * W2)

    # BN3+ReLU fused into conv4 64->64
    y4, s4, ss4 = conv3x3_bn_fused(y3, m3, i3, params["w4"])
    m4, i4 = _stats_to_mean_invstd(s4, ss4, N * H2 * W2)

    # final BN4 + ReLU
    h = bn_relu(y4, m4, i4)                              # (N, H2, W2, 64)
    return jnp.transpose(h, (0, 3, 1, 2))                # back to NCHW


def init_params(key):
    # Deterministic synthetic init (kaiming-uniform style); weight layout is
    # (kh, kw, Cin, Cout) == transpose of PyTorch's (Cout, Cin, kh, kw).
    def kaiming(k, shape):
        fan_in = shape[0] * shape[1] * shape[2]
        bound = (6.0 / fan_in) ** 0.5
        return jax.random.uniform(k, shape, jnp.float32, -bound, bound)

    ks = jax.random.split(key, 4)
    return {
        "w1": kaiming(ks[0], (3, 3, 1, 32)),
        "w2": kaiming(ks[1], (3, 3, 32, 32)),
        "w3": kaiming(ks[2], (3, 3, 32, 64)),
        "w4": kaiming(ks[3], (3, 3, 64, 64)),
    }


if __name__ == "__main__":
    key = jax.random.PRNGKey(0)
    kx, kp = jax.random.split(key)
    x = jax.random.normal(kx, (2, 1, 16, 16), jnp.float32)   # NCHW, 1 channel
    params = init_params(kp)

    fwd = jax.jit(hardnet_conv_crop_forward)
    out = fwd(x, params)
    jax.block_until_ready(out)

    assert out.shape == (2, 64, 8, 8), out.shape
    assert out.dtype == jnp.float32
    print("KERNEL_OK")
</pallas_src>

<mosaic_0001>
module attributes {stable_mosaic.version = 11 : i64} {
  func.func @_lrn_kernel(%arg0: i32, %arg1: memref<1x30x30xf32, #tpu.memory_space<vmem>>, %arg2: memref<1x16x16xf32, #tpu.memory_space<vmem>>) attributes {dimension_semantics = [#tpu.dimension_semantics<parallel>], iteration_bounds = array<i64: 2>, scalar_prefetch = 0 : i64, scratch_operands = 0 : i64, tpu.core_type = #tpu.core_type<tc>, window_params = [{transform_indices = @transform_0, window_bounds = array<i64: 1, 30, 30>}, {transform_indices = @transform_1, window_bounds = array<i64: 1, 16, 16>}]} {
    %c0 = arith.constant 0 : index
    %c0_0 = arith.constant 0 : index
    %c0_1 = arith.constant 0 : index
    %0 = vector.load %arg1[%c0, %c0_0, %c0_1] : memref<1x30x30xf32, #tpu.memory_space<vmem>>, vector<1x30x30xf32>
    %1 = vector.shape_cast %0 : vector<1x30x30xf32> to vector<30x30xf32>
    %2 = arith.mulf %1, %1 : vector<30x30xf32>
    %cst = arith.constant 0.000000e+00 : f32
    %3 = vector.broadcast %cst : f32 to vector<16x30xf32>
    %cst_2 = arith.constant 0.000000e+00 : f32
    %4 = vector.broadcast %cst_2 : f32 to vector<16x30xf32>
    %5 = vector.extract_strided_slice %1 {offsets = [0, 0], sizes = [16, 30], strides = [1, 1]} : vector<30x30xf32> to vector<16x30xf32>
    %6 = arith.addf %3, %5 : vector<16x30xf32>
    %7 = vector.extract_strided_slice %2 {offsets = [0, 0], sizes = [16, 30], strides = [1, 1]} : vector<30x30xf32> to vector<16x30xf32>
    %8 = arith.addf %4, %7 : vector<16x30xf32>
    %9 = vector.extract_strided_slice %1 {offsets = [1, 0], sizes = [16, 30], strides = [1, 1]} : vector<30x30xf32> to vector<16x30xf32>
    %10 = arith.addf %6, %9 : vector<16x30xf32>
    %11 = vector.extract_strided_slice %2 {offsets = [1, 0], sizes = [16, 30], strides = [1, 1]} : vector<30x30xf32> to vector<16x30xf32>
    %12 = arith.addf %8, %11 : vector<16x30xf32>
    %13 = vector.extract_strided_slice %1 {offsets = [2, 0], sizes = [16, 30], strides = [1, 1]} : vector<30x30xf32> to vector<16x30xf32>
    %14 = arith.addf %10, %13 : vector<16x30xf32>
    %15 = vector.extract_strided_slice %2 {offsets = [2, 0], sizes = [16, 30], strides = [1, 1]} : vector<30x30xf32> to vector<16x30xf32>
    %16 = arith.addf %12, %15 : vector<16x30xf32>
    %17 = vector.extract_strided_slice %1 {offsets = [3, 0], sizes = [16, 30], strides = [1, 1]} : vector<30x30xf32> to vector<16x30xf32>
    %18 = arith.addf %14, %17 : vector<16x30xf32>
    %19 = vector.extract_strided_slice %2 {offsets = [3, 0], sizes = [16, 30], strides = [1, 1]} : vector<30x30xf32> to vector<16x30xf32>
    %20 = arith.addf %16, %19 : vector<16x30xf32>
    %21 = vector.extract_strided_slice %1 {offsets = [4, 0], sizes = [16, 30], strides = [1, 1]} : vector<30x30xf32> to vector<16x30xf32>
    %22 = arith.addf %18, %21 : vector<16x30xf32>
    %23 = vector.extract_strided_slice %2 {offsets = [4, 0], sizes = [16, 30], strides = [1, 1]} : vector<30x30xf32> to vector<16x30xf32>
    %24 = arith.addf %20, %23 : vector<16x30xf32>
    %25 = vector.extract_strided_slice %1 {offsets = [5, 0], sizes = [16, 30], strides = [1, 1]} : vector<30x30xf32> to vector<16x30xf32>
    %26 = arith.addf %22, %25 : vector<16x30xf32>
    %27 = vector.extract_strided_slice %2 {offsets = [5, 0], sizes = [16, 30], strides = [1, 1]} : vector<30x30xf32> to vector<16x30xf32>
    %28 = arith.addf %24, %27 : vector<16x30xf32>
    %29 = vector.extract_strided_slice %1 {offsets = [6, 0], sizes = [16, 30], strides = [1, 1]} : vector<30x30xf32> to vector<16x30xf32>
    %30 = arith.addf %26, %29 : vector<16x30xf32>
    %31 = vector.extract_strided_slice %2 {offsets = [6, 0], sizes = [16, 30], strides = [1, 1]} : vector<30x30xf32> to vector<16x30xf32>
    %32 = arith.addf %28, %31 : vector<16x30xf32>
    %33 = vector.extract_strided_slice %1 {offsets = [7, 0], sizes = [16, 30], strides = [1, 1]} : vector<30x30xf32> to vector<16x30xf32>
    %34 = arith.addf %30, %33 : vector<16x30xf32>
    %35 = vector.extract_strided_slice %2 {offsets = [7, 0], sizes = [16, 30], strides = [1, 1]} : vector<30x30xf32> to vector<16x30xf32>
    %36 = arith.addf %32, %35 : vector<16x30xf32>
    %37 = vector.extract_strided_slice %1 {offsets = [8, 0], sizes = [16, 30], strides = [1, 1]} : vector<30x30xf32> to vector<16x30xf32>
    %38 = arith.addf %34, %37 : vector<16x30xf32>
    %39 = vector.extract_strided_slice %2 {offsets = [8, 0], sizes = [16, 30], strides = [1, 1]} : vector<30x30xf32> to vector<16x30xf32>
    %40 = arith.addf %36, %39 : vector<16x30xf32>
    %41 = vector.extract_strided_slice %1 {offsets = [9, 0], sizes = [16, 30], strides = [1, 1]} : vector<30x30xf32> to vector<16x30xf32>
    %42 = arith.addf %38, %41 : vector<16x30xf32>
    %43 = vector.extract_strided_slice %2 {offsets = [9, 0], sizes = [16, 30], strides = [1, 1]} : vector<30x30xf32> to vector<16x30xf32>
    %44 = arith.addf %40, %43 : vector<16x30xf32>
    %45 = vector.extract_strided_slice %1 {offsets = [10, 0], sizes = [16, 30], strides = [1, 1]} : vector<30x30xf32> to vector<16x30xf32>
    %46 = arith.addf %42, %45 : vector<16x30xf32>
    %47 = vector.extract_strided_slice %2 {offsets = [10, 0], sizes = [16, 30], strides = [1, 1]} : vector<30x30xf32> to vector<16x30xf32>
    %48 = arith.addf %44, %47 : vector<16x30xf32>
    %49 = vector.extract_strided_slice %1 {offsets = [11, 0], sizes = [16, 30], strides = [1, 1]} : vector<30x30xf32> to vector<16x30xf32>
    %50 = arith.addf %46, %49 : vector<16x30xf32>
    %51 = vector.extract_strided_slice %2 {offsets = [11, 0], sizes = [16, 30], strides = [1, 1]} : vector<30x30xf32> to vector<16x30xf32>
    %52 = arith.addf %48, %51 : vector<16x30xf32>
    %53 = vector.extract_strided_slice %1 {offsets = [12, 0], sizes = [16, 30], strides = [1, 1]} : vector<30x30xf32> to vector<16x30xf32>
    %54 = arith.addf %50, %53 : vector<16x30xf32>
    %55 = vector.extract_strided_slice %2 {offsets = [12, 0], sizes = [16, 30], strides = [1, 1]} : vector<30x30xf32> to vector<16x30xf32>
    %56 = arith.addf %52, %55 : vector<16x30xf32>
    %57 = vector.extract_strided_slice %1 {offsets = [13, 0], sizes = [16, 30], strides = [1, 1]} : vector<30x30xf32> to vector<16x30xf32>
    %58 = arith.addf %54, %57 : vector<16x30xf32>
    %59 = vector.extract_strided_slice %2 {offsets = [13, 0], sizes = [16, 30], strides = [1, 1]} : vector<30x30xf32> to vector<16x30xf32>
    %60 = arith.addf %56, %59 : vector<16x30xf32>
    %61 = vector.extract_strided_slice %1 {offsets = [14, 0], sizes = [16, 30], strides = [1, 1]} : vector<30x30xf32> to vector<16x30xf32>
    %62 = arith.addf %58, %61 : vector<16x30xf32>
    %63 = vector.extract_strided_slice %2 {offsets = [14, 0], sizes = [16, 30], strides = [1, 1]} : vector<30x30xf32> to vector<16x30xf32>
    %64 = arith.addf %60, %63 : vector<16x30xf32>
    %cst_3 = arith.constant 0.000000e+00 : f32
    %65 = vector.broadcast %cst_3 : f32 to vector<16x16xf32>
    %cst_4 = arith.constant 0.000000e+00 : f32
    %66 = vector.broadcast %cst_4 : f32 to vector<16x16xf32>
    %67 = vector.extract_strided_slice %62 {offsets = [0, 0], sizes = [16, 16], strides = [1, 1]} : vector<16x30xf32> to vector<16x16xf32>
    %68 = arith.addf %65, %67 : vector<16x16xf32>
    %69 = vector.extract_strided_slice %64 {offsets = [0, 0], sizes = [16, 16], strides = [1, 1]} : vector<16x30xf32> to vector<16x16xf32>
    %70 = arith.addf %66, %69 : vector<16x16xf32>
    %71 = vector.extract_strided_slice %62 {offsets = [0, 1], sizes = [16, 16], strides = [1, 1]} : vector<16x30xf32> to vector<16x16xf32>
    %72 = arith.addf %68, %71 : vector<16x16xf32>
    %73 = vector.extract_strided_slice %64 {offsets = [0, 1], sizes = [16, 16], strides = [1, 1]} : vector<16x30xf32> to vector<16x16xf32>
    %74 = arith.addf %70, %73 : vector<16x16xf32>
    %75 = vector.extract_strided_slice %62 {offsets = [0, 2], sizes = [16, 16], strides = [1, 1]} : vector<16x30xf32> to vector<16x16xf32>
    %76 = arith.addf %72, %75 : vector<16x16xf32>
    %77 = vector.extract_strided_slice %64 {offsets = [0, 2], sizes = [16, 16], strides = [1, 1]} : vector<16x30xf32> to vector<16x16xf32>
    %78 = arith.addf %74, %77 : vector<16x16xf32>
    %79 = vector.extract_strided_slice %62 {offsets = [0, 3], sizes = [16, 16], strides = [1, 1]} : vector<16x30xf32> to vector<16x16xf32>
    %80 = arith.addf %76, %79 : vector<16x16xf32>
    %81 = vector.extract_strided_slice %64 {offsets = [0, 3], sizes = [16, 16], strides = [1, 1]} : vector<16x30xf32> to vector<16x16xf32>
    %82 = arith.addf %78, %81 : vector<16x16xf32>
    %83 = vector.extract_strided_slice %62 {offsets = [0, 4], sizes = [16, 16], strides = [1, 1]} : vector<16x30xf32> to vector<16x16xf32>
    %84 = arith.addf %80, %83 : vector<16x16xf32>
    %85 = vector.extract_strided_slice %64 {offsets = [0, 4], sizes = [16, 16], strides = [1, 1]} : vector<16x30xf32> to vector<16x16xf32>
    %86 = arith.addf %82, %85 : vector<16x16xf32>
    %87 = vector.extract_strided_slice %62 {offsets = [0, 5], sizes = [16, 16], strides = [1, 1]} : vector<16x30xf32> to vector<16x16xf32>
    %88 = arith.addf %84, %87 : vector<16x16xf32>
    %89 = vector.extract_strided_slice %64 {offsets = [0, 5], sizes = [16, 16], strides = [1, 1]} : vector<16x30xf32> to vector<16x16xf32>
    %90 = arith.addf %86, %89 : vector<16x16xf32>
    %91 = vector.extract_strided_slice %62 {offsets = [0, 6], sizes = [16, 16], strides = [1, 1]} : vector<16x30xf32> to vector<16x16xf32>
    %92 = arith.addf %88, %91 : vector<16x16xf32>
    %93 = vector.extract_strided_slice %64 {offsets = [0, 6], sizes = [16, 16], strides = [1, 1]} : vector<16x30xf32> to vector<16x16xf32>
    %94 = arith.addf %90, %93 : vector<16x16xf32>
    %95 = vector.extract_strided_slice %62 {offsets = [0, 7], sizes = [16, 16], strides = [1, 1]} : vector<16x30xf32> to vector<16x16xf32>
    %96 = arith.addf %92, %95 : vector<16x16xf32>
    %97 = vector.extract_strided_slice %64 {offsets = [0, 7], sizes = [16, 16], strides = [1, 1]} : vector<16x30xf32> to vector<16x16xf32>
    %98 = arith.addf %94, %97 : vector<16x16xf32>
    %99 = vector.extract_strided_slice %62 {offsets = [0, 8], sizes = [16, 16], strides = [1, 1]} : vector<16x30xf32> to vector<16x16xf32>
    %100 = arith.addf %96, %99 : vector<16x16xf32>
    %101 = vector.extract_strided_slice %64 {offsets = [0, 8], sizes = [16, 16], strides = [1, 1]} : vector<16x30xf32> to vector<16x16xf32>
    %102 = arith.addf %98, %101 : vector<16x16xf32>
    %103 = vector.extract_strided_slice %62 {offsets = [0, 9], sizes = [16, 16], strides = [1, 1]} : vector<16x30xf32> to vector<16x16xf32>
    %104 = arith.addf %100, %103 : vector<16x16xf32>
    %105 = vector.extract_strided_slice %64 {offsets = [0, 9], sizes = [16, 16], strides = [1, 1]} : vector<16x30xf32> to vector<16x16xf32>
    %106 = arith.addf %102, %105 : vector<16x16xf32>
    %107 = vector.extract_strided_slice %62 {offsets = [0, 10], sizes = [16, 16], strides = [1, 1]} : vector<16x30xf32> to vector<16x16xf32>
    %108 = arith.addf %104, %107 : vector<16x16xf32>
    %109 = vector.extract_strided_slice %64 {offsets = [0, 10], sizes = [16, 16], strides = [1, 1]} : vector<16x30xf32> to vector<16x16xf32>
    %110 = arith.addf %106, %109 : vector<16x16xf32>
    %111 = vector.extract_strided_slice %62 {offsets = [0, 11], sizes = [16, 16], strides = [1, 1]} : vector<16x30xf32> to vector<16x16xf32>
    %112 = arith.addf %108, %111 : vector<16x16xf32>
    %113 = vector.extract_strided_slice %64 {offsets = [0, 11], sizes = [16, 16], strides = [1, 1]} : vector<16x30xf32> to vector<16x16xf32>
    %114 = arith.addf %110, %113 : vector<16x16xf32>
    %115 = vector.extract_strided_slice %62 {offsets = [0, 12], sizes = [16, 16], strides = [1, 1]} : vector<16x30xf32> to vector<16x16xf32>
    %116 = arith.addf %112, %115 : vector<16x16xf32>
    %117 = vector.extract_strided_slice %64 {offsets = [0, 12], sizes = [16, 16], strides = [1, 1]} : vector<16x30xf32> to vector<16x16xf32>
    %118 = arith.addf %114, %117 : vector<16x16xf32>
    %119 = vector.extract_strided_slice %62 {offsets = [0, 13], sizes = [16, 16], strides = [1, 1]} : vector<16x30xf32> to vector<16x16xf32>
    %120 = arith.addf %116, %119 : vector<16x16xf32>
    %121 = vector.extract_strided_slice %64 {offsets = [0, 13], sizes = [16, 16], strides = [1, 1]} : vector<16x30xf32> to vector<16x16xf32>
    %122 = arith.addf %118, %121 : vector<16x16xf32>
    %123 = vector.extract_strided_slice %62 {offsets = [0, 14], sizes = [16, 16], strides = [1, 1]} : vector<16x30xf32> to vector<16x16xf32>
    %124 = arith.addf %120, %123 : vector<16x16xf32>
    %125 = vector.extract_strided_slice %64 {offsets = [0, 14], sizes = [16, 16], strides = [1, 1]} : vector<16x30xf32> to vector<16x16xf32>
    %126 = arith.addf %122, %125 : vector<16x16xf32>
    %cst_5 = arith.constant 0.00444444455 : f32
    %127 = vector.broadcast %cst_5 : f32 to vector<16x16xf32>
    %128 = arith.mulf %124, %127 : vector<16x16xf32>
    %cst_6 = arith.constant 0.00444444455 : f32
    %129 = vector.broadcast %cst_6 : f32 to vector<16x16xf32>
    %130 = arith.mulf %126, %129 : vector<16x16xf32>
    %131 = vector.extract_strided_slice %1 {offsets = [7, 7], sizes = [16, 16], strides = [1, 1]} : vector<30x30xf32> to vector<16x16xf32>
    %132 = arith.mulf %128, %128 : vector<16x16xf32>
    %133 = arith.subf %130, %132 : vector<16x16xf32>
    %134 = math.absf %133 : vector<16x16xf32>
    %135 = math.sqrt %134 : vector<16x16xf32>
    %136 = arith.subf %131, %128 : vector<16x16xf32>
    %cst_7 = arith.constant 1.000000e-10 : f32
    %137 = vector.broadcast %cst_7 : f32 to vector<16x16xf32>
    %138 = arith.addf %135, %137 : vector<16x16xf32>
    %139 = arith.divf %136, %138 : vector<16x16xf32>
    %cst_8 = arith.constant -6.000000e+00 : f32
    %cst_9 = arith.constant 6.000000e+00 : f32
    %140 = vector.broadcast %cst_8 : f32 to vector<16x16xf32>
    %141 = arith.maximumf %140, %139 : vector<16x16xf32>
    %142 = vector.broadcast %cst_9 : f32 to vector<16x16xf32>
    %143 = arith.minimumf %142, %141 : vector<16x16xf32>
    %144 = vector.shape_cast %143 : vector<16x16xf32> to vector<1x16x16xf32>
    %c0_10 = arith.constant 0 : index
    %c0_11 = arith.constant 0 : index
    %c0_12 = arith.constant 0 : index
    %145 = vector.load %arg2[%c0_10, %c0_11, %c0_12] : memref<1x16x16xf32, #tpu.memory_space<vmem>>, vector<1x16x16xf32>
    tpu.vector_store %arg2[%c0_10, %c0_11, %c0_12], %144 {strides = array<i32>} : memref<1x16x16xf32, #tpu.memory_space<vmem>>, vector<1x16x16xf32>,
    return
  }
  func.func @transform_0(%arg0: i32) -> (i32, i32, i32) {
    %c0_i32 = arith.constant 0 : i32
    %c0_i32_0 = arith.constant 0 : i32
    %c0_i32_1 = arith.constant 0 : i32
    return %arg0, %c0_i32, %c0_i32_0 : i32, i32, i32
  }
  func.func @transform_1(%arg0: i32) -> (i32, i32, i32) {
    %c0_i32 = arith.constant 0 : i32
    %c0_i32_0 = arith.constant 0 : i32
    %c0_i32_1 = arith.constant 0 : i32
    return %arg0, %c0_i32, %c0_i32_0 : i32, i32, i32
  }
}

module attributes {stable_mosaic.version = 11 : i64} {
  func.func @_bn_relu_conv3x3_kernel(%arg0: i32, %arg1: memref<1x16x16x1xf32, #tpu.memory_space<vmem>>, %arg2: memref<1x1xf32, #tpu.memory_space<vmem>>, %arg3: memref<1x1xf32, #tpu.memory_space<vmem>>, %arg4: memref<9x32xf32, #tpu.memory_space<vmem>>, %arg5: memref<1x16x16x32xf32, #tpu.memory_space<vmem>>, %arg6: memref<1x1x32xf32, #tpu.memory_space<vmem>>, %arg7: memref<1x1x32xf32, #tpu.memory_space<vmem>>, %arg8: memref<18x18x1xf32, #tpu.memory_space<vmem>>) attributes {dimension_semantics = [#tpu.dimension_semantics<parallel>], iteration_bounds = array<i64: 2>, scalar_prefetch = 0 : i64, scratch_operands = 1 : i64, tpu.core_type = #tpu.core_type<tc>, window_params = [{transform_indices = @transform_0, window_bounds = array<i64: 1, 16, 16, 1>}, {pipeline_mode = #tpu.pipeline_mode<synchronous>, transform_indices = @transform_1, window_bounds = array<i64: 1, 1>}, {pipeline_mode = #tpu.pipeline_mode<synchronous>, transform_indices = @transform_2, window_bounds = array<i64: 1, 1>}, {pipeline_mode = #tpu.pipeline_mode<synchronous>, transform_indices = @transform_3, window_bounds = array<i64: 9, 32>}, {transform_indices = @transform_4, window_bounds = array<i64: 1, 16, 16, 32>}, {transform_indices = @transform_5, window_bounds = array<i64: 1, 1, 32>}, {transform_indices = @transform_6, window_bounds = array<i64: 1, 1, 32>}]} {
    %c0 = arith.constant 0 : index
    %c0_0 = arith.constant 0 : index
    %c0_1 = arith.constant 0 : index
    %c0_2 = arith.constant 0 : index
    %0 = vector.load %arg1[%c0, %c0_0, %c0_1, %c0_2] : memref<1x16x16x1xf32, #tpu.memory_space<vmem>>, vector<1x16x16x1xf32>
    %1 = vector.shape_cast %0 : vector<1x16x16x1xf32> to vector<16x16x1xf32>
    %cst = arith.constant 0.000000e+00 : f32
    %2 = vector.broadcast %cst : f32 to vector<18x18x1xf32>
    %c0_3 = arith.constant 0 : index
    %c0_4 = arith.constant 0 : index
    %c0_5 = arith.constant 0 : index
    %3 = vector.load %arg8[%c0_3, %c0_4, %c0_5] : memref<18x18x1xf32, #tpu.memory_space<vmem>>, vector<18x18x1xf32>
    tpu.vector_store %arg8[%c0_3, %c0_4, %c0_5], %2 {strides = array<i32>} : memref<18x18x1xf32, #tpu.memory_space<vmem>>, vector<18x18x1xf32>,
    %c1 = arith.constant 1 : index
    %c1_6 = arith.constant 1 : index
    %c0_7 = arith.constant 0 : index
    %4 = vector.load %arg8[%c1, %c1_6, %c0_7] : memref<18x18x1xf32, #tpu.memory_space<vmem>>, vector<16x16x1xf32>
    tpu.vector_store %arg8[%c1, %c1_6, %c0_7], %1 {strides = array<i32>} : memref<18x18x1xf32, #tpu.memory_space<vmem>>, vector<16x16x1xf32>,
    %cst_8 = arith.constant 0.000000e+00 : f32
    %5 = vector.broadcast %cst_8 : f32 to vector<256x32xf32>
    %c0_9 = arith.constant 0 : index
    %c0_10 = arith.constant 0 : index
    %c0_11 = arith.constant 0 : index
    %6 = vector.load %arg8[%c0_9, %c0_10, %c0_11] : memref<18x18x1xf32, #tpu.memory_space<vmem>>, vector<16x16x1xf32>
    %7 = vector.shape_cast %6 : vector<16x16x1xf32> to vector<256x1xf32>
    %c0_12 = arith.constant 0 : index
    %c0_13 = arith.constant 0 : index
    %8 = vector.load %arg4[%c0_12, %c0_13] : memref<9x32xf32, #tpu.memory_space<vmem>>, vector<1x32xf32>
    %9 = vector.broadcast %7 : vector<256x1xf32> to vector<256x32xf32>
    %10 = vector.broadcast %8 : vector<1x32xf32> to vector<256x32xf32>
    %11 = arith.mulf %9, %10 : vector<256x32xf32>
    %12 = arith.addf %5, %11 : vector<256x32xf32>
    %c0_14 = arith.constant 0 : index
    %c1_15 = arith.constant 1 : index
    %c0_16 = arith.constant 0 : index
    %13 = vector.load %arg8[%c0_14, %c1_15, %c0_16] : memref<18x18x1xf32, #tpu.memory_space<vmem>>, vector<16x16x1xf32>
    %14 = vector.shape_cast %13 : vector<16x16x1xf32> to vector<256x1xf32>
    %c1_17 = arith.constant 1 : index
    %c0_18 = arith.constant 0 : index
    %15 = vector.load %arg4[%c1_17, %c0_18] : memref<9x32xf32, #tpu.memory_space<vmem>>, vector<1x32xf32>
    %16 = vector.broadcast %14 : vector<256x1xf32> to vector<256x32xf32>
    %17 = vector.broadcast %15 : vector<1x32xf32> to vector<256x32xf32>
    %18 = arith.mulf %16, %17 : vector<256x32xf32>
    %19 = arith.addf %12, %18 : vector<256x32xf32>
    %c0_19 = arith.constant 0 : index
    %c2 = arith.constant 2 : index
    %c0_20 = arith.constant 0 : index
    %20 = vector.load %arg8[%c0_19, %c2, %c0_20] : memref<18x18x1xf32, #tpu.memory_space<vmem>>, vector<16x16x1xf32>
    %21 = vector.shape_cast %20 : vector<16x16x1xf32> to vector<256x1xf32>
    %c2_21 = arith.constant 2 : index
    %c0_22 = arith.constant 0 : index
    %22 = vector.load %arg4[%c2_21, %c0_22] : memref<9x32xf32, #tpu.memory_space<vmem>>, vector<1x32xf32>
    %23 = vector.broadcast %21 : vector<256x1xf32> to vector<256x32xf32>
    %24 = vector.broadcast %22 : vector<1x32xf32> to vector<256x32xf32>
    %25 = arith.mulf %23, %24 : vector<256x32xf32>
    %26 = arith.addf %19, %25 : vector<256x32xf32>
    %c1_23 = arith.constant 1 : index
    %c0_24 = arith.constant 0 : index
    %c0_25 = arith.constant 0 : index
    %27 = vector.load %arg8[%c1_23, %c0_24, %c0_25] : memref<18x18x1xf32, #tpu.memory_space<vmem>>, vector<16x16x1xf32>
    %28 = vector.shape_cast %27 : vector<16x16x1xf32> to vector<256x1xf32>
    %c3 = arith.constant 3 : index
    %c0_26 = arith.constant 0 : index
    %29 = vector.load %arg4[%c3, %c0_26] : memref<9x32xf32, #tpu.memory_space<vmem>>, vector<1x32xf32>
    %30 = vector.broadcast %28 : vector<256x1xf32> to vector<256x32xf32>
    %31 = vector.broadcast %29 : vector<1x32xf32> to vector<256x32xf32>
    %32 = arith.mulf %30, %31 : vector<256x32xf32>
    %33 = arith.addf %26, %32 : vector<256x32xf32>
    %c1_27 = arith.constant 1 : index
    %c1_28 = arith.constant 1 : index
    %c0_29 = arith.constant 0 : index
    %34 = vector.load %arg8[%c1_27, %c1_28, %c0_29] : memref<18x18x1xf32, #tpu.memory_space<vmem>>, vector<16x16x1xf32>
    %35 = vector.shape_cast %34 : vector<16x16x1xf32> to vector<256x1xf32>
    %c4 = arith.constant 4 : index
    %c0_30 = arith.constant 0 : index
    %36 = vector.load %arg4[%c4, %c0_30] : memref<9x32xf32, #tpu.memory_space<vmem>>, vector<1x32xf32>
    %37 = vector.broadcast %35 : vector<256x1xf32> to vector<256x32xf32>
    %38 = vector.broadcast %36 : vector<1x32xf32> to vector<256x32xf32>
    %39 = arith.mulf %37, %38 : vector<256x32xf32>
    %40 = arith.addf %33, %39 : vector<256x32xf32>
    %c1_31 = arith.constant 1 : index
    %c2_32 = arith.constant 2 : index
    %c0_33 = arith.constant 0 : index
    %41 = vector.load %arg8[%c1_31, %c2_32, %c0_33] : memref<18x18x1xf32, #tpu.memory_space<vmem>>, vector<16x16x1xf32>
    %42 = vector.shape_cast %41 : vector<16x16x1xf32> to vector<256x1xf32>
    %c5 = arith.constant 5 : index
    %c0_34 = arith.constant 0 : index
    %43 = vector.load %arg4[%c5, %c0_34] : memref<9x32xf32, #tpu.memory_space<vmem>>, vector<1x32xf32>
    %44 = vector.broadcast %42 : vector<256x1xf32> to vector<256x32xf32>
    %45 = vector.broadcast %43 : vector<1x32xf32> to vector<256x32xf32>
    %46 = arith.mulf %44, %45 : vector<256x32xf32>
    %47 = arith.addf %40, %46 : vector<256x32xf32>
    %c2_35 = arith.constant 2 : index
    %c0_36 = arith.constant 0 : index
    %c0_37 = arith.constant 0 : index
    %48 = vector.load %arg8[%c2_35, %c0_36, %c0_37] : memref<18x18x1xf32, #tpu.memory_space<vmem>>, vector<16x16x1xf32>
    %49 = vector.shape_cast %48 : vector<16x16x1xf32> to vector<256x1xf32>
    %c6 = arith.constant 6 : index
    %c0_38 = arith.constant 0 : index
    %50 = vector.load %arg4[%c6, %c0_38] : memref<9x32xf32, #tpu.memory_space<vmem>>, vector<1x32xf32>
    %51 = vector.broadcast %49 : vector<256x1xf32> to vector<256x32xf32>
    %52 = vector.broadcast %50 : vector<1x32xf32> to vector<256x32xf32>
    %53 = arith.mulf %51, %52 : vector<256x32xf32>
    %54 = arith.addf %47, %53 : vector<256x32xf32>
    %c2_39 = arith.constant 2 : index
    %c1_40 = arith.constant 1 : index
    %c0_41 = arith.constant 0 : index
    %55 = vector.load %arg8[%c2_39, %c1_40, %c0_41] : memref<18x18x1xf32, #tpu.memory_space<vmem>>, vector<16x16x1xf32>
    %56 = vector.shape_cast %55 : vector<16x16x1xf32> to vector<256x1xf32>
    %c7 = arith.constant 7 : index
    %c0_42 = arith.constant 0 : index
    %57 = vector.load %arg4[%c7, %c0_42] : memref<9x32xf32, #tpu.memory_space<vmem>>, vector<1x32xf32>
    %58 = vector.broadcast %56 : vector<256x1xf32> to vector<256x32xf32>
    %59 = vector.broadcast %57 : vector<1x32xf32> to vector<256x32xf32>
    %60 = arith.mulf %58, %59 : vector<256x32xf32>
    %61 = arith.addf %54, %60 : vector<256x32xf32>
    %c2_43 = arith.constant 2 : index
    %c2_44 = arith.constant 2 : index
    %c0_45 = arith.constant 0 : index
    %62 = vector.load %arg8[%c2_43, %c2_44, %c0_45] : memref<18x18x1xf32, #tpu.memory_space<vmem>>, vector<16x16x1xf32>
    %63 = vector.shape_cast %62 : vector<16x16x1xf32> to vector<256x1xf32>
    %c8 = arith.constant 8 : index
    %c0_46 = arith.constant 0 : index
    %64 = vector.load %arg4[%c8, %c0_46] : memref<9x32xf32, #tpu.memory_space<vmem>>, vector<1x32xf32>
    %65 = vector.broadcast %63 : vector<256x1xf32> to vector<256x32xf32>
    %66 = vector.broadcast %64 : vector<1x32xf32> to vector<256x32xf32>
    %67 = arith.mulf %65, %66 : vector<256x32xf32>
    %68 = arith.addf %61, %67 : vector<256x32xf32>
    %cst_47 = arith.constant dense<0.000000e+00> : vector<32xf32>
    %69 = vector.multi_reduction <add>, %68, %cst_47 [0] : vector<256x32xf32> to vector<32xf32>
    %70 = vector.shape_cast %69 : vector<32xf32> to vector<1x1x32xf32>
    %c0_48 = arith.constant 0 : index
    %c0_49 = arith.constant 0 : index
    %c0_50 = arith.constant 0 : index
    %71 = vector.load %arg6[%c0_48, %c0_49, %c0_50] : memref<1x1x32xf32, #tpu.memory_space<vmem>>, vector<1x1x32xf32>
    tpu.vector_store %arg6[%c0_48, %c0_49, %c0_50], %70 {strides = array<i32>} : memref<1x1x32xf32, #tpu.memory_space<vmem>>, vector<1x1x32xf32>,
    %72 = arith.mulf %68, %68 : vector<256x32xf32>
    %cst_51 = arith.constant dense<0.000000e+00> : vector<32xf32>
    %73 = vector.multi_reduction <add>, %72, %cst_51 [0] : vector<256x32xf32> to vector<32xf32>
    %74 = vector.shape_cast %73 : vector<32xf32> to vector<1x1x32xf32>
    %c0_52 = arith.constant 0 : index
    %c0_53 = arith.constant 0 : index
    %c0_54 = arith.constant 0 : index
    %75 = vector.load %arg7[%c0_52, %c0_53, %c0_54] : memref<1x1x32xf32, #tpu.memory_space<vmem>>, vector<1x1x32xf32>
    tpu.vector_store %arg7[%c0_52, %c0_53, %c0_54], %74 {strides = array<i32>} : memref<1x1x32xf32, #tpu.memory_space<vmem>>, vector<1x1x32xf32>,
    %76 = vector.shape_cast %68 : vector<256x32xf32> to vector<1x16x16x32xf32>
    %c0_55 = arith.constant 0 : index
    %c0_56 = arith.constant 0 : index
    %c0_57 = arith.constant 0 : index
    %c0_58 = arith.constant 0 : index
    %77 = vector.load %arg5[%c0_55, %c0_56, %c0_57, %c0_58] : memref<1x16x16x32xf32, #tpu.memory_space<vmem>>, vector<1x16x16x32xf32>
    tpu.vector_store %arg5[%c0_55, %c0_56, %c0_57, %c0_58], %76 {strides = array<i32>} : memref<1x16x16x32xf32, #tpu.memory_space<vmem>>, vector<1x16x16x32xf32>,
    return
  }
  func.func @transform_0(%arg0: i32) -> (i32, i32, i32, i32) {
    %c0_i32 = arith.constant 0 : i32
    %c0_i32_0 = arith.constant 0 : i32
    %c0_i32_1 = arith.constant 0 : i32
    %c0_i32_2 = arith.constant 0 : i32
    return %arg0, %c0_i32, %c0_i32_0, %c0_i32_1 : i32, i32, i32, i32
  }
  func.func @transform_1(%arg0: i32) -> (i32, i32) {
    %c0_i32 = arith.constant 0 : i32
    %c0_i32_0 = arith.constant 0 : i32
    %c0_i32_1 = arith.constant 0 : i32
    return %c0_i32, %c0_i32_0 : i32, i32
  }
  func.func @transform_2(%arg0: i32) -> (i32, i32) {
    %c0_i32 = arith.constant 0 : i32
    %c0_i32_0 = arith.constant 0 : i32
    %c0_i32_1 = arith.constant 0 : i32
    return %c0_i32, %c0_i32_0 : i32, i32
  }
  func.func @transform_3(%arg0: i32) -> (i32, i32) {
    %c0_i32 = arith.constant 0 : i32
    %c0_i32_0 = arith.constant 0 : i32
    %c0_i32_1 = arith.constant 0 : i32
    return %c0_i32, %c0_i32_0 : i32, i32
  }
  func.func @transform_4(%arg0: i32) -> (i32, i32, i32, i32) {
    %c0_i32 = arith.constant 0 : i32
    %c0_i32_0 = arith.constant 0 : i32
    %c0_i32_1 = arith.constant 0 : i32
    %c0_i32_2 = arith.constant 0 : i32
    return %arg0, %c0_i32, %c0_i32_0, %c0_i32_1 : i32, i32, i32, i32
  }
  func.func @transform_5(%arg0: i32) -> (i32, i32, i32) {
    %c0_i32 = arith.constant 0 : i32
    %c0_i32_0 = arith.constant 0 : i32
    %c0_i32_1 = arith.constant 0 : i32
    return %arg0, %c0_i32, %c0_i32_0 : i32, i32, i32
  }
  func.func @transform_6(%arg0: i32) -> (i32, i32, i32) {
    %c0_i32 = arith.constant 0 : i32
    %c0_i32_0 = arith.constant 0 : i32
    %c0_i32_1 = arith.constant 0 : i32
    return %arg0, %c0_i32, %c0_i32_0 : i32, i32, i32
  }
}

module attributes {stable_mosaic.version = 11 : i64} {
  func.func @_bn_relu_conv3x3_kernel(%arg0: i32, %arg1: memref<1x16x16x32xf32, #tpu.memory_space<vmem>>, %arg2: memref<1x32xf32, #tpu.memory_space<vmem>>, %arg3: memref<1x32xf32, #tpu.memory_space<vmem>>, %arg4: memref<288x32xbf16, #tpu.memory_space<vmem>>, %arg5: memref<1x16x16x32xf32, #tpu.memory_space<vmem>>, %arg6: memref<1x1x32xf32, #tpu.memory_space<vmem>>, %arg7: memref<1x1x32xf32, #tpu.memory_space<vmem>>, %arg8: memref<18x18x32xf32, #tpu.memory_space<vmem>>) attributes {dimension_semantics = [#tpu.dimension_semantics<parallel>], iteration_bounds = array<i64: 2>, scalar_prefetch = 0 : i64, scratch_operands = 1 : i64, tpu.core_type = #tpu.core_type<tc>, window_params = [{transform_indices = @transform_0, window_bounds = array<i64: 1, 16, 16, 32>}, {pipeline_mode = #tpu.pipeline_mode<synchronous>, transform_indices = @transform_1, window_bounds = array<i64: 1, 32>}, {pipeline_mode = #tpu.pipeline_mode<synchronous>, transform_indices = @transform_2, window_bounds = array<i64: 1, 32>}, {pipeline_mode = #tpu.pipeline_mode<synchronous>, transform_indices = @transform_3, window_bounds = array<i64: 288, 32>}, {transform_indices = @transform_4, window_bounds = array<i64: 1, 16, 16, 32>}, {transform_indices = @transform_5, window_bounds = array<i64: 1, 1, 32>}, {transform_indices = @transform_6, window_bounds = array<i64: 1, 1, 32>}]} {
    %c0 = arith.constant 0 : index
    %c0_0 = arith.constant 0 : index
    %c0_1 = arith.constant 0 : index
    %c0_2 = arith.constant 0 : index
    %0 = vector.load %arg1[%c0, %c0_0, %c0_1, %c0_2] : memref<1x16x16x32xf32, #tpu.memory_space<vmem>>, vector<1x16x16x32xf32>
    %1 = vector.shape_cast %0 : vector<1x16x16x32xf32> to vector<16x16x32xf32>
    %c0_3 = arith.constant 0 : index
    %c0_4 = arith.constant 0 : index
    %2 = vector.load %arg2[%c0_3, %c0_4] : memref<1x32xf32, #tpu.memory_space<vmem>>, vector<1x32xf32>
    %3 = vector.shape_cast %2 : vector<1x32xf32> to vector<1x1x32xf32>
    %c0_5 = arith.constant 0 : index
    %c0_6 = arith.constant 0 : index
    %4 = vector.load %arg3[%c0_5, %c0_6] : memref<1x32xf32, #tpu.memory_space<vmem>>, vector<1x32xf32>
    %5 = vector.shape_cast %4 : vector<1x32xf32> to vector<1x1x32xf32>
    %6 = vector.broadcast %3 : vector<1x1x32xf32> to vector<16x16x32xf32>
    %7 = arith.subf %1, %6 : vector<16x16x32xf32>
    %8 = vector.broadcast %5 : vector<1x1x32xf32> to vector<16x16x32xf32>
    %9 = arith.mulf %7, %8 : vector<16x16x32xf32>
    %cst = arith.constant 0.000000e+00 : f32
    %10 = vector.broadcast %cst : f32 to vector<16x16x32xf32>
    %11 = arith.maximumf %9, %10 : vector<16x16x32xf32>
    %cst_7 = arith.constant 0.000000e+00 : f32
    %12 = vector.broadcast %cst_7 : f32 to vector<18x18x32xf32>
    %c0_8 = arith.constant 0 : index
    %c0_9 = arith.constant 0 : index
    %c0_10 = arith.constant 0 : index
    %13 = vector.load %arg8[%c0_8, %c0_9, %c0_10] : memref<18x18x32xf32, #tpu.memory_space<vmem>>, vector<18x18x32xf32>
    tpu.vector_store %arg8[%c0_8, %c0_9, %c0_10], %12 {strides = array<i32>} : memref<18x18x32xf32, #tpu.memory_space<vmem>>, vector<18x18x32xf32>,
    %c1 = arith.constant 1 : index
    %c1_11 = arith.constant 1 : index
    %c0_12 = arith.constant 0 : index
    %14 = vector.load %arg8[%c1, %c1_11, %c0_12] : memref<18x18x32xf32, #tpu.memory_space<vmem>>, vector<16x16x32xf32>
    tpu.vector_store %arg8[%c1, %c1_11, %c0_12], %11 {strides = array<i32>} : memref<18x18x32xf32, #tpu.memory_space<vmem>>, vector<16x16x32xf32>,
    %c0_13 = arith.constant 0 : index
    %c0_14 = arith.constant 0 : index
    %c0_15 = arith.constant 0 : index
    %15 = vector.load %arg8[%c0_13, %c0_14, %c0_15] : memref<18x18x32xf32, #tpu.memory_space<vmem>>, vector<16x16x32xf32>
    %16 = vector.shape_cast %15 : vector<16x16x32xf32> to vector<256x32xf32>
    %c0_16 = arith.constant 0 : index
    %c1_17 = arith.constant 1 : index
    %c0_18 = arith.constant 0 : index
    %17 = vector.load %arg8[%c0_16, %c1_17, %c0_18] : memref<18x18x32xf32, #tpu.memory_space<vmem>>, vector<16x16x32xf32>
    %18 = vector.shape_cast %17 : vector<16x16x32xf32> to vector<256x32xf32>
    %c0_19 = arith.constant 0 : index
    %c2 = arith.constant 2 : index
    %c0_20 = arith.constant 0 : index
    %19 = vector.load %arg8[%c0_19, %c2, %c0_20] : memref<18x18x32xf32, #tpu.memory_space<vmem>>, vector<16x16x32xf32>
    %20 = vector.shape_cast %19 : vector<16x16x32xf32> to vector<256x32xf32>
    %c1_21 = arith.constant 1 : index
    %c0_22 = arith.constant 0 : index
    %c0_23 = arith.constant 0 : index
    %21 = vector.load %arg8[%c1_21, %c0_22, %c0_23] : memref<18x18x32xf32, #tpu.memory_space<vmem>>, vector<16x16x32xf32>
    %22 = vector.shape_cast %21 : vector<16x16x32xf32> to vector<256x32xf32>
    %c1_24 = arith.constant 1 : index
    %c1_25 = arith.constant 1 : index
    %c0_26 = arith.constant 0 : index
    %23 = vector.load %arg8[%c1_24, %c1_25, %c0_26] : memref<18x18x32xf32, #tpu.memory_space<vmem>>, vector<16x16x32xf32>
    %24 = vector.shape_cast %23 : vector<16x16x32xf32> to vector<256x32xf32>
    %c1_27 = arith.constant 1 : index
    %c2_28 = arith.constant 2 : index
    %c0_29 = arith.constant 0 : index
    %25 = vector.load %arg8[%c1_27, %c2_28, %c0_29] : memref<18x18x32xf32, #tpu.memory_space<vmem>>, vector<16x16x32xf32>
    %26 = vector.shape_cast %25 : vector<16x16x32xf32> to vector<256x32xf32>
    %c2_30 = arith.constant 2 : index
    %c0_31 = arith.constant 0 : index
    %c0_32 = arith.constant 0 : index
    %27 = vector.load %arg8[%c2_30, %c0_31, %c0_32] : memref<18x18x32xf32, #tpu.memory_space<vmem>>, vector<16x16x32xf32>
    %28 = vector.shape_cast %27 : vector<16x16x32xf32> to vector<256x32xf32>
    %c2_33 = arith.constant 2 : index
    %c1_34 = arith.constant 1 : index
    %c0_35 = arith.constant 0 : index
    %29 = vector.load %arg8[%c2_33, %c1_34, %c0_35] : memref<18x18x32xf32, #tpu.memory_space<vmem>>, vector<16x16x32xf32>
    %30 = vector.shape_cast %29 : vector<16x16x32xf32> to vector<256x32xf32>
    %c2_36 = arith.constant 2 : index
    %c2_37 = arith.constant 2 : index
    %c0_38 = arith.constant 0 : index
    %31 = vector.load %arg8[%c2_36, %c2_37, %c0_38] : memref<18x18x32xf32, #tpu.memory_space<vmem>>, vector<16x16x32xf32>
    %32 = vector.shape_cast %31 : vector<16x16x32xf32> to vector<256x32xf32>
    %33 = tpu.concatenate %16, %18, %20, %22, %24, %26, %28, %30, %32 in 1 : vector<256x32xf32>, vector<256x32xf32>, vector<256x32xf32>, vector<256x32xf32>, vector<256x32xf32>, vector<256x32xf32>, vector<256x32xf32>, vector<256x32xf32>, vector<256x32xf32> -> vector<256x288xf32>
    %34 = arith.truncf %33 : vector<256x288xf32> to vector<256x288xbf16>
    %c0_39 = arith.constant 0 : index
    %c0_40 = arith.constant 0 : index
    %35 = vector.load %arg4[%c0_39, %c0_40] : memref<288x32xbf16, #tpu.memory_space<vmem>>, vector<288x32xbf16>
    %cst_41 = arith.constant dense<0.000000e+00> : vector<256x32xf32>
    %36 = tpu.matmul %34, %35, %cst_41 {dimension_numbers = #tpu.dot_dimension_numbers<[1], [0], [0], [1], [0, 0, 1, 1], [], []>} : vector<256x288xbf16>, vector<288x32xbf16>, vector<256x32xf32> -> vector<256x32xf32>
    %cst_42 = arith.constant dense<0.000000e+00> : vector<32xf32>
    %37 = vector.multi_reduction <add>, %36, %cst_42 [0] : vector<256x32xf32> to vector<32xf32>
    %38 = vector.shape_cast %37 : vector<32xf32> to vector<1x1x32xf32>
    %c0_43 = arith.constant 0 : index
    %c0_44 = arith.constant 0 : index
    %c0_45 = arith.constant 0 : index
    %39 = vector.load %arg6[%c0_43, %c0_44, %c0_45] : memref<1x1x32xf32, #tpu.memory_space<vmem>>, vector<1x1x32xf32>
    tpu.vector_store %arg6[%c0_43, %c0_44, %c0_45], %38 {strides = array<i32>} : memref<1x1x32xf32, #tpu.memory_space<vmem>>, vector<1x1x32xf32>,
    %40 = arith.mulf %36, %36 : vector<256x32xf32>
    %cst_46 = arith.constant dense<0.000000e+00> : vector<32xf32>
    %41 = vector.multi_reduction <add>, %40, %cst_46 [0] : vector<256x32xf32> to vector<32xf32>
    %42 = vector.shape_cast %41 : vector<32xf32> to vector<1x1x32xf32>
    %c0_47 = arith.constant 0 : index
    %c0_48 = arith.constant 0 : index
    %c0_49 = arith.constant 0 : index
    %43 = vector.load %arg7[%c0_47, %c0_48, %c0_49] : memref<1x1x32xf32, #tpu.memory_space<vmem>>, vector<1x1x32xf32>
    tpu.vector_store %arg7[%c0_47, %c0_48, %c0_49], %42 {strides = array<i32>} : memref<1x1x32xf32, #tpu.memory_space<vmem>>, vector<1x1x32xf32>,
    %44 = vector.shape_cast %36 : vector<256x32xf32> to vector<1x16x16x32xf32>
    %c0_50 = arith.constant 0 : index
    %c0_51 = arith.constant 0 : index
    %c0_52 = arith.constant 0 : index
    %c0_53 = arith.constant 0 : index
    %45 = vector.load %arg5[%c0_50, %c0_51, %c0_52, %c0_53] : memref<1x16x16x32xf32, #tpu.memory_space<vmem>>, vector<1x16x16x32xf32>
    tpu.vector_store %arg5[%c0_50, %c0_51, %c0_52, %c0_53], %44 {strides = array<i32>} : memref<1x16x16x32xf32, #tpu.memory_space<vmem>>, vector<1x16x16x32xf32>,
    return
  }
  func.func @transform_0(%arg0: i32) -> (i32, i32, i32, i32) {
    %c0_i32 = arith.constant 0 : i32
    %c0_i32_0 = arith.constant 0 : i32
    %c0_i32_1 = arith.constant 0 : i32
    %c0_i32_2 = arith.constant 0 : i32
    return %arg0, %c0_i32, %c0_i32_0, %c0_i32_1 : i32, i32, i32, i32
  }
  func.func @transform_1(%arg0: i32) -> (i32, i32) {
    %c0_i32 = arith.constant 0 : i32
    %c0_i32_0 = arith.constant 0 : i32
    %c0_i32_1 = arith.constant 0 : i32
    return %c0_i32, %c0_i32_0 : i32, i32
  }
  func.func @transform_2(%arg0: i32) -> (i32, i32) {
    %c0_i32 = arith.constant 0 : i32
    %c0_i32_0 = arith.constant 0 : i32
    %c0_i32_1 = arith.constant 0 : i32
    return %c0_i32, %c0_i32_0 : i32, i32
  }
  func.func @transform_3(%arg0: i32) -> (i32, i32) {
    %c0_i32 = arith.constant 0 : i32
    %c0_i32_0 = arith.constant 0 : i32
    %c0_i32_1 = arith.constant 0 : i32
    return %c0_i32, %c0_i32_0 : i32, i32
  }
  func.func @transform_4(%arg0: i32) -> (i32, i32, i32, i32) {
    %c0_i32 = arith.constant 0 : i32
    %c0_i32_0 = arith.constant 0 : i32
    %c0_i32_1 = arith.constant 0 : i32
    %c0_i32_2 = arith.constant 0 : i32
    return %arg0, %c0_i32, %c0_i32_0, %c0_i32_1 : i32, i32, i32, i32
  }
  func.func @transform_5(%arg0: i32) -> (i32, i32, i32) {
    %c0_i32 = arith.constant 0 : i32
    %c0_i32_0 = arith.constant 0 : i32
    %c0_i32_1 = arith.constant 0 : i32
    return %arg0, %c0_i32, %c0_i32_0 : i32, i32, i32
  }
  func.func @transform_6(%arg0: i32) -> (i32, i32, i32) {
    %c0_i32 = arith.constant 0 : i32
    %c0_i32_0 = arith.constant 0 : i32
    %c0_i32_1 = arith.constant 0 : i32
    return %arg0, %c0_i32, %c0_i32_0 : i32, i32, i32
  }
}

module attributes {stable_mosaic.version = 11 : i64} {
  func.func @_bn_relu_conv3x3_kernel(%arg0: i32, %arg1: memref<1x16x16x32xf32, #tpu.memory_space<vmem>>, %arg2: memref<1x32xf32, #tpu.memory_space<vmem>>, %arg3: memref<1x32xf32, #tpu.memory_space<vmem>>, %arg4: memref<288x64xbf16, #tpu.memory_space<vmem>>, %arg5: memref<1x16x16x64xf32, #tpu.memory_space<vmem>>, %arg6: memref<1x1x64xf32, #tpu.memory_space<vmem>>, %arg7: memref<1x1x64xf32, #tpu.memory_space<vmem>>, %arg8: memref<18x18x32xf32, #tpu.memory_space<vmem>>) attributes {dimension_semantics = [#tpu.dimension_semantics<parallel>], iteration_bounds = array<i64: 2>, scalar_prefetch = 0 : i64, scratch_operands = 1 : i64, tpu.core_type = #tpu.core_type<tc>, window_params = [{transform_indices = @transform_0, window_bounds = array<i64: 1, 16, 16, 32>}, {pipeline_mode = #tpu.pipeline_mode<synchronous>, transform_indices = @transform_1, window_bounds = array<i64: 1, 32>}, {pipeline_mode = #tpu.pipeline_mode<synchronous>, transform_indices = @transform_2, window_bounds = array<i64: 1, 32>}, {pipeline_mode = #tpu.pipeline_mode<synchronous>, transform_indices = @transform_3, window_bounds = array<i64: 288, 64>}, {transform_indices = @transform_4, window_bounds = array<i64: 1, 16, 16, 64>}, {transform_indices = @transform_5, window_bounds = array<i64: 1, 1, 64>}, {transform_indices = @transform_6, window_bounds = array<i64: 1, 1, 64>}]} {
    %c0 = arith.constant 0 : index
    %c0_0 = arith.constant 0 : index
    %c0_1 = arith.constant 0 : index
    %c0_2 = arith.constant 0 : index
    %0 = vector.load %arg1[%c0, %c0_0, %c0_1, %c0_2] : memref<1x16x16x32xf32, #tpu.memory_space<vmem>>, vector<1x16x16x32xf32>
    %1 = vector.shape_cast %0 : vector<1x16x16x32xf32> to vector<16x16x32xf32>
    %c0_3 = arith.constant 0 : index
    %c0_4 = arith.constant 0 : index
    %2 = vector.load %arg2[%c0_3, %c0_4] : memref<1x32xf32, #tpu.memory_space<vmem>>, vector<1x32xf32>
    %3 = vector.shape_cast %2 : vector<1x32xf32> to vector<1x1x32xf32>
    %c0_5 = arith.constant 0 : index
    %c0_6 = arith.constant 0 : index
    %4 = vector.load %arg3[%c0_5, %c0_6] : memref<1x32xf32, #tpu.memory_space<vmem>>, vector<1x32xf32>
    %5 = vector.shape_cast %4 : vector<1x32xf32> to vector<1x1x32xf32>
    %6 = vector.broadcast %3 : vector<1x1x32xf32> to vector<16x16x32xf32>
    %7 = arith.subf %1, %6 : vector<16x16x32xf32>
    %8 = vector.broadcast %5 : vector<1x1x32xf32> to vector<16x16x32xf32>
    %9 = arith.mulf %7, %8 : vector<16x16x32xf32>
    %cst = arith.constant 0.000000e+00 : f32
    %10 = vector.broadcast %cst : f32 to vector<16x16x32xf32>
    %11 = arith.maximumf %9, %10 : vector<16x16x32xf32>
    %cst_7 = arith.constant 0.000000e+00 : f32
    %12 = vector.broadcast %cst_7 : f32 to vector<18x18x32xf32>
    %c0_8 = arith.constant 0 : index
    %c0_9 = arith.constant 0 : index
    %c0_10 = arith.constant 0 : index
    %13 = vector.load %arg8[%c0_8, %c0_9, %c0_10] : memref<18x18x32xf32, #tpu.memory_space<vmem>>, vector<18x18x32xf32>
    tpu.vector_store %arg8[%c0_8, %c0_9, %c0_10], %12 {strides = array<i32>} : memref<18x18x32xf32, #tpu.memory_space<vmem>>, vector<18x18x32xf32>,
    %c1 = arith.constant 1 : index
    %c1_11 = arith.constant 1 : index
    %c0_12 = arith.constant 0 : index
    %14 = vector.load %arg8[%c1, %c1_11, %c0_12] : memref<18x18x32xf32, #tpu.memory_space<vmem>>, vector<16x16x32xf32>
    tpu.vector_store %arg8[%c1, %c1_11, %c0_12], %11 {strides = array<i32>} : memref<18x18x32xf32, #tpu.memory_space<vmem>>, vector<16x16x32xf32>,
    %c0_13 = arith.constant 0 : index
    %c0_14 = arith.constant 0 : index
    %c0_15 = arith.constant 0 : index
    %15 = vector.load %arg8[%c0_13, %c0_14, %c0_15] : memref<18x18x32xf32, #tpu.memory_space<vmem>>, vector<16x16x32xf32>
    %16 = vector.shape_cast %15 : vector<16x16x32xf32> to vector<256x32xf32>
    %c0_16 = arith.constant 0 : index
    %c1_17 = arith.constant 1 : index
    %c0_18 = arith.constant 0 : index
    %17 = vector.load %arg8[%c0_16, %c1_17, %c0_18] : memref<18x18x32xf32, #tpu.memory_space<vmem>>, vector<16x16x32xf32>
    %18 = vector.shape_cast %17 : vector<16x16x32xf32> to vector<256x32xf32>
    %c0_19 = arith.constant 0 : index
    %c2 = arith.constant 2 : index
    %c0_20 = arith.constant 0 : index
    %19 = vector.load %arg8[%c0_19, %c2, %c0_20] : memref<18x18x32xf32, #tpu.memory_space<vmem>>, vector<16x16x32xf32>
    %20 = vector.shape_cast %19 : vector<16x16x32xf32> to vector<256x32xf32>
    %c1_21 = arith.constant 1 : index
    %c0_22 = arith.constant 0 : index
    %c0_23 = arith.constant 0 : index
    %21 = vector.load %arg8[%c1_21, %c0_22, %c0_23] : memref<18x18x32xf32, #tpu.memory_space<vmem>>, vector<16x16x32xf32>
    %22 = vector.shape_cast %21 : vector<16x16x32xf32> to vector<256x32xf32>
    %c1_24 = arith.constant 1 : index
    %c1_25 = arith.constant 1 : index
    %c0_26 = arith.constant 0 : index
    %23 = vector.load %arg8[%c1_24, %c1_25, %c0_26] : memref<18x18x32xf32, #tpu.memory_space<vmem>>, vector<16x16x32xf32>
    %24 = vector.shape_cast %23 : vector<16x16x32xf32> to vector<256x32xf32>
    %c1_27 = arith.constant 1 : index
    %c2_28 = arith.constant 2 : index
    %c0_29 = arith.constant 0 : index
    %25 = vector.load %arg8[%c1_27, %c2_28, %c0_29] : memref<18x18x32xf32, #tpu.memory_space<vmem>>, vector<16x16x32xf32>
    %26 = vector.shape_cast %25 : vector<16x16x32xf32> to vector<256x32xf32>
    %c2_30 = arith.constant 2 : index
    %c0_31 = arith.constant 0 : index
    %c0_32 = arith.constant 0 : index
    %27 = vector.load %arg8[%c2_30, %c0_31, %c0_32] : memref<18x18x32xf32, #tpu.memory_space<vmem>>, vector<16x16x32xf32>
    %28 = vector.shape_cast %27 : vector<16x16x32xf32> to vector<256x32xf32>
    %c2_33 = arith.constant 2 : index
    %c1_34 = arith.constant 1 : index
    %c0_35 = arith.constant 0 : index
    %29 = vector.load %arg8[%c2_33, %c1_34, %c0_35] : memref<18x18x32xf32, #tpu.memory_space<vmem>>, vector<16x16x32xf32>
    %30 = vector.shape_cast %29 : vector<16x16x32xf32> to vector<256x32xf32>
    %c2_36 = arith.constant 2 : index
    %c2_37 = arith.constant 2 : index
    %c0_38 = arith.constant 0 : index
    %31 = vector.load %arg8[%c2_36, %c2_37, %c0_38] : memref<18x18x32xf32, #tpu.memory_space<vmem>>, vector<16x16x32xf32>
    %32 = vector.shape_cast %31 : vector<16x16x32xf32> to vector<256x32xf32>
    %33 = tpu.concatenate %16, %18, %20, %22, %24, %26, %28, %30, %32 in 1 : vector<256x32xf32>, vector<256x32xf32>, vector<256x32xf32>, vector<256x32xf32>, vector<256x32xf32>, vector<256x32xf32>, vector<256x32xf32>, vector<256x32xf32>, vector<256x32xf32> -> vector<256x288xf32>
    %34 = arith.truncf %33 : vector<256x288xf32> to vector<256x288xbf16>
    %c0_39 = arith.constant 0 : index
    %c0_40 = arith.constant 0 : index
    %35 = vector.load %arg4[%c0_39, %c0_40] : memref<288x64xbf16, #tpu.memory_space<vmem>>, vector<288x64xbf16>
    %cst_41 = arith.constant dense<0.000000e+00> : vector<256x64xf32>
    %36 = tpu.matmul %34, %35, %cst_41 {dimension_numbers = #tpu.dot_dimension_numbers<[1], [0], [0], [1], [0, 0, 1, 1], [], []>} : vector<256x288xbf16>, vector<288x64xbf16>, vector<256x64xf32> -> vector<256x64xf32>
    %37 = tpu.iota {dimensions = array<i32: 0>} : vector<16x16x1xi32>
    %38 = tpu.iota {dimensions = array<i32: 1>} : vector<16x16x1xi32>
    %c1_i32 = arith.constant 1 : i32
    %39 = vector.broadcast %c1_i32 : i32 to vector<16x16x1xi32>
    %40 = arith.andi %37, %39 : vector<16x16x1xi32>
    %c0_i32 = arith.constant 0 : i32
    %41 = vector.broadcast %c0_i32 : i32 to vector<16x16x1xi32>
    %42 = arith.cmpi eq, %40, %41 : vector<16x16x1xi32>
    %c1_i32_42 = arith.constant 1 : i32
    %43 = vector.broadcast %c1_i32_42 : i32 to vector<16x16x1xi32>
    %44 = arith.andi %38, %43 : vector<16x16x1xi32>
    %c0_i32_43 = arith.constant 0 : i32
    %45 = vector.broadcast %c0_i32_43 : i32 to vector<16x16x1xi32>
    %46 = arith.cmpi eq, %44, %45 : vector<16x16x1xi32>
    %47 = arith.andi %42, %46 : vector<16x16x1xi1>
    %48 = arith.extui %47 : vector<16x16x1xi1> to vector<16x16x1xi32>
    %49 = arith.sitofp %48 : vector<16x16x1xi32> to vector<16x16x1xf32>
    %50 = vector.shape_cast %49 : vector<16x16x1xf32> to vector<256x1xf32>
    %51 = vector.broadcast %50 : vector<256x1xf32> to vector<256x64xf32>
    %52 = arith.mulf %36, %51 : vector<256x64xf32>
    %cst_44 = arith.constant dense<0.000000e+00> : vector<64xf32>
    %53 = vector.multi_reduction <add>, %52, %cst_44 [0] : vector<256x64xf32> to vector<64xf32>
    %54 = vector.shape_cast %53 : vector<64xf32> to vector<1x1x64xf32>
    %c0_45 = arith.constant 0 : index
    %c0_46 = arith.constant 0 : index
    %c0_47 = arith.constant 0 : index
    %55 = vector.load %arg6[%c0_45, %c0_46, %c0_47] : memref<1x1x64xf32, #tpu.memory_space<vmem>>, vector<1x1x64xf32>
    tpu.vector_store %arg6[%c0_45, %c0_46, %c0_47], %54 {strides = array<i32>} : memref<1x1x64xf32, #tpu.memory_space<vmem>>, vector<1x1x64xf32>,
    %56 = arith.mulf %52, %52 : vector<256x64xf32>
    %cst_48 = arith.constant dense<0.000000e+00> : vector<64xf32>
    %57 = vector.multi_reduction <add>, %56, %cst_48 [0] : vector<256x64xf32> to vector<64xf32>
    %58 = vector.shape_cast %57 : vector<64xf32> to vector<1x1x64xf32>
    %c0_49 = arith.constant 0 : index
    %c0_50 = arith.constant 0 : index
    %c0_51 = arith.constant 0 : index
    %59 = vector.load %arg7[%c0_49, %c0_50, %c0_51] : memref<1x1x64xf32, #tpu.memory_space<vmem>>, vector<1x1x64xf32>
    tpu.vector_store %arg7[%c0_49, %c0_50, %c0_51], %58 {strides = array<i32>} : memref<1x1x64xf32, #tpu.memory_space<vmem>>, vector<1x1x64xf32>,
    %60 = vector.shape_cast %36 : vector<256x64xf32> to vector<1x16x16x64xf32>
    %c0_52 = arith.constant 0 : index
    %c0_53 = arith.constant 0 : index
    %c0_54 = arith.constant 0 : index
    %c0_55 = arith.constant 0 : index
    %61 = vector.load %arg5[%c0_52, %c0_53, %c0_54, %c0_55] : memref<1x16x16x64xf32, #tpu.memory_space<vmem>>, vector<1x16x16x64xf32>
    tpu.vector_store %arg5[%c0_52, %c0_53, %c0_54, %c0_55], %60 {strides = array<i32>} : memref<1x16x16x64xf32, #tpu.memory_space<vmem>>, vector<1x16x16x64xf32>,
    return
  }
  func.func @transform_0(%arg0: i32) -> (i32, i32, i32, i32) {
    %c0_i32 = arith.constant 0 : i32
    %c0_i32_0 = arith.constant 0 : i32
    %c0_i32_1 = arith.constant 0 : i32
    %c0_i32_2 = arith.constant 0 : i32
    return %arg0, %c0_i32, %c0_i32_0, %c0_i32_1 : i32, i32, i32, i32
  }
  func.func @transform_1(%arg0: i32) -> (i32, i32) {
    %c0_i32 = arith.constant 0 : i32
    %c0_i32_0 = arith.constant 0 : i32
    %c0_i32_1 = arith.constant 0 : i32
    return %c0_i32, %c0_i32_0 : i32, i32
  }
  func.func @transform_2(%arg0: i32) -> (i32, i32) {
    %c0_i32 = arith.constant 0 : i32
    %c0_i32_0 = arith.constant 0 : i32
    %c0_i32_1 = arith.constant 0 : i32
    return %c0_i32, %c0_i32_0 : i32, i32
  }
  func.func @transform_3(%arg0: i32) -> (i32, i32) {
    %c0_i32 = arith.constant 0 : i32
    %c0_i32_0 = arith.constant 0 : i32
    %c0_i32_1 = arith.constant 0 : i32
    return %c0_i32, %c0_i32_0 : i32, i32
  }
  func.func @transform_4(%arg0: i32) -> (i32, i32, i32, i32) {
    %c0_i32 = arith.constant 0 : i32
    %c0_i32_0 = arith.constant 0 : i32
    %c0_i32_1 = arith.constant 0 : i32
    %c0_i32_2 = arith.constant 0 : i32
    return %arg0, %c0_i32, %c0_i32_0, %c0_i32_1 : i32, i32, i32, i32
  }
  func.func @transform_5(%arg0: i32) -> (i32, i32, i32) {
    %c0_i32 = arith.constant 0 : i32
    %c0_i32_0 = arith.constant 0 : i32
    %c0_i32_1 = arith.constant 0 : i32
    return %arg0, %c0_i32, %c0_i32_0 : i32, i32, i32
  }
  func.func @transform_6(%arg0: i32) -> (i32, i32, i32) {
    %c0_i32 = arith.constant 0 : i32
    %c0_i32_0 = arith.constant 0 : i32
    %c0_i32_1 = arith.constant 0 : i32
    return %arg0, %c0_i32, %c0_i32_0 : i32, i32, i32
  }
}

module attributes {stable_mosaic.version = 11 : i64} {
  func.func @_bn_relu_conv3x3_kernel(%arg0: i32, %arg1: memref<1x8x8x64xf32, #tpu.memory_space<vmem>>, %arg2: memref<1x64xf32, #tpu.memory_space<vmem>>, %arg3: memref<1x64xf32, #tpu.memory_space<vmem>>, %arg4: memref<576x64xbf16, #tpu.memory_space<vmem>>, %arg5: memref<1x8x8x64xf32, #tpu.memory_space<vmem>>, %arg6: memref<1x1x64xf32, #tpu.memory_space<vmem>>, %arg7: memref<1x1x64xf32, #tpu.memory_space<vmem>>, %arg8: memref<10x10x64xf32, #tpu.memory_space<vmem>>) attributes {dimension_semantics = [#tpu.dimension_semantics<parallel>], iteration_bounds = array<i64: 2>, scalar_prefetch = 0 : i64, scratch_operands = 1 : i64, tpu.core_type = #tpu.core_type<tc>, window_params = [{transform_indices = @transform_0, window_bounds = array<i64: 1, 8, 8, 64>}, {pipeline_mode = #tpu.pipeline_mode<synchronous>, transform_indices = @transform_1, window_bounds = array<i64: 1, 64>}, {pipeline_mode = #tpu.pipeline_mode<synchronous>, transform_indices = @transform_2, window_bounds = array<i64: 1, 64>}, {pipeline_mode = #tpu.pipeline_mode<synchronous>, transform_indices = @transform_3, window_bounds = array<i64: 576, 64>}, {transform_indices = @transform_4, window_bounds = array<i64: 1, 8, 8, 64>}, {transform_indices = @transform_5, window_bounds = array<i64: 1, 1, 64>}, {transform_indices = @transform_6, window_bounds = array<i64: 1, 1, 64>}]} {
    %c0 = arith.constant 0 : index
    %c0_0 = arith.constant 0 : index
    %c0_1 = arith.constant 0 : index
    %c0_2 = arith.constant 0 : index
    %0 = vector.load %arg1[%c0, %c0_0, %c0_1, %c0_2] : memref<1x8x8x64xf32, #tpu.memory_space<vmem>>, vector<1x8x8x64xf32>
    %1 = vector.shape_cast %0 : vector<1x8x8x64xf32> to vector<8x8x64xf32>
    %c0_3 = arith.constant 0 : index
    %c0_4 = arith.constant 0 : index
    %2 = vector.load %arg2[%c0_3, %c0_4] : memref<1x64xf32, #tpu.memory_space<vmem>>, vector<1x64xf32>
    %3 = vector.shape_cast %2 : vector<1x64xf32> to vector<1x1x64xf32>
    %c0_5 = arith.constant 0 : index
    %c0_6 = arith.constant 0 : index
    %4 = vector.load %arg3[%c0_5, %c0_6] : memref<1x64xf32, #tpu.memory_space<vmem>>, vector<1x64xf32>
    %5 = vector.shape_cast %4 : vector<1x64xf32> to vector<1x1x64xf32>
    %6 = vector.broadcast %3 : vector<1x1x64xf32> to vector<8x8x64xf32>
    %7 = arith.subf %1, %6 : vector<8x8x64xf32>
    %8 = vector.broadcast %5 : vector<1x1x64xf32> to vector<8x8x64xf32>
    %9 = arith.mulf %7, %8 : vector<8x8x64xf32>
    %cst = arith.constant 0.000000e+00 : f32
    %10 = vector.broadcast %cst : f32 to vector<8x8x64xf32>
    %11 = arith.maximumf %9, %10 : vector<8x8x64xf32>
    %cst_7 = arith.constant 0.000000e+00 : f32
    %12 = vector.broadcast %cst_7 : f32 to vector<10x10x64xf32>
    %c0_8 = arith.constant 0 : index
    %c0_9 = arith.constant 0 : index
    %c0_10 = arith.constant 0 : index
    %13 = vector.load %arg8[%c0_8, %c0_9, %c0_10] : memref<10x10x64xf32, #tpu.memory_space<vmem>>, vector<10x10x64xf32>
    tpu.vector_store %arg8[%c0_8, %c0_9, %c0_10], %12 {strides = array<i32>} : memref<10x10x64xf32, #tpu.memory_space<vmem>>, vector<10x10x64xf32>,
    %c1 = arith.constant 1 : index
    %c1_11 = arith.constant 1 : index
    %c0_12 = arith.constant 0 : index
    %14 = vector.load %arg8[%c1, %c1_11, %c0_12] : memref<10x10x64xf32, #tpu.memory_space<vmem>>, vector<8x8x64xf32>
    tpu.vector_store %arg8[%c1, %c1_11, %c0_12], %11 {strides = array<i32>} : memref<10x10x64xf32, #tpu.memory_space<vmem>>, vector<8x8x64xf32>,
    %c0_13 = arith.constant 0 : index
    %c0_14 = arith.constant 0 : index
    %c0_15 = arith.constant 0 : index
    %15 = vector.load %arg8[%c0_13, %c0_14, %c0_15] : memref<10x10x64xf32, #tpu.memory_space<vmem>>, vector<8x8x64xf32>
    %16 = vector.shape_cast %15 : vector<8x8x64xf32> to vector<64x64xf32>
    %c0_16 = arith.constant 0 : index
    %c1_17 = arith.constant 1 : index
    %c0_18 = arith.constant 0 : index
    %17 = vector.load %arg8[%c0_16, %c1_17, %c0_18] : memref<10x10x64xf32, #tpu.memory_space<vmem>>, vector<8x8x64xf32>
    %18 = vector.shape_cast %17 : vector<8x8x64xf32> to vector<64x64xf32>
    %c0_19 = arith.constant 0 : index
    %c2 = arith.constant 2 : index
    %c0_20 = arith.constant 0 : index
    %19 = vector.load %arg8[%c0_19, %c2, %c0_20] : memref<10x10x64xf32, #tpu.memory_space<vmem>>, vector<8x8x64xf32>
    %20 = vector.shape_cast %19 : vector<8x8x64xf32> to vector<64x64xf32>
    %c1_21 = arith.constant 1 : index
    %c0_22 = arith.constant 0 : index
    %c0_23 = arith.constant 0 : index
    %21 = vector.load %arg8[%c1_21, %c0_22, %c0_23] : memref<10x10x64xf32, #tpu.memory_space<vmem>>, vector<8x8x64xf32>
    %22 = vector.shape_cast %21 : vector<8x8x64xf32> to vector<64x64xf32>
    %c1_24 = arith.constant 1 : index
    %c1_25 = arith.constant 1 : index
    %c0_26 = arith.constant 0 : index
    %23 = vector.load %arg8[%c1_24, %c1_25, %c0_26] : memref<10x10x64xf32, #tpu.memory_space<vmem>>, vector<8x8x64xf32>
    %24 = vector.shape_cast %23 : vector<8x8x64xf32> to vector<64x64xf32>
    %c1_27 = arith.constant 1 : index
    %c2_28 = arith.constant 2 : index
    %c0_29 = arith.constant 0 : index
    %25 = vector.load %arg8[%c1_27, %c2_28, %c0_29] : memref<10x10x64xf32, #tpu.memory_space<vmem>>, vector<8x8x64xf32>
    %26 = vector.shape_cast %25 : vector<8x8x64xf32> to vector<64x64xf32>
    %c2_30 = arith.constant 2 : index
    %c0_31 = arith.constant 0 : index
    %c0_32 = arith.constant 0 : index
    %27 = vector.load %arg8[%c2_30, %c0_31, %c0_32] : memref<10x10x64xf32, #tpu.memory_space<vmem>>, vector<8x8x64xf32>
    %28 = vector.shape_cast %27 : vector<8x8x64xf32> to vector<64x64xf32>
    %c2_33 = arith.constant 2 : index
    %c1_34 = arith.constant 1 : index
    %c0_35 = arith.constant 0 : index
    %29 = vector.load %arg8[%c2_33, %c1_34, %c0_35] : memref<10x10x64xf32, #tpu.memory_space<vmem>>, vector<8x8x64xf32>
    %30 = vector.shape_cast %29 : vector<8x8x64xf32> to vector<64x64xf32>
    %c2_36 = arith.constant 2 : index
    %c2_37 = arith.constant 2 : index
    %c0_38 = arith.constant 0 : index
    %31 = vector.load %arg8[%c2_36, %c2_37, %c0_38] : memref<10x10x64xf32, #tpu.memory_space<vmem>>, vector<8x8x64xf32>
    %32 = vector.shape_cast %31 : vector<8x8x64xf32> to vector<64x64xf32>
    %33 = tpu.concatenate %16, %18, %20, %22, %24, %26, %28, %30, %32 in 1 : vector<64x64xf32>, vector<64x64xf32>, vector<64x64xf32>, vector<64x64xf32>, vector<64x64xf32>, vector<64x64xf32>, vector<64x64xf32>, vector<64x64xf32>, vector<64x64xf32> -> vector<64x576xf32>
    %34 = arith.truncf %33 : vector<64x576xf32> to vector<64x576xbf16>
    %c0_39 = arith.constant 0 : index
    %c0_40 = arith.constant 0 : index
    %35 = vector.load %arg4[%c0_39, %c0_40] : memref<576x64xbf16, #tpu.memory_space<vmem>>, vector<576x64xbf16>
    %cst_41 = arith.constant dense<0.000000e+00> : vector<64x64xf32>
    %36 = tpu.matmul %34, %35, %cst_41 {dimension_numbers = #tpu.dot_dimension_numbers<[1], [0], [0], [1], [0, 0, 1, 1], [], []>} : vector<64x576xbf16>, vector<576x64xbf16>, vector<64x64xf32> -> vector<64x64xf32>
    %cst_42 = arith.constant dense<0.000000e+00> : vector<64xf32>
    %37 = vector.multi_reduction <add>, %36, %cst_42 [0] : vector<64x64xf32> to vector<64xf32>
    %38 = vector.shape_cast %37 : vector<64xf32> to vector<1x1x64xf32>
    %c0_43 = arith.constant 0 : index
    %c0_44 = arith.constant 0 : index
    %c0_45 = arith.constant 0 : index
    %39 = vector.load %arg6[%c0_43, %c0_44, %c0_45] : memref<1x1x64xf32, #tpu.memory_space<vmem>>, vector<1x1x64xf32>
    tpu.vector_store %arg6[%c0_43, %c0_44, %c0_45], %38 {strides = array<i32>} : memref<1x1x64xf32, #tpu.memory_space<vmem>>, vector<1x1x64xf32>,
    %40 = arith.mulf %36, %36 : vector<64x64xf32>
    %cst_46 = arith.constant dense<0.000000e+00> : vector<64xf32>
    %41 = vector.multi_reduction <add>, %40, %cst_46 [0] : vector<64x64xf32> to vector<64xf32>
    %42 = vector.shape_cast %41 : vector<64xf32> to vector<1x1x64xf32>
    %c0_47 = arith.constant 0 : index
    %c0_48 = arith.constant 0 : index
    %c0_49 = arith.constant 0 : index
    %43 = vector.load %arg7[%c0_47, %c0_48, %c0_49] : memref<1x1x64xf32, #tpu.memory_space<vmem>>, vector<1x1x64xf32>
    tpu.vector_store %arg7[%c0_47, %c0_48, %c0_49], %42 {strides = array<i32>} : memref<1x1x64xf32, #tpu.memory_space<vmem>>, vector<1x1x64xf32>,
    %44 = vector.shape_cast %36 : vector<64x64xf32> to vector<1x8x8x64xf32>
    %c0_50 = arith.constant 0 : index
    %c0_51 = arith.constant 0 : index
    %c0_52 = arith.constant 0 : index
    %c0_53 = arith.constant 0 : index
    %45 = vector.load %arg5[%c0_50, %c0_51, %c0_52, %c0_53] : memref<1x8x8x64xf32, #tpu.memory_space<vmem>>, vector<1x8x8x64xf32>
    tpu.vector_store %arg5[%c0_50, %c0_51, %c0_52, %c0_53], %44 {strides = array<i32>} : memref<1x8x8x64xf32, #tpu.memory_space<vmem>>, vector<1x8x8x64xf32>,
    return
  }
  func.func @transform_0(%arg0: i32) -> (i32, i32, i32, i32) {
    %c0_i32 = arith.constant 0 : i32
    %c0_i32_0 = arith.constant 0 : i32
    %c0_i32_1 = arith.constant 0 : i32
    %c0_i32_2 = arith.constant 0 : i32
    return %arg0, %c0_i32, %c0_i32_0, %c0_i32_1 : i32, i32, i32, i32
  }
  func.func @transform_1(%arg0: i32) -> (i32, i32) {
    %c0_i32 = arith.constant 0 : i32
    %c0_i32_0 = arith.constant 0 : i32
    %c0_i32_1 = arith.constant 0 : i32
    return %c0_i32, %c0_i32_0 : i32, i32
  }
  func.func @transform_2(%arg0: i32) -> (i32, i32) {
    %c0_i32 = arith.constant 0 : i32
    %c0_i32_0 = arith.constant 0 : i32
    %c0_i32_1 = arith.constant 0 : i32
    return %c0_i32, %c0_i32_0 : i32, i32
  }
  func.func @transform_3(%arg0: i32) -> (i32, i32) {
    %c0_i32 = arith.constant 0 : i32
    %c0_i32_0 = arith.constant 0 : i32
    %c0_i32_1 = arith.constant 0 : i32
    return %c0_i32, %c0_i32_0 : i32, i32
  }
  func.func @transform_4(%arg0: i32) -> (i32, i32, i32, i32) {
    %c0_i32 = arith.constant 0 : i32
    %c0_i32_0 = arith.constant 0 : i32
    %c0_i32_1 = arith.constant 0 : i32
    %c0_i32_2 = arith.constant 0 : i32
    return %arg0, %c0_i32, %c0_i32_0, %c0_i32_1 : i32, i32, i32, i32
  }
  func.func @transform_5(%arg0: i32) -> (i32, i32, i32) {
    %c0_i32 = arith.constant 0 : i32
    %c0_i32_0 = arith.constant 0 : i32
    %c0_i32_1 = arith.constant 0 : i32
    return %arg0, %c0_i32, %c0_i32_0 : i32, i32, i32
  }
  func.func @transform_6(%arg0: i32) -> (i32, i32, i32) {
    %c0_i32 = arith.constant 0 : i32
    %c0_i32_0 = arith.constant 0 : i32
    %c0_i32_1 = arith.constant 0 : i32
    return %arg0, %c0_i32, %c0_i32_0 : i32, i32, i32
  }
}

module attributes {stable_mosaic.version = 11 : i64} {
  func.func @_bn_relu_kernel(%arg0: i32, %arg1: memref<1x8x8x64xf32, #tpu.memory_space<vmem>>, %arg2: memref<1x64xf32, #tpu.memory_space<vmem>>, %arg3: memref<1x64xf32, #tpu.memory_space<vmem>>, %arg4: memref<1x8x8x64xf32, #tpu.memory_space<vmem>>) attributes {dimension_semantics = [#tpu.dimension_semantics<parallel>], iteration_bounds = array<i64: 2>, scalar_prefetch = 0 : i64, scratch_operands = 0 : i64, tpu.core_type = #tpu.core_type<tc>, window_params = [{transform_indices = @transform_0, window_bounds = array<i64: 1, 8, 8, 64>}, {pipeline_mode = #tpu.pipeline_mode<synchronous>, transform_indices = @transform_1, window_bounds = array<i64: 1, 64>}, {pipeline_mode = #tpu.pipeline_mode<synchronous>, transform_indices = @transform_2, window_bounds = array<i64: 1, 64>}, {transform_indices = @transform_3, window_bounds = array<i64: 1, 8, 8, 64>}]} {
    %c0 = arith.constant 0 : index
    %c0_0 = arith.constant 0 : index
    %0 = vector.load %arg2[%c0, %c0_0] : memref<1x64xf32, #tpu.memory_space<vmem>>, vector<1x64xf32>
    %1 = vector.shape_cast %0 : vector<1x64xf32> to vector<1x1x1x64xf32>
    %c0_1 = arith.constant 0 : index
    %c0_2 = arith.constant 0 : index
    %2 = vector.load %arg3[%c0_1, %c0_2] : memref<1x64xf32, #tpu.memory_space<vmem>>, vector<1x64xf32>
    %3 = vector.shape_cast %2 : vector<1x64xf32> to vector<1x1x1x64xf32>
    %c0_3 = arith.constant 0 : index
    %c0_4 = arith.constant 0 : index
    %c0_5 = arith.constant 0 : index
    %c0_6 = arith.constant 0 : index
    %4 = vector.load %arg1[%c0_3, %c0_4, %c0_5, %c0_6] : memref<1x8x8x64xf32, #tpu.memory_space<vmem>>, vector<1x8x8x64xf32>
    %5 = vector.broadcast %1 : vector<1x1x1x64xf32> to vector<1x8x8x64xf32>
    %6 = arith.subf %4, %5 : vector<1x8x8x64xf32>
    %7 = vector.broadcast %3 : vector<1x1x1x64xf32> to vector<1x8x8x64xf32>
    %8 = arith.mulf %6, %7 : vector<1x8x8x64xf32>
    %cst = arith.constant 0.000000e+00 : f32
    %9 = vector.broadcast %cst : f32 to vector<1x8x8x64xf32>
    %10 = arith.maximumf %8, %9 : vector<1x8x8x64xf32>
    %c0_7 = arith.constant 0 : index
    %c0_8 = arith.constant 0 : index
    %c0_9 = arith.constant 0 : index
    %c0_10 = arith.constant 0 : index
    %11 = vector.load %arg4[%c0_7, %c0_8, %c0_9, %c0_10] : memref<1x8x8x64xf32, #tpu.memory_space<vmem>>, vector<1x8x8x64xf32>
    tpu.vector_store %arg4[%c0_7, %c0_8, %c0_9, %c0_10], %10 {strides = array<i32>} : memref<1x8x8x64xf32, #tpu.memory_space<vmem>>, vector<1x8x8x64xf32>,
    return
  }
  func.func @transform_0(%arg0: i32) -> (i32, i32, i32, i32) {
    %c0_i32 = arith.constant 0 : i32
    %c0_i32_0 = arith.constant 0 : i32
    %c0_i32_1 = arith.constant 0 : i32
    %c0_i32_2 = arith.constant 0 : i32
    return %arg0, %c0_i32, %c0_i32_0, %c0_i32_1 : i32, i32, i32, i32
  }
  func.func @transform_1(%arg0: i32) -> (i32, i32) {
    %c0_i32 = arith.constant 0 : i32
    %c0_i32_0 = arith.constant 0 : i32
    %c0_i32_1 = arith.constant 0 : i32
    return %c0_i32, %c0_i32_0 : i32, i32
  }
  func.func @transform_2(%arg0: i32) -> (i32, i32) {
    %c0_i32 = arith.constant 0 : i32
    %c0_i32_0 = arith.constant 0 : i32
    %c0_i32_1 = arith.constant 0 : i32
    return %c0_i32, %c0_i32_0 : i32, i32
  }
  func.func @transform_3(%arg0: i32) -> (i32, i32, i32, i32) {
    %c0_i32 = arith.constant 0 : i32
    %c0_i32_0 = arith.constant 0 : i32
    %c0_i32_1 = arith.constant 0 : i32
    %c0_i32_2 = arith.constant 0 : i32
    return %arg0, %c0_i32, %c0_i32_0, %c0_i32_1 : i32, i32, i32, i32
  }
}

</mosaic_0001>

<llo_original>
// kernel: hardnet_conv_crop_forward.6
$region0: #{hardnet_conv_crop_forward.6}
  #allocation0 [shape = 'u32[]', space=smem, size = 0x4, offset = 0x4, fixed_abs, tag = 'smem constant byte address 0x4 - core index']
  #allocation1 [shape = 'u32[72,128]{1,0:T(1,128)}', space=vmem, size = 0x9000, scoped, tag = 'internal scratch']
  %s0 = inlined_call_operand.vmem [shape: f32[2,30,30], index: 0, kind: input, shape index: {}]
  %s1 = inlined_call_operand.vmem [shape: f32[2,16,16], index: 1, kind: output, shape index: {}]
  %s2 = sld [smem:[#allocation0]]
  $region37: #{hardnet_conv_crop_forward.6} parent=0
    _
  %s4 = ssub.s32 1, %s2
  %s5 = scalar_select 0, %s4, %s2
  loop: start=0, step=1, limit=4
  $region2: #{hardnet_conv_crop_forward.6} parent=0 // loop_pre_header
    _
  $region3: #{hardnet_conv_crop_forward.6} parent=0 // loop_header
    %s7 = sphi 0, %s11
    %p8 = scmp.ge.s32.totalorder %s7, 4
    %s17 = sphi 0, %s19
    %s20 = sphi 0, %s17
    %s21 = sphi 0, %s20
    %s37 = sphi 0, %s21
    %s43 = sphi 0, %s45
    %s46 = sphi 0, %s43
    %s47 = sphi 0, %s46
    %s63 = sphi 0, %s47
  $region4: #{hardnet_conv_crop_forward.6} parent=0 // loop_header_branch
    %10 = sbr.rel (%p8) target = $region8
  $region5: #{hardnet_conv_crop_forward.6} parent=0 // loop_body
    %s12 = ssub.s32 %s7, 1
    %s13 = ssub.s32 %s7, 2
    %s14 = sadd.s32 %s7, 1
    %s15 = ssub.s32 %s7, %s14
    %p16 = scmp.eq.s32.totalorder %s15, 0
    %s18 = sadd.s32 %s17, 1
    %s19 = scalar_select %p16, %s17, %s18
    %p22 = pneg %p16
    %p23 = scmp.eq.s32.totalorder %s7, 1
    %p24 = por %p22, %p23
    %p25 = scmp.ne.s32.totalorder %s17, %s20
    %p26 = scmp.eq.s32.totalorder %s7, 0
    %p27 = por %p25, %p26
    %p28 = scmp.ne.s32.totalorder %s17, %s20
    %p29 = scmp.eq.s32.totalorder %s12, 1
    %p30 = por %p28, %p29
    %p31 = scmp.ne.s32.totalorder %s20, %s21
    %p32 = scmp.eq.s32.totalorder %s12, 0
    %p33 = por %p31, %p32
    %p34 = scmp.ne.s32.totalorder %s20, %s21
    %p35 = scmp.eq.s32.totalorder %s13, 1
    %p36 = por %p34, %p35
    %p38 = scmp.ne.s32.totalorder %s21, %s37
    %p39 = scmp.eq.s32.totalorder %s13, 0
    %p40 = por %p38, %p39
    %s41 = ssub.s32 %s7, %s14
    %p42 = scmp.eq.s32.totalorder %s41, 0
    %s44 = sadd.s32 %s43, 1
    %s45 = scalar_select %p42, %s43, %s44
    %p48 = pneg %p42
    %p49 = scmp.eq.s32.totalorder %s7, 1
    %p50 = por %p48, %p49
    %p51 = scmp.ne.s32.totalorder %s43, %s46
    %p52 = scmp.eq.s32.totalorder %s7, 0
    %p53 = por %p51, %p52
    %p54 = scmp.ne.s32.totalorder %s43, %s46
    %p55 = scmp.eq.s32.totalorder %s12, 1
    %p56 = por %p54, %p55
    %p57 = scmp.ne.s32.totalorder %s46, %s47
    %p58 = scmp.eq.s32.totalorder %s12, 0
    %p59 = por %p57, %p58
    %p60 = scmp.ne.s32.totalorder %s46, %s47
    %p61 = scmp.eq.s32.totalorder %s13, 1
    %p62 = por %p60, %p61
    %p64 = scmp.ne.s32.totalorder %s47, %s63
    %p65 = scmp.eq.s32.totalorder %s13, 0
    %p66 = por %p64, %p65
    %p67 = scmp.le.s32.totalorder 1, %s7
    %p68 = scmp.lt.s32.totalorder %s7, 3
    %p69 = pnand %p67, %p68
    %p70 = pneg %p69
    // Predicated region
    $region9: #{hardnet_conv_crop_forward.6} parent=5 // pred_check
      _
    $region10: #{hardnet_conv_crop_forward.6} parent=5 // pred_check_branch
      %72 = sbr.rel (%p69) target = $region12
    $region11: #{hardnet_conv_crop_forward.6} parent=5 // pred_region
      %s73 = ssub.s32 %s7, 1
    $region12: #{hardnet_conv_crop_forward.6} parent=5 // pred_fallthru
      _
    %p74 = scmp.lt.s32.totalorder %s7, 2
    // Predicated region
    $region13: #{hardnet_conv_crop_forward.6} parent=5 // pred_check
      %p75 = pneg %p74
    $region14: #{hardnet_conv_crop_forward.6} parent=5 // pred_check_branch
      %77 = sbr.rel (%p75) target = $region16
    $region15: #{hardnet_conv_crop_forward.6} parent=5 // pred_region
      // Predicated region
      $region17: #{hardnet_conv_crop_forward.6} parent=15 // pred_check
        %p78 = pneg %p27
      $region18: #{hardnet_conv_crop_forward.6} parent=15 // pred_check_branch
        %80 = sbr.rel (%p78) target = $region20
      $region19: #{hardnet_conv_crop_forward.6} parent=15 // pred_region
        %p81 = scmp.lt.s32.totalorder %s7, 1
        %s82 = scalar_select %p81, %s7, 1
        %s83 = smul.addr %s82, 4
        %s84 = smul.addr %s83, 8
        %s85 = scalar_lea.vmem %s0, %s84
      $region20: #{hardnet_conv_crop_forward.6} parent=15 // pred_fallthru
        _
    $region16: #{hardnet_conv_crop_forward.6} parent=5 // pred_fallthru
      _
    %p86 = scmp.le.s32.totalorder 1, %s7
    %p87 = scmp.lt.s32.totalorder %s7, 3
    %p88 = pnand %p86, %p87
    %p89 = pneg %p88
    // Predicated region
    $region21: #{hardnet_conv_crop_forward.6} parent=5 // pred_check
      _
    $region22: #{hardnet_conv_crop_forward.6} parent=5 // pred_check_branch
      %91 = sbr.rel (%p88) target = $region24
    $region23: #{hardnet_conv_crop_forward.6} parent=5 // pred_region
      %s92 = ssub.s32 %s7, 1
      %p93 = scmp.lt.s32.totalorder %s12, 1
      %s94 = scalar_select %p93, %s12, 1
      %s95 = smul.addr %s94, 4
      %s96 = smul.addr %s95, 8
      %s97 = scalar_lea.vmem %s0, %s96
      %p98 = pneg %p33
      %p99 = pneg %p30
      %p100 = pneg %p59
      %p101 = pneg %p56
      %p102 = scmp.lt.s32.totalorder %s12, 1
      %s103 = scalar_select %p102, %s12, 1
      %s104 = smul.addr %s103, 2
      %s105 = smul.addr %s104, 8
      %s106 = scalar_lea.vmem %s1, %s105
      %p107 = scmp.lt.s32.totalorder %s12, 1
      %s108 = scalar_select %p107, %s12, 1
      %s109 = smul.addr %s108, 4
      %s110 = smul.addr %s109, 8
      %s111 = scalar_lea.vmem %s0, %s110
      %p112 = scmp.lt.s32.totalorder %s12, 1
      %s113 = scalar_select %p112, %s12, 1
      %s114 = smul.addr %s113, 2
      %s115 = smul.addr %s114, 8
      %s116 = scalar_lea.vmem %s1, %s115
      %v117 = vld [vmem:[%s111] sm:$0xff]
      %v118 = vld [vmem:[%s111 + $0x8] sm:$0xff]
      %v119 = vld [vmem:[%s111 + $0x10] sm:$0xff]
      %v120 = vld [vmem:[%s111 + $0x18] sm:$0x3f]
      %v121 = vmul.f32 %v117, %v117
      %v122 = vmul.f32 %v118, %v118
      %v123 = vmul.f32 %v119, %v119
      %v124 = vmul.f32 %v120, %v120
      %v125 = vadd.f32 %v117, 0.0
      %v126 = vadd.f32 %v118, 0.0
      %v127 = vadd.f32 %v121, 0.0
      %v128 = vadd.f32 %v122, 0.0
      %vm132 = vcmask 1046528
      %v133 = vrot.slane %v117, 1
      %v134 = vrot.slane %v118, 1
      %v135 = vsel %vm132, %v133, %v134
      %v136 = vrot.slane %v119, 1
      %v137 = vsel %vm132, %v134, %v136
      %v140 = vadd.f32 %v125, %v135
      %v141 = vadd.f32 %v126, %v137
      %v145 = vrot.slane %v121, 1
      %v146 = vrot.slane %v122, 1
      %v147 = vsel %vm132, %v145, %v146
      %v148 = vrot.slane %v123, 1
      %v149 = vsel %vm132, %v146, %v148
      %v152 = vadd.f32 %v127, %v147
      %v153 = vadd.f32 %v128, %v149
      %vm154 = vcmask 1045504
      %v155 = vrot.slane %v117, 2
      %v156 = vrot.slane %v118, 2
      %v157 = vsel %vm154, %v155, %v156
      %v158 = vrot.slane %v119, 2
      %v159 = vsel %vm154, %v156, %v158
      %v162 = vadd.f32 %v140, %v157
      %v163 = vadd.f32 %v141, %v159
      %v164 = vrot.slane %v121, 2
      %v165 = vrot.slane %v122, 2
      %v166 = vsel %vm154, %v164, %v165
      %v167 = vrot.slane %v123, 2
      %v168 = vsel %vm154, %v165, %v167
      %v171 = vadd.f32 %v152, %v166
      %v172 = vadd.f32 %v153, %v168
      %vm173 = vcmask 1044480
      %v174 = vrot.slane %v117, 3
      %v175 = vrot.slane %v118, 3
      %v176 = vsel %vm173, %v174, %v175
      %v177 = vrot.slane %v119, 3
      %v178 = vsel %vm173, %v175, %v177
      %v181 = vadd.f32 %v162, %v176
      %v182 = vadd.f32 %v163, %v178
      %v183 = vrot.slane %v121, 3
      %v184 = vrot.slane %v122, 3
      %v185 = vsel %vm173, %v183, %v184
      %v186 = vrot.slane %v123, 3
      %v187 = vsel %vm173, %v184, %v186
      %v190 = vadd.f32 %v171, %v185
      %v191 = vadd.f32 %v172, %v187
      %vm192 = vcmask 1043456
      %v193 = vrot.slane %v117, 4
      %v194 = vrot.slane %v118, 4
      %v195 = vsel %vm192, %v193, %v194
      %v196 = vrot.slane %v119, 4
      %v197 = vsel %vm192, %v194, %v196
      %v200 = vadd.f32 %v181, %v195
      %v201 = vadd.f32 %v182, %v197
      %v202 = vrot.slane %v121, 4
      %v203 = vrot.slane %v122, 4
      %v204 = vsel %vm192, %v202, %v203
      %v205 = vrot.slane %v123, 4
      %v206 = vsel %vm192, %v203, %v205
      %v209 = vadd.f32 %v190, %v204
      %v210 = vadd.f32 %v191, %v206
      %vm211 = vcmask 1042432
      %v212 = vrot.slane %v117, 5
      %v213 = vrot.slane %v118, 5
      %v214 = vsel %vm211, %v212, %v213
      %v215 = vrot.slane %v119, 5
      %v216 = vsel %vm211, %v213, %v215
      %v219 = vadd.f32 %v200, %v214
      %v220 = vadd.f32 %v201, %v216
      %v221 = vrot.slane %v121, 5
      %v222 = vrot.slane %v122, 5
      %v223 = vsel %vm211, %v221, %v222
      %v224 = vrot.slane %v123, 5
      %v225 = vsel %vm211, %v222, %v224
      %v228 = vadd.f32 %v209, %v223
      %v229 = vadd.f32 %v210, %v225
      %vm230 = vcmask 1041408
      %v231 = vrot.slane %v117, 6
      %v232 = vrot.slane %v118, 6
      %v233 = vsel %vm230, %v231, %v232
      %v234 = vrot.slane %v119, 6
      %v235 = vsel %vm230, %v232, %v234
      %v238 = vadd.f32 %v219, %v233
      %v239 = vadd.f32 %v220, %v235
      %v240 = vrot.slane %v121, 6
      %v241 = vrot.slane %v122, 6
      %v242 = vsel %vm230, %v240, %v241
      %v243 = vrot.slane %v123, 6
      %v244 = vsel %vm230, %v241, %v243
      %v247 = vadd.f32 %v228, %v242
      %v248 = vadd.f32 %v229, %v244
      %vm249 = vcmask 1040384
      %v250 = vrot.slane %v117, 7
      %v251 = vrot.slane %v118, 7
      %v252 = vsel %vm249, %v250, %v251
      %v253 = vrot.slane %v119, 7
      %v254 = vsel %vm249, %v251, %v253
      %v257 = vadd.f32 %v238, %v252
      %v258 = vadd.f32 %v239, %v254
      %v259 = vrot.slane %v121, 7
      %v260 = vrot.slane %v122, 7
      %v261 = vsel %vm249, %v259, %v260
      %v262 = vrot.slane %v123, 7
      %v263 = vsel %vm249, %v260, %v262
      %v266 = vadd.f32 %v247, %v261
      %v267 = vadd.f32 %v248, %v263
      %v268 = vadd.f32 %v257, %v118
      %v269 = vadd.f32 %v258, %v119
      %v270 = vadd.f32 %v266, %v122
      %v271 = vadd.f32 %v267, %v123
      %v273 = vrot.slane %v120, 1
      %v274 = vsel %vm132, %v136, %v273
      %v276 = vadd.f32 %v268, %v137
      %v277 = vadd.f32 %v269, %v274
      %v279 = vrot.slane %v124, 1
      %v280 = vsel %vm132, %v148, %v279
      %v282 = vadd.f32 %v270, %v149
      %v283 = vadd.f32 %v271, %v280
      %v284 = vrot.slane %v120, 2
      %v285 = vsel %vm154, %v158, %v284
      %v287 = vadd.f32 %v276, %v159
      %v288 = vadd.f32 %v277, %v285
      %v289 = vrot.slane %v124, 2
      %v290 = vsel %vm154, %v167, %v289
      %v292 = vadd.f32 %v282, %v168
      %v293 = vadd.f32 %v283, %v290
      %v294 = vrot.slane %v120, 3
      %v295 = vsel %vm173, %v177, %v294
      %v297 = vadd.f32 %v287, %v178
      %v298 = vadd.f32 %v288, %v295
      %v299 = vrot.slane %v124, 3
      %v300 = vsel %vm173, %v186, %v299
      %v302 = vadd.f32 %v292, %v187
      %v303 = vadd.f32 %v293, %v300
      %v304 = vrot.slane %v120, 4
      %v305 = vsel %vm192, %v196, %v304
      %v307 = vadd.f32 %v297, %v197
      %v308 = vadd.f32 %v298, %v305
      %v309 = vrot.slane %v124, 4
      %v310 = vsel %vm192, %v205, %v309
      %v312 = vadd.f32 %v302, %v206
      %v313 = vadd.f32 %v303, %v310
      %v314 = vrot.slane %v120, 5
      %v315 = vsel %vm211, %v215, %v314
      %v317 = vadd.f32 %v307, %v216
      %v318 = vadd.f32 %v308, %v315
      %v319 = vrot.slane %v124, 5
      %v320 = vsel %vm211, %v224, %v319
      %v322 = vadd.f32 %v312, %v225
      %v323 = vadd.f32 %v313, %v320
      %v324 = vrot.slane %v120, 6
      %v325 = vsel %vm230, %v234, %v324
      %v327 = vadd.f32 %v317, %v235
      %v328 = vadd.f32 %v318, %v325
      %v329 = vrot.slane %v124, 6
      %v330 = vsel %vm230, %v243, %v329
      %v332 = vadd.f32 %v322, %v244
      %v333 = vadd.f32 %v323, %v330
      %v334 = vadd.f32 %v327, 0.0
      %v335 = vadd.f32 %v328, 0.0
      %v336 = vadd.f32 %v332, 0.0
      %v337 = vadd.f32 %v333, 0.0
      %340 = vrot.lane.b32.xlu0 %v327, 127
      %v341 = vpop.permute.xlu0 %340
      %342 = vrot.lane.b32.xlu0 %v328, 127
      %v343 = vpop.permute.xlu0 %342
      %v346 = vadd.f32 %v334, %v341
      %v347 = vadd.f32 %v335, %v343
      %350 = vrot.lane.b32.xlu0 %v332, 127
      %v351 = vpop.permute.xlu0 %350
      %352 = vrot.lane.b32.xlu0 %v333, 127
      %v353 = vpop.permute.xlu0 %352
      %v356 = vadd.f32 %v336, %v351
      %v357 = vadd.f32 %v337, %v353
      %358 = vrot.lane.b32.xlu0 %v327, 126
      %v359 = vpop.permute.xlu0 %358
      %360 = vrot.lane.b32.xlu0 %v328, 126
      %v361 = vpop.permute.xlu0 %360
      %v364 = vadd.f32 %v346, %v359
      %v365 = vadd.f32 %v347, %v361
      %366 = vrot.lane.b32.xlu0 %v332, 126
      %v367 = vpop.permute.xlu0 %366
      %368 = vrot.lane.b32.xlu0 %v333, 126
      %v369 = vpop.permute.xlu0 %368
      %v372 = vadd.f32 %v356, %v367
      %v373 = vadd.f32 %v357, %v369
      %374 = vrot.lane.b32.xlu0 %v327, 125
      %v375 = vpop.permute.xlu0 %374
      %376 = vrot.lane.b32.xlu0 %v328, 125
      %v377 = vpop.permute.xlu0 %376
      %v380 = vadd.f32 %v364, %v375
      %v381 = vadd.f32 %v365, %v377
      %382 = vrot.lane.b32.xlu0 %v332, 125
      %v383 = vpop.permute.xlu0 %382
      %384 = vrot.lane.b32.xlu0 %v333, 125
      %v385 = vpop.permute.xlu0 %384
      %v388 = vadd.f32 %v372, %v383
      %v389 = vadd.f32 %v373, %v385
      %390 = vrot.lane.b32.xlu0 %v327, 124
      %v391 = vpop.permute.xlu0 %390
      %392 = vrot.lane.b32.xlu0 %v328, 124
      %v393 = vpop.permute.xlu0 %392
      %v396 = vadd.f32 %v380, %v391
      %v397 = vadd.f32 %v381, %v393
      %398 = vrot.lane.b32.xlu0 %v332, 124
      %v399 = vpop.permute.xlu0 %398
      %400 = vrot.lane.b32.xlu0 %v333, 124
      %v401 = vpop.permute.xlu0 %400
      %v404 = vadd.f32 %v388, %v399
      %v405 = vadd.f32 %v389, %v401
      %406 = vrot.lane.b32.xlu0 %v327, 123
      %v407 = vpop.permute.xlu0 %406
      %408 = vrot.lane.b32.xlu0 %v328, 123
      %v409 = vpop.permute.xlu0 %408
      %v412 = vadd.f32 %v396, %v407
      %v413 = vadd.f32 %v397, %v409
      %414 = vrot.lane.b32.xlu0 %v332, 123
      %v415 = vpop.permute.xlu0 %414
      %416 = vrot.lane.b32.xlu0 %v333, 123
      %v417 = vpop.permute.xlu0 %416
      %v420 = vadd.f32 %v404, %v415
      %v421 = vadd.f32 %v405, %v417
      %422 = vrot.lane.b32.xlu0 %v327, 122
      %v423 = vpop.permute.xlu0 %422
      %424 = vrot.lane.b32.xlu0 %v328, 122
      %v425 = vpop.permute.xlu0 %424
      %v428 = vadd.f32 %v412, %v423
      %v429 = vadd.f32 %v413, %v425
      %430 = vrot.lane.b32.xlu0 %v332, 122
      %v431 = vpop.permute.xlu0 %430
      %432 = vrot.lane.b32.xlu0 %v333, 122
      %v433 = vpop.permute.xlu0 %432
      %v436 = vadd.f32 %v420, %v431
      %v437 = vadd.f32 %v421, %v433
      %438 = vrot.lane.b32.xlu0 %v327, 121
      %v439 = vpop.permute.xlu0 %438
      %440 = vrot.lane.b32.xlu0 %v328, 121
      %v441 = vpop.permute.xlu0 %440
      %v444 = vadd.f32 %v428, %v439
      %v445 = vadd.f32 %v429, %v441
      %446 = vrot.lane.b32.xlu0 %v332, 121
      %v447 = vpop.permute.xlu0 %446
      %448 = vrot.lane.b32.xlu0 %v333, 121
      %v449 = vpop.permute.xlu0 %448
      %v452 = vadd.f32 %v436, %v447
      %v453 = vadd.f32 %v437, %v449
      %454 = vrot.lane.b32.xlu0 %v327, 120
      %v455 = vpop.permute.xlu0 %454
      %456 = vrot.lane.b32.xlu0 %v328, 120
      %v457 = vpop.permute.xlu0 %456
      %v460 = vadd.f32 %v444, %v455
      %v461 = vadd.f32 %v445, %v457
      %462 = vrot.lane.b32.xlu0 %v332, 120
      %v463 = vpop.permute.xlu0 %462
      %464 = vrot.lane.b32.xlu0 %v333, 120
      %v465 = vpop.permute.xlu0 %464
      %v468 = vadd.f32 %v452, %v463
      %v469 = vadd.f32 %v453, %v465
      %470 = vrot.lane.b32.xlu0 %v327, 119
      %v471 = vpop.permute.xlu0 %470
      %472 = vrot.lane.b32.xlu0 %v328, 119
      %v473 = vpop.permute.xlu0 %472
      %v476 = vadd.f32 %v460, %v471
      %v477 = vadd.f32 %v461, %v473
      %478 = vrot.lane.b32.xlu0 %v332, 119
      %v479 = vpop.permute.xlu0 %478
      %480 = vrot.lane.b32.xlu0 %v333, 119
      %v481 = vpop.permute.xlu0 %480
      %v484 = vadd.f32 %v468, %v479
      %v485 = vadd.f32 %v469, %v481
      %486 = vrot.lane.b32.xlu0 %v327, 118
      %v487 = vpop.permute.xlu0 %486
      %488 = vrot.lane.b32.xlu0 %v328, 118
      %v489 = vpop.permute.xlu0 %488
      %v492 = vadd.f32 %v476, %v487
      %v493 = vadd.f32 %v477, %v489
      %494 = vrot.lane.b32.xlu0 %v332, 118
      %v495 = vpop.permute.xlu0 %494
      %496 = vrot.lane.b32.xlu0 %v333, 118
      %v497 = vpop.permute.xlu0 %496
      %v500 = vadd.f32 %v484, %v495
      %v501 = vadd.f32 %v485, %v497
      %502 = vrot.lane.b32.xlu0 %v327, 117
      %v503 = vpop.permute.xlu0 %502
      %504 = vrot.lane.b32.xlu0 %v328, 117
      %v505 = vpop.permute.xlu0 %504
      %v508 = vadd.f32 %v492, %v503
      %v509 = vadd.f32 %v493, %v505
      %510 = vrot.lane.b32.xlu0 %v332, 117
      %v511 = vpop.permute.xlu0 %510
      %512 = vrot.lane.b32.xlu0 %v333, 117
      %v513 = vpop.permute.xlu0 %512
      %v516 = vadd.f32 %v500, %v511
      %v517 = vadd.f32 %v501, %v513
      %518 = vrot.lane.b32.xlu0 %v327, 116
      %v519 = vpop.permute.xlu0 %518
      %520 = vrot.lane.b32.xlu0 %v328, 116
      %v521 = vpop.permute.xlu0 %520
      %v524 = vadd.f32 %v508, %v519
      %v525 = vadd.f32 %v509, %v521
      %526 = vrot.lane.b32.xlu0 %v332, 116
      %v527 = vpop.permute.xlu0 %526
      %528 = vrot.lane.b32.xlu0 %v333, 116
      %v529 = vpop.permute.xlu0 %528
      %v532 = vadd.f32 %v516, %v527
      %v533 = vadd.f32 %v517, %v529
      %534 = vrot.lane.b32.xlu0 %v327, 115
      %v535 = vpop.permute.xlu0 %534
      %536 = vrot.lane.b32.xlu0 %v328, 115
      %v537 = vpop.permute.xlu0 %536
      %v540 = vadd.f32 %v524, %v535
      %v541 = vadd.f32 %v525, %v537
      %542 = vrot.lane.b32.xlu0 %v332, 115
      %v543 = vpop.permute.xlu0 %542
      %544 = vrot.lane.b32.xlu0 %v333, 115
      %v545 = vpop.permute.xlu0 %544
      %v548 = vadd.f32 %v532, %v543
      %v549 = vadd.f32 %v533, %v545
      %550 = vrot.lane.b32.xlu0 %v327, 114
      %v551 = vpop.permute.xlu0 %550
      %552 = vrot.lane.b32.xlu0 %v328, 114
      %v553 = vpop.permute.xlu0 %552
      %v556 = vadd.f32 %v540, %v551
      %v557 = vadd.f32 %v541, %v553
      %558 = vrot.lane.b32.xlu0 %v332, 114
      %v559 = vpop.permute.xlu0 %558
      %560 = vrot.lane.b32.xlu0 %v333, 114
      %v561 = vpop.permute.xlu0 %560
      %v564 = vadd.f32 %v548, %v559
      %v565 = vadd.f32 %v549, %v561
      %v566 = vmul.f32 %v556, 0.0044444446
      %v567 = vmul.f32 %v557, 0.0044444446
      %v568 = vmul.f32 %v564, 0.0044444446
      %v569 = vmul.f32 %v565, 0.0044444446
      %v570 = vmul.f32 %v566, %v566
      %v571 = vmul.f32 %v567, %v567
      %v572 = vsub.f32 %v568, %v570
      %v573 = vsub.f32 %v569, %v571
      %v574 = vand.u32 2147483647, %v572
      %v575 = vand.u32 2147483647, %v573
      %v576 = vrsqrt.pop %v574
      %v577 = vmul.f32 %v576, %v574
      %v578 = vmul.f32 %v577, %v576
      %v579 = vmul.f32 0.5, %v578
      %v580 = vsub.f32 1.5, %v579
      %v581 = vmul.f32 %v576, %v580
      %v582 = vmul.f32 %v574, %v581
      %vm583 = vcmp.eq.f32.partialorder %v574, inf
      %v584 = vsel %vm583, %v574, %v582
      %vm585 = vcmp.eq.f32.partialorder %v574, 0.0
      %v586 = vand.u32 %v574, 2147483648
      %v587 = vsel %vm585, %v586, %v584
      %v588 = vrsqrt.pop %v575
      %v589 = vmul.f32 %v588, %v575
      %v590 = vmul.f32 %v589, %v588
      %v591 = vmul.f32 0.5, %v590
      %v592 = vsub.f32 1.5, %v591
      %v593 = vmul.f32 %v588, %v592
      %v594 = vmul.f32 %v575, %v593
      %vm595 = vcmp.eq.f32.partialorder %v575, inf
      %v596 = vsel %vm595, %v575, %v594
      %vm597 = vcmp.eq.f32.partialorder %v575, 0.0
      %v598 = vand.u32 %v575, 2147483648
      %v599 = vsel %vm597, %v598, %v596
      %v602 = vrot.slane %v566, 1
      %v603 = vrot.slane %v567, 1
      %v604 = vsel %vm132, %v602, %v603
      %605 = vrot.lane.b32.xlu0 %v602, 7
      %v606 = vpop.permute.xlu0 %605
      %607 = vrot.lane.b32.xlu0 %v604, 7
      %v608 = vpop.permute.xlu0 %607
      %609 = vrot.lane.b32.xlu0 %v603, 7
      %v610 = vpop.permute.xlu0 %609
      %v614 = vsub.f32 %v117, %v606
      %v615 = vsub.f32 %v118, %v608
      %v616 = vsub.f32 %v119, %v610
      %v617 = vadd.f32 %v587, 1e-10
      %v618 = vadd.f32 %v599, 1e-10
      %v621 = vrot.slane %v617, 1
      %v622 = vrot.slane %v618, 1
      %v623 = vsel %vm132, %v621, %v622
      %624 = vrot.lane.b32.xlu0 %v621, 7
      %v625 = vpop.permute.xlu0 %624
      %626 = vrot.lane.b32.xlu0 %v623, 7
      %v627 = vpop.permute.xlu0 %626
      %628 = vrot.lane.b32.xlu0 %v622, 7
      %v629 = vpop.permute.xlu0 %628
      %v633 = vrcp.pop %v625
      %v634 = vmul.f32 %v625, %v633
      %v635 = vsub.f32 1.0, %v634
      %v636 = vmul.f32 %v633, %v635
      %v637 = vadd.f32 %v633, %v636
      %vm638 = vweird.f32 %v625
      %vm639 = vweird.f32 %v633
      %vm640 = vmor %vm638, %vm639
      %v641 = vsel %vm640, %v633, %v637
      %v642 = vand.u32 2147483647, %v625
      %vm643 = vcmp.eq.f32.partialorder %v642, 8.507059e+37
      %v644 = vand.u32 %v625, 2147483648
      %v645 = vor.u32 1.1754944e-38, %v644
      %v646 = vsel %vm643, %v645, %v641
      %v647 = vmul.f32 %v614, %v646
      %v648 = vrcp.pop %v627
      %v649 = vmul.f32 %v627, %v648
      %v650 = vsub.f32 1.0, %v649
      %v651 = vmul.f32 %v648, %v650
      %v652 = vadd.f32 %v648, %v651
      %vm653 = vweird.f32 %v627
      %vm654 = vweird.f32 %v648
      %vm655 = vmor %vm653, %vm654
      %v656 = vsel %vm655, %v648, %v652
      %v657 = vand.u32 2147483647, %v627
      %vm658 = vcmp.eq.f32.partialorder %v657, 8.507059e+37
      %v659 = vand.u32 %v627, 2147483648
      %v660 = vor.u32 1.1754944e-38, %v659
      %v661 = vsel %vm658, %v660, %v656
      %v662 = vmul.f32 %v615, %v661
      %v663 = vrcp.pop %v629
      %v664 = vmul.f32 %v629, %v663
      %v665 = vsub.f32 1.0, %v664
      %v666 = vmul.f32 %v663, %v665
      %v667 = vadd.f32 %v663, %v666
      %vm668 = vweird.f32 %v629
      %vm669 = vweird.f32 %v663
      %vm670 = vmor %vm668, %vm669
      %v671 = vsel %vm670, %v663, %v667
      %v672 = vand.u32 2147483647, %v629
      %vm673 = vcmp.eq.f32.partialorder %v672, 8.507059e+37
      %v674 = vand.u32 %v629, 2147483648
      %v675 = vor.u32 1.1754944e-38, %v674
      %v676 = vsel %vm673, %v675, %v671
      %v677 = vmul.f32 %v616, %v676
      %v678 = vmax.f32 %v647, -6.0
      %v679 = vmax.f32 %v662, -6.0
      %v680 = vmax.f32 %v677, -6.0
      %v681 = vmin.f32 %v678, 6.0
      %v682 = vmin.f32 %v679, 6.0
      %v683 = vmin.f32 %v680, 6.0
      %687 = vrot.lane.b32.xlu0 %v681, 121
      %v688 = vpop.permute.xlu0 %687
      %689 = vrot.lane.b32.xlu0 %v682, 121
      %v690 = vpop.permute.xlu0 %689
      %691 = vrot.lane.b32.xlu0 %v683, 121
      %v692 = vpop.permute.xlu0 %691
      %vm696 = vcmask 130055
      %697 = vst.msk [vmem:[%s116 - $0x7] sm:$0x80] %vm696, %v688
      %vm698 = vcmask 130048
      %699 = vst.msk [vmem:[%s116 + $0x1] sm:$0xff] %vm698, %v690
      %vm700 = vcmask 129024
      %701 = vst.msk [vmem:[%s116 + $0x9] sm:$0x7f] %vm700, %v692
      %p702 = scmp.lt.s32.totalorder %s12, 1
      %s703 = scalar_select %p702, %s12, 1
      %s704 = smul.addr %s703, 2
      %s705 = smul.addr %s704, 8
      %s706 = scalar_lea.vmem %s1, %s705
      // Predicated region
      $region25: #{hardnet_conv_crop_forward.6} parent=23 // pred_check
        %p707 = pneg %p56
      $region26: #{hardnet_conv_crop_forward.6} parent=23 // pred_check_branch
        %709 = sbr.rel (%p707) target = $region28
      $region27: #{hardnet_conv_crop_forward.6} parent=23 // pred_region
        _
      $region28: #{hardnet_conv_crop_forward.6} parent=23 // pred_fallthru
        _
    $region24: #{hardnet_conv_crop_forward.6} parent=5 // pred_fallthru
      _
    %p710 = scmp.le.s32.totalorder 2, %s7
    // Predicated region
    $region29: #{hardnet_conv_crop_forward.6} parent=5 // pred_check
      %p711 = pneg %p710
    $region30: #{hardnet_conv_crop_forward.6} parent=5 // pred_check_branch
      %713 = sbr.rel (%p711) target = $region32
    $region31: #{hardnet_conv_crop_forward.6} parent=5 // pred_region
      %s714 = ssub.s32 %s7, 2
      // Predicated region
      $region33: #{hardnet_conv_crop_forward.6} parent=31 // pred_check
        %p715 = pneg %p62
      $region34: #{hardnet_conv_crop_forward.6} parent=31 // pred_check_branch
        %717 = sbr.rel (%p715) target = $region36
      $region35: #{hardnet_conv_crop_forward.6} parent=31 // pred_region
        %p718 = scmp.lt.s32.totalorder %s13, 1
        %s719 = scalar_select %p718, %s13, 1
        %s720 = smul.addr %s719, 2
        %s721 = smul.addr %s720, 8
        %s722 = scalar_lea.vmem %s1, %s721
      $region36: #{hardnet_conv_crop_forward.6} parent=31 // pred_fallthru
        _
    $region32: #{hardnet_conv_crop_forward.6} parent=5 // pred_fallthru
      _
  $region6: #{hardnet_conv_crop_forward.6} parent=0 // loop_footer
    %s11 = sadd.s32 1, %s7
  $region7: #{hardnet_conv_crop_forward.6} parent=0 // loop_footer_branch
    %6 = sbr.rel target = $region3
  $region8: #{hardnet_conv_crop_forward.6} parent=0 // loop_exit
    _

// kernel: hardnet_conv_crop_forward.8
$region0: #{hardnet_conv_crop_forward.8}
  #allocation0 [shape = 'u32[]', space=smem, size = 0x4, offset = 0x4, fixed_abs, tag = 'smem constant byte address 0x4 - core index']
  #allocation1 [shape = 'u32[72,128]{1,0:T(1,128)}', space=vmem, size = 0x9000, scoped, tag = 'internal scratch']
  #allocation2 [shape = 'f32[18,18,32]{2,1,0:T(8,128)}', space=vmem, size = 0x36000, scoped, tag = 'scratch operand']
  %s0 = inlined_call_operand.vmem [shape: f32[2,16,16,32], index: 0, kind: input, shape index: {}]
  %s1 = inlined_call_operand.vmem [shape: f32[1,32], index: 1, kind: input, shape index: {}]
  %s2 = inlined_call_operand.vmem [shape: f32[1,32], index: 2, kind: input, shape index: {}]
  %s3 = inlined_call_operand.vmem [shape: bf16[288,32], index: 3, kind: input, shape index: {}]
  %s4 = inlined_call_operand.vmem [shape: f32[2,16,16,32], index: 4, kind: output, shape index: {0}]
  %s5 = inlined_call_operand.vmem [shape: f32[2,1,32], index: 5, kind: output, shape index: {1}]
  %s6 = inlined_call_operand.vmem [shape: f32[2,1,32], index: 6, kind: output, shape index: {2}]
  %7 = xla_tuple %s4, %s5, %s6
  %s8 = sld [smem:[#allocation0]]
  $region65: #{hardnet_conv_crop_forward.8} parent=0
    _
  %s10 = ssub.s32 1, %s8
  %s11 = scalar_select 0, %s10, %s8
  loop: start=0, step=1, limit=4
  $region2: #{hardnet_conv_crop_forward.8} parent=0 // loop_pre_header
    _
  $region3: #{hardnet_conv_crop_forward.8} parent=0 // loop_header
    %s13 = sphi 0, %s17
    %p14 = scmp.ge.s32.totalorder %s13, 4
    %s23 = sphi 0, %s25
    %s26 = sphi 0, %s23
    %s27 = sphi 0, %s26
    %s43 = sphi 0, %s27
    %s47 = sphi 0, %s47
    %s49 = sphi 0, %s47
    %s50 = sphi 0, %s49
    %s64 = sphi 0, %s50
    %s68 = sphi 0, %s68
    %s70 = sphi 0, %s68
    %s71 = sphi 0, %s70
    %s85 = sphi 0, %s71
    %s89 = sphi 0, %s89
    %s91 = sphi 0, %s89
    %s92 = sphi 0, %s91
    %s106 = sphi 0, %s92
    %s112 = sphi 0, %s114
    %s115 = sphi 0, %s112
    %s116 = sphi 0, %s115
    %s132 = sphi 0, %s116
    %s138 = sphi 0, %s140
    %s141 = sphi 0, %s138
    %s142 = sphi 0, %s141
    %s158 = sphi 0, %s142
    %s164 = sphi 0, %s166
    %s167 = sphi 0, %s164
    %s168 = sphi 0, %s167
    %s184 = sphi 0, %s168
  $region4: #{hardnet_conv_crop_forward.8} parent=0 // loop_header_branch
    %16 = sbr.rel (%p14) target = $region8
  $region5: #{hardnet_conv_crop_forward.8} parent=0 // loop_body
    %s18 = ssub.s32 %s13, 1
    %s19 = ssub.s32 %s13, 2
    %s20 = sadd.s32 %s13, 1
    %s21 = ssub.s32 %s13, %s20
    %p22 = scmp.eq.s32.totalorder %s21, 0
    %s24 = sadd.s32 %s23, 1
    %s25 = scalar_select %p22, %s23, %s24
    %p28 = pneg %p22
    %p29 = scmp.eq.s32.totalorder %s13, 1
    %p30 = por %p28, %p29
    %p31 = scmp.ne.s32.totalorder %s23, %s26
    %p32 = scmp.eq.s32.totalorder %s13, 0
    %p33 = por %p31, %p32
    %p34 = scmp.ne.s32.totalorder %s23, %s26
    %p35 = scmp.eq.s32.totalorder %s18, 1
    %p36 = por %p34, %p35
    %p37 = scmp.ne.s32.totalorder %s26, %s27
    %p38 = scmp.eq.s32.totalorder %s18, 0
    %p39 = por %p37, %p38
    %p40 = scmp.ne.s32.totalorder %s26, %s27
    %p41 = scmp.eq.s32.totalorder %s19, 1
    %p42 = por %p40, %p41
    %p44 = scmp.ne.s32.totalorder %s27, %s43
    %p45 = scmp.eq.s32.totalorder %s19, 0
    %p46 = por %p44, %p45
    %s48 = sadd.s32 %s47, 1
    %p51 = scmp.eq.s32.totalorder %s13, 1
    %p52 = scmp.ne.s32.totalorder %s47, %s49
    %p53 = scmp.eq.s32.totalorder %s13, 0
    %p54 = por %p52, %p53
    %p55 = scmp.ne.s32.totalorder %s47, %s49
    %p56 = scmp.eq.s32.totalorder %s18, 1
    %p57 = por %p55, %p56
    %p58 = scmp.ne.s32.totalorder %s49, %s50
    %p59 = scmp.eq.s32.totalorder %s18, 0
    %p60 = por %p58, %p59
    %p61 = scmp.ne.s32.totalorder %s49, %s50
    %p62 = scmp.eq.s32.totalorder %s19, 1
    %p63 = por %p61, %p62
    %p65 = scmp.ne.s32.totalorder %s50, %s64
    %p66 = scmp.eq.s32.totalorder %s19, 0
    %p67 = por %p65, %p66
    %s69 = sadd.s32 %s68, 1
    %p72 = scmp.eq.s32.totalorder %s13, 1
    %p73 = scmp.ne.s32.totalorder %s68, %s70
    %p74 = scmp.eq.s32.totalorder %s13, 0
    %p75 = por %p73, %p74
    %p76 = scmp.ne.s32.totalorder %s68, %s70
    %p77 = scmp.eq.s32.totalorder %s18, 1
    %p78 = por %p76, %p77
    %p79 = scmp.ne.s32.totalorder %s70, %s71
    %p80 = scmp.eq.s32.totalorder %s18, 0
    %p81 = por %p79, %p80
    %p82 = scmp.ne.s32.totalorder %s70, %s71
    %p83 = scmp.eq.s32.totalorder %s19, 1
    %p84 = por %p82, %p83
    %p86 = scmp.ne.s32.totalorder %s71, %s85
    %p87 = scmp.eq.s32.totalorder %s19, 0
    %p88 = por %p86, %p87
    %s90 = sadd.s32 %s89, 1
    %p93 = scmp.eq.s32.totalorder %s13, 1
    %p94 = scmp.ne.s32.totalorder %s89, %s91
    %p95 = scmp.eq.s32.totalorder %s13, 0
    %p96 = por %p94, %p95
    %p97 = scmp.ne.s32.totalorder %s89, %s91
    %p98 = scmp.eq.s32.totalorder %s18, 1
    %p99 = por %p97, %p98
    %p100 = scmp.ne.s32.totalorder %s91, %s92
    %p101 = scmp.eq.s32.totalorder %s18, 0
    %p102 = por %p100, %p101
    %p103 = scmp.ne.s32.totalorder %s91, %s92
    %p104 = scmp.eq.s32.totalorder %s19, 1
    %p105 = por %p103, %p104
    %p107 = scmp.ne.s32.totalorder %s92, %s106
    %p108 = scmp.eq.s32.totalorder %s19, 0
    %p109 = por %p107, %p108
    %s110 = ssub.s32 %s13, %s20
    %p111 = scmp.eq.s32.totalorder %s110, 0
    %s113 = sadd.s32 %s112, 1
    %s114 = scalar_select %p111, %s112, %s113
    %p117 = pneg %p111
    %p118 = scmp.eq.s32.totalorder %s13, 1
    %p119 = por %p117, %p118
    %p120 = scmp.ne.s32.totalorder %s112, %s115
    %p121 = scmp.eq.s32.totalorder %s13, 0
    %p122 = por %p120, %p121
    %p123 = scmp.ne.s32.totalorder %s112, %s115
    %p124 = scmp.eq.s32.totalorder %s18, 1
    %p125 = por %p123, %p124
    %p126 = scmp.ne.s32.totalorder %s115, %s116
    %p127 = scmp.eq.s32.totalorder %s18, 0
    %p128 = por %p126, %p127
    %p129 = scmp.ne.s32.totalorder %s115, %s116
    %p130 = scmp.eq.s32.totalorder %s19, 1
    %p131 = por %p129, %p130
    %p133 = scmp.ne.s32.totalorder %s116, %s132
    %p134 = scmp.eq.s32.totalorder %s19, 0
    %p135 = por %p133, %p134
    %s136 = ssub.s32 %s13, %s20
    %p137 = scmp.eq.s32.totalorder %s136, 0
    %s139 = sadd.s32 %s138, 1
    %s140 = scalar_select %p137, %s138, %s139
    %p143 = pneg %p137
    %p144 = scmp.eq.s32.totalorder %s13, 1
    %p145 = por %p143, %p144
    %p146 = scmp.ne.s32.totalorder %s138, %s141
    %p147 = scmp.eq.s32.totalorder %s13, 0
    %p148 = por %p146, %p147
    %p149 = scmp.ne.s32.totalorder %s138, %s141
    %p150 = scmp.eq.s32.totalorder %s18, 1
    %p151 = por %p149, %p150
    %p152 = scmp.ne.s32.totalorder %s141, %s142
    %p153 = scmp.eq.s32.totalorder %s18, 0
    %p154 = por %p152, %p153
    %p155 = scmp.ne.s32.totalorder %s141, %s142
    %p156 = scmp.eq.s32.totalorder %s19, 1
    %p157 = por %p155, %p156
    %p159 = scmp.ne.s32.totalorder %s142, %s158
    %p160 = scmp.eq.s32.totalorder %s19, 0
    %p161 = por %p159, %p160
    %s162 = ssub.s32 %s13, %s20
    %p163 = scmp.eq.s32.totalorder %s162, 0
    %s165 = sadd.s32 %s164, 1
    %s166 = scalar_select %p163, %s164, %s165
    %p169 = pneg %p163
    %p170 = scmp.eq.s32.totalorder %s13, 1
    %p171 = por %p169, %p170
    %p172 = scmp.ne.s32.totalorder %s164, %s167
    %p173 = scmp.eq.s32.totalorder %s13, 0
    %p174 = por %p172, %p173
    %p175 = scmp.ne.s32.totalorder %s164, %s167
    %p176 = scmp.eq.s32.totalorder %s18, 1
    %p177 = por %p175, %p176
    %p178 = scmp.ne.s32.totalorder %s167, %s168
    %p179 = scmp.eq.s32.totalorder %s18, 0
    %p180 = por %p178, %p179
    %p181 = scmp.ne.s32.totalorder %s167, %s168
    %p182 = scmp.eq.s32.totalorder %s19, 1
    %p183 = por %p181, %p182
    %p185 = scmp.ne.s32.totalorder %s168, %s184
    %p186 = scmp.eq.s32.totalorder %s19, 0
    %p187 = por %p185, %p186
    %p188 = scmp.le.s32.totalorder 1, %s13
    %p189 = scmp.lt.s32.totalorder %s13, 3
    %p190 = pnand %p188, %p189
    %p191 = pneg %p190
    // Predicated region
    $region9: #{hardnet_conv_crop_forward.8} parent=5 // pred_check
      _
    $region10: #{hardnet_conv_crop_forward.8} parent=5 // pred_check_branch
      %193 = sbr.rel (%p190) target = $region12
    $region11: #{hardnet_conv_crop_forward.8} parent=5 // pred_region
      %s194 = ssub.s32 %s13, 1
      // Predicated region
      $region13: #{hardnet_conv_crop_forward.8} parent=11 // pred_check
        %p195 = pneg %p60
      $region14: #{hardnet_conv_crop_forward.8} parent=11 // pred_check_branch
        %197 = sbr.rel (%p195) target = $region16
      $region15: #{hardnet_conv_crop_forward.8} parent=11 // pred_region
        _
      $region16: #{hardnet_conv_crop_forward.8} parent=11 // pred_fallthru
        _
      // Predicated region
      $region17: #{hardnet_conv_crop_forward.8} parent=11 // pred_check
        %p198 = pneg %p81
      $region18: #{hardnet_conv_crop_forward.8} parent=11 // pred_check_branch
        %200 = sbr.rel (%p198) target = $region20
      $region19: #{hardnet_conv_crop_forward.8} parent=11 // pred_region
        _
      $region20: #{hardnet_conv_crop_forward.8} parent=11 // pred_fallthru
        _
      // Predicated region
      $region21: #{hardnet_conv_crop_forward.8} parent=11 // pred_check
        %p201 = pneg %p102
      $region22: #{hardnet_conv_crop_forward.8} parent=11 // pred_check_branch
        %203 = sbr.rel (%p201) target = $region24
      $region23: #{hardnet_conv_crop_forward.8} parent=11 // pred_region
        _
      $region24: #{hardnet_conv_crop_forward.8} parent=11 // pred_fallthru
        _
    $region12: #{hardnet_conv_crop_forward.8} parent=5 // pred_fallthru
      _
    %p204 = scmp.lt.s32.totalorder %s13, 2
    // Predicated region
    $region25: #{hardnet_conv_crop_forward.8} parent=5 // pred_check
      %p205 = pneg %p204
    $region26: #{hardnet_conv_crop_forward.8} parent=5 // pred_check_branch
      %207 = sbr.rel (%p205) target = $region28
    $region27: #{hardnet_conv_crop_forward.8} parent=5 // pred_region
      // Predicated region
      $region29: #{hardnet_conv_crop_forward.8} parent=27 // pred_check
        %p208 = pneg %p33
      $region30: #{hardnet_conv_crop_forward.8} parent=27 // pred_check_branch
        %210 = sbr.rel (%p208) target = $region32
      $region31: #{hardnet_conv_crop_forward.8} parent=27 // pred_region
        %p211 = scmp.lt.s32.totalorder %s13, 1
        %s212 = scalar_select %p211, %s13, 1
        %s213 = smul.addr %s212, 32
        %s214 = smul.addr %s213, 8
        %s215 = scalar_lea.vmem %s0, %s214
      $region32: #{hardnet_conv_crop_forward.8} parent=27 // pred_fallthru
        _
    $region28: #{hardnet_conv_crop_forward.8} parent=5 // pred_fallthru
      _
    %p216 = scmp.le.s32.totalorder 1, %s13
    %p217 = scmp.lt.s32.totalorder %s13, 3
    %p218 = pnand %p216, %p217
    %p219 = pneg %p218
    // Predicated region
    $region33: #{hardnet_conv_crop_forward.8} parent=5 // pred_check
      _
    $region34: #{hardnet_conv_crop_forward.8} parent=5 // pred_check_branch
      %221 = sbr.rel (%p218) target = $region36
    $region35: #{hardnet_conv_crop_forward.8} parent=5 // pred_region
      %s222 = ssub.s32 %s13, 1
      %p223 = scmp.lt.s32.totalorder %s18, 1
      %s224 = scalar_select %p223, %s18, 1
      %s225 = smul.addr %s224, 32
      %s226 = smul.addr %s225, 8
      %s227 = scalar_lea.vmem %s0, %s226
      %p228 = pneg %p39
      %p229 = pneg %p36
      %p230 = pneg %p60
      %p231 = pneg %p57
      %p232 = pneg %p81
      %p233 = pneg %p78
      %p234 = pneg %p102
      %p235 = pneg %p99
      %p236 = pneg %p128
      %p237 = pneg %p125
      %p238 = scmp.lt.s32.totalorder %s18, 1
      %s239 = scalar_select %p238, %s18, 1
      %s240 = smul.addr %s239, 32
      %s241 = smul.addr %s240, 8
      %s242 = scalar_lea.vmem %s4, %s241
      %p243 = pneg %p154
      %p244 = pneg %p151
      %p245 = scmp.lt.s32.totalorder %s18, 1
      %s246 = scalar_select %p245, %s18, 1
      %s247 = scalar_lea.vmem %s5, %s246
      %p248 = pneg %p180
      %p249 = pneg %p177
      %p250 = scmp.lt.s32.totalorder %s18, 1
      %s251 = scalar_select %p250, %s18, 1
      %s252 = scalar_lea.vmem %s6, %s251
      %p253 = scmp.lt.s32.totalorder %s18, 1
      %s254 = scalar_select %p253, %s18, 1
      %s255 = smul.addr %s254, 32
      %s256 = smul.addr %s255, 8
      %s257 = scalar_lea.vmem %s0, %s256
      %p258 = scmp.lt.s32.totalorder %s18, 1
      %s259 = scalar_select %p258, %s18, 1
      %s260 = smul.addr %s259, 32
      %s261 = smul.addr %s260, 8
      %s262 = scalar_lea.vmem %s4, %s261
      %p263 = scmp.lt.s32.totalorder %s18, 1
      %s264 = scalar_select %p263, %s18, 1
      %s265 = scalar_lea.vmem %s5, %s264
      %p266 = scmp.lt.s32.totalorder %s18, 1
      %s267 = scalar_select %p266, %s18, 1
      %s268 = scalar_lea.vmem %s6, %s267
      %v270 = vld [vmem:[%s257] sm:$0xff]
      %v271 = vld [vmem:[%s257 + $0x8] sm:$0xff]
      %v272 = vld [vmem:[%s257 + $0x10] sm:$0xff]
      %v273 = vld [vmem:[%s257 + $0x18] sm:$0xff]
      %v274 = vld [vmem:[%s257 + $0x20] sm:$0xff]
      %v275 = vld [vmem:[%s257 + $0x28] sm:$0xff]
      %v276 = vld [vmem:[%s257 + $0x30] sm:$0xff]
      %v277 = vld [vmem:[%s257 + $0x38] sm:$0xff]
      %v278 = vld [vmem:[%s257 + $0x40] sm:$0xff]
      %v279 = vld [vmem:[%s257 + $0x48] sm:$0xff]
      %v280 = vld [vmem:[%s257 + $0x50] sm:$0xff]
      %v281 = vld [vmem:[%s257 + $0x58] sm:$0xff]
      %v282 = vld [vmem:[%s257 + $0x60] sm:$0xff]
      %v283 = vld [vmem:[%s257 + $0x68] sm:$0xff]
      %v284 = vld [vmem:[%s257 + $0x70] sm:$0xff]
      %v285 = vld [vmem:[%s257 + $0x78] sm:$0xff]
      %v286 = vld [vmem:[%s257 + $0x80] sm:$0xff]
      %v287 = vld [vmem:[%s257 + $0x88] sm:$0xff]
      %v288 = vld [vmem:[%s257 + $0x90] sm:$0xff]
      %v289 = vld [vmem:[%s257 + $0x98] sm:$0xff]
      %v290 = vld [vmem:[%s257 + $0xa0] sm:$0xff]
      %v291 = vld [vmem:[%s257 + $0xa8] sm:$0xff]
      %v292 = vld [vmem:[%s257 + $0xb0] sm:$0xff]
      %v293 = vld [vmem:[%s257 + $0xb8] sm:$0xff]
      %v294 = vld [vmem:[%s257 + $0xc0] sm:$0xff]
      %v295 = vld [vmem:[%s257 + $0xc8] sm:$0xff]
      %v296 = vld [vmem:[%s257 + $0xd0] sm:$0xff]
      %v297 = vld [vmem:[%s257 + $0xd8] sm:$0xff]
      %v298 = vld [vmem:[%s257 + $0xe0] sm:$0xff]
      %v299 = vld [vmem:[%s257 + $0xe8] sm:$0xff]
      %v300 = vld [vmem:[%s257 + $0xf0] sm:$0xff]
      %v301 = vld [vmem:[%s257 + $0xf8] sm:$0xff]
      %v302 = vld [vmem:[%s1] sm:$0x1]
      %v303 = vld [vmem:[%s2] sm:$0x1]
      %v305 = vperm.slane %v302, 0
      %v307 = vsub.f32 %v270, %v305
      %v308 = vsub.f32 %v271, %v305
      %v309 = vsub.f32 %v272, %v305
      %v310 = vsub.f32 %v273, %v305
      %v311 = vsub.f32 %v274, %v305
      %v312 = vsub.f32 %v275, %v305
      %v313 = vsub.f32 %v276, %v305
      %v314 = vsub.f32 %v277, %v305
      %v315 = vsub.f32 %v278, %v305
      %v316 = vsub.f32 %v279, %v305
      %v317 = vsub.f32 %v280, %v305
      %v318 = vsub.f32 %v281, %v305
      %v319 = vsub.f32 %v282, %v305
      %v320 = vsub.f32 %v283, %v305
      %v321 = vsub.f32 %v284, %v305
      %v322 = vsub.f32 %v285, %v305
      %v323 = vsub.f32 %v286, %v305
      %v324 = vsub.f32 %v287, %v305
      %v325 = vsub.f32 %v288, %v305
      %v326 = vsub.f32 %v289, %v305
      %v327 = vsub.f32 %v290, %v305
      %v328 = vsub.f32 %v291, %v305
      %v329 = vsub.f32 %v292, %v305
      %v330 = vsub.f32 %v293, %v305
      %v331 = vsub.f32 %v294, %v305
      %v332 = vsub.f32 %v295, %v305
      %v333 = vsub.f32 %v296, %v305
      %v334 = vsub.f32 %v297, %v305
      %v335 = vsub.f32 %v298, %v305
      %v336 = vsub.f32 %v299, %v305
      %v337 = vsub.f32 %v300, %v305
      %v338 = vsub.f32 %v301, %v305
      %v340 = vperm.slane %v303, 0
      %v342 = vmul.f32 %v307, %v340
      %v343 = vmul.f32 %v308, %v340
      %v344 = vmul.f32 %v309, %v340
      %v345 = vmul.f32 %v310, %v340
      %v346 = vmul.f32 %v311, %v340
      %v347 = vmul.f32 %v312, %v340
      %v348 = vmul.f32 %v313, %v340
      %v349 = vmul.f32 %v314, %v340
      %v350 = vmul.f32 %v315, %v340
      %v351 = vmul.f32 %v316, %v340
      %v352 = vmul.f32 %v317, %v340
      %v353 = vmul.f32 %v318, %v340
      %v354 = vmul.f32 %v319, %v340
      %v355 = vmul.f32 %v320, %v340
      %v356 = vmul.f32 %v321, %v340
      %v357 = vmul.f32 %v322, %v340
      %v358 = vmul.f32 %v323, %v340
      %v359 = vmul.f32 %v324, %v340
      %v360 = vmul.f32 %v325, %v340
      %v361 = vmul.f32 %v326, %v340
      %v362 = vmul.f32 %v327, %v340
      %v363 = vmul.f32 %v328, %v340
      %v364 = vmul.f32 %v329, %v340
      %v365 = vmul.f32 %v330, %v340
      %v366 = vmul.f32 %v331, %v340
      %v367 = vmul.f32 %v332, %v340
      %v368 = vmul.f32 %v333, %v340
      %v369 = vmul.f32 %v334, %v340
      %v370 = vmul.f32 %v335, %v340
      %v371 = vmul.f32 %v336, %v340
      %v372 = vmul.f32 %v337, %v340
      %v373 = vmul.f32 %v338, %v340
      %v374 = vmax.f32 %v342, 0.0
      %v375 = vmax.f32 %v343, 0.0
      %v376 = vmax.f32 %v344, 0.0
      %v377 = vmax.f32 %v345, 0.0
      %v378 = vmax.f32 %v346, 0.0
      %v379 = vmax.f32 %v347, 0.0
      %v380 = vmax.f32 %v348, 0.0
      %v381 = vmax.f32 %v349, 0.0
      %v382 = vmax.f32 %v350, 0.0
      %v383 = vmax.f32 %v351, 0.0
      %v384 = vmax.f32 %v352, 0.0
      %v385 = vmax.f32 %v353, 0.0
      %v386 = vmax.f32 %v354, 0.0
      %v387 = vmax.f32 %v355, 0.0
      %v388 = vmax.f32 %v356, 0.0
      %v389 = vmax.f32 %v357, 0.0
      %v390 = vmax.f32 %v358, 0.0
      %v391 = vmax.f32 %v359, 0.0
      %v392 = vmax.f32 %v360, 0.0
      %v393 = vmax.f32 %v361, 0.0
      %v394 = vmax.f32 %v362, 0.0
      %v395 = vmax.f32 %v363, 0.0
      %v396 = vmax.f32 %v364, 0.0
      %v397 = vmax.f32 %v365, 0.0
      %v398 = vmax.f32 %v366, 0.0
      %v399 = vmax.f32 %v367, 0.0
      %v400 = vmax.f32 %v368, 0.0
      %v401 = vmax.f32 %v369, 0.0
      %v402 = vmax.f32 %v370, 0.0
      %v403 = vmax.f32 %v371, 0.0
      %v404 = vmax.f32 %v372, 0.0
      %v405 = vmax.f32 %v373, 0.0
      %vm406 = vcmask 261120
      %407 = vst.msk [vmem:[#allocation2] sm:$0xff] %vm406, 0.0
      %408 = vst.msk [vmem:[#allocation2 + $0x8] sm:$0xff] %vm406, 0.0
      %vm409 = vcmask 254976
      %410 = vst.msk [vmem:[#allocation2 + $0x10] sm:$0x3] %vm409, 0.0
      %411 = vst.msk [vmem:[#allocation2 + $0x18] sm:$0xff] %vm406, 0.0
      %412 = vst.msk [vmem:[#allocation2 + $0x20] sm:$0xff] %vm406, 0.0
      %413 = vst.msk [vmem:[#allocation2 + $0x28] sm:$0x3] %vm409, 0.0
      %414 = vst.msk [vmem:[#allocation2 + $0x30] sm:$0xff] %vm406, 0.0
      %415 = vst.msk [vmem:[#allocation2 + $0x38] sm:$0xff] %vm406, 0.0
      %416 = vst.msk [vmem:[#allocation2 + $0x40] sm:$0x3] %vm409, 0.0
      %417 = vst.msk [vmem:[#allocation2 + $0x48] sm:$0xff] %vm406, 0.0
      %418 = vst.msk [vmem:[#allocation2 + $0x50] sm:$0xff] %vm406, 0.0
      %419 = vst.msk [vmem:[#allocation2 + $0x58] sm:$0x3] %vm409, 0.0
      %420 = vst.msk [vmem:[#allocation2 + $0x60] sm:$0xff] %vm406, 0.0
      %421 = vst.msk [vmem:[#allocation2 + $0x68] sm:$0xff] %vm406, 0.0
      %422 = vst.msk [vmem:[#allocation2 + $0x70] sm:$0x3] %vm409, 0.0
      %423 = vst.msk [vmem:[#allocation2 + $0x78] sm:$0xff] %vm406, 0.0
      %424 = vst.msk [vmem:[#allocation2 + $0x80] sm:$0xff] %vm406, 0.0
      %425 = vst.msk [vmem:[#allocation2 + $0x88] sm:$0x3] %vm409, 0.0
      %426 = vst.msk [vmem:[#allocation2 + $0x90] sm:$0xff] %vm406, 0.0
      %427 = vst.msk [vmem:[#allocation2 + $0x98] sm:$0xff] %vm406, 0.0
      %428 = vst.msk [vmem:[#allocation2 + $0xa0] sm:$0x3] %vm409, 0.0
      %429 = vst.msk [vmem:[#allocation2 + $0xa8] sm:$0xff] %vm406, 0.0
      %430 = vst.msk [vmem:[#allocation2 + $0xb0] sm:$0xff] %vm406, 0.0
      %431 = vst.msk [vmem:[#allocation2 + $0xb8] sm:$0x3] %vm409, 0.0
      %432 = vst.msk [vmem:[#allocation2 + $0xc0] sm:$0xff] %vm406, 0.0
      %433 = vst.msk [vmem:[#allocation2 + $0xc8] sm:$0xff] %vm406, 0.0
      %434 = vst.msk [vmem:[#allocation2 + $0xd0] sm:$0x3] %vm409, 0.0
      %435 = vst.msk [vmem:[#allocation2 + $0xd8] sm:$0xff] %vm406, 0.0
      %436 = vst.msk [vmem:[#allocation2 + $0xe0] sm:$0xff] %vm406, 0.0
      %437 = vst.msk [vmem:[#allocation2 + $0xe8] sm:$0x3] %vm409, 0.0
      %438 = vst.msk [vmem:[#allocation2 + $0xf0] sm:$0xff] %vm406, 0.0
      %439 = vst.msk [vmem:[#allocation2 + $0xf8] sm:$0xff] %vm406, 0.0
      %440 = vst.msk [vmem:[#allocation2 + $0x100] sm:$0x3] %vm409, 0.0
      %441 = vst.msk [vmem:[#allocation2 + $0x108] sm:$0xff] %vm406, 0.0
      %442 = vst.msk [vmem:[#allocation2 + $0x110] sm:$0xff] %vm406, 0.0
      %443 = vst.msk [vmem:[#allocation2 + $0x118] sm:$0x3] %vm409, 0.0
      %444 = vst.msk [vmem:[#allocation2 + $0x120] sm:$0xff] %vm406, 0.0
      %445 = vst.msk [vmem:[#allocation2 + $0x128] sm:$0xff] %vm406, 0.0
      %446 = vst.msk [vmem:[#allocation2 + $0x130] sm:$0x3] %vm409, 0.0
      %447 = vst.msk [vmem:[#allocation2 + $0x138] sm:$0xff] %vm406, 0.0
      %448 = vst.msk [vmem:[#allocation2 + $0x140] sm:$0xff] %vm406, 0.0
      %449 = vst.msk [vmem:[#allocation2 + $0x148] sm:$0x3] %vm409, 0.0
      %450 = vst.msk [vmem:[#allocation2 + $0x150] sm:$0xff] %vm406, 0.0
      %451 = vst.msk [vmem:[#allocation2 + $0x158] sm:$0xff] %vm406, 0.0
      %452 = vst.msk [vmem:[#allocation2 + $0x160] sm:$0x3] %vm409, 0.0
      %453 = vst.msk [vmem:[#allocation2 + $0x168] sm:$0xff] %vm406, 0.0
      %454 = vst.msk [vmem:[#allocation2 + $0x170] sm:$0xff] %vm406, 0.0
      %455 = vst.msk [vmem:[#allocation2 + $0x178] sm:$0x3] %vm409, 0.0
      %456 = vst.msk [vmem:[#allocation2 + $0x180] sm:$0xff] %vm406, 0.0
      %457 = vst.msk [vmem:[#allocation2 + $0x188] sm:$0xff] %vm406, 0.0
      %458 = vst.msk [vmem:[#allocation2 + $0x190] sm:$0x3] %vm409, 0.0
      %459 = vst.msk [vmem:[#allocation2 + $0x198] sm:$0xff] %vm406, 0.0
      %460 = vst.msk [vmem:[#allocation2 + $0x1a0] sm:$0xff] %vm406, 0.0
      %461 = vst.msk [vmem:[#allocation2 + $0x1a8] sm:$0x3] %vm409, 0.0
      %s462 = scalar_lea.vmem [#allocation2], 24
      %463 = vst.msk [vmem:[%s462 + $0x1] sm:$0xff] %vm406, %v374
      %464 = vst.msk [vmem:[%s462 + $0x9] sm:$0xff] %vm406, %v375
      %465 = vst.msk [vmem:[%s462 + $0x19] sm:$0xff] %vm406, %v376
      %466 = vst.msk [vmem:[%s462 + $0x21] sm:$0xff] %vm406, %v377
      %467 = vst.msk [vmem:[%s462 + $0x31] sm:$0xff] %vm406, %v378
      %468 = vst.msk [vmem:[%s462 + $0x39] sm:$0xff] %vm406, %v379
      %469 = vst.msk [vmem:[%s462 + $0x49] sm:$0xff] %vm406, %v380
      %470 = vst.msk [vmem:[%s462 + $0x51] sm:$0xff] %vm406, %v381
      %471 = vst.msk [vmem:[%s462 + $0x61] sm:$0xff] %vm406, %v382
      %472 = vst.msk [vmem:[%s462 + $0x69] sm:$0xff] %vm406, %v383
      %473 = vst.msk [vmem:[%s462 + $0x79] sm:$0xff] %vm406, %v384
      %474 = vst.msk [vmem:[%s462 + $0x81] sm:$0xff] %vm406, %v385
      %475 = vst.msk [vmem:[%s462 + $0x91] sm:$0xff] %vm406, %v386
      %476 = vst.msk [vmem:[%s462 + $0x99] sm:$0xff] %vm406, %v387
      %477 = vst.msk [vmem:[%s462 + $0xa9] sm:$0xff] %vm406, %v388
      %478 = vst.msk [vmem:[%s462 + $0xb1] sm:$0xff] %vm406, %v389
      %479 = vst.msk [vmem:[%s462 + $0xc1] sm:$0xff] %vm406, %v390
      %480 = vst.msk [vmem:[%s462 + $0xc9] sm:$0xff] %vm406, %v391
      %481 = vst.msk [vmem:[%s462 + $0xd9] sm:$0xff] %vm406, %v392
      %482 = vst.msk [vmem:[%s462 + $0xe1] sm:$0xff] %vm406, %v393
      %483 = vst.msk [vmem:[%s462 + $0xf1] sm:$0xff] %vm406, %v394
      %484 = vst.msk [vmem:[%s462 + $0xf9] sm:$0xff] %vm406, %v395
      %485 = vst.msk [vmem:[%s462 + $0x109] sm:$0xff] %vm406, %v396
      %486 = vst.msk [vmem:[%s462 + $0x111] sm:$0xff] %vm406, %v397
      %487 = vst.msk [vmem:[%s462 + $0x121] sm:$0xff] %vm406, %v398
      %488 = vst.msk [vmem:[%s462 + $0x129] sm:$0xff] %vm406, %v399
      %489 = vst.msk [vmem:[%s462 + $0x139] sm:$0xff] %vm406, %v400
      %490 = vst.msk [vmem:[%s462 + $0x141] sm:$0xff] %vm406, %v401
      %491 = vst.msk [vmem:[%s462 + $0x151] sm:$0xff] %vm406, %v402
      %492 = vst.msk [vmem:[%s462 + $0x159] sm:$0xff] %vm406, %v403
      %493 = vst.msk [vmem:[%s462 + $0x169] sm:$0xff] %vm406, %v404
      %494 = vst.msk [vmem:[%s462 + $0x171] sm:$0xff] %vm406, %v405
      %v495 = vld [vmem:[#allocation2] sm:$0xff]
      %v496 = vld [vmem:[#allocation2 + $0x8] sm:$0xff]
      %v497 = vld [vmem:[#allocation2 + $0x18] sm:$0xff]
      %v498 = vld [vmem:[#allocation2 + $0x20] sm:$0xff]
      %v499 = vld [vmem:[#allocation2 + $0x30] sm:$0xff]
      %v500 = vld [vmem:[#allocation2 + $0x38] sm:$0xff]
      %v501 = vld [vmem:[#allocation2 + $0x48] sm:$0xff]
      %v502 = vld [vmem:[#allocation2 + $0x50] sm:$0xff]
      %v503 = vld [vmem:[#allocation2 + $0x60] sm:$0xff]
      %v504 = vld [vmem:[#allocation2 + $0x68] sm:$0xff]
      %v505 = vld [vmem:[#allocation2 + $0x78] sm:$0xff]
      %v506 = vld [vmem:[#allocation2 + $0x80] sm:$0xff]
      %v507 = vld [vmem:[#allocation2 + $0x90] sm:$0xff]
      %v508 = vld [vmem:[#allocation2 + $0x98] sm:$0xff]
      %v509 = vld [vmem:[#allocation2 + $0xa8] sm:$0xff]
      %v510 = vld [vmem:[#allocation2 + $0xb0] sm:$0xff]
      %v511 = vld [vmem:[#allocation2 + $0xc0] sm:$0xff]
      %v512 = vld [vmem:[#allocation2 + $0xc8] sm:$0xff]
      %v513 = vld [vmem:[#allocation2 + $0xd8] sm:$0xff]
      %v514 = vld [vmem:[#allocation2 + $0xe0] sm:$0xff]
      %v515 = vld [vmem:[#allocation2 + $0xf0] sm:$0xff]
      %v516 = vld [vmem:[#allocation2 + $0xf8] sm:$0xff]
      %v517 = vld [vmem:[#allocation2 + $0x108] sm:$0xff]
      %v518 = vld [vmem:[#allocation2 + $0x110] sm:$0xff]
      %v519 = vld [vmem:[#allocation2 + $0x120] sm:$0xff]
      %v520 = vld [vmem:[#allocation2 + $0x128] sm:$0xff]
      %v521 = vld [vmem:[#allocation2 + $0x138] sm:$0xff]
      %v522 = vld [vmem:[#allocation2 + $0x140] sm:$0xff]
      %v523 = vld [vmem:[#allocation2 + $0x150] sm:$0xff]
      %v524 = vld [vmem:[#allocation2 + $0x158] sm:$0xff]
      %v525 = vld [vmem:[#allocation2 + $0x168] sm:$0xff]
      %v526 = vld [vmem:[#allocation2 + $0x170] sm:$0xff]
      %v527 = vld [vmem:[#allocation2 + $0x1] sm:$0xff]
      %v528 = vld [vmem:[#allocation2 + $0x9] sm:$0xff]
      %v529 = vld [vmem:[#allocation2 + $0x19] sm:$0xff]
      %v530 = vld [vmem:[#allocation2 + $0x21] sm:$0xff]
      %v531 = vld [vmem:[#allocation2 + $0x31] sm:$0xff]
      %v532 = vld [vmem:[#allocation2 + $0x39] sm:$0xff]
      %v533 = vld [vmem:[#allocation2 + $0x49] sm:$0xff]
      %v534 = vld [vmem:[#allocation2 + $0x51] sm:$0xff]
      %v535 = vld [vmem:[#allocation2 + $0x61] sm:$0xff]
      %v536 = vld [vmem:[#allocation2 + $0x69] sm:$0xff]
      %v537 = vld [vmem:[#allocation2 + $0x79] sm:$0xff]
      %v538 = vld [vmem:[#allocation2 + $0x81] sm:$0xff]
      %v539 = vld [vmem:[#allocation2 + $0x91] sm:$0xff]
      %v540 = vld [vmem:[#allocation2 + $0x99] sm:$0xff]
      %v541 = vld [vmem:[#allocation2 + $0xa9] sm:$0xff]
      %v542 = vld [vmem:[#allocation2 + $0xb1] sm:$0xff]
      %v543 = vld [vmem:[#allocation2 + $0xc1] sm:$0xff]
      %v544 = vld [vmem:[#allocation2 + $0xc9] sm:$0xff]
      %v545 = vld [vmem:[#allocation2 + $0xd9] sm:$0xff]
      %v546 = vld [vmem:[#allocation2 + $0xe1] sm:$0xff]
      %v547 = vld [vmem:[#allocation2 + $0xf1] sm:$0xff]
      %v548 = vld [vmem:[#allocation2 + $0xf9] sm:$0xff]
      %v549 = vld [vmem:[#allocation2 + $0x109] sm:$0xff]
      %v550 = vld [vmem:[#allocation2 + $0x111] sm:$0xff]
      %v551 = vld [vmem:[#allocation2 + $0x121] sm:$0xff]
      %v552 = vld [vmem:[#allocation2 + $0x129] sm:$0xff]
      %v553 = vld [vmem:[#allocation2 + $0x139] sm:$0xff]
      %v554 = vld [vmem:[#allocation2 + $0x141] sm:$0xff]
      %v555 = vld [vmem:[#allocation2 + $0x151] sm:$0xff]
      %v556 = vld [vmem:[#allocation2 + $0x159] sm:$0xff]
      %v557 = vld [vmem:[#allocation2 + $0x169] sm:$0xff]
      %v558 = vld [vmem:[#allocation2 + $0x171] sm:$0xff]
      %v559 = vld [vmem:[#allocation2 + $0x2] sm:$0xff]
      %v560 = vld [vmem:[#allocation2 + $0xa] sm:$0xff]
      %v561 = vld [vmem:[#allocation2 + $0x1a] sm:$0xff]
      %v562 = vld [vmem:[#allocation2 + $0x22] sm:$0xff]
      %v563 = vld [vmem:[#allocation2 + $0x32] sm:$0xff]
      %v564 = vld [vmem:[#allocation2 + $0x3a] sm:$0xff]
      %v565 = vld [vmem:[#allocation2 + $0x4a] sm:$0xff]
      %v566 = vld [vmem:[#allocation2 + $0x52] sm:$0xff]
      %v567 = vld [vmem:[#allocation2 + $0x62] sm:$0xff]
      %v568 = vld [vmem:[#allocation2 + $0x6a] sm:$0xff]
      %v569 = vld [vmem:[#allocation2 + $0x7a] sm:$0xff]
      %v570 = vld [vmem:[#allocation2 + $0x82] sm:$0xff]
      %v571 = vld [vmem:[#allocation2 + $0x92] sm:$0xff]
      %v572 = vld [vmem:[#allocation2 + $0x9a] sm:$0xff]
      %v573 = vld [vmem:[#allocation2 + $0xaa] sm:$0xff]
      %v574 = vld [vmem:[#allocation2 + $0xb2] sm:$0xff]
      %v575 = vld [vmem:[#allocation2 + $0xc2] sm:$0xff]
      %v576 = vld [vmem:[#allocation2 + $0xca] sm:$0xff]
      %v577 = vld [vmem:[#allocation2 + $0xda] sm:$0xff]
      %v578 = vld [vmem:[#allocation2 + $0xe2] sm:$0xff]
      %v579 = vld [vmem:[#allocation2 + $0xf2] sm:$0xff]
      %v580 = vld [vmem:[#allocation2 + $0xfa] sm:$0xff]
      %v581 = vld [vmem:[#allocation2 + $0x10a] sm:$0xff]
      %v582 = vld [vmem:[#allocation2 + $0x112] sm:$0xff]
      %v583 = vld [vmem:[#allocation2 + $0x122] sm:$0xff]
      %v584 = vld [vmem:[#allocation2 + $0x12a] sm:$0xff]
      %v585 = vld [vmem:[#allocation2 + $0x13a] sm:$0xff]
      %v586 = vld [vmem:[#allocation2 + $0x142] sm:$0xff]
      %v587 = vld [vmem:[#allocation2 + $0x152] sm:$0xff]
      %v588 = vld [vmem:[#allocation2 + $0x15a] sm:$0xff]
      %v589 = vld [vmem:[#allocation2 + $0x16a] sm:$0xff]
      %v590 = vld [vmem:[#allocation2 + $0x172] sm:$0xff]
      %v591 = vld [vmem:[%s462] sm:$0xff]
      %v592 = vld [vmem:[%s462 + $0x8] sm:$0xff]
      %v593 = vld [vmem:[%s462 + $0x18] sm:$0xff]
      %v594 = vld [vmem:[%s462 + $0x20] sm:$0xff]
      %v595 = vld [vmem:[%s462 + $0x30] sm:$0xff]
      %v596 = vld [vmem:[%s462 + $0x38] sm:$0xff]
      %v597 = vld [vmem:[%s462 + $0x48] sm:$0xff]
      %v598 = vld [vmem:[%s462 + $0x50] sm:$0xff]
      %v599 = vld [vmem:[%s462 + $0x60] sm:$0xff]
      %v600 = vld [vmem:[%s462 + $0x68] sm:$0xff]
      %v601 = vld [vmem:[%s462 + $0x78] sm:$0xff]
      %v602 = vld [vmem:[%s462 + $0x80] sm:$0xff]
      %v603 = vld [vmem:[%s462 + $0x90] sm:$0xff]
      %v604 = vld [vmem:[%s462 + $0x98] sm:$0xff]
      %v605 = vld [vmem:[%s462 + $0xa8] sm:$0xff]
      %v606 = vld [vmem:[%s462 + $0xb0] sm:$0xff]
      %v607 = vld [vmem:[%s462 + $0xc0] sm:$0xff]
      %v608 = vld [vmem:[%s462 + $0xc8] sm:$0xff]
      %v609 = vld [vmem:[%s462 + $0xd8] sm:$0xff]
      %v610 = vld [vmem:[%s462 + $0xe0] sm:$0xff]
      %v611 = vld [vmem:[%s462 + $0xf0] sm:$0xff]
      %v612 = vld [vmem:[%s462 + $0xf8] sm:$0xff]
      %v613 = vld [vmem:[%s462 + $0x108] sm:$0xff]
      %v614 = vld [vmem:[%s462 + $0x110] sm:$0xff]
      %v615 = vld [vmem:[%s462 + $0x120] sm:$0xff]
      %v616 = vld [vmem:[%s462 + $0x128] sm:$0xff]
      %v617 = vld [vmem:[%s462 + $0x138] sm:$0xff]
      %v618 = vld [vmem:[%s462 + $0x140] sm:$0xff]
      %v619 = vld [vmem:[%s462 + $0x150] sm:$0xff]
      %v620 = vld [vmem:[%s462 + $0x158] sm:$0xff]
      %v621 = vld [vmem:[%s462 + $0x168] sm:$0xff]
      %v622 = vld [vmem:[%s462 + $0x170] sm:$0xff]
      %v623 = vld [vmem:[%s462 + $0x1] sm:$0xff]
      %v624 = vld [vmem:[%s462 + $0x9] sm:$0xff]
      %v625 = vld [vmem:[%s462 + $0x19] sm:$0xff]
      %v626 = vld [vmem:[%s462 + $0x21] sm:$0xff]
      %v627 = vld [vmem:[%s462 + $0x31] sm:$0xff]
      %v628 = vld [vmem:[%s462 + $0x39] sm:$0xff]
      %v629 = vld [vmem:[%s462 + $0x49] sm:$0xff]
      %v630 = vld [vmem:[%s462 + $0x51] sm:$0xff]
      %v631 = vld [vmem:[%s462 + $0x61] sm:$0xff]
      %v632 = vld [vmem:[%s462 + $0x69] sm:$0xff]
      %v633 = vld [vmem:[%s462 + $0x79] sm:$0xff]
      %v634 = vld [vmem:[%s462 + $0x81] sm:$0xff]
      %v635 = vld [vmem:[%s462 + $0x91] sm:$0xff]
      %v636 = vld [vmem:[%s462 + $0x99] sm:$0xff]
      %v637 = vld [vmem:[%s462 + $0xa9] sm:$0xff]
      %v638 = vld [vmem:[%s462 + $0xb1] sm:$0xff]
      %v639 = vld [vmem:[%s462 + $0xc1] sm:$0xff]
      %v640 = vld [vmem:[%s462 + $0xc9] sm:$0xff]
      %v641 = vld [vmem:[%s462 + $0xd9] sm:$0xff]
      %v642 = vld [vmem:[%s462 + $0xe1] sm:$0xff]
      %v643 = vld [vmem:[%s462 + $0xf1] sm:$0xff]
      %v644 = vld [vmem:[%s462 + $0xf9] sm:$0xff]
      %v645 = vld [vmem:[%s462 + $0x109] sm:$0xff]
      %v646 = vld [vmem:[%s462 + $0x111] sm:$0xff]
      %v647 = vld [vmem:[%s462 + $0x121] sm:$0xff]
      %v648 = vld [vmem:[%s462 + $0x129] sm:$0xff]
      %v649 = vld [vmem:[%s462 + $0x139] sm:$0xff]
      %v650 = vld [vmem:[%s462 + $0x141] sm:$0xff]
      %v651 = vld [vmem:[%s462 + $0x151] sm:$0xff]
      %v652 = vld [vmem:[%s462 + $0x159] sm:$0xff]
      %v653 = vld [vmem:[%s462 + $0x169] sm:$0xff]
      %v654 = vld [vmem:[%s462 + $0x171] sm:$0xff]
      %v655 = vld [vmem:[%s462 + $0x2] sm:$0xff]
      %v656 = vld [vmem:[%s462 + $0xa] sm:$0xff]
      %v657 = vld [vmem:[%s462 + $0x1a] sm:$0xff]
      %v658 = vld [vmem:[%s462 + $0x22] sm:$0xff]
      %v659 = vld [vmem:[%s462 + $0x32] sm:$0xff]
      %v660 = vld [vmem:[%s462 + $0x3a] sm:$0xff]
      %v661 = vld [vmem:[%s462 + $0x4a] sm:$0xff]
      %v662 = vld [vmem:[%s462 + $0x52] sm:$0xff]
      %v663 = vld [vmem:[%s462 + $0x62] sm:$0xff]
      %v664 = vld [vmem:[%s462 + $0x6a] sm:$0xff]
      %v665 = vld [vmem:[%s462 + $0x7a] sm:$0xff]
      %v666 = vld [vmem:[%s462 + $0x82] sm:$0xff]
      %v667 = vld [vmem:[%s462 + $0x92] sm:$0xff]
      %v668 = vld [vmem:[%s462 + $0x9a] sm:$0xff]
      %v669 = vld [vmem:[%s462 + $0xaa] sm:$0xff]
      %v670 = vld [vmem:[%s462 + $0xb2] sm:$0xff]
      %v671 = vld [vmem:[%s462 + $0xc2] sm:$0xff]
      %v672 = vld [vmem:[%s462 + $0xca] sm:$0xff]
      %v673 = vld [vmem:[%s462 + $0xda] sm:$0xff]
      %v674 = vld [vmem:[%s462 + $0xe2] sm:$0xff]
      %v675 = vld [vmem:[%s462 + $0xf2] sm:$0xff]
      %v676 = vld [vmem:[%s462 + $0xfa] sm:$0xff]
      %v677 = vld [vmem:[%s462 + $0x10a] sm:$0xff]
      %v678 = vld [vmem:[%s462 + $0x112] sm:$0xff]
      %v679 = vld [vmem:[%s462 + $0x122] sm:$0xff]
      %v680 = vld [vmem:[%s462 + $0x12a] sm:$0xff]
      %v681 = vld [vmem:[%s462 + $0x13a] sm:$0xff]
      %v682 = vld [vmem:[%s462 + $0x142] sm:$0xff]
      %v683 = vld [vmem:[%s462 + $0x152] sm:$0xff]
      %v684 = vld [vmem:[%s462 + $0x15a] sm:$0xff]
      %v685 = vld [vmem:[%s462 + $0x16a] sm:$0xff]
      %v686 = vld [vmem:[%s462 + $0x172] sm:$0xff]
      %s687 = scalar_lea.vmem [#allocation2], 48
      %v688 = vld [vmem:[%s687] sm:$0xff]
      %v689 = vld [vmem:[%s687 + $0x8] sm:$0xff]
      %v690 = vld [vmem:[%s687 + $0x18] sm:$0xff]
      %v691 = vld [vmem:[%s687 + $0x20] sm:$0xff]
      %v692 = vld [vmem:[%s687 + $0x30] sm:$0xff]
      %v693 = vld [vmem:[%s687 + $0x38] sm:$0xff]
      %v694 = vld [vmem:[%s687 + $0x48] sm:$0xff]
      %v695 = vld [vmem:[%s687 + $0x50] sm:$0xff]
      %v696 = vld [vmem:[%s687 + $0x60] sm:$0xff]
      %v697 = vld [vmem:[%s687 + $0x68] sm:$0xff]
      %v698 = vld [vmem:[%s687 + $0x78] sm:$0xff]
      %v699 = vld [vmem:[%s687 + $0x80] sm:$0xff]
      %v700 = vld [vmem:[%s687 + $0x90] sm:$0xff]
      %v701 = vld [vmem:[%s687 + $0x98] sm:$0xff]
      %v702 = vld [vmem:[%s687 + $0xa8] sm:$0xff]
      %v703 = vld [vmem:[%s687 + $0xb0] sm:$0xff]
      %v704 = vld [vmem:[%s687 + $0xc0] sm:$0xff]
      %v705 = vld [vmem:[%s687 + $0xc8] sm:$0xff]
      %v706 = vld [vmem:[%s687 + $0xd8] sm:$0xff]
      %v707 = vld [vmem:[%s687 + $0xe0] sm:$0xff]
      %v708 = vld [vmem:[%s687 + $0xf0] sm:$0xff]
      %v709 = vld [vmem:[%s687 + $0xf8] sm:$0xff]
      %v710 = vld [vmem:[%s687 + $0x108] sm:$0xff]
      %v711 = vld [vmem:[%s687 + $0x110] sm:$0xff]
      %v712 = vld [vmem:[%s687 + $0x120] sm:$0xff]
      %v713 = vld [vmem:[%s687 + $0x128] sm:$0xff]
      %v714 = vld [vmem:[%s687 + $0x138] sm:$0xff]
      %v715 = vld [vmem:[%s687 + $0x140] sm:$0xff]
      %v716 = vld [vmem:[%s687 + $0x150] sm:$0xff]
      %v717 = vld [vmem:[%s687 + $0x158] sm:$0xff]
      %v718 = vld [vmem:[%s687 + $0x168] sm:$0xff]
      %v719 = vld [vmem:[%s687 + $0x170] sm:$0xff]
      %v720 = vld [vmem:[%s687 + $0x1] sm:$0xff]
      %v721 = vld [vmem:[%s687 + $0x9] sm:$0xff]
      %v722 = vld [vmem:[%s687 + $0x19] sm:$0xff]
      %v723 = vld [vmem:[%s687 + $0x21] sm:$0xff]
      %v724 = vld [vmem:[%s687 + $0x31] sm:$0xff]
      %v725 = vld [vmem:[%s687 + $0x39] sm:$0xff]
      %v726 = vld [vmem:[%s687 + $0x49] sm:$0xff]
      %v727 = vld [vmem:[%s687 + $0x51] sm:$0xff]
      %v728 = vld [vmem:[%s687 + $0x61] sm:$0xff]
      %v729 = vld [vmem:[%s687 + $0x69] sm:$0xff]
      %v730 = vld [vmem:[%s687 + $0x79] sm:$0xff]
      %v731 = vld [vmem:[%s687 + $0x81] sm:$0xff]
      %v732 = vld [vmem:[%s687 + $0x91] sm:$0xff]
      %v733 = vld [vmem:[%s687 + $0x99] sm:$0xff]
      %v734 = vld [vmem:[%s687 + $0xa9] sm:$0xff]
      %v735 = vld [vmem:[%s687 + $0xb1] sm:$0xff]
      %v736 = vld [vmem:[%s687 + $0xc1] sm:$0xff]
      %v737 = vld [vmem:[%s687 + $0xc9] sm:$0xff]
      %v738 = vld [vmem:[%s687 + $0xd9] sm:$0xff]
      %v739 = vld [vmem:[%s687 + $0xe1] sm:$0xff]
      %v740 = vld [vmem:[%s687 + $0xf1] sm:$0xff]
      %v741 = vld [vmem:[%s687 + $0xf9] sm:$0xff]
      %v742 = vld [vmem:[%s687 + $0x109] sm:$0xff]
      %v743 = vld [vmem:[%s687 + $0x111] sm:$0xff]
      %v744 = vld [vmem:[%s687 + $0x121] sm:$0xff]
      %v745 = vld [vmem:[%s687 + $0x129] sm:$0xff]
      %v746 = vld [vmem:[%s687 + $0x139] sm:$0xff]
      %v747 = vld [vmem:[%s687 + $0x141] sm:$0xff]
      %v748 = vld [vmem:[%s687 + $0x151] sm:$0xff]
      %v749 = vld [vmem:[%s687 + $0x159] sm:$0xff]
      %v750 = vld [vmem:[%s687 + $0x169] sm:$0xff]
      %v751 = vld [vmem:[%s687 + $0x171] sm:$0xff]
      %v752 = vld [vmem:[%s687 + $0x2] sm:$0xff]
      %v753 = vld [vmem:[%s687 + $0xa] sm:$0xff]
      %v754 = vld [vmem:[%s687 + $0x1a] sm:$0xff]
      %v755 = vld [vmem:[%s687 + $0x22] sm:$0xff]
      %v756 = vld [vmem:[%s687 + $0x32] sm:$0xff]
      %v757 = vld [vmem:[%s687 + $0x3a] sm:$0xff]
      %v758 = vld [vmem:[%s687 + $0x4a] sm:$0xff]
      %v759 = vld [vmem:[%s687 + $0x52] sm:$0xff]
      %v760 = vld [vmem:[%s687 + $0x62] sm:$0xff]
      %v761 = vld [vmem:[%s687 + $0x6a] sm:$0xff]
      %v762 = vld [vmem:[%s687 + $0x7a] sm:$0xff]
      %v763 = vld [vmem:[%s687 + $0x82] sm:$0xff]
      %v764 = vld [vmem:[%s687 + $0x92] sm:$0xff]
      %v765 = vld [vmem:[%s687 + $0x9a] sm:$0xff]
      %v766 = vld [vmem:[%s687 + $0xaa] sm:$0xff]
      %v767 = vld [vmem:[%s687 + $0xb2] sm:$0xff]
      %v768 = vld [vmem:[%s687 + $0xc2] sm:$0xff]
      %v769 = vld [vmem:[%s687 + $0xca] sm:$0xff]
      %v770 = vld [vmem:[%s687 + $0xda] sm:$0xff]
      %v771 = vld [vmem:[%s687 + $0xe2] sm:$0xff]
      %v772 = vld [vmem:[%s687 + $0xf2] sm:$0xff]
      %v773 = vld [vmem:[%s687 + $0xfa] sm:$0xff]
      %v774 = vld [vmem:[%s687 + $0x10a] sm:$0xff]
      %v775 = vld [vmem:[%s687 + $0x112] sm:$0xff]
      %v776 = vld [vmem:[%s687 + $0x122] sm:$0xff]
      %v777 = vld [vmem:[%s687 + $0x12a] sm:$0xff]
      %v778 = vld [vmem:[%s687 + $0x13a] sm:$0xff]
      %v779 = vld [vmem:[%s687 + $0x142] sm:$0xff]
      %v780 = vld [vmem:[%s687 + $0x152] sm:$0xff]
      %v781 = vld [vmem:[%s687 + $0x15a] sm:$0xff]
      %v782 = vld [vmem:[%s687 + $0x16a] sm:$0xff]
      %v783 = vld [vmem:[%s687 + $0x172] sm:$0xff]
      %816 = vrot.lane.b32.xlu0 %v527, 32
      %v817 = vpop.permute.xlu0 %816
      %818 = vrot.lane.b32.xlu0 %v528, 32
      %v819 = vpop.permute.xlu0 %818
      %820 = vrot.lane.b32.xlu0 %v529, 32
      %v821 = vpop.permute.xlu0 %820
      %822 = vrot.lane.b32.xlu0 %v530, 32
      %v823 = vpop.permute.xlu0 %822
      %824 = vrot.lane.b32.xlu0 %v531, 32
      %v825 = vpop.permute.xlu0 %824
      %826 = vrot.lane.b32.xlu0 %v532, 32
      %v827 = vpop.permute.xlu0 %826
      %828 = vrot.lane.b32.xlu0 %v533, 32
      %v829 = vpop.permute.xlu0 %828
      %830 = vrot.lane.b32.xlu0 %v534, 32
      %v831 = vpop.permute.xlu0 %830
      %832 = vrot.lane.b32.xlu0 %v535, 32
      %v833 = vpop.permute.xlu0 %832
      %834 = vrot.lane.b32.xlu0 %v536, 32
      %v835 = vpop.permute.xlu0 %834
      %836 = vrot.lane.b32.xlu0 %v537, 32
      %v837 = vpop.permute.xlu0 %836
      %838 = vrot.lane.b32.xlu0 %v538, 32
      %v839 = vpop.permute.xlu0 %838
      %840 = vrot.lane.b32.xlu0 %v539, 32
      %v841 = vpop.permute.xlu0 %840
      %842 = vrot.lane.b32.xlu0 %v540, 32
      %v843 = vpop.permute.xlu0 %842
      %844 = vrot.lane.b32.xlu0 %v541, 32
      %v845 = vpop.permute.xlu0 %844
      %846 = vrot.lane.b32.xlu0 %v542, 32
      %v847 = vpop.permute.xlu0 %846
      %848 = vrot.lane.b32.xlu0 %v543, 32
      %v849 = vpop.permute.xlu0 %848
      %850 = vrot.lane.b32.xlu0 %v544, 32
      %v851 = vpop.permute.xlu0 %850
      %852 = vrot.lane.b32.xlu0 %v545, 32
      %v853 = vpop.permute.xlu0 %852
      %854 = vrot.lane.b32.xlu0 %v546, 32
      %v855 = vpop.permute.xlu0 %854
      %856 = vrot.lane.b32.xlu0 %v547, 32
      %v857 = vpop.permute.xlu0 %856
      %858 = vrot.lane.b32.xlu0 %v548, 32
      %v859 = vpop.permute.xlu0 %858
      %860 = vrot.lane.b32.xlu0 %v549, 32
      %v861 = vpop.permute.xlu0 %860
      %862 = vrot.lane.b32.xlu0 %v550, 32
      %v863 = vpop.permute.xlu0 %862
      %864 = vrot.lane.b32.xlu0 %v551, 32
      %v865 = vpop.permute.xlu0 %864
      %866 = vrot.lane.b32.xlu0 %v552, 32
      %v867 = vpop.permute.xlu0 %866
      %868 = vrot.lane.b32.xlu0 %v553, 32
      %v869 = vpop.permute.xlu0 %868
      %870 = vrot.lane.b32.xlu0 %v554, 32
      %v871 = vpop.permute.xlu0 %870
      %872 = vrot.lane.b32.xlu0 %v555, 32
      %v873 = vpop.permute.xlu0 %872
      %874 = vrot.lane.b32.xlu0 %v556, 32
      %v875 = vpop.permute.xlu0 %874
      %876 = vrot.lane.b32.xlu0 %v557, 32
      %v877 = vpop.permute.xlu0 %876
      %878 = vrot.lane.b32.xlu0 %v558, 32
      %v879 = vpop.permute.xlu0 %878
      %944 = vrot.lane.b32.xlu0 %v559, 64
      %v945 = vpop.permute.xlu0 %944
      %946 = vrot.lane.b32.xlu0 %v560, 64
      %v947 = vpop.permute.xlu0 %946
      %948 = vrot.lane.b32.xlu0 %v561, 64
      %v949 = vpop.permute.xlu0 %948
      %950 = vrot.lane.b32.xlu0 %v562, 64
      %v951 = vpop.permute.xlu0 %950
      %952 = vrot.lane.b32.xlu0 %v563, 64
      %v953 = vpop.permute.xlu0 %952
      %954 = vrot.lane.b32.xlu0 %v564, 64
      %v955 = vpop.permute.xlu0 %954
      %956 = vrot.lane.b32.xlu0 %v565, 64
      %v957 = vpop.permute.xlu0 %956
      %958 = vrot.lane.b32.xlu0 %v566, 64
      %v959 = vpop.permute.xlu0 %958
      %960 = vrot.lane.b32.xlu0 %v567, 64
      %v961 = vpop.permute.xlu0 %960
      %962 = vrot.lane.b32.xlu0 %v568, 64
      %v963 = vpop.permute.xlu0 %962
      %964 = vrot.lane.b32.xlu0 %v569, 64
      %v965 = vpop.permute.xlu0 %964
      %966 = vrot.lane.b32.xlu0 %v570, 64
      %v967 = vpop.permute.xlu0 %966
      %968 = vrot.lane.b32.xlu0 %v571, 64
      %v969 = vpop.permute.xlu0 %968
      %970 = vrot.lane.b32.xlu0 %v572, 64
      %v971 = vpop.permute.xlu0 %970
      %972 = vrot.lane.b32.xlu0 %v573, 64
      %v973 = vpop.permute.xlu0 %972
      %974 = vrot.lane.b32.xlu0 %v574, 64
      %v975 = vpop.permute.xlu0 %974
      %976 = vrot.lane.b32.xlu0 %v575, 64
      %v977 = vpop.permute.xlu0 %976
      %978 = vrot.lane.b32.xlu0 %v576, 64
      %v979 = vpop.permute.xlu0 %978
      %980 = vrot.lane.b32.xlu0 %v577, 64
      %v981 = vpop.permute.xlu0 %980
      %982 = vrot.lane.b32.xlu0 %v578, 64
      %v983 = vpop.permute.xlu0 %982
      %984 = vrot.lane.b32.xlu0 %v579, 64
      %v985 = vpop.permute.xlu0 %984
      %986 = vrot.lane.b32.xlu0 %v580, 64
      %v987 = vpop.permute.xlu0 %986
      %988 = vrot.lane.b32.xlu0 %v581, 64
      %v989 = vpop.permute.xlu0 %988
      %990 = vrot.lane.b32.xlu0 %v582, 64
      %v991 = vpop.permute.xlu0 %990
      %992 = vrot.lane.b32.xlu0 %v583, 64
      %v993 = vpop.permute.xlu0 %992
      %994 = vrot.lane.b32.xlu0 %v584, 64
      %v995 = vpop.permute.xlu0 %994
      %996 = vrot.lane.b32.xlu0 %v585, 64
      %v997 = vpop.permute.xlu0 %996
      %998 = vrot.lane.b32.xlu0 %v586, 64
      %v999 = vpop.permute.xlu0 %998
      %1000 = vrot.lane.b32.xlu0 %v587, 64
      %v1001 = vpop.permute.xlu0 %1000
      %1002 = vrot.lane.b32.xlu0 %v588, 64
      %v1003 = vpop.permute.xlu0 %1002
      %1004 = vrot.lane.b32.xlu0 %v589, 64
      %v1005 = vpop.permute.xlu0 %1004
      %1006 = vrot.lane.b32.xlu0 %v590, 64
      %v1007 = vpop.permute.xlu0 %1006
      %1072 = vrot.lane.b32.xlu0 %v591, 96
      %v1073 = vpop.permute.xlu0 %1072
      %1074 = vrot.lane.b32.xlu0 %v592, 96
      %v1075 = vpop.permute.xlu0 %1074
      %1076 = vrot.lane.b32.xlu0 %v593, 96
      %v1077 = vpop.permute.xlu0 %1076
      %1078 = vrot.lane.b32.xlu0 %v594, 96
      %v1079 = vpop.permute.xlu0 %1078
      %1080 = vrot.lane.b32.xlu0 %v595, 96
      %v1081 = vpop.permute.xlu0 %1080
      %1082 = vrot.lane.b32.xlu0 %v596, 96
      %v1083 = vpop.permute.xlu0 %1082
      %1084 = vrot.lane.b32.xlu0 %v597, 96
      %v1085 = vpop.permute.xlu0 %1084
      %1086 = vrot.lane.b32.xlu0 %v598, 96
      %v1087 = vpop.permute.xlu0 %1086
      %1088 = vrot.lane.b32.xlu0 %v599, 96
      %v1089 = vpop.permute.xlu0 %1088
      %1090 = vrot.lane.b32.xlu0 %v600, 96
      %v1091 = vpop.permute.xlu0 %1090
      %1092 = vrot.lane.b32.xlu0 %v601, 96
      %v1093 = vpop.permute.xlu0 %1092
      %1094 = vrot.lane.b32.xlu0 %v602, 96
      %v1095 = vpop.permute.xlu0 %1094
      %1096 = vrot.lane.b32.xlu0 %v603, 96
      %v1097 = vpop.permute.xlu0 %1096
      %1098 = vrot.lane.b32.xlu0 %v604, 96
      %v1099 = vpop.permute.xlu0 %1098
      %1100 = vrot.lane.b32.xlu0 %v605, 96
      %v1101 = vpop.permute.xlu0 %1100
      %1102 = vrot.lane.b32.xlu0 %v606, 96
      %v1103 = vpop.permute.xlu0 %1102
      %1104 = vrot.lane.b32.xlu0 %v607, 96
      %v1105 = vpop.permute.xlu0 %1104
      %1106 = vrot.lane.b32.xlu0 %v608, 96
      %v1107 = vpop.permute.xlu0 %1106
      %1108 = vrot.lane.b32.xlu0 %v609, 96
      %v1109 = vpop.permute.xlu0 %1108
      %1110 = vrot.lane.b32.xlu0 %v610, 96
      %v1111 = vpop.permute.xlu0 %1110
      %1112 = vrot.lane.b32.xlu0 %v611, 96
      %v1113 = vpop.permute.xlu0 %1112
      %1114 = vrot.lane.b32.xlu0 %v612, 96
      %v1115 = vpop.permute.xlu0 %1114
      %1116 = vrot.lane.b32.xlu0 %v613, 96
      %v1117 = vpop.permute.xlu0 %1116
      %1118 = vrot.lane.b32.xlu0 %v614, 96
      %v1119 = vpop.permute.xlu0 %1118
      %1120 = vrot.lane.b32.xlu0 %v615, 96
      %v1121 = vpop.permute.xlu0 %1120
      %1122 = vrot.lane.b32.xlu0 %v616, 96
      %v1123 = vpop.permute.xlu0 %1122
      %1124 = vrot.lane.b32.xlu0 %v617, 96
      %v1125 = vpop.permute.xlu0 %1124
      %1126 = vrot.lane.b32.xlu0 %v618, 96
      %v1127 = vpop.permute.xlu0 %1126
      %1128 = vrot.lane.b32.xlu0 %v619, 96
      %v1129 = vpop.permute.xlu0 %1128
      %1130 = vrot.lane.b32.xlu0 %v620, 96
      %v1131 = vpop.permute.xlu0 %1130
      %1132 = vrot.lane.b32.xlu0 %v621, 96
      %v1133 = vpop.permute.xlu0 %1132
      %1134 = vrot.lane.b32.xlu0 %v622, 96
      %v1135 = vpop.permute.xlu0 %1134
      %1200 = vrot.lane.b32.xlu0 %v655, 32
      %v1201 = vpop.permute.xlu0 %1200
      %1202 = vrot.lane.b32.xlu0 %v656, 32
      %v1203 = vpop.permute.xlu0 %1202
      %1204 = vrot.lane.b32.xlu0 %v657, 32
      %v1205 = vpop.permute.xlu0 %1204
      %1206 = vrot.lane.b32.xlu0 %v658, 32
      %v1207 = vpop.permute.xlu0 %1206
      %1208 = vrot.lane.b32.xlu0 %v659, 32
      %v1209 = vpop.permute.xlu0 %1208
      %1210 = vrot.lane.b32.xlu0 %v660, 32
      %v1211 = vpop.permute.xlu0 %1210
      %1212 = vrot.lane.b32.xlu0 %v661, 32
      %v1213 = vpop.permute.xlu0 %1212
      %1214 = vrot.lane.b32.xlu0 %v662, 32
      %v1215 = vpop.permute.xlu0 %1214
      %1216 = vrot.lane.b32.xlu0 %v663, 32
      %v1217 = vpop.permute.xlu0 %1216
      %1218 = vrot.lane.b32.xlu0 %v664, 32
      %v1219 = vpop.permute.xlu0 %1218
      %1220 = vrot.lane.b32.xlu0 %v665, 32
      %v1221 = vpop.permute.xlu0 %1220
      %1222 = vrot.lane.b32.xlu0 %v666, 32
      %v1223 = vpop.permute.xlu0 %1222
      %1224 = vrot.lane.b32.xlu0 %v667, 32
      %v1225 = vpop.permute.xlu0 %1224
      %1226 = vrot.lane.b32.xlu0 %v668, 32
      %v1227 = vpop.permute.xlu0 %1226
      %1228 = vrot.lane.b32.xlu0 %v669, 32
      %v1229 = vpop.permute.xlu0 %1228
      %1230 = vrot.lane.b32.xlu0 %v670, 32
      %v1231 = vpop.permute.xlu0 %1230
      %1232 = vrot.lane.b32.xlu0 %v671, 32
      %v1233 = vpop.permute.xlu0 %1232
      %1234 = vrot.lane.b32.xlu0 %v672, 32
      %v1235 = vpop.permute.xlu0 %1234
      %1236 = vrot.lane.b32.xlu0 %v673, 32
      %v1237 = vpop.permute.xlu0 %1236
      %1238 = vrot.lane.b32.xlu0 %v674, 32
      %v1239 = vpop.permute.xlu0 %1238
      %1240 = vrot.lane.b32.xlu0 %v675, 32
      %v1241 = vpop.permute.xlu0 %1240
      %1242 = vrot.lane.b32.xlu0 %v676, 32
      %v1243 = vpop.permute.xlu0 %1242
      %1244 = vrot.lane.b32.xlu0 %v677, 32
      %v1245 = vpop.permute.xlu0 %1244
      %1246 = vrot.lane.b32.xlu0 %v678, 32
      %v1247 = vpop.permute.xlu0 %1246
      %1248 = vrot.lane.b32.xlu0 %v679, 32
      %v1249 = vpop.permute.xlu0 %1248
      %1250 = vrot.lane.b32.xlu0 %v680, 32
      %v1251 = vpop.permute.xlu0 %1250
      %1252 = vrot.lane.b32.xlu0 %v681, 32
      %v1253 = vpop.permute.xlu0 %1252
      %1254 = vrot.lane.b32.xlu0 %v682, 32
      %v1255 = vpop.permute.xlu0 %1254
      %1256 = vrot.lane.b32.xlu0 %v683, 32
      %v1257 = vpop.permute.xlu0 %1256
      %1258 = vrot.lane.b32.xlu0 %v684, 32
      %v1259 = vpop.permute.xlu0 %1258
      %1260 = vrot.lane.b32.xlu0 %v685, 32
      %v1261 = vpop.permute.xlu0 %1260
      %1262 = vrot.lane.b32.xlu0 %v686, 32
      %v1263 = vpop.permute.xlu0 %1262
      %1328 = vrot.lane.b32.xlu0 %v688, 64
      %v1329 = vpop.permute.xlu0 %1328
      %1330 = vrot.lane.b32.xlu0 %v689, 64
      %v1331 = vpop.permute.xlu0 %1330
      %1332 = vrot.lane.b32.xlu0 %v690, 64
      %v1333 = vpop.permute.xlu0 %1332
      %1334 = vrot.lane.b32.xlu0 %v691, 64
      %v1335 = vpop.permute.xlu0 %1334
      %1336 = vrot.lane.b32.xlu0 %v692, 64
      %v1337 = vpop.permute.xlu0 %1336
      %1338 = vrot.lane.b32.xlu0 %v693, 64
      %v1339 = vpop.permute.xlu0 %1338
      %1340 = vrot.lane.b32.xlu0 %v694, 64
      %v1341 = vpop.permute.xlu0 %1340
      %1342 = vrot.lane.b32.xlu0 %v695, 64
      %v1343 = vpop.permute.xlu0 %1342
      %1344 = vrot.lane.b32.xlu0 %v696, 64
      %v1345 = vpop.permute.xlu0 %1344
      %1346 = vrot.lane.b32.xlu0 %v697, 64
      %v1347 = vpop.permute.xlu0 %1346
      %1348 = vrot.lane.b32.xlu0 %v698, 64
      %v1349 = vpop.permute.xlu0 %1348
      %1350 = vrot.lane.b32.xlu0 %v699, 64
      %v1351 = vpop.permute.xlu0 %1350
      %1352 = vrot.lane.b32.xlu0 %v700, 64
      %v1353 = vpop.permute.xlu0 %1352
      %1354 = vrot.lane.b32.xlu0 %v701, 64
      %v1355 = vpop.permute.xlu0 %1354
      %1356 = vrot.lane.b32.xlu0 %v702, 64
      %v1357 = vpop.permute.xlu0 %1356
      %1358 = vrot.lane.b32.xlu0 %v703, 64
      %v1359 = vpop.permute.xlu0 %1358
      %1360 = vrot.lane.b32.xlu0 %v704, 64
      %v1361 = vpop.permute.xlu0 %1360
      %1362 = vrot.lane.b32.xlu0 %v705, 64
      %v1363 = vpop.permute.xlu0 %1362
      %1364 = vrot.lane.b32.xlu0 %v706, 64
      %v1365 = vpop.permute.xlu0 %1364
      %1366 = vrot.lane.b32.xlu0 %v707, 64
      %v1367 = vpop.permute.xlu0 %1366
      %1368 = vrot.lane.b32.xlu0 %v708, 64
      %v1369 = vpop.permute.xlu0 %1368
      %1370 = vrot.lane.b32.xlu0 %v709, 64
      %v1371 = vpop.permute.xlu0 %1370
      %1372 = vrot.lane.b32.xlu0 %v710, 64
      %v1373 = vpop.permute.xlu0 %1372
      %1374 = vrot.lane.b32.xlu0 %v711, 64
      %v1375 = vpop.permute.xlu0 %1374
      %1376 = vrot.lane.b32.xlu0 %v712, 64
      %v1377 = vpop.permute.xlu0 %1376
      %1378 = vrot.lane.b32.xlu0 %v713, 64
      %v1379 = vpop.permute.xlu0 %1378
      %1380 = vrot.lane.b32.xlu0 %v714, 64
      %v1381 = vpop.permute.xlu0 %1380
      %1382 = vrot.lane.b32.xlu0 %v715, 64
      %v1383 = vpop.permute.xlu0 %1382
      %1384 = vrot.lane.b32.xlu0 %v716, 64
      %v1385 = vpop.permute.xlu0 %1384
      %1386 = vrot.lane.b32.xlu0 %v717, 64
      %v1387 = vpop.permute.xlu0 %1386
      %1388 = vrot.lane.b32.xlu0 %v718, 64
      %v1389 = vpop.permute.xlu0 %1388
      %1390 = vrot.lane.b32.xlu0 %v719, 64
      %v1391 = vpop.permute.xlu0 %1390
      %1456 = vrot.lane.b32.xlu0 %v720, 96
      %v1457 = vpop.permute.xlu0 %1456
      %1458 = vrot.lane.b32.xlu0 %v721, 96
      %v1459 = vpop.permute.xlu0 %1458
      %1460 = vrot.lane.b32.xlu0 %v722, 96
      %v1461 = vpop.permute.xlu0 %1460
      %1462 = vrot.lane.b32.xlu0 %v723, 96
      %v1463 = vpop.permute.xlu0 %1462
      %1464 = vrot.lane.b32.xlu0 %v724, 96
      %v1465 = vpop.permute.xlu0 %1464
      %1466 = vrot.lane.b32.xlu0 %v725, 96
      %v1467 = vpop.permute.xlu0 %1466
      %1468 = vrot.lane.b32.xlu0 %v726, 96
      %v1469 = vpop.permute.xlu0 %1468
      %1470 = vrot.lane.b32.xlu0 %v727, 96
      %v1471 = vpop.permute.xlu0 %1470
      %1472 = vrot.lane.b32.xlu0 %v728, 96
      %v1473 = vpop.permute.xlu0 %1472
      %1474 = vrot.lane.b32.xlu0 %v729, 96
      %v1475 = vpop.permute.xlu0 %1474
      %1476 = vrot.lane.b32.xlu0 %v730, 96
      %v1477 = vpop.permute.xlu0 %1476
      %1478 = vrot.lane.b32.xlu0 %v731, 96
      %v1479 = vpop.permute.xlu0 %1478
      %1480 = vrot.lane.b32.xlu0 %v732, 96
      %v1481 = vpop.permute.xlu0 %1480
      %1482 = vrot.lane.b32.xlu0 %v733, 96
      %v1483 = vpop.permute.xlu0 %1482
      %1484 = vrot.lane.b32.xlu0 %v734, 96
      %v1485 = vpop.permute.xlu0 %1484
      %1486 = vrot.lane.b32.xlu0 %v735, 96
      %v1487 = vpop.permute.xlu0 %1486
      %1488 = vrot.lane.b32.xlu0 %v736, 96
      %v1489 = vpop.permute.xlu0 %1488
      %1490 = vrot.lane.b32.xlu0 %v737, 96
      %v1491 = vpop.permute.xlu0 %1490
      %1492 = vrot.lane.b32.xlu0 %v738, 96
      %v1493 = vpop.permute.xlu0 %1492
      %1494 = vrot.lane.b32.xlu0 %v739, 96
      %v1495 = vpop.permute.xlu0 %1494
      %1496 = vrot.lane.b32.xlu0 %v740, 96
      %v1497 = vpop.permute.xlu0 %1496
      %1498 = vrot.lane.b32.xlu0 %v741, 96
      %v1499 = vpop.permute.xlu0 %1498
      %1500 = vrot.lane.b32.xlu0 %v742, 96
      %v1501 = vpop.permute.xlu0 %1500
      %1502 = vrot.lane.b32.xlu0 %v743, 96
      %v1503 = vpop.permute.xlu0 %1502
      %1504 = vrot.lane.b32.xlu0 %v744, 96
      %v1505 = vpop.permute.xlu0 %1504
      %1506 = vrot.lane.b32.xlu0 %v745, 96
      %v1507 = vpop.permute.xlu0 %1506
      %1508 = vrot.lane.b32.xlu0 %v746, 96
      %v1509 = vpop.permute.xlu0 %1508
      %1510 = vrot.lane.b32.xlu0 %v747, 96
      %v1511 = vpop.permute.xlu0 %1510
      %1512 = vrot.lane.b32.xlu0 %v748, 96
      %v1513 = vpop.permute.xlu0 %1512
      %1514 = vrot.lane.b32.xlu0 %v749, 96
      %v1515 = vpop.permute.xlu0 %1514
      %1516 = vrot.lane.b32.xlu0 %v750, 96
      %v1517 = vpop.permute.xlu0 %1516
      %1518 = vrot.lane.b32.xlu0 %v751, 96
      %v1519 = vpop.permute.xlu0 %1518
      %v1552 = vsel %vm406, %v495, %v817
      %v1553 = vsel %vm406, %v496, %v819
      %v1554 = vsel %vm406, %v497, %v821
      %v1555 = vsel %vm406, %v498, %v823
      %v1556 = vsel %vm406, %v499, %v825
      %v1557 = vsel %vm406, %v500, %v827
      %v1558 = vsel %vm406, %v501, %v829
      %v1559 = vsel %vm406, %v502, %v831
      %v1560 = vsel %vm406, %v503, %v833
      %v1561 = vsel %vm406, %v504, %v835
      %v1562 = vsel %vm406, %v505, %v837
      %v1563 = vsel %vm406, %v506, %v839
      %v1564 = vsel %vm406, %v507, %v841
      %v1565 = vsel %vm406, %v508, %v843
      %v1566 = vsel %vm406, %v509, %v845
      %v1567 = vsel %vm406, %v510, %v847
      %v1568 = vsel %vm406, %v511, %v849
      %v1569 = vsel %vm406, %v512, %v851
      %v1570 = vsel %vm406, %v513, %v853
      %v1571 = vsel %vm406, %v514, %v855
      %v1572 = vsel %vm406, %v515, %v857
      %v1573 = vsel %vm406, %v516, %v859
      %v1574 = vsel %vm406, %v517, %v861
      %v1575 = vsel %vm406, %v518, %v863
      %v1576 = vsel %vm406, %v519, %v865
      %v1577 = vsel %vm406, %v520, %v867
      %v1578 = vsel %vm406, %v521, %v869
      %v1579 = vsel %vm406, %v522, %v871
      %v1580 = vsel %vm406, %v523, %v873
      %v1581 = vsel %vm406, %v524, %v875
      %v1582 = vsel %vm406, %v525, %v877
      %v1583 = vsel %vm406, %v526, %v879
      %vm1584 = vcmask 523264
      %v1585 = vsel %vm1584, %v1552, %v945
      %v1586 = vsel %vm1584, %v1553, %v947
      %v1587 = vsel %vm1584, %v1554, %v949
      %v1588 = vsel %vm1584, %v1555, %v951
      %v1589 = vsel %vm1584, %v1556, %v953
      %v1590 = vsel %vm1584, %v1557, %v955
      %v1591 = vsel %vm1584, %v1558, %v957
      %v1592 = vsel %vm1584, %v1559, %v959
      %v1593 = vsel %vm1584, %v1560, %v961
      %v1594 = vsel %vm1584, %v1561, %v963
      %v1595 = vsel %vm1584, %v1562, %v965
      %v1596 = vsel %vm1584, %v1563, %v967
      %v1597 = vsel %vm1584, %v1564, %v969
      %v1598 = vsel %vm1584, %v1565, %v971
      %v1599 = vsel %vm1584, %v1566, %v973
      %v1600 = vsel %vm1584, %v1567, %v975
      %v1601 = vsel %vm1584, %v1568, %v977
      %v1602 = vsel %vm1584, %v1569, %v979
      %v1603 = vsel %vm1584, %v1570, %v981
      %v1604 = vsel %vm1584, %v1571, %v983
      %v1605 = vsel %vm1584, %v1572, %v985
      %v1606 = vsel %vm1584, %v1573, %v987
      %v1607 = vsel %vm1584, %v1574, %v989
      %v1608 = vsel %vm1584, %v1575, %v991
      %v1609 = vsel %vm1584, %v1576, %v993
      %v1610 = vsel %vm1584, %v1577, %v995
      %v1611 = vsel %vm1584, %v1578, %v997
      %v1612 = vsel %vm1584, %v1579, %v999
      %v1613 = vsel %vm1584, %v1580, %v1001
      %v1614 = vsel %vm1584, %v1581, %v1003
      %v1615 = vsel %vm1584, %v1582, %v1005
      %v1616 = vsel %vm1584, %v1583, %v1007
      %vm1617 = vcmask 785408
      %v1618 = vsel %vm1617, %v1585, %v1073
      %v1619 = vsel %vm1617, %v1586, %v1075
      %v1620 = vsel %vm1617, %v1587, %v1077
      %v1621 = vsel %vm1617, %v1588, %v1079
      %v1622 = vsel %vm1617, %v1589, %v1081
      %v1623 = vsel %vm1617, %v1590, %v1083
      %v1624 = vsel %vm1617, %v1591, %v1085
      %v1625 = vsel %vm1617, %v1592, %v1087
      %v1626 = vsel %vm1617, %v1593, %v1089
      %v1627 = vsel %vm1617, %v1594, %v1091
      %v1628 = vsel %vm1617, %v1595, %v1093
      %v1629 = vsel %vm1617, %v1596, %v1095
      %v1630 = vsel %vm1617, %v1597, %v1097
      %v1631 = vsel %vm1617, %v1598, %v1099
      %v1632 = vsel %vm1617, %v1599, %v1101
      %v1633 = vsel %vm1617, %v1600, %v1103
      %v1634 = vsel %vm1617, %v1601, %v1105
      %v1635 = vsel %vm1617, %v1602, %v1107
      %v1636 = vsel %vm1617, %v1603, %v1109
      %v1637 = vsel %vm1617, %v1604, %v1111
      %v1638 = vsel %vm1617, %v1605, %v1113
      %v1639 = vsel %vm1617, %v1606, %v1115
      %v1640 = vsel %vm1617, %v1607, %v1117
      %v1641 = vsel %vm1617, %v1608, %v1119
      %v1642 = vsel %vm1617, %v1609, %v1121
      %v1643 = vsel %vm1617, %v1610, %v1123
      %v1644 = vsel %vm1617, %v1611, %v1125
      %v1645 = vsel %vm1617, %v1612, %v1127
      %v1646 = vsel %vm1617, %v1613, %v1129
      %v1647 = vsel %vm1617, %v1614, %v1131
      %v1648 = vsel %vm1617, %v1615, %v1133
      %v1649 = vsel %vm1617, %v1616, %v1135
      %v1650 = vsel %vm406, %v623, %v1201
      %v1651 = vsel %vm406, %v624, %v1203
      %v1652 = vsel %vm406, %v625, %v1205
      %v1653 = vsel %vm406, %v626, %v1207
      %v1654 = vsel %vm406, %v627, %v1209
      %v1655 = vsel %vm406, %v628, %v1211
      %v1656 = vsel %vm406, %v629, %v1213
      %v1657 = vsel %vm406, %v630, %v1215
      %v1658 = vsel %vm406, %v631, %v1217
      %v1659 = vsel %vm406, %v632, %v1219
      %v1660 = vsel %vm406, %v633, %v1221
      %v1661 = vsel %vm406, %v634, %v1223
      %v1662 = vsel %vm406, %v635, %v1225
      %v1663 = vsel %vm406, %v636, %v1227
      %v1664 = vsel %vm406, %v637, %v1229
      %v1665 = vsel %vm406, %v638, %v1231
      %v1666 = vsel %vm406, %v639, %v1233
      %v1667 = vsel %vm406, %v640, %v1235
      %v1668 = vsel %vm406, %v641, %v1237
      %v1669 = vsel %vm406, %v642, %v1239
      %v1670 = vsel %vm406, %v643, %v1241
      %v1671 = vsel %vm406, %v644, %v1243
      %v1672 = vsel %vm406, %v645, %v1245
      %v1673 = vsel %vm406, %v646, %v1247
      %v1674 = vsel %vm406, %v647, %v1249
      %v1675 = vsel %vm406, %v648, %v1251
      %v1676 = vsel %vm406, %v649, %v1253
      %v1677 = vsel %vm406, %v650, %v1255
      %v1678 = vsel %vm406, %v651, %v1257
      %v1679 = vsel %vm406, %v652, %v1259
      %v1680 = vsel %vm406, %v653, %v1261
      %v1681 = vsel %vm406, %v654, %v1263
      %v1682 = vsel %vm1584, %v1650, %v1329
      %v1683 = vsel %vm1584, %v1651, %v1331
      %v1684 = vsel %vm1584, %v1652, %v1333
      %v1685 = vsel %vm1584, %v1653, %v1335
      %v1686 = vsel %vm1584, %v1654, %v1337
      %v1687 = vsel %vm1584, %v1655, %v1339
      %v1688 = vsel %vm1584, %v1656, %v1341
      %v1689 = vsel %vm1584, %v1657, %v1343
      %v1690 = vsel %vm1584, %v1658, %v1345
      %v1691 = vsel %vm1584, %v1659, %v1347
      %v1692 = vsel %vm1584, %v1660, %v1349
      %v1693 = vsel %vm1584, %v1661, %v1351
      %v1694 = vsel %vm1584, %v1662, %v1353
      %v1695 = vsel %vm1584, %v1663, %v1355
      %v1696 = vsel %vm1584, %v1664, %v1357
      %v1697 = vsel %vm1584, %v1665, %v1359
      %v1698 = vsel %vm1584, %v1666, %v1361
      %v1699 = vsel %vm1584, %v1667, %v1363
      %v1700 = vsel %vm1584, %v1668, %v1365
      %v1701 = vsel %vm1584, %v1669, %v1367
      %v1702 = vsel %vm1584, %v1670, %v1369
      %v1703 = vsel %vm1584, %v1671, %v1371
      %v1704 = vsel %vm1584, %v1672, %v1373
      %v1705 = vsel %vm1584, %v1673, %v1375
      %v1706 = vsel %vm1584, %v1674, %v1377
      %v1707 = vsel %vm1584, %v1675, %v1379
      %v1708 = vsel %vm1584, %v1676, %v1381
      %v1709 = vsel %vm1584, %v1677, %v1383
      %v1710 = vsel %vm1584, %v1678, %v1385
      %v1711 = vsel %vm1584, %v1679, %v1387
      %v1712 = vsel %vm1584, %v1680, %v1389
      %v1713 = vsel %vm1584, %v1681, %v1391
      %v1714 = vsel %vm1617, %v1682, %v1457
      %v1715 = vsel %vm1617, %v1683, %v1459
      %v1716 = vsel %vm1617, %v1684, %v1461
      %v1717 = vsel %vm1617, %v1685, %v1463
      %v1718 = vsel %vm1617, %v1686, %v1465
      %v1719 = vsel %vm1617, %v1687, %v1467
      %v1720 = vsel %vm1617, %v1688, %v1469
      %v1721 = vsel %vm1617, %v1689, %v1471
      %v1722 = vsel %vm1617, %v1690, %v1473
      %v1723 = vsel %vm1617, %v1691, %v1475
      %v1724 = vsel %vm1617, %v1692, %v1477
      %v1725 = vsel %vm1617, %v1693, %v1479
      %v1726 = vsel %vm1617, %v1694, %v1481
      %v1727 = vsel %vm1617, %v1695, %v1483
      %v1728 = vsel %vm1617, %v1696, %v1485
      %v1729 = vsel %vm1617, %v1697, %v1487
      %v1730 = vsel %vm1617, %v1698, %v1489
      %v1731 = vsel %vm1617, %v1699, %v1491
      %v1732 = vsel %vm1617, %v1700, %v1493
      %v1733 = vsel %vm1617, %v1701, %v1495
      %v1734 = vsel %vm1617, %v1702, %v1497
      %v1735 = vsel %vm1617, %v1703, %v1499
      %v1736 = vsel %vm1617, %v1704, %v1501
      %v1737 = vsel %vm1617, %v1705, %v1503
      %v1738 = vsel %vm1617, %v1706, %v1505
      %v1739 = vsel %vm1617, %v1707, %v1507
      %v1740 = vsel %vm1617, %v1708, %v1509
      %v1741 = vsel %vm1617, %v1709, %v1511
      %v1742 = vsel %vm1617, %v1710, %v1513
      %v1743 = vsel %vm1617, %v1711, %v1515
      %v1744 = vsel %vm1617, %v1712, %v1517
      %v1745 = vsel %vm1617, %v1713, %v1519
      %v1746 = vpack.c.bf16 %v1619, %v1618
      %v1747 = vpack.c.bf16 %v1715, %v1714
      %v1748 = vpack.c.bf16 %v753, %v752
      %v1749 = vpack.c.bf16 %v1621, %v1620
      %v1750 = vpack.c.bf16 %v1717, %v1716
      %v1751 = vpack.c.bf16 %v755, %v754
      %v1752 = vpack.c.bf16 %v1623, %v1622
      %v1753 = vpack.c.bf16 %v1719, %v1718
      %v1754 = vpack.c.bf16 %v757, %v756
      %v1755 = vpack.c.bf16 %v1625, %v1624
      %v1756 = vpack.c.bf16 %v1721, %v1720
      %v1757 = vpack.c.bf16 %v759, %v758
      %v1758 = vpack.c.bf16 %v1627, %v1626
      %v1759 = vpack.c.bf16 %v1723, %v1722
      %v1760 = vpack.c.bf16 %v761, %v760
      %v1761 = vpack.c.bf16 %v1629, %v1628
      %v1762 = vpack.c.bf16 %v1725, %v1724
      %v1763 = vpack.c.bf16 %v763, %v762
      %v1764 = vpack.c.bf16 %v1631, %v1630
      %v1765 = vpack.c.bf16 %v1727, %v1726
      %v1766 = vpack.c.bf16 %v765, %v764
      %v1767 = vpack.c.bf16 %v1633, %v1632
      %v1768 = vpack.c.bf16 %v1729, %v1728
      %v1769 = vpack.c.bf16 %v767, %v766
      %v1770 = vpack.c.bf16 %v1635, %v1634
      %v1771 = vpack.c.bf16 %v1731, %v1730
      %v1772 = vpack.c.bf16 %v769, %v768
      %v1773 = vpack.c.bf16 %v1637, %v1636
      %v1774 = vpack.c.bf16 %v1733, %v1732
      %v1775 = vpack.c.bf16 %v771, %v770
      %v1776 = vpack.c.bf16 %v1639, %v1638
      %v1777 = vpack.c.bf16 %v1735, %v1734
      %v1778 = vpack.c.bf16 %v773, %v772
      %v1779 = vpack.c.bf16 %v1641, %v1640
      %v1780 = vpack.c.bf16 %v1737, %v1736
      %v1781 = vpack.c.bf16 %v775, %v774
      %v1782 = vpack.c.bf16 %v1643, %v1642
      %v1783 = vpack.c.bf16 %v1739, %v1738
      %v1784 = vpack.c.bf16 %v777, %v776
      %v1785 = vpack.c.bf16 %v1645, %v1644
      %v1786 = vpack.c.bf16 %v1741, %v1740
      %v1787 = vpack.c.bf16 %v779, %v778
      %v1788 = vpack.c.bf16 %v1647, %v1646
      %v1789 = vpack.c.bf16 %v1743, %v1742
      %v1790 = vpack.c.bf16 %v781, %v780
      %v1791 = vpack.c.bf16 %v1649, %v1648
      %v1792 = vpack.c.bf16 %v1745, %v1744
      %v1793 = vpack.c.bf16 %v783, %v782
      %v1794 = vld [vmem:[%s3] sm:$0xf]
      %v1795 = vld [vmem:[%s3 + $0x4] sm:$0xf]
      %v1796 = vld [vmem:[%s3 + $0x8] sm:$0xf]
      %v1797 = vld [vmem:[%s3 + $0xc] sm:$0xf]
      %v1798 = vld [vmem:[%s3 + $0x10] sm:$0xf]
      %v1799 = vld [vmem:[%s3 + $0x14] sm:$0xf]
      %v1800 = vld [vmem:[%s3 + $0x18] sm:$0xf]
      %v1801 = vld [vmem:[%s3 + $0x1c] sm:$0xf]
      %v1802 = vld [vmem:[%s3 + $0x20] sm:$0xf]
      %v1803 = vld [vmem:[%s3 + $0x24] sm:$0xf]
      %v1804 = vld [vmem:[%s3 + $0x28] sm:$0xf]
      %v1805 = vld [vmem:[%s3 + $0x2c] sm:$0xf]
      %v1806 = vld [vmem:[%s3 + $0x30] sm:$0xf]
      %v1807 = vld [vmem:[%s3 + $0x34] sm:$0xf]
      %v1808 = vld [vmem:[%s3 + $0x38] sm:$0xf]
      %v1809 = vld [vmem:[%s3 + $0x3c] sm:$0xf]
      %v1810 = vld [vmem:[%s3 + $0x40] sm:$0xf]
      %v1811 = vld [vmem:[%s3 + $0x44] sm:$0xf]
      %v1812 = vld [vmem:[%s3 + $0x48] sm:$0xf]
      %v1813 = vld [vmem:[%s3 + $0x4c] sm:$0xf]
      %v1814 = vld [vmem:[%s3 + $0x50] sm:$0xf]
      %v1815 = vld [vmem:[%s3 + $0x54] sm:$0xf]
      %v1816 = vld [vmem:[%s3 + $0x58] sm:$0xf]
      %v1817 = vld [vmem:[%s3 + $0x5c] sm:$0xf]
      %v1818 = vld [vmem:[%s3 + $0x60] sm:$0xf]
      %v1819 = vld [vmem:[%s3 + $0x64] sm:$0xf]
      %v1820 = vld [vmem:[%s3 + $0x68] sm:$0xf]
      %v1821 = vld [vmem:[%s3 + $0x6c] sm:$0xf]
      %v1822 = vld [vmem:[%s3 + $0x70] sm:$0xf]
      %v1823 = vld [vmem:[%s3 + $0x74] sm:$0xf]
      %v1824 = vld [vmem:[%s3 + $0x78] sm:$0xf]
      %v1825 = vld [vmem:[%s3 + $0x7c] sm:$0xf]
      %v1826 = vld [vmem:[%s3 + $0x80] sm:$0xf]
      %v1827 = vld [vmem:[%s3 + $0x84] sm:$0xf]
      %v1828 = vld [vmem:[%s3 + $0x88] sm:$0xf]
      %v1829 = vld [vmem:[%s3 + $0x8c] sm:$0xf]
      %v1866 = vunpack.c.l.b16 %v1794
      %v1867 = vunpack.c.l.b16 %v1795
      %v1868 = vunpack.c.l.b16 %v1796
      %v1869 = vunpack.c.l.b16 %v1797
      %v1870 = vunpack.c.l.b16 %v1798
      %v1871 = vunpack.c.l.b16 %v1799
      %v1872 = vunpack.c.l.b16 %v1800
      %v1873 = vunpack.c.l.b16 %v1801
      %v1874 = vunpack.c.l.b16 %v1802
      %v1875 = vunpack.c.l.b16 %v1803
      %v1876 = vunpack.c.l.b16 %v1804
      %v1877 = vunpack.c.l.b16 %v1805
      %v1878 = vunpack.c.l.b16 %v1806
      %v1879 = vunpack.c.l.b16 %v1807
      %v1880 = vunpack.c.l.b16 %v1808
      %v1881 = vunpack.c.l.b16 %v1809
      %v1882 = vunpack.c.l.b16 %v1810
      %v1883 = vunpack.c.l.b16 %v1811
      %v1884 = vunpack.c.l.b16 %v1812
      %v1885 = vunpack.c.l.b16 %v1813
      %v1886 = vunpack.c.l.b16 %v1814
      %v1887 = vunpack.c.l.b16 %v1815
      %v1888 = vunpack.c.l.b16 %v1816
      %v1889 = vunpack.c.l.b16 %v1817
      %v1890 = vunpack.c.l.b16 %v1818
      %v1891 = vunpack.c.l.b16 %v1819
      %v1892 = vunpack.c.l.b16 %v1820
      %v1893 = vunpack.c.l.b16 %v1821
      %v1894 = vunpack.c.l.b16 %v1822
      %v1895 = vunpack.c.l.b16 %v1823
      %v1896 = vunpack.c.l.b16 %v1824
      %v1897 = vunpack.c.l.b16 %v1825
      %v1898 = vunpack.c.l.b16 %v1826
      %v1899 = vunpack.c.l.b16 %v1827
      %v1900 = vunpack.c.l.b16 %v1828
      %v1901 = vunpack.c.l.b16 %v1829
      %v1902 = vpack.c.b16 %v1867, %v1866
      %v1903 = vpack.c.b16 %v1869, %v1868
      %v1904 = vpack.c.b16 %v1871, %v1870
      %v1905 = vpack.c.b16 %v1873, %v1872
      %v1906 = vpack.c.b16 %v1875, %v1874
      %v1907 = vpack.c.b16 %v1877, %v1876
      %v1908 = vpack.c.b16 %v1879, %v1878
      %v1909 = vpack.c.b16 %v1881, %v1880
      %v1910 = vpack.c.b16 %v1883, %v1882
      %v1911 = vpack.c.b16 %v1885, %v1884
      %v1912 = vpack.c.b16 %v1887, %v1886
      %v1913 = vpack.c.b16 %v1889, %v1888
      %v1914 = vpack.c.b16 %v1891, %v1890
      %v1915 = vpack.c.b16 %v1893, %v1892
      %v1916 = vpack.c.b16 %v1895, %v1894
      %v1917 = vpack.c.b16 %v1897, %v1896
      %v1918 = vpack.c.b16 %v1899, %v1898
      %v1919 = vpack.c.b16 %v1901, %v1900
      %v1939 = vsel %vm406, %v1748, 0
      %v1942 = vsel %vm406, %v1751, 0
      %v1945 = vsel %vm406, %v1754, 0
      %v1948 = vsel %vm406, %v1757, 0
      %v1951 = vsel %vm406, %v1760, 0
      %v1954 = vsel %vm406, %v1763, 0
      %v1957 = vsel %vm406, %v1766, 0
      %v1960 = vsel %vm406, %v1769, 0
      %v1963 = vsel %vm406, %v1772, 0
      %v1966 = vsel %vm406, %v1775, 0
      %v1969 = vsel %vm406, %v1778, 0
      %v1972 = vsel %vm406, %v1781, 0
      %v1975 = vsel %vm406, %v1784, 0
      %v1978 = vsel %vm406, %v1787, 0
      %v1981 = vsel %vm406, %v1790, 0
      %v1984 = vsel %vm406, %v1793, 0
      %1986 = vmatpush.bf16.msra.mxu0 %v1909
      %1987 = vmatpush.bf16.msra.mxu0 %v1908
      %1988 = vmatpush.bf16.msra.mxu0 %v1907
      %1989 = vmatpush.bf16.msra.mxu0 %v1906
      %1990 = vmatpush.bf16.msra.mxu0 %v1905
      %1991 = vmatpush.bf16.msra.mxu0 %v1904
      %1992 = vmatpush.bf16.msra.mxu0 %v1903
      %1993 = vmatpush.bf16.msra.mxu0 %v1902
      %1994 = vmatmul.bf16.gmra.mxu0 %v1746
      %v1995 = vpop.f32.mrf.mxu0
      %v1996 = vadd.f32 0.0, %v1995
      %v1997 = vpop.f32.mrf.mxu0
      %v1998 = vadd.f32 0.0, %v1997
      %1999 = vmatmul.bf16.gmra.mxu0 %v1749
      %v2000 = vpop.f32.mrf.mxu0
      %v2001 = vadd.f32 0.0, %v2000
      %v2002 = vpop.f32.mrf.mxu0
      %v2003 = vadd.f32 0.0, %v2002
      %2004 = vmatmul.bf16.gmra.mxu0 %v1752
      %v2005 = vpop.f32.mrf.mxu0
      %v2006 = vadd.f32 0.0, %v2005
      %v2007 = vpop.f32.mrf.mxu0
      %v2008 = vadd.f32 0.0, %v2007
      %2009 = vmatmul.bf16.gmra.mxu0 %v1755
      %v2010 = vpop.f32.mrf.mxu0
      %v2011 = vadd.f32 0.0, %v2010
      %v2012 = vpop.f32.mrf.mxu0
      %v2013 = vadd.f32 0.0, %v2012
      %2014 = vmatmul.bf16.gmra.mxu0 %v1758
      %v2015 = vpop.f32.mrf.mxu0
      %v2016 = vadd.f32 0.0, %v2015
      %v2017 = vpop.f32.mrf.mxu0
      %v2018 = vadd.f32 0.0, %v2017
      %2019 = vmatmul.bf16.gmra.mxu0 %v1761
      %v2020 = vpop.f32.mrf.mxu0
      %v2021 = vadd.f32 0.0, %v2020
      %v2022 = vpop.f32.mrf.mxu0
      %v2023 = vadd.f32 0.0, %v2022
      %2024 = vmatmul.bf16.gmra.mxu0 %v1764
      %v2025 = vpop.f32.mrf.mxu0
      %v2026 = vadd.f32 0.0, %v2025
      %v2027 = vpop.f32.mrf.mxu0
      %v2028 = vadd.f32 0.0, %v2027
      %2029 = vmatmul.bf16.gmra.mxu0 %v1767
      %v2030 = vpop.f32.mrf.mxu0
      %v2031 = vadd.f32 0.0, %v2030
      %v2032 = vpop.f32.mrf.mxu0
      %v2033 = vadd.f32 0.0, %v2032
      %2034 = vmatmul.bf16.gmra.mxu0 %v1770
      %v2035 = vpop.f32.mrf.mxu0
      %v2036 = vadd.f32 0.0, %v2035
      %v2037 = vpop.f32.mrf.mxu0
      %v2038 = vadd.f32 0.0, %v2037
      %2039 = vmatmul.bf16.gmra.mxu0 %v1773
      %v2040 = vpop.f32.mrf.mxu0
      %v2041 = vadd.f32 0.0, %v2040
      %v2042 = vpop.f32.mrf.mxu0
      %v2043 = vadd.f32 0.0, %v2042
      %2044 = vmatmul.bf16.gmra.mxu0 %v1776
      %v2045 = vpop.f32.mrf.mxu0
      %v2046 = vadd.f32 0.0, %v2045
      %v2047 = vpop.f32.mrf.mxu0
      %v2048 = vadd.f32 0.0, %v2047
      %2049 = vmatmul.bf16.gmra.mxu0 %v1779
      %v2050 = vpop.f32.mrf.mxu0
      %v2051 = vadd.f32 0.0, %v2050
      %v2052 = vpop.f32.mrf.mxu0
      %v2053 = vadd.f32 0.0, %v2052
      %2054 = vmatmul.bf16.gmra.mxu0 %v1782
      %v2055 = vpop.f32.mrf.mxu0
      %v2056 = vadd.f32 0.0, %v2055
      %v2057 = vpop.f32.mrf.mxu0
      %v2058 = vadd.f32 0.0, %v2057
      %2059 = vmatmul.bf16.gmra.mxu0 %v1785
      %v2060 = vpop.f32.mrf.mxu0
      %v2061 = vadd.f32 0.0, %v2060
      %v2062 = vpop.f32.mrf.mxu0
      %v2063 = vadd.f32 0.0, %v2062
      %2064 = vmatmul.bf16.gmra.mxu0 %v1788
      %v2065 = vpop.f32.mrf.mxu0
      %v2066 = vadd.f32 0.0, %v2065
      %v2067 = vpop.f32.mrf.mxu0
      %v2068 = vadd.f32 0.0, %v2067
      %2069 = vmatmul.bf16.gmra.mxu0 %v1791
      %v2070 = vpop.f32.mrf.mxu0
      %v2071 = vadd.f32 0.0, %v2070
      %v2072 = vpop.f32.mrf.mxu0
      %v2073 = vadd.f32 0.0, %v2072
      %2074 = vdwg.mxu0
      %2075 = vmatpush.bf16.msra.mxu0 %v1917
      %2076 = vmatpush.bf16.msra.mxu0 %v1916
      %2077 = vmatpush.bf16.msra.mxu0 %v1915
      %2078 = vmatpush.bf16.msra.mxu0 %v1914
      %2079 = vmatpush.bf16.msra.mxu0 %v1913
      %2080 = vmatpush.bf16.msra.mxu0 %v1912
      %2081 = vmatpush.bf16.msra.mxu0 %v1911
      %2082 = vmatpush.bf16.msra.mxu0 %v1910
      %2083 = vmatmul.bf16.gmra.mxu0 %v1747
      %v2084 = vpop.f32.mrf.mxu0
      %v2085 = vadd.f32 %v1996, %v2084
      %v2086 = vpop.f32.mrf.mxu0
      %v2087 = vadd.f32 %v1998, %v2086
      %2088 = vmatmul.bf16.gmra.mxu0 %v1750
      %v2089 = vpop.f32.mrf.mxu0
      %v2090 = vadd.f32 %v2001, %v2089
      %v2091 = vpop.f32.mrf.mxu0
      %v2092 = vadd.f32 %v2003, %v2091
      %2093 = vmatmul.bf16.gmra.mxu0 %v1753
      %v2094 = vpop.f32.mrf.mxu0
      %v2095 = vadd.f32 %v2006, %v2094
      %v2096 = vpop.f32.mrf.mxu0
      %v2097 = vadd.f32 %v2008, %v2096
      %2098 = vmatmul.bf16.gmra.mxu0 %v1756
      %v2099 = vpop.f32.mrf.mxu0
      %v2100 = vadd.f32 %v2011, %v2099
      %v2101 = vpop.f32.mrf.mxu0
      %v2102 = vadd.f32 %v2013, %v2101
      %2103 = vmatmul.bf16.gmra.mxu0 %v1759
      %v2104 = vpop.f32.mrf.mxu0
      %v2105 = vadd.f32 %v2016, %v2104
      %v2106 = vpop.f32.mrf.mxu0
      %v2107 = vadd.f32 %v2018, %v2106
      %2108 = vmatmul.bf16.gmra.mxu0 %v1762
      %v2109 = vpop.f32.mrf.mxu0
      %v2110 = vadd.f32 %v2021, %v2109
      %v2111 = vpop.f32.mrf.mxu0
      %v2112 = vadd.f32 %v2023, %v2111
      %2113 = vmatmul.bf16.gmra.mxu0 %v1765
      %v2114 = vpop.f32.mrf.mxu0
      %v2115 = vadd.f32 %v2026, %v2114
      %v2116 = vpop.f32.mrf.mxu0
      %v2117 = vadd.f32 %v2028, %v2116
      %2118 = vmatmul.bf16.gmra.mxu0 %v1768
      %v2119 = vpop.f32.mrf.mxu0
      %v2120 = vadd.f32 %v2031, %v2119
      %v2121 = vpop.f32.mrf.mxu0
      %v2122 = vadd.f32 %v2033, %v2121
      %2123 = vmatmul.bf16.gmra.mxu0 %v1771
      %v2124 = vpop.f32.mrf.mxu0
      %v2125 = vadd.f32 %v2036, %v2124
      %v2126 = vpop.f32.mrf.mxu0
      %v2127 = vadd.f32 %v2038, %v2126
      %2128 = vmatmul.bf16.gmra.mxu0 %v1774
      %v2129 = vpop.f32.mrf.mxu0
      %v2130 = vadd.f32 %v2041, %v2129
      %v2131 = vpop.f32.mrf.mxu0
      %v2132 = vadd.f32 %v2043, %v2131
      %2133 = vmatmul.bf16.gmra.mxu0 %v1777
      %v2134 = vpop.f32.mrf.mxu0
      %v2135 = vadd.f32 %v2046, %v2134
      %v2136 = vpop.f32.mrf.mxu0
      %v2137 = vadd.f32 %v2048, %v2136
      %2138 = vmatmul.bf16.gmra.mxu0 %v1780
      %v2139 = vpop.f32.mrf.mxu0
      %v2140 = vadd.f32 %v2051, %v2139
      %v2141 = vpop.f32.mrf.mxu0
      %v2142 = vadd.f32 %v2053, %v2141
      %2143 = vmatmul.bf16.gmra.mxu0 %v1783
      %v2144 = vpop.f32.mrf.mxu0
      %v2145 = vadd.f32 %v2056, %v2144
      %v2146 = vpop.f32.mrf.mxu0
      %v2147 = vadd.f32 %v2058, %v2146
      %2148 = vmatmul.bf16.gmra.mxu0 %v1786
      %v2149 = vpop.f32.mrf.mxu0
      %v2150 = vadd.f32 %v2061, %v2149
      %v2151 = vpop.f32.mrf.mxu0
      %v2152 = vadd.f32 %v2063, %v2151
      %2153 = vmatmul.bf16.gmra.mxu0 %v1789
      %v2154 = vpop.f32.mrf.mxu0
      %v2155 = vadd.f32 %v2066, %v2154
      %v2156 = vpop.f32.mrf.mxu0
      %v2157 = vadd.f32 %v2068, %v2156
      %2158 = vmatmul.bf16.gmra.mxu0 %v1792
      %v2159 = vpop.f32.mrf.mxu0
      %v2160 = vadd.f32 %v2071, %v2159
      %v2161 = vpop.f32.mrf.mxu0
      %v2162 = vadd.f32 %v2073, %v2161
      %2163 = vdwg.mxu0
      %2164 = vmatpush.bf16.msra.mxu0 0
      %2165 = vmatpush.bf16.msra.mxu0 0
      %2166 = vmatpush.bf16.msra.mxu0 0
      %2167 = vmatpush.bf16.msra.mxu0 0
      %2168 = vmatpush.bf16.msra.mxu0 0
      %2169 = vmatpush.bf16.msra.mxu0 0
      %2170 = vmatpush.bf16.msra.mxu0 %v1919
      %2171 = vmatpush.bf16.msra.mxu0 %v1918
      %2172 = vmatmul.bf16.gmra.mxu0 %v1939
      %v2173 = vpop.f32.mrf.mxu0
      %v2174 = vadd.f32 %v2085, %v2173
      %v2175 = vpop.f32.mrf.mxu0
      %v2176 = vadd.f32 %v2087, %v2175
      %2177 = vmatmul.bf16.gmra.mxu0 %v1942
      %v2178 = vpop.f32.mrf.mxu0
      %v2179 = vadd.f32 %v2090, %v2178
      %v2180 = vpop.f32.mrf.mxu0
      %v2181 = vadd.f32 %v2092, %v2180
      %2182 = vmatmul.bf16.gmra.mxu0 %v1945
      %v2183 = vpop.f32.mrf.mxu0
      %v2184 = vadd.f32 %v2095, %v2183
      %v2185 = vpop.f32.mrf.mxu0
      %v2186 = vadd.f32 %v2097, %v2185
      %2187 = vmatmul.bf16.gmra.mxu0 %v1948
      %v2188 = vpop.f32.mrf.mxu0
      %v2189 = vadd.f32 %v2100, %v2188
      %v2190 = vpop.f32.mrf.mxu0
      %v2191 = vadd.f32 %v2102, %v2190
      %2192 = vmatmul.bf16.gmra.mxu0 %v1951
      %v2193 = vpop.f32.mrf.mxu0
      %v2194 = vadd.f32 %v2105, %v2193
      %v2195 = vpop.f32.mrf.mxu0
      %v2196 = vadd.f32 %v2107, %v2195
      %2197 = vmatmul.bf16.gmra.mxu0 %v1954
      %v2198 = vpop.f32.mrf.mxu0
      %v2199 = vadd.f32 %v2110, %v2198
      %v2200 = vpop.f32.mrf.mxu0
      %v2201 = vadd.f32 %v2112, %v2200
      %2202 = vmatmul.bf16.gmra.mxu0 %v1957
      %v2203 = vpop.f32.mrf.mxu0
      %v2204 = vadd.f32 %v2115, %v2203
      %v2205 = vpop.f32.mrf.mxu0
      %v2206 = vadd.f32 %v2117, %v2205
      %2207 = vmatmul.bf16.gmra.mxu0 %v1960
      %v2208 = vpop.f32.mrf.mxu0
      %v2209 = vadd.f32 %v2120, %v2208
      %v2210 = vpop.f32.mrf.mxu0
      %v2211 = vadd.f32 %v2122, %v2210
      %2212 = vmatmul.bf16.gmra.mxu0 %v1963
      %v2213 = vpop.f32.mrf.mxu0
      %v2214 = vadd.f32 %v2125, %v2213
      %v2215 = vpop.f32.mrf.mxu0
      %v2216 = vadd.f32 %v2127, %v2215
      %2217 = vmatmul.bf16.gmra.mxu0 %v1966
      %v2218 = vpop.f32.mrf.mxu0
      %v2219 = vadd.f32 %v2130, %v2218
      %v2220 = vpop.f32.mrf.mxu0
      %v2221 = vadd.f32 %v2132, %v2220
      %2222 = vmatmul.bf16.gmra.mxu0 %v1969
      %v2223 = vpop.f32.mrf.mxu0
      %v2224 = vadd.f32 %v2135, %v2223
      %v2225 = vpop.f32.mrf.mxu0
      %v2226 = vadd.f32 %v2137, %v2225
      %2227 = vmatmul.bf16.gmra.mxu0 %v1972
      %v2228 = vpop.f32.mrf.mxu0
      %v2229 = vadd.f32 %v2140, %v2228
      %v2230 = vpop.f32.mrf.mxu0
      %v2231 = vadd.f32 %v2142, %v2230
      %2232 = vmatmul.bf16.gmra.mxu0 %v1975
      %v2233 = vpop.f32.mrf.mxu0
      %v2234 = vadd.f32 %v2145, %v2233
      %v2235 = vpop.f32.mrf.mxu0
      %v2236 = vadd.f32 %v2147, %v2235
      %2237 = vmatmul.bf16.gmra.mxu0 %v1978
      %v2238 = vpop.f32.mrf.mxu0
      %v2239 = vadd.f32 %v2150, %v2238
      %v2240 = vpop.f32.mrf.mxu0
      %v2241 = vadd.f32 %v2152, %v2240
      %2242 = vmatmul.bf16.gmra.mxu0 %v1981
      %v2243 = vpop.f32.mrf.mxu0
      %v2244 = vadd.f32 %v2155, %v2243
      %v2245 = vpop.f32.mrf.mxu0
      %v2246 = vadd.f32 %v2157, %v2245
      %2247 = vmatmul.bf16.gmra.mxu0 %v1984
      %v2248 = vpop.f32.mrf.mxu0
      %v2249 = vadd.f32 %v2160, %v2248
      %v2250 = vpop.f32.mrf.mxu0
      %v2251 = vadd.f32 %v2162, %v2250
      %2252 = vdwg.mxu0
      %v2253 = vsel %vm406, %v2174, 0.0
      %v2254 = vsel %vm406, %v2176, 0.0
      %v2255 = vadd.f32 %v2253, %v2254
      %v2256 = vsel %vm406, %v2179, 0.0
      %v2257 = vadd.f32 %v2255, %v2256
      %v2258 = vsel %vm406, %v2181, 0.0
      %v2259 = vadd.f32 %v2257, %v2258
      %v2260 = vsel %vm406, %v2184, 0.0
      %v2261 = vadd.f32 %v2259, %v2260
      %v2262 = vsel %vm406, %v2186, 0.0
      %v2263 = vadd.f32 %v2261, %v2262
      %v2264 = vsel %vm406, %v2189, 0.0
      %v2265 = vadd.f32 %v2263, %v2264
      %v2266 = vsel %vm406, %v2191, 0.0
      %v2267 = vadd.f32 %v2265, %v2266
      %v2268 = vsel %vm406, %v2194, 0.0
      %v2269 = vadd.f32 %v2267, %v2268
      %v2270 = vsel %vm406, %v2196, 0.0
      %v2271 = vadd.f32 %v2269, %v2270
      %v2272 = vsel %vm406, %v2199, 0.0
      %v2273 = vadd.f32 %v2271, %v2272
      %v2274 = vsel %vm406, %v2201, 0.0
      %v2275 = vadd.f32 %v2273, %v2274
      %v2276 = vsel %vm406, %v2204, 0.0
      %v2277 = vadd.f32 %v2275, %v2276
      %v2278 = vsel %vm406, %v2206, 0.0
      %v2279 = vadd.f32 %v2277, %v2278
      %v2280 = vsel %vm406, %v2209, 0.0
      %v2281 = vadd.f32 %v2279, %v2280
      %v2282 = vsel %vm406, %v2211, 0.0
      %v2283 = vadd.f32 %v2281, %v2282
      %v2284 = vsel %vm406, %v2214, 0.0
      %v2285 = vadd.f32 %v2283, %v2284
      %v2286 = vsel %vm406, %v2216, 0.0
      %v2287 = vadd.f32 %v2285, %v2286
      %v2288 = vsel %vm406, %v2219, 0.0
      %v2289 = vadd.f32 %v2287, %v2288
      %v2290 = vsel %vm406, %v2221, 0.0
      %v2291 = vadd.f32 %v2289, %v2290
      %v2292 = vsel %vm406, %v2224, 0.0
      %v2293 = vadd.f32 %v2291, %v2292
      %v2294 = vsel %vm406, %v2226, 0.0
      %v2295 = vadd.f32 %v2293, %v2294
      %v2296 = vsel %vm406, %v2229, 0.0
      %v2297 = vadd.f32 %v2295, %v2296
      %v2298 = vsel %vm406, %v2231, 0.0
      %v2299 = vadd.f32 %v2297, %v2298
      %v2300 = vsel %vm406, %v2234, 0.0
      %v2301 = vadd.f32 %v2299, %v2300
      %v2302 = vsel %vm406, %v2236, 0.0
      %v2303 = vadd.f32 %v2301, %v2302
      %v2304 = vsel %vm406, %v2239, 0.0
      %v2305 = vadd.f32 %v2303, %v2304
      %v2306 = vsel %vm406, %v2241, 0.0
      %v2307 = vadd.f32 %v2305, %v2306
      %v2308 = vsel %vm406, %v2244, 0.0
      %v2309 = vadd.f32 %v2307, %v2308
      %v2310 = vsel %vm406, %v2246, 0.0
      %v2311 = vadd.f32 %v2309, %v2310
      %v2312 = vsel %vm406, %v2249, 0.0
      %v2313 = vadd.f32 %v2311, %v2312
      %v2314 = vsel %vm406, %v2251, 0.0
      %v2315 = vadd.f32 %v2313, %v2314
      %v2316 = vrot.slane %v2315, 4
      %v2317 = vadd.f32 %v2315, %v2316
      %v2318 = vrot.slane %v2317, 2
      %v2319 = vadd.f32 %v2317, %v2318
      %v2320 = vrot.slane %v2319, 1
      %v2321 = vadd.f32 %v2319, %v2320
      %vm2322 = vcmask 253952
      %2323 = vst.msk [vmem:[%s265] sm:$0x1] %vm2322, %v2321
      %v2324 = vmul.f32 %v2174, %v2174
      %v2325 = vmul.f32 %v2176, %v2176
      %v2326 = vmul.f32 %v2179, %v2179
      %v2327 = vmul.f32 %v2181, %v2181
      %v2328 = vmul.f32 %v2184, %v2184
      %v2329 = vmul.f32 %v2186, %v2186
      %v2330 = vmul.f32 %v2189, %v2189
      %v2331 = vmul.f32 %v2191, %v2191
      %v2332 = vmul.f32 %v2194, %v2194
      %v2333 = vmul.f32 %v2196, %v2196
      %v2334 = vmul.f32 %v2199, %v2199
      %v2335 = vmul.f32 %v2201, %v2201
      %v2336 = vmul.f32 %v2204, %v2204
      %v2337 = vmul.f32 %v2206, %v2206
      %v2338 = vmul.f32 %v2209, %v2209
      %v2339 = vmul.f32 %v2211, %v2211
      %v2340 = vmul.f32 %v2214, %v2214
      %v2341 = vmul.f32 %v2216, %v2216
      %v2342 = vmul.f32 %v2219, %v2219
      %v2343 = vmul.f32 %v2221, %v2221
      %v2344 = vmul.f32 %v2224, %v2224
      %v2345 = vmul.f32 %v2226, %v2226
      %v2346 = vmul.f32 %v2229, %v2229
      %v2347 = vmul.f32 %v2231, %v2231
      %v2348 = vmul.f32 %v2234, %v2234
      %v2349 = vmul.f32 %v2236, %v2236
      %v2350 = vmul.f32 %v2239, %v2239
      %v2351 = vmul.f32 %v2241, %v2241
      %v2352 = vmul.f32 %v2244, %v2244
      %v2353 = vmul.f32 %v2246, %v2246
      %v2354 = vmul.f32 %v2249, %v2249
      %v2355 = vmul.f32 %v2251, %v2251
      %v2356 = vsel %vm406, %v2324, 0.0
      %v2357 = vsel %vm406, %v2325, 0.0
      %v2358 = vadd.f32 %v2356, %v2357
      %v2359 = vsel %vm406, %v2326, 0.0
      %v2360 = vadd.f32 %v2358, %v2359
      %v2361 = vsel %vm406, %v2327, 0.0
      %v2362 = vadd.f32 %v2360, %v2361
      %v2363 = vsel %vm406, %v2328, 0.0
      %v2364 = vadd.f32 %v2362, %v2363
      %v2365 = vsel %vm406, %v2329, 0.0
      %v2366 = vadd.f32 %v2364, %v2365
      %v2367 = vsel %vm406, %v2330, 0.0
      %v2368 = vadd.f32 %v2366, %v2367
      %v2369 = vsel %vm406, %v2331, 0.0
      %v2370 = vadd.f32 %v2368, %v2369
      %v2371 = vsel %vm406, %v2332, 0.0
      %v2372 = vadd.f32 %v2370, %v2371
      %v2373 = vsel %vm406, %v2333, 0.0
      %v2374 = vadd.f32 %v2372, %v2373
      %v2375 = vsel %vm406, %v2334, 0.0
      %v2376 = vadd.f32 %v2374, %v2375
      %v2377 = vsel %vm406, %v2335, 0.0
      %v2378 = vadd.f32 %v2376, %v2377
      %v2379 = vsel %vm406, %v2336, 0.0
      %v2380 = vadd.f32 %v2378, %v2379
      %v2381 = vsel %vm406, %v2337, 0.0
      %v2382 = vadd.f32 %v2380, %v2381
      %v2383 = vsel %vm406, %v2338, 0.0
      %v2384 = vadd.f32 %v2382, %v2383
      %v2385 = vsel %vm406, %v2339, 0.0
      %v2386 = vadd.f32 %v2384, %v2385
      %v2387 = vsel %vm406, %v2340, 0.0
      %v2388 = vadd.f32 %v2386, %v2387
      %v2389 = vsel %vm406, %v2341, 0.0
      %v2390 = vadd.f32 %v2388, %v2389
      %v2391 = vsel %vm406, %v2342, 0.0
      %v2392 = vadd.f32 %v2390, %v2391
      %v2393 = vsel %vm406, %v2343, 0.0
      %v2394 = vadd.f32 %v2392, %v2393
      %v2395 = vsel %vm406, %v2344, 0.0
      %v2396 = vadd.f32 %v2394, %v2395
      %v2397 = vsel %vm406, %v2345, 0.0
      %v2398 = vadd.f32 %v2396, %v2397
      %v2399 = vsel %vm406, %v2346, 0.0
      %v2400 = vadd.f32 %v2398, %v2399
      %v2401 = vsel %vm406, %v2347, 0.0
      %v2402 = vadd.f32 %v2400, %v2401
      %v2403 = vsel %vm406, %v2348, 0.0
      %v2404 = vadd.f32 %v2402, %v2403
      %v2405 = vsel %vm406, %v2349, 0.0
      %v2406 = vadd.f32 %v2404, %v2405
      %v2407 = vsel %vm406, %v2350, 0.0
      %v2408 = vadd.f32 %v2406, %v2407
      %v2409 = vsel %vm406, %v2351, 0.0
      %v2410 = vadd.f32 %v2408, %v2409
      %v2411 = vsel %vm406, %v2352, 0.0
      %v2412 = vadd.f32 %v2410, %v2411
      %v2413 = vsel %vm406, %v2353, 0.0
      %v2414 = vadd.f32 %v2412, %v2413
      %v2415 = vsel %vm406, %v2354, 0.0
      %v2416 = vadd.f32 %v2414, %v2415
      %v2417 = vsel %vm406, %v2355, 0.0
      %v2418 = vadd.f32 %v2416, %v2417
      %v2419 = vrot.slane %v2418, 4
      %v2420 = vadd.f32 %v2418, %v2419
      %v2421 = vrot.slane %v2420, 2
      %v2422 = vadd.f32 %v2420, %v2421
      %v2423 = vrot.slane %v2422, 1
      %v2424 = vadd.f32 %v2422, %v2423
      %2425 = vst.msk [vmem:[%s268] sm:$0x1] %vm2322, %v2424
      %2426 = vst.msk [vmem:[%s262] sm:$0xff] %vm406, %v2174
      %2427 = vst.msk [vmem:[%s262 + $0x8] sm:$0xff] %vm406, %v2176
      %2428 = vst.msk [vmem:[%s262 + $0x10] sm:$0xff] %vm406, %v2179
      %2429 = vst.msk [vmem:[%s262 + $0x18] sm:$0xff] %vm406, %v2181
      %2430 = vst.msk [vmem:[%s262 + $0x20] sm:$0xff] %vm406, %v2184
      %2431 = vst.msk [vmem:[%s262 + $0x28] sm:$0xff] %vm406, %v2186
      %2432 = vst.msk [vmem:[%s262 + $0x30] sm:$0xff] %vm406, %v2189
      %2433 = vst.msk [vmem:[%s262 + $0x38] sm:$0xff] %vm406, %v2191
      %2434 = vst.msk [vmem:[%s262 + $0x40] sm:$0xff] %vm406, %v2194
      %2435 = vst.msk [vmem:[%s262 + $0x48] sm:$0xff] %vm406, %v2196
      %2436 = vst.msk [vmem:[%s262 + $0x50] sm:$0xff] %vm406, %v2199
      %2437 = vst.msk [vmem:[%s262 + $0x58] sm:$0xff] %vm406, %v2201
      %2438 = vst.msk [vmem:[%s262 + $0x60] sm:$0xff] %vm406, %v2204
      %2439 = vst.msk [vmem:[%s262 + $0x68] sm:$0xff] %vm406, %v2206
      %2440 = vst.msk [vmem:[%s262 + $0x70] sm:$0xff] %vm406, %v2209
      %2441 = vst.msk [vmem:[%s262 + $0x78] sm:$0xff] %vm406, %v2211
      %2442 = vst.msk [vmem:[%s262 + $0x80] sm:$0xff] %vm406, %v2214
      %2443 = vst.msk [vmem:[%s262 + $0x88] sm:$0xff] %vm406, %v2216
      %2444 = vst.msk [vmem:[%s262 + $0x90] sm:$0xff] %vm406, %v2219
      %2445 = vst.msk [vmem:[%s262 + $0x98] sm:$0xff] %vm406, %v2221
      %2446 = vst.msk [vmem:[%s262 + $0xa0] sm:$0xff] %vm406, %v2224
      %2447 = vst.msk [vmem:[%s262 + $0xa8] sm:$0xff] %vm406, %v2226
      %2448 = vst.msk [vmem:[%s262 + $0xb0] sm:$0xff] %vm406, %v2229
      %2449 = vst.msk [vmem:[%s262 + $0xb8] sm:$0xff] %vm406, %v2231
      %2450 = vst.msk [vmem:[%s262 + $0xc0] sm:$0xff] %vm406, %v2234
      %2451 = vst.msk [vmem:[%s262 + $0xc8] sm:$0xff] %vm406, %v2236
      %2452 = vst.msk [vmem:[%s262 + $0xd0] sm:$0xff] %vm406, %v2239
      %2453 = vst.msk [vmem:[%s262 + $0xd8] sm:$0xff] %vm406, %v2241
      %2454 = vst.msk [vmem:[%s262 + $0xe0] sm:$0xff] %vm406, %v2244
      %2455 = vst.msk [vmem:[%s262 + $0xe8] sm:$0xff] %vm406, %v2246
      %2456 = vst.msk [vmem:[%s262 + $0xf0] sm:$0xff] %vm406, %v2249
      %2457 = vst.msk [vmem:[%s262 + $0xf8] sm:$0xff] %vm406, %v2251
      %p2458 = scmp.lt.s32.totalorder %s18, 1
      %s2459 = scalar_select %p2458, %s18, 1
      %s2460 = smul.addr %s2459, 32
      %s2461 = smul.addr %s2460, 8
      %s2462 = scalar_lea.vmem %s4, %s2461
      %p2463 = scmp.lt.s32.totalorder %s18, 1
      %s2464 = scalar_select %p2463, %s18, 1
      %s2465 = scalar_lea.vmem %s5, %s2464
      %p2466 = scmp.lt.s32.totalorder %s18, 1
      %s2467 = scalar_select %p2466, %s18, 1
      %s2468 = scalar_lea.vmem %s6, %s2467
      // Predicated region
      $region37: #{hardnet_conv_crop_forward.8} parent=35 // pred_check
        %p2469 = pneg %p125
      $region38: #{hardnet_conv_crop_forward.8} parent=35 // pred_check_branch
        %2471 = sbr.rel (%p2469) target = $region40
      $region39: #{hardnet_conv_crop_forward.8} parent=35 // pred_region
        _
      $region40: #{hardnet_conv_crop_forward.8} parent=35 // pred_fallthru
        _
      // Predicated region
      $region41: #{hardnet_conv_crop_forward.8} parent=35 // pred_check
        %p2472 = pneg %p151
      $region42: #{hardnet_conv_crop_forward.8} parent=35 // pred_check_branch
        %2474 = sbr.rel (%p2472) target = $region44
      $region43: #{hardnet_conv_crop_forward.8} parent=35 // pred_region
        _
      $region44: #{hardnet_conv_crop_forward.8} parent=35 // pred_fallthru
        _
      // Predicated region
      $region45: #{hardnet_conv_crop_forward.8} parent=35 // pred_check
        %p2475 = pneg %p177
      $region46: #{hardnet_conv_crop_forward.8} parent=35 // pred_check_branch
        %2477 = sbr.rel (%p2475) target = $region48
      $region47: #{hardnet_conv_crop_forward.8} parent=35 // pred_region
        _
      $region48: #{hardnet_conv_crop_forward.8} parent=35 // pred_fallthru
        _
    $region36: #{hardnet_conv_crop_forward.8} parent=5 // pred_fallthru
      _
    %p2478 = scmp.le.s32.totalorder 2, %s13
    // Predicated region
    $region49: #{hardnet_conv_crop_forward.8} parent=5 // pred_check
      %p2479 = pneg %p2478
    $region50: #{hardnet_conv_crop_forward.8} parent=5 // pred_check_branch
      %2481 = sbr.rel (%p2479) target = $region52
    $region51: #{hardnet_conv_crop_forward.8} parent=5 // pred_region
      %s2482 = ssub.s32 %s13, 2
      // Predicated region
      $region53: #{hardnet_conv_crop_forward.8} parent=51 // pred_check
        %p2483 = pneg %p131
      $region54: #{hardnet_conv_crop_forward.8} parent=51 // pred_check_branch
        %2485 = sbr.rel (%p2483) target = $region56
      $region55: #{hardnet_conv_crop_forward.8} parent=51 // pred_region
        %p2486 = scmp.lt.s32.totalorder %s19, 1
        %s2487 = scalar_select %p2486, %s19, 1
        %s2488 = smul.addr %s2487, 32
        %s2489 = smul.addr %s2488, 8
        %s2490 = scalar_lea.vmem %s4, %s2489
      $region56: #{hardnet_conv_crop_forward.8} parent=51 // pred_fallthru
        _
      // Predicated region
      $region57: #{hardnet_conv_crop_forward.8} parent=51 // pred_check
        %p2491 = pneg %p157
      $region58: #{hardnet_conv_crop_forward.8} parent=51 // pred_check_branch
        %2493 = sbr.rel (%p2491) target = $region60
      $region59: #{hardnet_conv_crop_forward.8} parent=51 // pred_region
        %p2494 = scmp.lt.s32.totalorder %s19, 1
        %s2495 = scalar_select %p2494, %s19, 1
        %s2496 = scalar_lea.vmem %s5, %s2495
      $region60: #{hardnet_conv_crop_forward.8} parent=51 // pred_fallthru
        _
      // Predicated region
      $region61: #{hardnet_conv_crop_forward.8} parent=51 // pred_check
        %p2497 = pneg %p183
      $region62: #{hardnet_conv_crop_forward.8} parent=51 // pred_check_branch
        %2499 = sbr.rel (%p2497) target = $region64
      $region63: #{hardnet_conv_crop_forward.8} parent=51 // pred_region
        %p2500 = scmp.lt.s32.totalorder %s19, 1
        %s2501 = scalar_select %p2500, %s19, 1
        %s2502 = scalar_lea.vmem %s6, %s2501
      $region64: #{hardnet_conv_crop_forward.8} parent=51 // pred_fallthru
        _
    $region52: #{hardnet_conv_crop_forward.8} parent=5 // pred_fallthru
      _
  $region6: #{hardnet_conv_crop_forward.8} parent=0 // loop_footer
    %s17 = sadd.s32 1, %s13
  $region7: #{hardnet_conv_crop_forward.8} parent=0 // loop_footer_branch
    %12 = sbr.rel target = $region3
  $region8: #{hardnet_conv_crop_forward.8} parent=0 // loop_exit
    _

// kernel: hardnet_conv_crop_forward.7
$region0: #{hardnet_conv_crop_forward.7}
  #allocation0 [shape = 'u32[]', space=smem, size = 0x4, offset = 0x4, fixed_abs, tag = 'smem constant byte address 0x4 - core index']
  #allocation1 [shape = 'u32[72,128]{1,0:T(1,128)}', space=vmem, size = 0x9000, scoped, tag = 'internal scratch']
  #allocation2 [shape = 'f32[18,18,1]{2,1,0:T(8,128)}', space=vmem, size = 0x36000, scoped, tag = 'scratch operand']
  #allocation3 [shape = 'f32[1,1]{1,0:T(1,128)S(1)}', space=vmem, size = 0x200, scoped, tag = 'scoped memory for hardnet_conv_crop_forward.7']
  #allocation4 [shape = 'f32[1,1]{1,0:T(1,128)S(1)}', space=vmem, size = 0x200, scoped, tag = 'scoped memory for hardnet_conv_crop_forward.7']
  %s0 = inlined_call_operand.vmem [shape: f32[2,16,16,1], index: 0, kind: input, shape index: {}]
  %s1 = inlined_call_operand.<no memory space> [shape: f32[1,1], index: 1, kind: input, shape index: {}]
  %s2 = inlined_call_operand.<no memory space> [shape: f32[1,1], index: 2, kind: input, shape index: {}]
  %s3 = inlined_call_operand.vmem [shape: f32[9,32], index: 3, kind: input, shape index: {}]
  %s4 = inlined_call_operand.vmem [shape: f32[2,16,16,32], index: 4, kind: output, shape index: {0}]
  %s5 = inlined_call_operand.vmem [shape: f32[2,1,32], index: 5, kind: output, shape index: {1}]
  %s6 = inlined_call_operand.vmem [shape: f32[2,1,32], index: 6, kind: output, shape index: {2}]
  %7 = xla_tuple %s4, %s5, %s6
  %s8 = sld [smem:[#allocation0]]
  $region65: #{hardnet_conv_crop_forward.7} parent=0
    _
  %s10 = ssub.s32 1, %s8
  %s11 = scalar_select 0, %s10, %s8
  %v12 = vstv %s1
  %13 = vst [vmem:[#allocation3] sm:$0x1] %v12
  %v14 = vstv %s2
  %15 = vst [vmem:[#allocation4] sm:$0x1] %v14
  loop: start=0, step=1, limit=4
  $region2: #{hardnet_conv_crop_forward.7} parent=0 // loop_pre_header
    _
  $region3: #{hardnet_conv_crop_forward.7} parent=0 // loop_header
    %s17 = sphi 0, %s21
    %p18 = scmp.ge.s32.totalorder %s17, 4
    %s27 = sphi 0, %s29
    %s30 = sphi 0, %s27
    %s31 = sphi 0, %s30
    %s47 = sphi 0, %s31
    %s51 = sphi 0, %s51
    %s53 = sphi 0, %s51
    %s54 = sphi 0, %s53
    %s68 = sphi 0, %s54
    %s72 = sphi 0, %s72
    %s74 = sphi 0, %s72
    %s75 = sphi 0, %s74
    %s89 = sphi 0, %s75
    %s93 = sphi 0, %s93
    %s95 = sphi 0, %s93
    %s96 = sphi 0, %s95
    %s110 = sphi 0, %s96
    %s116 = sphi 0, %s118
    %s119 = sphi 0, %s116
    %s120 = sphi 0, %s119
    %s136 = sphi 0, %s120
    %s142 = sphi 0, %s144
    %s145 = sphi 0, %s142
    %s146 = sphi 0, %s145
    %s162 = sphi 0, %s146
    %s168 = sphi 0, %s170
    %s171 = sphi 0, %s168
    %s172 = sphi 0, %s171
    %s188 = sphi 0, %s172
  $region4: #{hardnet_conv_crop_forward.7} parent=0 // loop_header_branch
    %20 = sbr.rel (%p18) target = $region8
  $region5: #{hardnet_conv_crop_forward.7} parent=0 // loop_body
    %s22 = ssub.s32 %s17, 1
    %s23 = ssub.s32 %s17, 2
    %s24 = sadd.s32 %s17, 1
    %s25 = ssub.s32 %s17, %s24
    %p26 = scmp.eq.s32.totalorder %s25, 0
    %s28 = sadd.s32 %s27, 1
    %s29 = scalar_select %p26, %s27, %s28
    %p32 = pneg %p26
    %p33 = scmp.eq.s32.totalorder %s17, 1
    %p34 = por %p32, %p33
    %p35 = scmp.ne.s32.totalorder %s27, %s30
    %p36 = scmp.eq.s32.totalorder %s17, 0
    %p37 = por %p35, %p36
    %p38 = scmp.ne.s32.totalorder %s27, %s30
    %p39 = scmp.eq.s32.totalorder %s22, 1
    %p40 = por %p38, %p39
    %p41 = scmp.ne.s32.totalorder %s30, %s31
    %p42 = scmp.eq.s32.totalorder %s22, 0
    %p43 = por %p41, %p42
    %p44 = scmp.ne.s32.totalorder %s30, %s31
    %p45 = scmp.eq.s32.totalorder %s23, 1
    %p46 = por %p44, %p45
    %p48 = scmp.ne.s32.totalorder %s31, %s47
    %p49 = scmp.eq.s32.totalorder %s23, 0
    %p50 = por %p48, %p49
    %s52 = sadd.s32 %s51, 1
    %p55 = scmp.eq.s32.totalorder %s17, 1
    %p56 = scmp.ne.s32.totalorder %s51, %s53
    %p57 = scmp.eq.s32.totalorder %s17, 0
    %p58 = por %p56, %p57
    %p59 = scmp.ne.s32.totalorder %s51, %s53
    %p60 = scmp.eq.s32.totalorder %s22, 1
    %p61 = por %p59, %p60
    %p62 = scmp.ne.s32.totalorder %s53, %s54
    %p63 = scmp.eq.s32.totalorder %s22, 0
    %p64 = por %p62, %p63
    %p65 = scmp.ne.s32.totalorder %s53, %s54
    %p66 = scmp.eq.s32.totalorder %s23, 1
    %p67 = por %p65, %p66
    %p69 = scmp.ne.s32.totalorder %s54, %s68
    %p70 = scmp.eq.s32.totalorder %s23, 0
    %p71 = por %p69, %p70
    %s73 = sadd.s32 %s72, 1
    %p76 = scmp.eq.s32.totalorder %s17, 1
    %p77 = scmp.ne.s32.totalorder %s72, %s74
    %p78 = scmp.eq.s32.totalorder %s17, 0
    %p79 = por %p77, %p78
    %p80 = scmp.ne.s32.totalorder %s72, %s74
    %p81 = scmp.eq.s32.totalorder %s22, 1
    %p82 = por %p80, %p81
    %p83 = scmp.ne.s32.totalorder %s74, %s75
    %p84 = scmp.eq.s32.totalorder %s22, 0
    %p85 = por %p83, %p84
    %p86 = scmp.ne.s32.totalorder %s74, %s75
    %p87 = scmp.eq.s32.totalorder %s23, 1
    %p88 = por %p86, %p87
    %p90 = scmp.ne.s32.totalorder %s75, %s89
    %p91 = scmp.eq.s32.totalorder %s23, 0
    %p92 = por %p90, %p91
    %s94 = sadd.s32 %s93, 1
    %p97 = scmp.eq.s32.totalorder %s17, 1
    %p98 = scmp.ne.s32.totalorder %s93, %s95
    %p99 = scmp.eq.s32.totalorder %s17, 0
    %p100 = por %p98, %p99
    %p101 = scmp.ne.s32.totalorder %s93, %s95
    %p102 = scmp.eq.s32.totalorder %s22, 1
    %p103 = por %p101, %p102
    %p104 = scmp.ne.s32.totalorder %s95, %s96
    %p105 = scmp.eq.s32.totalorder %s22, 0
    %p106 = por %p104, %p105
    %p107 = scmp.ne.s32.totalorder %s95, %s96
    %p108 = scmp.eq.s32.totalorder %s23, 1
    %p109 = por %p107, %p108
    %p111 = scmp.ne.s32.totalorder %s96, %s110
    %p112 = scmp.eq.s32.totalorder %s23, 0
    %p113 = por %p111, %p112
    %s114 = ssub.s32 %s17, %s24
    %p115 = scmp.eq.s32.totalorder %s114, 0
    %s117 = sadd.s32 %s116, 1
    %s118 = scalar_select %p115, %s116, %s117
    %p121 = pneg %p115
    %p122 = scmp.eq.s32.totalorder %s17, 1
    %p123 = por %p121, %p122
    %p124 = scmp.ne.s32.totalorder %s116, %s119
    %p125 = scmp.eq.s32.totalorder %s17, 0
    %p126 = por %p124, %p125
    %p127 = scmp.ne.s32.totalorder %s116, %s119
    %p128 = scmp.eq.s32.totalorder %s22, 1
    %p129 = por %p127, %p128
    %p130 = scmp.ne.s32.totalorder %s119, %s120
    %p131 = scmp.eq.s32.totalorder %s22, 0
    %p132 = por %p130, %p131
    %p133 = scmp.ne.s32.totalorder %s119, %s120
    %p134 = scmp.eq.s32.totalorder %s23, 1
    %p135 = por %p133, %p134
    %p137 = scmp.ne.s32.totalorder %s120, %s136
    %p138 = scmp.eq.s32.totalorder %s23, 0
    %p139 = por %p137, %p138
    %s140 = ssub.s32 %s17, %s24
    %p141 = scmp.eq.s32.totalorder %s140, 0
    %s143 = sadd.s32 %s142, 1
    %s144 = scalar_select %p141, %s142, %s143
    %p147 = pneg %p141
    %p148 = scmp.eq.s32.totalorder %s17, 1
    %p149 = por %p147, %p148
    %p150 = scmp.ne.s32.totalorder %s142, %s145
    %p151 = scmp.eq.s32.totalorder %s17, 0
    %p152 = por %p150, %p151
    %p153 = scmp.ne.s32.totalorder %s142, %s145
    %p154 = scmp.eq.s32.totalorder %s22, 1
    %p155 = por %p153, %p154
    %p156 = scmp.ne.s32.totalorder %s145, %s146
    %p157 = scmp.eq.s32.totalorder %s22, 0
    %p158 = por %p156, %p157
    %p159 = scmp.ne.s32.totalorder %s145, %s146
    %p160 = scmp.eq.s32.totalorder %s23, 1
    %p161 = por %p159, %p160
    %p163 = scmp.ne.s32.totalorder %s146, %s162
    %p164 = scmp.eq.s32.totalorder %s23, 0
    %p165 = por %p163, %p164
    %s166 = ssub.s32 %s17, %s24
    %p167 = scmp.eq.s32.totalorder %s166, 0
    %s169 = sadd.s32 %s168, 1
    %s170 = scalar_select %p167, %s168, %s169
    %p173 = pneg %p167
    %p174 = scmp.eq.s32.totalorder %s17, 1
    %p175 = por %p173, %p174
    %p176 = scmp.ne.s32.totalorder %s168, %s171
    %p177 = scmp.eq.s32.totalorder %s17, 0
    %p178 = por %p176, %p177
    %p179 = scmp.ne.s32.totalorder %s168, %s171
    %p180 = scmp.eq.s32.totalorder %s22, 1
    %p181 = por %p179, %p180
    %p182 = scmp.ne.s32.totalorder %s171, %s172
    %p183 = scmp.eq.s32.totalorder %s22, 0
    %p184 = por %p182, %p183
    %p185 = scmp.ne.s32.totalorder %s171, %s172
    %p186 = scmp.eq.s32.totalorder %s23, 1
    %p187 = por %p185, %p186
    %p189 = scmp.ne.s32.totalorder %s172, %s188
    %p190 = scmp.eq.s32.totalorder %s23, 0
    %p191 = por %p189, %p190
    %p192 = scmp.le.s32.totalorder 1, %s17
    %p193 = scmp.lt.s32.totalorder %s17, 3
    %p194 = pnand %p192, %p193
    %p195 = pneg %p194
    // Predicated region
    $region9: #{hardnet_conv_crop_forward.7} parent=5 // pred_check
      _
    $region10: #{hardnet_conv_crop_forward.7} parent=5 // pred_check_branch
      %197 = sbr.rel (%p194) target = $region12
    $region11: #{hardnet_conv_crop_forward.7} parent=5 // pred_region
      %s198 = ssub.s32 %s17, 1
      // Predicated region
      $region13: #{hardnet_conv_crop_forward.7} parent=11 // pred_check
        %p199 = pneg %p64
      $region14: #{hardnet_conv_crop_forward.7} parent=11 // pred_check_branch
        %201 = sbr.rel (%p199) target = $region16
      $region15: #{hardnet_conv_crop_forward.7} parent=11 // pred_region
        _
      $region16: #{hardnet_conv_crop_forward.7} parent=11 // pred_fallthru
        _
      // Predicated region
      $region17: #{hardnet_conv_crop_forward.7} parent=11 // pred_check
        %p202 = pneg %p85
      $region18: #{hardnet_conv_crop_forward.7} parent=11 // pred_check_branch
        %204 = sbr.rel (%p202) target = $region20
      $region19: #{hardnet_conv_crop_forward.7} parent=11 // pred_region
        _
      $region20: #{hardnet_conv_crop_forward.7} parent=11 // pred_fallthru
        _
      // Predicated region
      $region21: #{hardnet_conv_crop_forward.7} parent=11 // pred_check
        %p205 = pneg %p106
      $region22: #{hardnet_conv_crop_forward.7} parent=11 // pred_check_branch
        %207 = sbr.rel (%p205) target = $region24
      $region23: #{hardnet_conv_crop_forward.7} parent=11 // pred_region
        _
      $region24: #{hardnet_conv_crop_forward.7} parent=11 // pred_fallthru
        _
    $region12: #{hardnet_conv_crop_forward.7} parent=5 // pred_fallthru
      _
    %p208 = scmp.lt.s32.totalorder %s17, 2
    // Predicated region
    $region25: #{hardnet_conv_crop_forward.7} parent=5 // pred_check
      %p209 = pneg %p208
    $region26: #{hardnet_conv_crop_forward.7} parent=5 // pred_check_branch
      %211 = sbr.rel (%p209) target = $region28
    $region27: #{hardnet_conv_crop_forward.7} parent=5 // pred_region
      // Predicated region
      $region29: #{hardnet_conv_crop_forward.7} parent=27 // pred_check
        %p212 = pneg %p37
      $region30: #{hardnet_conv_crop_forward.7} parent=27 // pred_check_branch
        %214 = sbr.rel (%p212) target = $region32
      $region31: #{hardnet_conv_crop_forward.7} parent=27 // pred_region
        %p215 = scmp.lt.s32.totalorder %s17, 1
        %s216 = scalar_select %p215, %s17, 1
        %s217 = smul.addr %s216, 32
        %s218 = smul.addr %s217, 8
        %s219 = scalar_lea.vmem %s0, %s218
      $region32: #{hardnet_conv_crop_forward.7} parent=27 // pred_fallthru
        _
    $region28: #{hardnet_conv_crop_forward.7} parent=5 // pred_fallthru
      _
    %p220 = scmp.le.s32.totalorder 1, %s17
    %p221 = scmp.lt.s32.totalorder %s17, 3
    %p222 = pnand %p220, %p221
    %p223 = pneg %p222
    // Predicated region
    $region33: #{hardnet_conv_crop_forward.7} parent=5 // pred_check
      _
    $region34: #{hardnet_conv_crop_forward.7} parent=5 // pred_check_branch
      %225 = sbr.rel (%p222) target = $region36
    $region35: #{hardnet_conv_crop_forward.7} parent=5 // pred_region
      %s226 = ssub.s32 %s17, 1
      %p227 = scmp.lt.s32.totalorder %s22, 1
      %s228 = scalar_select %p227, %s22, 1
      %s229 = smul.addr %s228, 32
      %s230 = smul.addr %s229, 8
      %s231 = scalar_lea.vmem %s0, %s230
      %p232 = pneg %p43
      %p233 = pneg %p40
      %p234 = pneg %p64
      %p235 = pneg %p61
      %p236 = pneg %p85
      %p237 = pneg %p82
      %p238 = pneg %p106
      %p239 = pneg %p103
      %p240 = pneg %p132
      %p241 = pneg %p129
      %p242 = scmp.lt.s32.totalorder %s22, 1
      %s243 = scalar_select %p242, %s22, 1
      %s244 = smul.addr %s243, 32
      %s245 = smul.addr %s244, 8
      %s246 = scalar_lea.vmem %s4, %s245
      %p247 = pneg %p158
      %p248 = pneg %p155
      %p249 = scmp.lt.s32.totalorder %s22, 1
      %s250 = scalar_select %p249, %s22, 1
      %s251 = scalar_lea.vmem %s5, %s250
      %p252 = pneg %p184
      %p253 = pneg %p181
      %p254 = scmp.lt.s32.totalorder %s22, 1
      %s255 = scalar_select %p254, %s22, 1
      %s256 = scalar_lea.vmem %s6, %s255
      %p257 = scmp.lt.s32.totalorder %s22, 1
      %s258 = scalar_select %p257, %s22, 1
      %s259 = smul.addr %s258, 32
      %s260 = smul.addr %s259, 8
      %s261 = scalar_lea.vmem %s0, %s260
      %p262 = scmp.lt.s32.totalorder %s22, 1
      %s263 = scalar_select %p262, %s22, 1
      %s264 = smul.addr %s263, 32
      %s265 = smul.addr %s264, 8
      %s266 = scalar_lea.vmem %s4, %s265
      %p267 = scmp.lt.s32.totalorder %s22, 1
      %s268 = scalar_select %p267, %s22, 1
      %s269 = scalar_lea.vmem %s5, %s268
      %p270 = scmp.lt.s32.totalorder %s22, 1
      %s271 = scalar_select %p270, %s22, 1
      %s272 = scalar_lea.vmem %s6, %s271
      %v273 = vld [vmem:[%s261] sm:$0xff]
      %v274 = vld [vmem:[%s261 + $0x8] sm:$0xff]
      %v275 = vld [vmem:[%s261 + $0x10] sm:$0xff]
      %v276 = vld [vmem:[%s261 + $0x18] sm:$0xff]
      %v277 = vld [vmem:[%s261 + $0x20] sm:$0xff]
      %v278 = vld [vmem:[%s261 + $0x28] sm:$0xff]
      %v279 = vld [vmem:[%s261 + $0x30] sm:$0xff]
      %v280 = vld [vmem:[%s261 + $0x38] sm:$0xff]
      %v281 = vld [vmem:[%s261 + $0x40] sm:$0xff]
      %v282 = vld [vmem:[%s261 + $0x48] sm:$0xff]
      %v283 = vld [vmem:[%s261 + $0x50] sm:$0xff]
      %v284 = vld [vmem:[%s261 + $0x58] sm:$0xff]
      %v285 = vld [vmem:[%s261 + $0x60] sm:$0xff]
      %v286 = vld [vmem:[%s261 + $0x68] sm:$0xff]
      %v287 = vld [vmem:[%s261 + $0x70] sm:$0xff]
      %v288 = vld [vmem:[%s261 + $0x78] sm:$0xff]
      %v289 = vld [vmem:[%s261 + $0x80] sm:$0xff]
      %v290 = vld [vmem:[%s261 + $0x88] sm:$0xff]
      %v291 = vld [vmem:[%s261 + $0x90] sm:$0xff]
      %v292 = vld [vmem:[%s261 + $0x98] sm:$0xff]
      %v293 = vld [vmem:[%s261 + $0xa0] sm:$0xff]
      %v294 = vld [vmem:[%s261 + $0xa8] sm:$0xff]
      %v295 = vld [vmem:[%s261 + $0xb0] sm:$0xff]
      %v296 = vld [vmem:[%s261 + $0xb8] sm:$0xff]
      %v297 = vld [vmem:[%s261 + $0xc0] sm:$0xff]
      %v298 = vld [vmem:[%s261 + $0xc8] sm:$0xff]
      %v299 = vld [vmem:[%s261 + $0xd0] sm:$0xff]
      %v300 = vld [vmem:[%s261 + $0xd8] sm:$0xff]
      %v301 = vld [vmem:[%s261 + $0xe0] sm:$0xff]
      %v302 = vld [vmem:[%s261 + $0xe8] sm:$0xff]
      %v303 = vld [vmem:[%s261 + $0xf0] sm:$0xff]
      %v304 = vld [vmem:[%s261 + $0xf8] sm:$0xff]
      %vm305 = vcmask 7168
      %306 = vst.msk [vmem:[#allocation2] sm:$0xff] %vm305, 0.0
      %307 = vst.msk [vmem:[#allocation2 + $0x8] sm:$0xff] %vm305, 0.0
      %vm308 = vcmask 1024
      %309 = vst.msk [vmem:[#allocation2 + $0x10] sm:$0x3] %vm308, 0.0
      %310 = vst.msk [vmem:[#allocation2 + $0x18] sm:$0xff] %vm305, 0.0
      %311 = vst.msk [vmem:[#allocation2 + $0x20] sm:$0xff] %vm305, 0.0
      %312 = vst.msk [vmem:[#allocation2 + $0x28] sm:$0x3] %vm308, 0.0
      %313 = vst.msk [vmem:[#allocation2 + $0x30] sm:$0xff] %vm305, 0.0
      %314 = vst.msk [vmem:[#allocation2 + $0x38] sm:$0xff] %vm305, 0.0
      %315 = vst.msk [vmem:[#allocation2 + $0x40] sm:$0x3] %vm308, 0.0
      %316 = vst.msk [vmem:[#allocation2 + $0x48] sm:$0xff] %vm305, 0.0
      %317 = vst.msk [vmem:[#allocation2 + $0x50] sm:$0xff] %vm305, 0.0
      %318 = vst.msk [vmem:[#allocation2 + $0x58] sm:$0x3] %vm308, 0.0
      %319 = vst.msk [vmem:[#allocation2 + $0x60] sm:$0xff] %vm305, 0.0
      %320 = vst.msk [vmem:[#allocation2 + $0x68] sm:$0xff] %vm305, 0.0
      %321 = vst.msk [vmem:[#allocation2 + $0x70] sm:$0x3] %vm308, 0.0
      %322 = vst.msk [vmem:[#allocation2 + $0x78] sm:$0xff] %vm305, 0.0
      %323 = vst.msk [vmem:[#allocation2 + $0x80] sm:$0xff] %vm305, 0.0
      %324 = vst.msk [vmem:[#allocation2 + $0x88] sm:$0x3] %vm308, 0.0
      %325 = vst.msk [vmem:[#allocation2 + $0x90] sm:$0xff] %vm305, 0.0
      %326 = vst.msk [vmem:[#allocation2 + $0x98] sm:$0xff] %vm305, 0.0
      %327 = vst.msk [vmem:[#allocation2 + $0xa0] sm:$0x3] %vm308, 0.0
      %328 = vst.msk [vmem:[#allocation2 + $0xa8] sm:$0xff] %vm305, 0.0
      %329 = vst.msk [vmem:[#allocation2 + $0xb0] sm:$0xff] %vm305, 0.0
      %330 = vst.msk [vmem:[#allocation2 + $0xb8] sm:$0x3] %vm308, 0.0
      %331 = vst.msk [vmem:[#allocation2 + $0xc0] sm:$0xff] %vm305, 0.0
      %332 = vst.msk [vmem:[#allocation2 + $0xc8] sm:$0xff] %vm305, 0.0
      %333 = vst.msk [vmem:[#allocation2 + $0xd0] sm:$0x3] %vm308, 0.0
      %334 = vst.msk [vmem:[#allocation2 + $0xd8] sm:$0xff] %vm305, 0.0
      %335 = vst.msk [vmem:[#allocation2 + $0xe0] sm:$0xff] %vm305, 0.0
      %336 = vst.msk [vmem:[#allocation2 + $0xe8] sm:$0x3] %vm308, 0.0
      %337 = vst.msk [vmem:[#allocation2 + $0xf0] sm:$0xff] %vm305, 0.0
      %338 = vst.msk [vmem:[#allocation2 + $0xf8] sm:$0xff] %vm305, 0.0
      %339 = vst.msk [vmem:[#allocation2 + $0x100] sm:$0x3] %vm308, 0.0
      %340 = vst.msk [vmem:[#allocation2 + $0x108] sm:$0xff] %vm305, 0.0
      %341 = vst.msk [vmem:[#allocation2 + $0x110] sm:$0xff] %vm305, 0.0
      %342 = vst.msk [vmem:[#allocation2 + $0x118] sm:$0x3] %vm308, 0.0
      %343 = vst.msk [vmem:[#allocation2 + $0x120] sm:$0xff] %vm305, 0.0
      %344 = vst.msk [vmem:[#allocation2 + $0x128] sm:$0xff] %vm305, 0.0
      %345 = vst.msk [vmem:[#allocation2 + $0x130] sm:$0x3] %vm308, 0.0
      %346 = vst.msk [vmem:[#allocation2 + $0x138] sm:$0xff] %vm305, 0.0
      %347 = vst.msk [vmem:[#allocation2 + $0x140] sm:$0xff] %vm305, 0.0
      %348 = vst.msk [vmem:[#allocation2 + $0x148] sm:$0x3] %vm308, 0.0
      %349 = vst.msk [vmem:[#allocation2 + $0x150] sm:$0xff] %vm305, 0.0
      %350 = vst.msk [vmem:[#allocation2 + $0x158] sm:$0xff] %vm305, 0.0
      %351 = vst.msk [vmem:[#allocation2 + $0x160] sm:$0x3] %vm308, 0.0
      %352 = vst.msk [vmem:[#allocation2 + $0x168] sm:$0xff] %vm305, 0.0
      %353 = vst.msk [vmem:[#allocation2 + $0x170] sm:$0xff] %vm305, 0.0
      %354 = vst.msk [vmem:[#allocation2 + $0x178] sm:$0x3] %vm308, 0.0
      %355 = vst.msk [vmem:[#allocation2 + $0x180] sm:$0xff] %vm305, 0.0
      %356 = vst.msk [vmem:[#allocation2 + $0x188] sm:$0xff] %vm305, 0.0
      %357 = vst.msk [vmem:[#allocation2 + $0x190] sm:$0x3] %vm308, 0.0
      %358 = vst.msk [vmem:[#allocation2 + $0x198] sm:$0xff] %vm305, 0.0
      %359 = vst.msk [vmem:[#allocation2 + $0x1a0] sm:$0xff] %vm305, 0.0
      %360 = vst.msk [vmem:[#allocation2 + $0x1a8] sm:$0x3] %vm308, 0.0
      %s361 = scalar_lea.vmem [#allocation2], 24
      %362 = vst.msk [vmem:[%s361 + $0x1] sm:$0xff] %vm305, %v273
      %363 = vst.msk [vmem:[%s361 + $0x9] sm:$0xff] %vm305, %v274
      %364 = vst.msk [vmem:[%s361 + $0x19] sm:$0xff] %vm305, %v275
      %365 = vst.msk [vmem:[%s361 + $0x21] sm:$0xff] %vm305, %v276
      %366 = vst.msk [vmem:[%s361 + $0x31] sm:$0xff] %vm305, %v277
      %367 = vst.msk [vmem:[%s361 + $0x39] sm:$0xff] %vm305, %v278
      %368 = vst.msk [vmem:[%s361 + $0x49] sm:$0xff] %vm305, %v279
      %369 = vst.msk [vmem:[%s361 + $0x51] sm:$0xff] %vm305, %v280
      %370 = vst.msk [vmem:[%s361 + $0x61] sm:$0xff] %vm305, %v281
      %371 = vst.msk [vmem:[%s361 + $0x69] sm:$0xff] %vm305, %v282
      %372 = vst.msk [vmem:[%s361 + $0x79] sm:$0xff] %vm305, %v283
      %373 = vst.msk [vmem:[%s361 + $0x81] sm:$0xff] %vm305, %v284
      %374 = vst.msk [vmem:[%s361 + $0x91] sm:$0xff] %vm305, %v285
      %375 = vst.msk [vmem:[%s361 + $0x99] sm:$0xff] %vm305, %v286
      %376 = vst.msk [vmem:[%s361 + $0xa9] sm:$0xff] %vm305, %v287
      %377 = vst.msk [vmem:[%s361 + $0xb1] sm:$0xff] %vm305, %v288
      %378 = vst.msk [vmem:[%s361 + $0xc1] sm:$0xff] %vm305, %v289
      %379 = vst.msk [vmem:[%s361 + $0xc9] sm:$0xff] %vm305, %v290
      %380 = vst.msk [vmem:[%s361 + $0xd9] sm:$0xff] %vm305, %v291
      %381 = vst.msk [vmem:[%s361 + $0xe1] sm:$0xff] %vm305, %v292
      %382 = vst.msk [vmem:[%s361 + $0xf1] sm:$0xff] %vm305, %v293
      %383 = vst.msk [vmem:[%s361 + $0xf9] sm:$0xff] %vm305, %v294
      %384 = vst.msk [vmem:[%s361 + $0x109] sm:$0xff] %vm305, %v295
      %385 = vst.msk [vmem:[%s361 + $0x111] sm:$0xff] %vm305, %v296
      %386 = vst.msk [vmem:[%s361 + $0x121] sm:$0xff] %vm305, %v297
      %387 = vst.msk [vmem:[%s361 + $0x129] sm:$0xff] %vm305, %v298
      %388 = vst.msk [vmem:[%s361 + $0x139] sm:$0xff] %vm305, %v299
      %389 = vst.msk [vmem:[%s361 + $0x141] sm:$0xff] %vm305, %v300
      %390 = vst.msk [vmem:[%s361 + $0x151] sm:$0xff] %vm305, %v301
      %391 = vst.msk [vmem:[%s361 + $0x159] sm:$0xff] %vm305, %v302
      %392 = vst.msk [vmem:[%s361 + $0x169] sm:$0xff] %vm305, %v303
      %393 = vst.msk [vmem:[%s361 + $0x171] sm:$0xff] %vm305, %v304
      %v394 = vld [vmem:[#allocation2] sm:$0xff]
      %v395 = vld [vmem:[#allocation2 + $0x8] sm:$0xff]
      %v396 = vld [vmem:[#allocation2 + $0x18] sm:$0xff]
      %v397 = vld [vmem:[#allocation2 + $0x20] sm:$0xff]
      %v398 = vld [vmem:[#allocation2 + $0x30] sm:$0xff]
      %v399 = vld [vmem:[#allocation2 + $0x38] sm:$0xff]
      %v400 = vld [vmem:[#allocation2 + $0x48] sm:$0xff]
      %v401 = vld [vmem:[#allocation2 + $0x50] sm:$0xff]
      %v402 = vld [vmem:[#allocation2 + $0x60] sm:$0xff]
      %v403 = vld [vmem:[#allocation2 + $0x68] sm:$0xff]
      %v404 = vld [vmem:[#allocation2 + $0x78] sm:$0xff]
      %v405 = vld [vmem:[#allocation2 + $0x80] sm:$0xff]
      %v406 = vld [vmem:[#allocation2 + $0x90] sm:$0xff]
      %v407 = vld [vmem:[#allocation2 + $0x98] sm:$0xff]
      %v408 = vld [vmem:[#allocation2 + $0xa8] sm:$0xff]
      %v409 = vld [vmem:[#allocation2 + $0xb0] sm:$0xff]
      %v410 = vld [vmem:[#allocation2 + $0xc0] sm:$0xff]
      %v411 = vld [vmem:[#allocation2 + $0xc8] sm:$0xff]
      %v412 = vld [vmem:[#allocation2 + $0xd8] sm:$0xff]
      %v413 = vld [vmem:[#allocation2 + $0xe0] sm:$0xff]
      %v414 = vld [vmem:[#allocation2 + $0xf0] sm:$0xff]
      %v415 = vld [vmem:[#allocation2 + $0xf8] sm:$0xff]
      %v416 = vld [vmem:[#allocation2 + $0x108] sm:$0xff]
      %v417 = vld [vmem:[#allocation2 + $0x110] sm:$0xff]
      %v418 = vld [vmem:[#allocation2 + $0x120] sm:$0xff]
      %v419 = vld [vmem:[#allocation2 + $0x128] sm:$0xff]
      %v420 = vld [vmem:[#allocation2 + $0x138] sm:$0xff]
      %v421 = vld [vmem:[#allocation2 + $0x140] sm:$0xff]
      %v422 = vld [vmem:[#allocation2 + $0x150] sm:$0xff]
      %v423 = vld [vmem:[#allocation2 + $0x158] sm:$0xff]
      %v424 = vld [vmem:[#allocation2 + $0x168] sm:$0xff]
      %v425 = vld [vmem:[#allocation2 + $0x170] sm:$0xff]
      %v426 = vld [vmem:[%s3] sm:$0x1]
      %428 = vset.pattern.permute.xlu0 0
      %429 = vperm.xlu0 %428, %v394
      %v430 = vpop.permute.xlu0 %429
      %433 = vset.pattern.permute.xlu0 0
      %434 = vperm.xlu0 %433, %v395
      %v435 = vpop.permute.xlu0 %434
      %438 = vset.pattern.permute.xlu0 0
      %439 = vperm.xlu0 %438, %v396
      %v440 = vpop.permute.xlu0 %439
      %443 = vset.pattern.permute.xlu0 0
      %444 = vperm.xlu0 %443, %v397
      %v445 = vpop.permute.xlu0 %444
      %448 = vset.pattern.permute.xlu0 0
      %449 = vperm.xlu0 %448, %v398
      %v450 = vpop.permute.xlu0 %449
      %453 = vset.pattern.permute.xlu0 0
      %454 = vperm.xlu0 %453, %v399
      %v455 = vpop.permute.xlu0 %454
      %458 = vset.pattern.permute.xlu0 0
      %459 = vperm.xlu0 %458, %v400
      %v460 = vpop.permute.xlu0 %459
      %463 = vset.pattern.permute.xlu0 0
      %464 = vperm.xlu0 %463, %v401
      %v465 = vpop.permute.xlu0 %464
      %468 = vset.pattern.permute.xlu0 0
      %469 = vperm.xlu0 %468, %v402
      %v470 = vpop.permute.xlu0 %469
      %473 = vset.pattern.permute.xlu0 0
      %474 = vperm.xlu0 %473, %v403
      %v475 = vpop.permute.xlu0 %474
      %478 = vset.pattern.permute.xlu0 0
      %479 = vperm.xlu0 %478, %v404
      %v480 = vpop.permute.xlu0 %479
      %483 = vset.pattern.permute.xlu0 0
      %484 = vperm.xlu0 %483, %v405
      %v485 = vpop.permute.xlu0 %484
      %488 = vset.pattern.permute.xlu0 0
      %489 = vperm.xlu0 %488, %v406
      %v490 = vpop.permute.xlu0 %489
      %493 = vset.pattern.permute.xlu0 0
      %494 = vperm.xlu0 %493, %v407
      %v495 = vpop.permute.xlu0 %494
      %498 = vset.pattern.permute.xlu0 0
      %499 = vperm.xlu0 %498, %v408
      %v500 = vpop.permute.xlu0 %499
      %503 = vset.pattern.permute.xlu0 0
      %504 = vperm.xlu0 %503, %v409
      %v505 = vpop.permute.xlu0 %504
      %508 = vset.pattern.permute.xlu0 0
      %509 = vperm.xlu0 %508, %v410
      %v510 = vpop.permute.xlu0 %509
      %513 = vset.pattern.permute.xlu0 0
      %514 = vperm.xlu0 %513, %v411
      %v515 = vpop.permute.xlu0 %514
      %518 = vset.pattern.permute.xlu0 0
      %519 = vperm.xlu0 %518, %v412
      %v520 = vpop.permute.xlu0 %519
      %523 = vset.pattern.permute.xlu0 0
      %524 = vperm.xlu0 %523, %v413
      %v525 = vpop.permute.xlu0 %524
      %528 = vset.pattern.permute.xlu0 0
      %529 = vperm.xlu0 %528, %v414
      %v530 = vpop.permute.xlu0 %529
      %533 = vset.pattern.permute.xlu0 0
      %534 = vperm.xlu0 %533, %v415
      %v535 = vpop.permute.xlu0 %534
      %538 = vset.pattern.permute.xlu0 0
      %539 = vperm.xlu0 %538, %v416
      %v540 = vpop.permute.xlu0 %539
      %543 = vset.pattern.permute.xlu0 0
      %544 = vperm.xlu0 %543, %v417
      %v545 = vpop.permute.xlu0 %544
      %548 = vset.pattern.permute.xlu0 0
      %549 = vperm.xlu0 %548, %v418
      %v550 = vpop.permute.xlu0 %549
      %553 = vset.pattern.permute.xlu0 0
      %554 = vperm.xlu0 %553, %v419
      %v555 = vpop.permute.xlu0 %554
      %558 = vset.pattern.permute.xlu0 0
      %559 = vperm.xlu0 %558, %v420
      %v560 = vpop.permute.xlu0 %559
      %563 = vset.pattern.permute.xlu0 0
      %564 = vperm.xlu0 %563, %v421
      %v565 = vpop.permute.xlu0 %564
      %568 = vset.pattern.permute.xlu0 0
      %569 = vperm.xlu0 %568, %v422
      %v570 = vpop.permute.xlu0 %569
      %573 = vset.pattern.permute.xlu0 0
      %574 = vperm.xlu0 %573, %v423
      %v575 = vpop.permute.xlu0 %574
      %578 = vset.pattern.permute.xlu0 0
      %579 = vperm.xlu0 %578, %v424
      %v580 = vpop.permute.xlu0 %579
      %583 = vset.pattern.permute.xlu0 0
      %584 = vperm.xlu0 %583, %v425
      %v585 = vpop.permute.xlu0 %584
      %v587 = vperm.slane %v426, 0
      %v588 = vmul.f32 %v430, %v587
      %v589 = vmul.f32 %v435, %v587
      %v590 = vmul.f32 %v440, %v587
      %v591 = vmul.f32 %v445, %v587
      %v592 = vmul.f32 %v450, %v587
      %v593 = vmul.f32 %v455, %v587
      %v594 = vmul.f32 %v460, %v587
      %v595 = vmul.f32 %v465, %v587
      %v596 = vmul.f32 %v470, %v587
      %v597 = vmul.f32 %v475, %v587
      %v598 = vmul.f32 %v480, %v587
      %v599 = vmul.f32 %v485, %v587
      %v600 = vmul.f32 %v490, %v587
      %v601 = vmul.f32 %v495, %v587
      %v602 = vmul.f32 %v500, %v587
      %v603 = vmul.f32 %v505, %v587
      %v604 = vmul.f32 %v510, %v587
      %v605 = vmul.f32 %v515, %v587
      %v606 = vmul.f32 %v520, %v587
      %v607 = vmul.f32 %v525, %v587
      %v608 = vmul.f32 %v530, %v587
      %v609 = vmul.f32 %v535, %v587
      %v610 = vmul.f32 %v540, %v587
      %v611 = vmul.f32 %v545, %v587
      %v612 = vmul.f32 %v550, %v587
      %v613 = vmul.f32 %v555, %v587
      %v614 = vmul.f32 %v560, %v587
      %v615 = vmul.f32 %v565, %v587
      %v616 = vmul.f32 %v570, %v587
      %v617 = vmul.f32 %v575, %v587
      %v618 = vmul.f32 %v580, %v587
      %v619 = vmul.f32 %v585, %v587
      %v620 = vadd.f32 %v588, 0.0
      %v621 = vadd.f32 %v589, 0.0
      %v622 = vadd.f32 %v590, 0.0
      %v623 = vadd.f32 %v591, 0.0
      %v624 = vadd.f32 %v592, 0.0
      %v625 = vadd.f32 %v593, 0.0
      %v626 = vadd.f32 %v594, 0.0
      %v627 = vadd.f32 %v595, 0.0
      %v628 = vadd.f32 %v596, 0.0
      %v629 = vadd.f32 %v597, 0.0
      %v630 = vadd.f32 %v598, 0.0
      %v631 = vadd.f32 %v599, 0.0
      %v632 = vadd.f32 %v600, 0.0
      %v633 = vadd.f32 %v601, 0.0
      %v634 = vadd.f32 %v602, 0.0
      %v635 = vadd.f32 %v603, 0.0
      %v636 = vadd.f32 %v604, 0.0
      %v637 = vadd.f32 %v605, 0.0
      %v638 = vadd.f32 %v606, 0.0
      %v639 = vadd.f32 %v607, 0.0
      %v640 = vadd.f32 %v608, 0.0
      %v641 = vadd.f32 %v609, 0.0
      %v642 = vadd.f32 %v610, 0.0
      %v643 = vadd.f32 %v611, 0.0
      %v644 = vadd.f32 %v612, 0.0
      %v645 = vadd.f32 %v613, 0.0
      %v646 = vadd.f32 %v614, 0.0
      %v647 = vadd.f32 %v615, 0.0
      %v648 = vadd.f32 %v616, 0.0
      %v649 = vadd.f32 %v617, 0.0
      %v650 = vadd.f32 %v618, 0.0
      %v651 = vadd.f32 %v619, 0.0
      %v652 = vld [vmem:[#allocation2 + $0x1] sm:$0xff]
      %v653 = vld [vmem:[#allocation2 + $0x9] sm:$0xff]
      %v654 = vld [vmem:[#allocation2 + $0x19] sm:$0xff]
      %v655 = vld [vmem:[#allocation2 + $0x21] sm:$0xff]
      %v656 = vld [vmem:[#allocation2 + $0x31] sm:$0xff]
      %v657 = vld [vmem:[#allocation2 + $0x39] sm:$0xff]
      %v658 = vld [vmem:[#allocation2 + $0x49] sm:$0xff]
      %v659 = vld [vmem:[#allocation2 + $0x51] sm:$0xff]
      %v660 = vld [vmem:[#allocation2 + $0x61] sm:$0xff]
      %v661 = vld [vmem:[#allocation2 + $0x69] sm:$0xff]
      %v662 = vld [vmem:[#allocation2 + $0x79] sm:$0xff]
      %v663 = vld [vmem:[#allocation2 + $0x81] sm:$0xff]
      %v664 = vld [vmem:[#allocation2 + $0x91] sm:$0xff]
      %v665 = vld [vmem:[#allocation2 + $0x99] sm:$0xff]
      %v666 = vld [vmem:[#allocation2 + $0xa9] sm:$0xff]
      %v667 = vld [vmem:[#allocation2 + $0xb1] sm:$0xff]
      %v668 = vld [vmem:[#allocation2 + $0xc1] sm:$0xff]
      %v669 = vld [vmem:[#allocation2 + $0xc9] sm:$0xff]
      %v670 = vld [vmem:[#allocation2 + $0xd9] sm:$0xff]
      %v671 = vld [vmem:[#allocation2 + $0xe1] sm:$0xff]
      %v672 = vld [vmem:[#allocation2 + $0xf1] sm:$0xff]
      %v673 = vld [vmem:[#allocation2 + $0xf9] sm:$0xff]
      %v674 = vld [vmem:[#allocation2 + $0x109] sm:$0xff]
      %v675 = vld [vmem:[#allocation2 + $0x111] sm:$0xff]
      %v676 = vld [vmem:[#allocation2 + $0x121] sm:$0xff]
      %v677 = vld [vmem:[#allocation2 + $0x129] sm:$0xff]
      %v678 = vld [vmem:[#allocation2 + $0x139] sm:$0xff]
      %v679 = vld [vmem:[#allocation2 + $0x141] sm:$0xff]
      %v680 = vld [vmem:[#allocation2 + $0x151] sm:$0xff]
      %v681 = vld [vmem:[#allocation2 + $0x159] sm:$0xff]
      %v682 = vld [vmem:[#allocation2 + $0x169] sm:$0xff]
      %v683 = vld [vmem:[#allocation2 + $0x171] sm:$0xff]
      %v684 = vld [vmem:[%s3 + $0x1] sm:$0x1]
      %686 = vset.pattern.permute.xlu0 0
      %687 = vperm.xlu0 %686, %v652
      %v688 = vpop.permute.xlu0 %687
      %691 = vset.pattern.permute.xlu0 0
      %692 = vperm.xlu0 %691, %v653
      %v693 = vpop.permute.xlu0 %692
      %696 = vset.pattern.permute.xlu0 0
      %697 = vperm.xlu0 %696, %v654
      %v698 = vpop.permute.xlu0 %697
      %701 = vset.pattern.permute.xlu0 0
      %702 = vperm.xlu0 %701, %v655
      %v703 = vpop.permute.xlu0 %702
      %706 = vset.pattern.permute.xlu0 0
      %707 = vperm.xlu0 %706, %v656
      %v708 = vpop.permute.xlu0 %707
      %711 = vset.pattern.permute.xlu0 0
      %712 = vperm.xlu0 %711, %v657
      %v713 = vpop.permute.xlu0 %712
      %716 = vset.pattern.permute.xlu0 0
      %717 = vperm.xlu0 %716, %v658
      %v718 = vpop.permute.xlu0 %717
      %721 = vset.pattern.permute.xlu0 0
      %722 = vperm.xlu0 %721, %v659
      %v723 = vpop.permute.xlu0 %722
      %726 = vset.pattern.permute.xlu0 0
      %727 = vperm.xlu0 %726, %v660
      %v728 = vpop.permute.xlu0 %727
      %731 = vset.pattern.permute.xlu0 0
      %732 = vperm.xlu0 %731, %v661
      %v733 = vpop.permute.xlu0 %732
      %736 = vset.pattern.permute.xlu0 0
      %737 = vperm.xlu0 %736, %v662
      %v738 = vpop.permute.xlu0 %737
      %741 = vset.pattern.permute.xlu0 0
      %742 = vperm.xlu0 %741, %v663
      %v743 = vpop.permute.xlu0 %742
      %746 = vset.pattern.permute.xlu0 0
      %747 = vperm.xlu0 %746, %v664
      %v748 = vpop.permute.xlu0 %747
      %751 = vset.pattern.permute.xlu0 0
      %752 = vperm.xlu0 %751, %v665
      %v753 = vpop.permute.xlu0 %752
      %756 = vset.pattern.permute.xlu0 0
      %757 = vperm.xlu0 %756, %v666
      %v758 = vpop.permute.xlu0 %757
      %761 = vset.pattern.permute.xlu0 0
      %762 = vperm.xlu0 %761, %v667
      %v763 = vpop.permute.xlu0 %762
      %766 = vset.pattern.permute.xlu0 0
      %767 = vperm.xlu0 %766, %v668
      %v768 = vpop.permute.xlu0 %767
      %771 = vset.pattern.permute.xlu0 0
      %772 = vperm.xlu0 %771, %v669
      %v773 = vpop.permute.xlu0 %772
      %776 = vset.pattern.permute.xlu0 0
      %777 = vperm.xlu0 %776, %v670
      %v778 = vpop.permute.xlu0 %777
      %781 = vset.pattern.permute.xlu0 0
      %782 = vperm.xlu0 %781, %v671
      %v783 = vpop.permute.xlu0 %782
      %786 = vset.pattern.permute.xlu0 0
      %787 = vperm.xlu0 %786, %v672
      %v788 = vpop.permute.xlu0 %787
      %791 = vset.pattern.permute.xlu0 0
      %792 = vperm.xlu0 %791, %v673
      %v793 = vpop.permute.xlu0 %792
      %796 = vset.pattern.permute.xlu0 0
      %797 = vperm.xlu0 %796, %v674
      %v798 = vpop.permute.xlu0 %797
      %801 = vset.pattern.permute.xlu0 0
      %802 = vperm.xlu0 %801, %v675
      %v803 = vpop.permute.xlu0 %802
      %806 = vset.pattern.permute.xlu0 0
      %807 = vperm.xlu0 %806, %v676
      %v808 = vpop.permute.xlu0 %807
      %811 = vset.pattern.permute.xlu0 0
      %812 = vperm.xlu0 %811, %v677
      %v813 = vpop.permute.xlu0 %812
      %816 = vset.pattern.permute.xlu0 0
      %817 = vperm.xlu0 %816, %v678
      %v818 = vpop.permute.xlu0 %817
      %821 = vset.pattern.permute.xlu0 0
      %822 = vperm.xlu0 %821, %v679
      %v823 = vpop.permute.xlu0 %822
      %826 = vset.pattern.permute.xlu0 0
      %827 = vperm.xlu0 %826, %v680
      %v828 = vpop.permute.xlu0 %827
      %831 = vset.pattern.permute.xlu0 0
      %832 = vperm.xlu0 %831, %v681
      %v833 = vpop.permute.xlu0 %832
      %836 = vset.pattern.permute.xlu0 0
      %837 = vperm.xlu0 %836, %v682
      %v838 = vpop.permute.xlu0 %837
      %841 = vset.pattern.permute.xlu0 0
      %842 = vperm.xlu0 %841, %v683
      %v843 = vpop.permute.xlu0 %842
      %v845 = vperm.slane %v684, 0
      %v846 = vmul.f32 %v688, %v845
      %v847 = vmul.f32 %v693, %v845
      %v848 = vmul.f32 %v698, %v845
      %v849 = vmul.f32 %v703, %v845
      %v850 = vmul.f32 %v708, %v845
      %v851 = vmul.f32 %v713, %v845
      %v852 = vmul.f32 %v718, %v845
      %v853 = vmul.f32 %v723, %v845
      %v854 = vmul.f32 %v728, %v845
      %v855 = vmul.f32 %v733, %v845
      %v856 = vmul.f32 %v738, %v845
      %v857 = vmul.f32 %v743, %v845
      %v858 = vmul.f32 %v748, %v845
      %v859 = vmul.f32 %v753, %v845
      %v860 = vmul.f32 %v758, %v845
      %v861 = vmul.f32 %v763, %v845
      %v862 = vmul.f32 %v768, %v845
      %v863 = vmul.f32 %v773, %v845
      %v864 = vmul.f32 %v778, %v845
      %v865 = vmul.f32 %v783, %v845
      %v866 = vmul.f32 %v788, %v845
      %v867 = vmul.f32 %v793, %v845
      %v868 = vmul.f32 %v798, %v845
      %v869 = vmul.f32 %v803, %v845
      %v870 = vmul.f32 %v808, %v845
      %v871 = vmul.f32 %v813, %v845
      %v872 = vmul.f32 %v818, %v845
      %v873 = vmul.f32 %v823, %v845
      %v874 = vmul.f32 %v828, %v845
      %v875 = vmul.f32 %v833, %v845
      %v876 = vmul.f32 %v838, %v845
      %v877 = vmul.f32 %v843, %v845
      %v878 = vadd.f32 %v620, %v846
      %v879 = vadd.f32 %v621, %v847
      %v880 = vadd.f32 %v622, %v848
      %v881 = vadd.f32 %v623, %v849
      %v882 = vadd.f32 %v624, %v850
      %v883 = vadd.f32 %v625, %v851
      %v884 = vadd.f32 %v626, %v852
      %v885 = vadd.f32 %v627, %v853
      %v886 = vadd.f32 %v628, %v854
      %v887 = vadd.f32 %v629, %v855
      %v888 = vadd.f32 %v630, %v856
      %v889 = vadd.f32 %v631, %v857
      %v890 = vadd.f32 %v632, %v858
      %v891 = vadd.f32 %v633, %v859
      %v892 = vadd.f32 %v634, %v860
      %v893 = vadd.f32 %v635, %v861
      %v894 = vadd.f32 %v636, %v862
      %v895 = vadd.f32 %v637, %v863
      %v896 = vadd.f32 %v638, %v864
      %v897 = vadd.f32 %v639, %v865
      %v898 = vadd.f32 %v640, %v866
      %v899 = vadd.f32 %v641, %v867
      %v900 = vadd.f32 %v642, %v868
      %v901 = vadd.f32 %v643, %v869
      %v902 = vadd.f32 %v644, %v870
      %v903 = vadd.f32 %v645, %v871
      %v904 = vadd.f32 %v646, %v872
      %v905 = vadd.f32 %v647, %v873
      %v906 = vadd.f32 %v648, %v874
      %v907 = vadd.f32 %v649, %v875
      %v908 = vadd.f32 %v650, %v876
      %v909 = vadd.f32 %v651, %v877
      %v910 = vld [vmem:[#allocation2 + $0x2] sm:$0xff]
      %v911 = vld [vmem:[#allocation2 + $0xa] sm:$0xff]
      %v912 = vld [vmem:[#allocation2 + $0x1a] sm:$0xff]
      %v913 = vld [vmem:[#allocation2 + $0x22] sm:$0xff]
      %v914 = vld [vmem:[#allocation2 + $0x32] sm:$0xff]
      %v915 = vld [vmem:[#allocation2 + $0x3a] sm:$0xff]
      %v916 = vld [vmem:[#allocation2 + $0x4a] sm:$0xff]
      %v917 = vld [vmem:[#allocation2 + $0x52] sm:$0xff]
      %v918 = vld [vmem:[#allocation2 + $0x62] sm:$0xff]
      %v919 = vld [vmem:[#allocation2 + $0x6a] sm:$0xff]
      %v920 = vld [vmem:[#allocation2 + $0x7a] sm:$0xff]
      %v921 = vld [vmem:[#allocation2 + $0x82] sm:$0xff]
      %v922 = vld [vmem:[#allocation2 + $0x92] sm:$0xff]
      %v923 = vld [vmem:[#allocation2 + $0x9a] sm:$0xff]
      %v924 = vld [vmem:[#allocation2 + $0xaa] sm:$0xff]
      %v925 = vld [vmem:[#allocation2 + $0xb2] sm:$0xff]
      %v926 = vld [vmem:[#allocation2 + $0xc2] sm:$0xff]
      %v927 = vld [vmem:[#allocation2 + $0xca] sm:$0xff]
      %v928 = vld [vmem:[#allocation2 + $0xda] sm:$0xff]
      %v929 = vld [vmem:[#allocation2 + $0xe2] sm:$0xff]
      %v930 = vld [vmem:[#allocation2 + $0xf2] sm:$0xff]
      %v931 = vld [vmem:[#allocation2 + $0xfa] sm:$0xff]
      %v932 = vld [vmem:[#allocation2 + $0x10a] sm:$0xff]
      %v933 = vld [vmem:[#allocation2 + $0x112] sm:$0xff]
      %v934 = vld [vmem:[#allocation2 + $0x122] sm:$0xff]
      %v935 = vld [vmem:[#allocation2 + $0x12a] sm:$0xff]
      %v936 = vld [vmem:[#allocation2 + $0x13a] sm:$0xff]
      %v937 = vld [vmem:[#allocation2 + $0x142] sm:$0xff]
      %v938 = vld [vmem:[#allocation2 + $0x152] sm:$0xff]
      %v939 = vld [vmem:[#allocation2 + $0x15a] sm:$0xff]
      %v940 = vld [vmem:[#allocation2 + $0x16a] sm:$0xff]
      %v941 = vld [vmem:[#allocation2 + $0x172] sm:$0xff]
      %v942 = vld [vmem:[%s3 + $0x2] sm:$0x1]
      %944 = vset.pattern.permute.xlu0 0
      %945 = vperm.xlu0 %944, %v910
      %v946 = vpop.permute.xlu0 %945
      %949 = vset.pattern.permute.xlu0 0
      %950 = vperm.xlu0 %949, %v911
      %v951 = vpop.permute.xlu0 %950
      %954 = vset.pattern.permute.xlu0 0
      %955 = vperm.xlu0 %954, %v912
      %v956 = vpop.permute.xlu0 %955
      %959 = vset.pattern.permute.xlu0 0
      %960 = vperm.xlu0 %959, %v913
      %v961 = vpop.permute.xlu0 %960
      %964 = vset.pattern.permute.xlu0 0
      %965 = vperm.xlu0 %964, %v914
      %v966 = vpop.permute.xlu0 %965
      %969 = vset.pattern.permute.xlu0 0
      %970 = vperm.xlu0 %969, %v915
      %v971 = vpop.permute.xlu0 %970
      %974 = vset.pattern.permute.xlu0 0
      %975 = vperm.xlu0 %974, %v916
      %v976 = vpop.permute.xlu0 %975
      %979 = vset.pattern.permute.xlu0 0
      %980 = vperm.xlu0 %979, %v917
      %v981 = vpop.permute.xlu0 %980
      %984 = vset.pattern.permute.xlu0 0
      %985 = vperm.xlu0 %984, %v918
      %v986 = vpop.permute.xlu0 %985
      %989 = vset.pattern.permute.xlu0 0
      %990 = vperm.xlu0 %989, %v919
      %v991 = vpop.permute.xlu0 %990
      %994 = vset.pattern.permute.xlu0 0
      %995 = vperm.xlu0 %994, %v920
      %v996 = vpop.permute.xlu0 %995
      %999 = vset.pattern.permute.xlu0 0
      %1000 = vperm.xlu0 %999, %v921
      %v1001 = vpop.permute.xlu0 %1000
      %1004 = vset.pattern.permute.xlu0 0
      %1005 = vperm.xlu0 %1004, %v922
      %v1006 = vpop.permute.xlu0 %1005
      %1009 = vset.pattern.permute.xlu0 0
      %1010 = vperm.xlu0 %1009, %v923
      %v1011 = vpop.permute.xlu0 %1010
      %1014 = vset.pattern.permute.xlu0 0
      %1015 = vperm.xlu0 %1014, %v924
      %v1016 = vpop.permute.xlu0 %1015
      %1019 = vset.pattern.permute.xlu0 0
      %1020 = vperm.xlu0 %1019, %v925
      %v1021 = vpop.permute.xlu0 %1020
      %1024 = vset.pattern.permute.xlu0 0
      %1025 = vperm.xlu0 %1024, %v926
      %v1026 = vpop.permute.xlu0 %1025
      %1029 = vset.pattern.permute.xlu0 0
      %1030 = vperm.xlu0 %1029, %v927
      %v1031 = vpop.permute.xlu0 %1030
      %1034 = vset.pattern.permute.xlu0 0
      %1035 = vperm.xlu0 %1034, %v928
      %v1036 = vpop.permute.xlu0 %1035
      %1039 = vset.pattern.permute.xlu0 0
      %1040 = vperm.xlu0 %1039, %v929
      %v1041 = vpop.permute.xlu0 %1040
      %1044 = vset.pattern.permute.xlu0 0
      %1045 = vperm.xlu0 %1044, %v930
      %v1046 = vpop.permute.xlu0 %1045
      %1049 = vset.pattern.permute.xlu0 0
      %1050 = vperm.xlu0 %1049, %v931
      %v1051 = vpop.permute.xlu0 %1050
      %1054 = vset.pattern.permute.xlu0 0
      %1055 = vperm.xlu0 %1054, %v932
      %v1056 = vpop.permute.xlu0 %1055
      %1059 = vset.pattern.permute.xlu0 0
      %1060 = vperm.xlu0 %1059, %v933
      %v1061 = vpop.permute.xlu0 %1060
      %1064 = vset.pattern.permute.xlu0 0
      %1065 = vperm.xlu0 %1064, %v934
      %v1066 = vpop.permute.xlu0 %1065
      %1069 = vset.pattern.permute.xlu0 0
      %1070 = vperm.xlu0 %1069, %v935
      %v1071 = vpop.permute.xlu0 %1070
      %1074 = vset.pattern.permute.xlu0 0
      %1075 = vperm.xlu0 %1074, %v936
      %v1076 = vpop.permute.xlu0 %1075
      %1079 = vset.pattern.permute.xlu0 0
      %1080 = vperm.xlu0 %1079, %v937
      %v1081 = vpop.permute.xlu0 %1080
      %1084 = vset.pattern.permute.xlu0 0
      %1085 = vperm.xlu0 %1084, %v938
      %v1086 = vpop.permute.xlu0 %1085
      %1089 = vset.pattern.permute.xlu0 0
      %1090 = vperm.xlu0 %1089, %v939
      %v1091 = vpop.permute.xlu0 %1090
      %1094 = vset.pattern.permute.xlu0 0
      %1095 = vperm.xlu0 %1094, %v940
      %v1096 = vpop.permute.xlu0 %1095
      %1099 = vset.pattern.permute.xlu0 0
      %1100 = vperm.xlu0 %1099, %v941
      %v1101 = vpop.permute.xlu0 %1100
      %v1103 = vperm.slane %v942, 0
      %v1104 = vmul.f32 %v946, %v1103
      %v1105 = vmul.f32 %v951, %v1103
      %v1106 = vmul.f32 %v956, %v1103
      %v1107 = vmul.f32 %v961, %v1103
      %v1108 = vmul.f32 %v966, %v1103
      %v1109 = vmul.f32 %v971, %v1103
      %v1110 = vmul.f32 %v976, %v1103
      %v1111 = vmul.f32 %v981, %v1103
      %v1112 = vmul.f32 %v986, %v1103
      %v1113 = vmul.f32 %v991, %v1103
      %v1114 = vmul.f32 %v996, %v1103
      %v1115 = vmul.f32 %v1001, %v1103
      %v1116 = vmul.f32 %v1006, %v1103
      %v1117 = vmul.f32 %v1011, %v1103
      %v1118 = vmul.f32 %v1016, %v1103
      %v1119 = vmul.f32 %v1021, %v1103
      %v1120 = vmul.f32 %v1026, %v1103
      %v1121 = vmul.f32 %v1031, %v1103
      %v1122 = vmul.f32 %v1036, %v1103
      %v1123 = vmul.f32 %v1041, %v1103
      %v1124 = vmul.f32 %v1046, %v1103
      %v1125 = vmul.f32 %v1051, %v1103
      %v1126 = vmul.f32 %v1056, %v1103
      %v1127 = vmul.f32 %v1061, %v1103
      %v1128 = vmul.f32 %v1066, %v1103
      %v1129 = vmul.f32 %v1071, %v1103
      %v1130 = vmul.f32 %v1076, %v1103
      %v1131 = vmul.f32 %v1081, %v1103
      %v1132 = vmul.f32 %v1086, %v1103
      %v1133 = vmul.f32 %v1091, %v1103
      %v1134 = vmul.f32 %v1096, %v1103
      %v1135 = vmul.f32 %v1101, %v1103
      %v1136 = vadd.f32 %v878, %v1104
      %v1137 = vadd.f32 %v879, %v1105
      %v1138 = vadd.f32 %v880, %v1106
      %v1139 = vadd.f32 %v881, %v1107
      %v1140 = vadd.f32 %v882, %v1108
      %v1141 = vadd.f32 %v883, %v1109
      %v1142 = vadd.f32 %v884, %v1110
      %v1143 = vadd.f32 %v885, %v1111
      %v1144 = vadd.f32 %v886, %v1112
      %v1145 = vadd.f32 %v887, %v1113
      %v1146 = vadd.f32 %v888, %v1114
      %v1147 = vadd.f32 %v889, %v1115
      %v1148 = vadd.f32 %v890, %v1116
      %v1149 = vadd.f32 %v891, %v1117
      %v1150 = vadd.f32 %v892, %v1118
      %v1151 = vadd.f32 %v893, %v1119
      %v1152 = vadd.f32 %v894, %v1120
      %v1153 = vadd.f32 %v895, %v1121
      %v1154 = vadd.f32 %v896, %v1122
      %v1155 = vadd.f32 %v897, %v1123
      %v1156 = vadd.f32 %v898, %v1124
      %v1157 = vadd.f32 %v899, %v1125
      %v1158 = vadd.f32 %v900, %v1126
      %v1159 = vadd.f32 %v901, %v1127
      %v1160 = vadd.f32 %v902, %v1128
      %v1161 = vadd.f32 %v903, %v1129
      %v1162 = vadd.f32 %v904, %v1130
      %v1163 = vadd.f32 %v905, %v1131
      %v1164 = vadd.f32 %v906, %v1132
      %v1165 = vadd.f32 %v907, %v1133
      %v1166 = vadd.f32 %v908, %v1134
      %v1167 = vadd.f32 %v909, %v1135
      %v1168 = vld [vmem:[%s361] sm:$0xff]
      %v1169 = vld [vmem:[%s361 + $0x8] sm:$0xff]
      %v1170 = vld [vmem:[%s361 + $0x18] sm:$0xff]
      %v1171 = vld [vmem:[%s361 + $0x20] sm:$0xff]
      %v1172 = vld [vmem:[%s361 + $0x30] sm:$0xff]
      %v1173 = vld [vmem:[%s361 + $0x38] sm:$0xff]
      %v1174 = vld [vmem:[%s361 + $0x48] sm:$0xff]
      %v1175 = vld [vmem:[%s361 + $0x50] sm:$0xff]
      %v1176 = vld [vmem:[%s361 + $0x60] sm:$0xff]
      %v1177 = vld [vmem:[%s361 + $0x68] sm:$0xff]
      %v1178 = vld [vmem:[%s361 + $0x78] sm:$0xff]
      %v1179 = vld [vmem:[%s361 + $0x80] sm:$0xff]
      %v1180 = vld [vmem:[%s361 + $0x90] sm:$0xff]
      %v1181 = vld [vmem:[%s361 + $0x98] sm:$0xff]
      %v1182 = vld [vmem:[%s361 + $0xa8] sm:$0xff]
      %v1183 = vld [vmem:[%s361 + $0xb0] sm:$0xff]
      %v1184 = vld [vmem:[%s361 + $0xc0] sm:$0xff]
      %v1185 = vld [vmem:[%s361 + $0xc8] sm:$0xff]
      %v1186 = vld [vmem:[%s361 + $0xd8] sm:$0xff]
      %v1187 = vld [vmem:[%s361 + $0xe0] sm:$0xff]
      %v1188 = vld [vmem:[%s361 + $0xf0] sm:$0xff]
      %v1189 = vld [vmem:[%s361 + $0xf8] sm:$0xff]
      %v1190 = vld [vmem:[%s361 + $0x108] sm:$0xff]
      %v1191 = vld [vmem:[%s361 + $0x110] sm:$0xff]
      %v1192 = vld [vmem:[%s361 + $0x120] sm:$0xff]
      %v1193 = vld [vmem:[%s361 + $0x128] sm:$0xff]
      %v1194 = vld [vmem:[%s361 + $0x138] sm:$0xff]
      %v1195 = vld [vmem:[%s361 + $0x140] sm:$0xff]
      %v1196 = vld [vmem:[%s361 + $0x150] sm:$0xff]
      %v1197 = vld [vmem:[%s361 + $0x158] sm:$0xff]
      %v1198 = vld [vmem:[%s361 + $0x168] sm:$0xff]
      %v1199 = vld [vmem:[%s361 + $0x170] sm:$0xff]
      %v1200 = vld [vmem:[%s3 + $0x3] sm:$0x1]
      %1202 = vset.pattern.permute.xlu0 0
      %1203 = vperm.xlu0 %1202, %v1168
      %v1204 = vpop.permute.xlu0 %1203
      %1207 = vset.pattern.permute.xlu0 0
      %1208 = vperm.xlu0 %1207, %v1169
      %v1209 = vpop.permute.xlu0 %1208
      %1212 = vset.pattern.permute.xlu0 0
      %1213 = vperm.xlu0 %1212, %v1170
      %v1214 = vpop.permute.xlu0 %1213
      %1217 = vset.pattern.permute.xlu0 0
      %1218 = vperm.xlu0 %1217, %v1171
      %v1219 = vpop.permute.xlu0 %1218
      %1222 = vset.pattern.permute.xlu0 0
      %1223 = vperm.xlu0 %1222, %v1172
      %v1224 = vpop.permute.xlu0 %1223
      %1227 = vset.pattern.permute.xlu0 0
      %1228 = vperm.xlu0 %1227, %v1173
      %v1229 = vpop.permute.xlu0 %1228
      %1232 = vset.pattern.permute.xlu0 0
      %1233 = vperm.xlu0 %1232, %v1174
      %v1234 = vpop.permute.xlu0 %1233
      %1237 = vset.pattern.permute.xlu0 0
      %1238 = vperm.xlu0 %1237, %v1175
      %v1239 = vpop.permute.xlu0 %1238
      %1242 = vset.pattern.permute.xlu0 0
      %1243 = vperm.xlu0 %1242, %v1176
      %v1244 = vpop.permute.xlu0 %1243
      %1247 = vset.pattern.permute.xlu0 0
      %1248 = vperm.xlu0 %1247, %v1177
      %v1249 = vpop.permute.xlu0 %1248
      %1252 = vset.pattern.permute.xlu0 0
      %1253 = vperm.xlu0 %1252, %v1178
      %v1254 = vpop.permute.xlu0 %1253
      %1257 = vset.pattern.permute.xlu0 0
      %1258 = vperm.xlu0 %1257, %v1179
      %v1259 = vpop.permute.xlu0 %1258
      %1262 = vset.pattern.permute.xlu0 0
      %1263 = vperm.xlu0 %1262, %v1180
      %v1264 = vpop.permute.xlu0 %1263
      %1267 = vset.pattern.permute.xlu0 0
      %1268 = vperm.xlu0 %1267, %v1181
      %v1269 = vpop.permute.xlu0 %1268
      %1272 = vset.pattern.permute.xlu0 0
      %1273 = vperm.xlu0 %1272, %v1182
      %v1274 = vpop.permute.xlu0 %1273
      %1277 = vset.pattern.permute.xlu0 0
      %1278 = vperm.xlu0 %1277, %v1183
      %v1279 = vpop.permute.xlu0 %1278
      %1282 = vset.pattern.permute.xlu0 0
      %1283 = vperm.xlu0 %1282, %v1184
      %v1284 = vpop.permute.xlu0 %1283
      %1287 = vset.pattern.permute.xlu0 0
      %1288 = vperm.xlu0 %1287, %v1185
      %v1289 = vpop.permute.xlu0 %1288
      %1292 = vset.pattern.permute.xlu0 0
      %1293 = vperm.xlu0 %1292, %v1186
      %v1294 = vpop.permute.xlu0 %1293
      %1297 = vset.pattern.permute.xlu0 0
      %1298 = vperm.xlu0 %1297, %v1187
      %v1299 = vpop.permute.xlu0 %1298
      %1302 = vset.pattern.permute.xlu0 0
      %1303 = vperm.xlu0 %1302, %v1188
      %v1304 = vpop.permute.xlu0 %1303
      %1307 = vset.pattern.permute.xlu0 0
      %1308 = vperm.xlu0 %1307, %v1189
      %v1309 = vpop.permute.xlu0 %1308
      %1312 = vset.pattern.permute.xlu0 0
      %1313 = vperm.xlu0 %1312, %v1190
      %v1314 = vpop.permute.xlu0 %1313
      %1317 = vset.pattern.permute.xlu0 0
      %1318 = vperm.xlu0 %1317, %v1191
      %v1319 = vpop.permute.xlu0 %1318
      %1322 = vset.pattern.permute.xlu0 0
      %1323 = vperm.xlu0 %1322, %v1192
      %v1324 = vpop.permute.xlu0 %1323
      %1327 = vset.pattern.permute.xlu0 0
      %1328 = vperm.xlu0 %1327, %v1193
      %v1329 = vpop.permute.xlu0 %1328
      %1332 = vset.pattern.permute.xlu0 0
      %1333 = vperm.xlu0 %1332, %v1194
      %v1334 = vpop.permute.xlu0 %1333
      %1337 = vset.pattern.permute.xlu0 0
      %1338 = vperm.xlu0 %1337, %v1195
      %v1339 = vpop.permute.xlu0 %1338
      %1342 = vset.pattern.permute.xlu0 0
      %1343 = vperm.xlu0 %1342, %v1196
      %v1344 = vpop.permute.xlu0 %1343
      %1347 = vset.pattern.permute.xlu0 0
      %1348 = vperm.xlu0 %1347, %v1197
      %v1349 = vpop.permute.xlu0 %1348
      %1352 = vset.pattern.permute.xlu0 0
      %1353 = vperm.xlu0 %1352, %v1198
      %v1354 = vpop.permute.xlu0 %1353
      %1357 = vset.pattern.permute.xlu0 0
      %1358 = vperm.xlu0 %1357, %v1199
      %v1359 = vpop.permute.xlu0 %1358
      %v1361 = vperm.slane %v1200, 0
      %v1362 = vmul.f32 %v1204, %v1361
      %v1363 = vmul.f32 %v1209, %v1361
      %v1364 = vmul.f32 %v1214, %v1361
      %v1365 = vmul.f32 %v1219, %v1361
      %v1366 = vmul.f32 %v1224, %v1361
      %v1367 = vmul.f32 %v1229, %v1361
      %v1368 = vmul.f32 %v1234, %v1361
      %v1369 = vmul.f32 %v1239, %v1361
      %v1370 = vmul.f32 %v1244, %v1361
      %v1371 = vmul.f32 %v1249, %v1361
      %v1372 = vmul.f32 %v1254, %v1361
      %v1373 = vmul.f32 %v1259, %v1361
      %v1374 = vmul.f32 %v1264, %v1361
      %v1375 = vmul.f32 %v1269, %v1361
      %v1376 = vmul.f32 %v1274, %v1361
      %v1377 = vmul.f32 %v1279, %v1361
      %v1378 = vmul.f32 %v1284, %v1361
      %v1379 = vmul.f32 %v1289, %v1361
      %v1380 = vmul.f32 %v1294, %v1361
      %v1381 = vmul.f32 %v1299, %v1361
      %v1382 = vmul.f32 %v1304, %v1361
      %v1383 = vmul.f32 %v1309, %v1361
      %v1384 = vmul.f32 %v1314, %v1361
      %v1385 = vmul.f32 %v1319, %v1361
      %v1386 = vmul.f32 %v1324, %v1361
      %v1387 = vmul.f32 %v1329, %v1361
      %v1388 = vmul.f32 %v1334, %v1361
      %v1389 = vmul.f32 %v1339, %v1361
      %v1390 = vmul.f32 %v1344, %v1361
      %v1391 = vmul.f32 %v1349, %v1361
      %v1392 = vmul.f32 %v1354, %v1361
      %v1393 = vmul.f32 %v1359, %v1361
      %v1394 = vadd.f32 %v1136, %v1362
      %v1395 = vadd.f32 %v1137, %v1363
      %v1396 = vadd.f32 %v1138, %v1364
      %v1397 = vadd.f32 %v1139, %v1365
      %v1398 = vadd.f32 %v1140, %v1366
      %v1399 = vadd.f32 %v1141, %v1367
      %v1400 = vadd.f32 %v1142, %v1368
      %v1401 = vadd.f32 %v1143, %v1369
      %v1402 = vadd.f32 %v1144, %v1370
      %v1403 = vadd.f32 %v1145, %v1371
      %v1404 = vadd.f32 %v1146, %v1372
      %v1405 = vadd.f32 %v1147, %v1373
      %v1406 = vadd.f32 %v1148, %v1374
      %v1407 = vadd.f32 %v1149, %v1375
      %v1408 = vadd.f32 %v1150, %v1376
      %v1409 = vadd.f32 %v1151, %v1377
      %v1410 = vadd.f32 %v1152, %v1378
      %v1411 = vadd.f32 %v1153, %v1379
      %v1412 = vadd.f32 %v1154, %v1380
      %v1413 = vadd.f32 %v1155, %v1381
      %v1414 = vadd.f32 %v1156, %v1382
      %v1415 = vadd.f32 %v1157, %v1383
      %v1416 = vadd.f32 %v1158, %v1384
      %v1417 = vadd.f32 %v1159, %v1385
      %v1418 = vadd.f32 %v1160, %v1386
      %v1419 = vadd.f32 %v1161, %v1387
      %v1420 = vadd.f32 %v1162, %v1388
      %v1421 = vadd.f32 %v1163, %v1389
      %v1422 = vadd.f32 %v1164, %v1390
      %v1423 = vadd.f32 %v1165, %v1391
      %v1424 = vadd.f32 %v1166, %v1392
      %v1425 = vadd.f32 %v1167, %v1393
      %v1426 = vld [vmem:[%s361 + $0x1] sm:$0xff]
      %v1427 = vld [vmem:[%s361 + $0x9] sm:$0xff]
      %v1428 = vld [vmem:[%s361 + $0x19] sm:$0xff]
      %v1429 = vld [vmem:[%s361 + $0x21] sm:$0xff]
      %v1430 = vld [vmem:[%s361 + $0x31] sm:$0xff]
      %v1431 = vld [vmem:[%s361 + $0x39] sm:$0xff]
      %v1432 = vld [vmem:[%s361 + $0x49] sm:$0xff]
      %v1433 = vld [vmem:[%s361 + $0x51] sm:$0xff]
      %v1434 = vld [vmem:[%s361 + $0x61] sm:$0xff]
      %v1435 = vld [vmem:[%s361 + $0x69] sm:$0xff]
      %v1436 = vld [vmem:[%s361 + $0x79] sm:$0xff]
      %v1437 = vld [vmem:[%s361 + $0x81] sm:$0xff]
      %v1438 = vld [vmem:[%s361 + $0x91] sm:$0xff]
      %v1439 = vld [vmem:[%s361 + $0x99] sm:$0xff]
      %v1440 = vld [vmem:[%s361 + $0xa9] sm:$0xff]
      %v1441 = vld [vmem:[%s361 + $0xb1] sm:$0xff]
      %v1442 = vld [vmem:[%s361 + $0xc1] sm:$0xff]
      %v1443 = vld [vmem:[%s361 + $0xc9] sm:$0xff]
      %v1444 = vld [vmem:[%s361 + $0xd9] sm:$0xff]
      %v1445 = vld [vmem:[%s361 + $0xe1] sm:$0xff]
      %v1446 = vld [vmem:[%s361 + $0xf1] sm:$0xff]
      %v1447 = vld [vmem:[%s361 + $0xf9] sm:$0xff]
      %v1448 = vld [vmem:[%s361 + $0x109] sm:$0xff]
      %v1449 = vld [vmem:[%s361 + $0x111] sm:$0xff]
      %v1450 = vld [vmem:[%s361 + $0x121] sm:$0xff]
      %v1451 = vld [vmem:[%s361 + $0x129] sm:$0xff]
      %v1452 = vld [vmem:[%s361 + $0x139] sm:$0xff]
      %v1453 = vld [vmem:[%s361 + $0x141] sm:$0xff]
      %v1454 = vld [vmem:[%s361 + $0x151] sm:$0xff]
      %v1455 = vld [vmem:[%s361 + $0x159] sm:$0xff]
      %v1456 = vld [vmem:[%s361 + $0x169] sm:$0xff]
      %v1457 = vld [vmem:[%s361 + $0x171] sm:$0xff]
      %v1458 = vld [vmem:[%s3 + $0x4] sm:$0x1]
      %1460 = vset.pattern.permute.xlu0 0
      %1461 = vperm.xlu0 %1460, %v1426
      %v1462 = vpop.permute.xlu0 %1461
      %1465 = vset.pattern.permute.xlu0 0
      %1466 = vperm.xlu0 %1465, %v1427
      %v1467 = vpop.permute.xlu0 %1466
      %1470 = vset.pattern.permute.xlu0 0
      %1471 = vperm.xlu0 %1470, %v1428
      %v1472 = vpop.permute.xlu0 %1471
      %1475 = vset.pattern.permute.xlu0 0
      %1476 = vperm.xlu0 %1475, %v1429
      %v1477 = vpop.permute.xlu0 %1476
      %1480 = vset.pattern.permute.xlu0 0
      %1481 = vperm.xlu0 %1480, %v1430
      %v1482 = vpop.permute.xlu0 %1481
      %1485 = vset.pattern.permute.xlu0 0
      %1486 = vperm.xlu0 %1485, %v1431
      %v1487 = vpop.permute.xlu0 %1486
      %1490 = vset.pattern.permute.xlu0 0
      %1491 = vperm.xlu0 %1490, %v1432
      %v1492 = vpop.permute.xlu0 %1491
      %1495 = vset.pattern.permute.xlu0 0
      %1496 = vperm.xlu0 %1495, %v1433
      %v1497 = vpop.permute.xlu0 %1496
      %1500 = vset.pattern.permute.xlu0 0
      %1501 = vperm.xlu0 %1500, %v1434
      %v1502 = vpop.permute.xlu0 %1501
      %1505 = vset.pattern.permute.xlu0 0
      %1506 = vperm.xlu0 %1505, %v1435
      %v1507 = vpop.permute.xlu0 %1506
      %1510 = vset.pattern.permute.xlu0 0
      %1511 = vperm.xlu0 %1510, %v1436
      %v1512 = vpop.permute.xlu0 %1511
      %1515 = vset.pattern.permute.xlu0 0
      %1516 = vperm.xlu0 %1515, %v1437
      %v1517 = vpop.permute.xlu0 %1516
      %1520 = vset.pattern.permute.xlu0 0
      %1521 = vperm.xlu0 %1520, %v1438
      %v1522 = vpop.permute.xlu0 %1521
      %1525 = vset.pattern.permute.xlu0 0
      %1526 = vperm.xlu0 %1525, %v1439
      %v1527 = vpop.permute.xlu0 %1526
      %1530 = vset.pattern.permute.xlu0 0
      %1531 = vperm.xlu0 %1530, %v1440
      %v1532 = vpop.permute.xlu0 %1531
      %1535 = vset.pattern.permute.xlu0 0
      %1536 = vperm.xlu0 %1535, %v1441
      %v1537 = vpop.permute.xlu0 %1536
      %1540 = vset.pattern.permute.xlu0 0
      %1541 = vperm.xlu0 %1540, %v1442
      %v1542 = vpop.permute.xlu0 %1541
      %1545 = vset.pattern.permute.xlu0 0
      %1546 = vperm.xlu0 %1545, %v1443
      %v1547 = vpop.permute.xlu0 %1546
      %1550 = vset.pattern.permute.xlu0 0
      %1551 = vperm.xlu0 %1550, %v1444
      %v1552 = vpop.permute.xlu0 %1551
      %1555 = vset.pattern.permute.xlu0 0
      %1556 = vperm.xlu0 %1555, %v1445
      %v1557 = vpop.permute.xlu0 %1556
      %1560 = vset.pattern.permute.xlu0 0
      %1561 = vperm.xlu0 %1560, %v1446
      %v1562 = vpop.permute.xlu0 %1561
      %1565 = vset.pattern.permute.xlu0 0
      %1566 = vperm.xlu0 %1565, %v1447
      %v1567 = vpop.permute.xlu0 %1566
      %1570 = vset.pattern.permute.xlu0 0
      %1571 = vperm.xlu0 %1570, %v1448
      %v1572 = vpop.permute.xlu0 %1571
      %1575 = vset.pattern.permute.xlu0 0
      %1576 = vperm.xlu0 %1575, %v1449
      %v1577 = vpop.permute.xlu0 %1576
      %1580 = vset.pattern.permute.xlu0 0
      %1581 = vperm.xlu0 %1580, %v1450
      %v1582 = vpop.permute.xlu0 %1581
      %1585 = vset.pattern.permute.xlu0 0
      %1586 = vperm.xlu0 %1585, %v1451
      %v1587 = vpop.permute.xlu0 %1586
      %1590 = vset.pattern.permute.xlu0 0
      %1591 = vperm.xlu0 %1590, %v1452
      %v1592 = vpop.permute.xlu0 %1591
      %1595 = vset.pattern.permute.xlu0 0
      %1596 = vperm.xlu0 %1595, %v1453
      %v1597 = vpop.permute.xlu0 %1596
      %1600 = vset.pattern.permute.xlu0 0
      %1601 = vperm.xlu0 %1600, %v1454
      %v1602 = vpop.permute.xlu0 %1601
      %1605 = vset.pattern.permute.xlu0 0
      %1606 = vperm.xlu0 %1605, %v1455
      %v1607 = vpop.permute.xlu0 %1606
      %1610 = vset.pattern.permute.xlu0 0
      %1611 = vperm.xlu0 %1610, %v1456
      %v1612 = vpop.permute.xlu0 %1611
      %1615 = vset.pattern.permute.xlu0 0
      %1616 = vperm.xlu0 %1615, %v1457
      %v1617 = vpop.permute.xlu0 %1616
      %v1619 = vperm.slane %v1458, 0
      %v1620 = vmul.f32 %v1462, %v1619
      %v1621 = vmul.f32 %v1467, %v1619
      %v1622 = vmul.f32 %v1472, %v1619
      %v1623 = vmul.f32 %v1477, %v1619
      %v1624 = vmul.f32 %v1482, %v1619
      %v1625 = vmul.f32 %v1487, %v1619
      %v1626 = vmul.f32 %v1492, %v1619
      %v1627 = vmul.f32 %v1497, %v1619
      %v1628 = vmul.f32 %v1502, %v1619
      %v1629 = vmul.f32 %v1507, %v1619
      %v1630 = vmul.f32 %v1512, %v1619
      %v1631 = vmul.f32 %v1517, %v1619
      %v1632 = vmul.f32 %v1522, %v1619
      %v1633 = vmul.f32 %v1527, %v1619
      %v1634 = vmul.f32 %v1532, %v1619
      %v1635 = vmul.f32 %v1537, %v1619
      %v1636 = vmul.f32 %v1542, %v1619
      %v1637 = vmul.f32 %v1547, %v1619
      %v1638 = vmul.f32 %v1552, %v1619
      %v1639 = vmul.f32 %v1557, %v1619
      %v1640 = vmul.f32 %v1562, %v1619
      %v1641 = vmul.f32 %v1567, %v1619
      %v1642 = vmul.f32 %v1572, %v1619
      %v1643 = vmul.f32 %v1577, %v1619
      %v1644 = vmul.f32 %v1582, %v1619
      %v1645 = vmul.f32 %v1587, %v1619
      %v1646 = vmul.f32 %v1592, %v1619
      %v1647 = vmul.f32 %v1597, %v1619
      %v1648 = vmul.f32 %v1602, %v1619
      %v1649 = vmul.f32 %v1607, %v1619
      %v1650 = vmul.f32 %v1612, %v1619
      %v1651 = vmul.f32 %v1617, %v1619
      %v1652 = vadd.f32 %v1394, %v1620
      %v1653 = vadd.f32 %v1395, %v1621
      %v1654 = vadd.f32 %v1396, %v1622
      %v1655 = vadd.f32 %v1397, %v1623
      %v1656 = vadd.f32 %v1398, %v1624
      %v1657 = vadd.f32 %v1399, %v1625
      %v1658 = vadd.f32 %v1400, %v1626
      %v1659 = vadd.f32 %v1401, %v1627
      %v1660 = vadd.f32 %v1402, %v1628
      %v1661 = vadd.f32 %v1403, %v1629
      %v1662 = vadd.f32 %v1404, %v1630
      %v1663 = vadd.f32 %v1405, %v1631
      %v1664 = vadd.f32 %v1406, %v1632
      %v1665 = vadd.f32 %v1407, %v1633
      %v1666 = vadd.f32 %v1408, %v1634
      %v1667 = vadd.f32 %v1409, %v1635
      %v1668 = vadd.f32 %v1410, %v1636
      %v1669 = vadd.f32 %v1411, %v1637
      %v1670 = vadd.f32 %v1412, %v1638
      %v1671 = vadd.f32 %v1413, %v1639
      %v1672 = vadd.f32 %v1414, %v1640
      %v1673 = vadd.f32 %v1415, %v1641
      %v1674 = vadd.f32 %v1416, %v1642
      %v1675 = vadd.f32 %v1417, %v1643
      %v1676 = vadd.f32 %v1418, %v1644
      %v1677 = vadd.f32 %v1419, %v1645
      %v1678 = vadd.f32 %v1420, %v1646
      %v1679 = vadd.f32 %v1421, %v1647
      %v1680 = vadd.f32 %v1422, %v1648
      %v1681 = vadd.f32 %v1423, %v1649
      %v1682 = vadd.f32 %v1424, %v1650
      %v1683 = vadd.f32 %v1425, %v1651
      %v1684 = vld [vmem:[%s361 + $0x2] sm:$0xff]
      %v1685 = vld [vmem:[%s361 + $0xa] sm:$0xff]
      %v1686 = vld [vmem:[%s361 + $0x1a] sm:$0xff]
      %v1687 = vld [vmem:[%s361 + $0x22] sm:$0xff]
      %v1688 = vld [vmem:[%s361 + $0x32] sm:$0xff]
      %v1689 = vld [vmem:[%s361 + $0x3a] sm:$0xff]
      %v1690 = vld [vmem:[%s361 + $0x4a] sm:$0xff]
      %v1691 = vld [vmem:[%s361 + $0x52] sm:$0xff]
      %v1692 = vld [vmem:[%s361 + $0x62] sm:$0xff]
      %v1693 = vld [vmem:[%s361 + $0x6a] sm:$0xff]
      %v1694 = vld [vmem:[%s361 + $0x7a] sm:$0xff]
      %v1695 = vld [vmem:[%s361 + $0x82] sm:$0xff]
      %v1696 = vld [vmem:[%s361 + $0x92] sm:$0xff]
      %v1697 = vld [vmem:[%s361 + $0x9a] sm:$0xff]
      %v1698 = vld [vmem:[%s361 + $0xaa] sm:$0xff]
      %v1699 = vld [vmem:[%s361 + $0xb2] sm:$0xff]
      %v1700 = vld [vmem:[%s361 + $0xc2] sm:$0xff]
      %v1701 = vld [vmem:[%s361 + $0xca] sm:$0xff]
      %v1702 = vld [vmem:[%s361 + $0xda] sm:$0xff]
      %v1703 = vld [vmem:[%s361 + $0xe2] sm:$0xff]
      %v1704 = vld [vmem:[%s361 + $0xf2] sm:$0xff]
      %v1705 = vld [vmem:[%s361 + $0xfa] sm:$0xff]
      %v1706 = vld [vmem:[%s361 + $0x10a] sm:$0xff]
      %v1707 = vld [vmem:[%s361 + $0x112] sm:$0xff]
      %v1708 = vld [vmem:[%s361 + $0x122] sm:$0xff]
      %v1709 = vld [vmem:[%s361 + $0x12a] sm:$0xff]
      %v1710 = vld [vmem:[%s361 + $0x13a] sm:$0xff]
      %v1711 = vld [vmem:[%s361 + $0x142] sm:$0xff]
      %v1712 = vld [vmem:[%s361 + $0x152] sm:$0xff]
      %v1713 = vld [vmem:[%s361 + $0x15a] sm:$0xff]
      %v1714 = vld [vmem:[%s361 + $0x16a] sm:$0xff]
      %v1715 = vld [vmem:[%s361 + $0x172] sm:$0xff]
      %v1716 = vld [vmem:[%s3 + $0x5] sm:$0x1]
      %1718 = vset.pattern.permute.xlu0 0
      %1719 = vperm.xlu0 %1718, %v1684
      %v1720 = vpop.permute.xlu0 %1719
      %1723 = vset.pattern.permute.xlu0 0
      %1724 = vperm.xlu0 %1723, %v1685
      %v1725 = vpop.permute.xlu0 %1724
      %1728 = vset.pattern.permute.xlu0 0
      %1729 = vperm.xlu0 %1728, %v1686
      %v1730 = vpop.permute.xlu0 %1729
      %1733 = vset.pattern.permute.xlu0 0
      %1734 = vperm.xlu0 %1733, %v1687
      %v1735 = vpop.permute.xlu0 %1734
      %1738 = vset.pattern.permute.xlu0 0
      %1739 = vperm.xlu0 %1738, %v1688
      %v1740 = vpop.permute.xlu0 %1739
      %1743 = vset.pattern.permute.xlu0 0
      %1744 = vperm.xlu0 %1743, %v1689
      %v1745 = vpop.permute.xlu0 %1744
      %1748 = vset.pattern.permute.xlu0 0
      %1749 = vperm.xlu0 %1748, %v1690
      %v1750 = vpop.permute.xlu0 %1749
      %1753 = vset.pattern.permute.xlu0 0
      %1754 = vperm.xlu0 %1753, %v1691
      %v1755 = vpop.permute.xlu0 %1754
      %1758 = vset.pattern.permute.xlu0 0
      %1759 = vperm.xlu0 %1758, %v1692
      %v1760 = vpop.permute.xlu0 %1759
      %1763 = vset.pattern.permute.xlu0 0
      %1764 = vperm.xlu0 %1763, %v1693
      %v1765 = vpop.permute.xlu0 %1764
      %1768 = vset.pattern.permute.xlu0 0
      %1769 = vperm.xlu0 %1768, %v1694
      %v1770 = vpop.permute.xlu0 %1769
      %1773 = vset.pattern.permute.xlu0 0
      %1774 = vperm.xlu0 %1773, %v1695
      %v1775 = vpop.permute.xlu0 %1774
      %1778 = vset.pattern.permute.xlu0 0
      %1779 = vperm.xlu0 %1778, %v1696
      %v1780 = vpop.permute.xlu0 %1779
      %1783 = vset.pattern.permute.xlu0 0
      %1784 = vperm.xlu0 %1783, %v1697
      %v1785 = vpop.permute.xlu0 %1784
      %1788 = vset.pattern.permute.xlu0 0
      %1789 = vperm.xlu0 %1788, %v1698
      %v1790 = vpop.permute.xlu0 %1789
      %1793 = vset.pattern.permute.xlu0 0
      %1794 = vperm.xlu0 %1793, %v1699
      %v1795 = vpop.permute.xlu0 %1794
      %1798 = vset.pattern.permute.xlu0 0
      %1799 = vperm.xlu0 %1798, %v1700
      %v1800 = vpop.permute.xlu0 %1799
      %1803 = vset.pattern.permute.xlu0 0
      %1804 = vperm.xlu0 %1803, %v1701
      %v1805 = vpop.permute.xlu0 %1804
      %1808 = vset.pattern.permute.xlu0 0
      %1809 = vperm.xlu0 %1808, %v1702
      %v1810 = vpop.permute.xlu0 %1809
      %1813 = vset.pattern.permute.xlu0 0
      %1814 = vperm.xlu0 %1813, %v1703
      %v1815 = vpop.permute.xlu0 %1814
      %1818 = vset.pattern.permute.xlu0 0
      %1819 = vperm.xlu0 %1818, %v1704
      %v1820 = vpop.permute.xlu0 %1819
      %1823 = vset.pattern.permute.xlu0 0
      %1824 = vperm.xlu0 %1823, %v1705
      %v1825 = vpop.permute.xlu0 %1824
      %1828 = vset.pattern.permute.xlu0 0
      %1829 = vperm.xlu0 %1828, %v1706
      %v1830 = vpop.permute.xlu0 %1829
      %1833 = vset.pattern.permute.xlu0 0
      %1834 = vperm.xlu0 %1833, %v1707
      %v1835 = vpop.permute.xlu0 %1834
      %1838 = vset.pattern.permute.xlu0 0
      %1839 = vperm.xlu0 %1838, %v1708
      %v1840 = vpop.permute.xlu0 %1839
      %1843 = vset.pattern.permute.xlu0 0
      %1844 = vperm.xlu0 %1843, %v1709
      %v1845 = vpop.permute.xlu0 %1844
      %1848 = vset.pattern.permute.xlu0 0
      %1849 = vperm.xlu0 %1848, %v1710
      %v1850 = vpop.permute.xlu0 %1849
      %1853 = vset.pattern.permute.xlu0 0
      %1854 = vperm.xlu0 %1853, %v1711
      %v1855 = vpop.permute.xlu0 %1854
      %1858 = vset.pattern.permute.xlu0 0
      %1859 = vperm.xlu0 %1858, %v1712
      %v1860 = vpop.permute.xlu0 %1859
      %1863 = vset.pattern.permute.xlu0 0
      %1864 = vperm.xlu0 %1863, %v1713
      %v1865 = vpop.permute.xlu0 %1864
      %1868 = vset.pattern.permute.xlu0 0
      %1869 = vperm.xlu0 %1868, %v1714
      %v1870 = vpop.permute.xlu0 %1869
      %1873 = vset.pattern.permute.xlu0 0
      %1874 = vperm.xlu0 %1873, %v1715
      %v1875 = vpop.permute.xlu0 %1874
      %v1877 = vperm.slane %v1716, 0
      %v1878 = vmul.f32 %v1720, %v1877
      %v1879 = vmul.f32 %v1725, %v1877
      %v1880 = vmul.f32 %v1730, %v1877
      %v1881 = vmul.f32 %v1735, %v1877
      %v1882 = vmul.f32 %v1740, %v1877
      %v1883 = vmul.f32 %v1745, %v1877
      %v1884 = vmul.f32 %v1750, %v1877
      %v1885 = vmul.f32 %v1755, %v1877
      %v1886 = vmul.f32 %v1760, %v1877
      %v1887 = vmul.f32 %v1765, %v1877
      %v1888 = vmul.f32 %v1770, %v1877
      %v1889 = vmul.f32 %v1775, %v1877
      %v1890 = vmul.f32 %v1780, %v1877
      %v1891 = vmul.f32 %v1785, %v1877
      %v1892 = vmul.f32 %v1790, %v1877
      %v1893 = vmul.f32 %v1795, %v1877
      %v1894 = vmul.f32 %v1800, %v1877
      %v1895 = vmul.f32 %v1805, %v1877
      %v1896 = vmul.f32 %v1810, %v1877
      %v1897 = vmul.f32 %v1815, %v1877
      %v1898 = vmul.f32 %v1820, %v1877
      %v1899 = vmul.f32 %v1825, %v1877
      %v1900 = vmul.f32 %v1830, %v1877
      %v1901 = vmul.f32 %v1835, %v1877
      %v1902 = vmul.f32 %v1840, %v1877
      %v1903 = vmul.f32 %v1845, %v1877
      %v1904 = vmul.f32 %v1850, %v1877
      %v1905 = vmul.f32 %v1855, %v1877
      %v1906 = vmul.f32 %v1860, %v1877
      %v1907 = vmul.f32 %v1865, %v1877
      %v1908 = vmul.f32 %v1870, %v1877
      %v1909 = vmul.f32 %v1875, %v1877
      %v1910 = vadd.f32 %v1652, %v1878
      %v1911 = vadd.f32 %v1653, %v1879
      %v1912 = vadd.f32 %v1654, %v1880
      %v1913 = vadd.f32 %v1655, %v1881
      %v1914 = vadd.f32 %v1656, %v1882
      %v1915 = vadd.f32 %v1657, %v1883
      %v1916 = vadd.f32 %v1658, %v1884
      %v1917 = vadd.f32 %v1659, %v1885
      %v1918 = vadd.f32 %v1660, %v1886
      %v1919 = vadd.f32 %v1661, %v1887
      %v1920 = vadd.f32 %v1662, %v1888
      %v1921 = vadd.f32 %v1663, %v1889
      %v1922 = vadd.f32 %v1664, %v1890
      %v1923 = vadd.f32 %v1665, %v1891
      %v1924 = vadd.f32 %v1666, %v1892
      %v1925 = vadd.f32 %v1667, %v1893
      %v1926 = vadd.f32 %v1668, %v1894
      %v1927 = vadd.f32 %v1669, %v1895
      %v1928 = vadd.f32 %v1670, %v1896
      %v1929 = vadd.f32 %v1671, %v1897
      %v1930 = vadd.f32 %v1672, %v1898
      %v1931 = vadd.f32 %v1673, %v1899
      %v1932 = vadd.f32 %v1674, %v1900
      %v1933 = vadd.f32 %v1675, %v1901
      %v1934 = vadd.f32 %v1676, %v1902
      %v1935 = vadd.f32 %v1677, %v1903
      %v1936 = vadd.f32 %v1678, %v1904
      %v1937 = vadd.f32 %v1679, %v1905
      %v1938 = vadd.f32 %v1680, %v1906
      %v1939 = vadd.f32 %v1681, %v1907
      %v1940 = vadd.f32 %v1682, %v1908
      %v1941 = vadd.f32 %v1683, %v1909
      %s1942 = scalar_lea.vmem [#allocation2], 48
      %v1943 = vld [vmem:[%s1942] sm:$0xff]
      %v1944 = vld [vmem:[%s1942 + $0x8] sm:$0xff]
      %v1945 = vld [vmem:[%s1942 + $0x18] sm:$0xff]
      %v1946 = vld [vmem:[%s1942 + $0x20] sm:$0xff]
      %v1947 = vld [vmem:[%s1942 + $0x30] sm:$0xff]
      %v1948 = vld [vmem:[%s1942 + $0x38] sm:$0xff]
      %v1949 = vld [vmem:[%s1942 + $0x48] sm:$0xff]
      %v1950 = vld [vmem:[%s1942 + $0x50] sm:$0xff]
      %v1951 = vld [vmem:[%s1942 + $0x60] sm:$0xff]
      %v1952 = vld [vmem:[%s1942 + $0x68] sm:$0xff]
      %v1953 = vld [vmem:[%s1942 + $0x78] sm:$0xff]
      %v1954 = vld [vmem:[%s1942 + $0x80] sm:$0xff]
      %v1955 = vld [vmem:[%s1942 + $0x90] sm:$0xff]
      %v1956 = vld [vmem:[%s1942 + $0x98] sm:$0xff]
      %v1957 = vld [vmem:[%s1942 + $0xa8] sm:$0xff]
      %v1958 = vld [vmem:[%s1942 + $0xb0] sm:$0xff]
      %v1959 = vld [vmem:[%s1942 + $0xc0] sm:$0xff]
      %v1960 = vld [vmem:[%s1942 + $0xc8] sm:$0xff]
      %v1961 = vld [vmem:[%s1942 + $0xd8] sm:$0xff]
      %v1962 = vld [vmem:[%s1942 + $0xe0] sm:$0xff]
      %v1963 = vld [vmem:[%s1942 + $0xf0] sm:$0xff]
      %v1964 = vld [vmem:[%s1942 + $0xf8] sm:$0xff]
      %v1965 = vld [vmem:[%s1942 + $0x108] sm:$0xff]
      %v1966 = vld [vmem:[%s1942 + $0x110] sm:$0xff]
      %v1967 = vld [vmem:[%s1942 + $0x120] sm:$0xff]
      %v1968 = vld [vmem:[%s1942 + $0x128] sm:$0xff]
      %v1969 = vld [vmem:[%s1942 + $0x138] sm:$0xff]
      %v1970 = vld [vmem:[%s1942 + $0x140] sm:$0xff]
      %v1971 = vld [vmem:[%s1942 + $0x150] sm:$0xff]
      %v1972 = vld [vmem:[%s1942 + $0x158] sm:$0xff]
      %v1973 = vld [vmem:[%s1942 + $0x168] sm:$0xff]
      %v1974 = vld [vmem:[%s1942 + $0x170] sm:$0xff]
      %v1975 = vld [vmem:[%s3 + $0x6] sm:$0x1]
      %1977 = vset.pattern.permute.xlu0 0
      %1978 = vperm.xlu0 %1977, %v1943
      %v1979 = vpop.permute.xlu0 %1978
      %1982 = vset.pattern.permute.xlu0 0
      %1983 = vperm.xlu0 %1982, %v1944
      %v1984 = vpop.permute.xlu0 %1983
      %1987 = vset.pattern.permute.xlu0 0
      %1988 = vperm.xlu0 %1987, %v1945
      %v1989 = vpop.permute.xlu0 %1988
      %1992 = vset.pattern.permute.xlu0 0
      %1993 = vperm.xlu0 %1992, %v1946
      %v1994 = vpop.permute.xlu0 %1993
      %1997 = vset.pattern.permute.xlu0 0
      %1998 = vperm.xlu0 %1997, %v1947
      %v1999 = vpop.permute.xlu0 %1998
      %2002 = vset.pattern.permute.xlu0 0
      %2003 = vperm.xlu0 %2002, %v1948
      %v2004 = vpop.permute.xlu0 %2003
      %2007 = vset.pattern.permute.xlu0 0
      %2008 = vperm.xlu0 %2007, %v1949
      %v2009 = vpop.permute.xlu0 %2008
      %2012 = vset.pattern.permute.xlu0 0
      %2013 = vperm.xlu0 %2012, %v1950
      %v2014 = vpop.permute.xlu0 %2013
      %2017 = vset.pattern.permute.xlu0 0
      %2018 = vperm.xlu0 %2017, %v1951
      %v2019 = vpop.permute.xlu0 %2018
      %2022 = vset.pattern.permute.xlu0 0
      %2023 = vperm.xlu0 %2022, %v1952
      %v2024 = vpop.permute.xlu0 %2023
      %2027 = vset.pattern.permute.xlu0 0
      %2028 = vperm.xlu0 %2027, %v1953
      %v2029 = vpop.permute.xlu0 %2028
      %2032 = vset.pattern.permute.xlu0 0
      %2033 = vperm.xlu0 %2032, %v1954
      %v2034 = vpop.permute.xlu0 %2033
      %2037 = vset.pattern.permute.xlu0 0
      %2038 = vperm.xlu0 %2037, %v1955
      %v2039 = vpop.permute.xlu0 %2038
      %2042 = vset.pattern.permute.xlu0 0
      %2043 = vperm.xlu0 %2042, %v1956
      %v2044 = vpop.permute.xlu0 %2043
      %2047 = vset.pattern.permute.xlu0 0
      %2048 = vperm.xlu0 %2047, %v1957
      %v2049 = vpop.permute.xlu0 %2048
      %2052 = vset.pattern.permute.xlu0 0
      %2053 = vperm.xlu0 %2052, %v1958
      %v2054 = vpop.permute.xlu0 %2053
      %2057 = vset.pattern.permute.xlu0 0
      %2058 = vperm.xlu0 %2057, %v1959
      %v2059 = vpop.permute.xlu0 %2058
      %2062 = vset.pattern.permute.xlu0 0
      %2063 = vperm.xlu0 %2062, %v1960
      %v2064 = vpop.permute.xlu0 %2063
      %2067 = vset.pattern.permute.xlu0 0
      %2068 = vperm.xlu0 %2067, %v1961
      %v2069 = vpop.permute.xlu0 %2068
      %2072 = vset.pattern.permute.xlu0 0
      %2073 = vperm.xlu0 %2072, %v1962
      %v2074 = vpop.permute.xlu0 %2073
      %2077 = vset.pattern.permute.xlu0 0
      %2078 = vperm.xlu0 %2077, %v1963
      %v2079 = vpop.permute.xlu0 %2078
      %2082 = vset.pattern.permute.xlu0 0
      %2083 = vperm.xlu0 %2082, %v1964
      %v2084 = vpop.permute.xlu0 %2083
      %2087 = vset.pattern.permute.xlu0 0
      %2088 = vperm.xlu0 %2087, %v1965
      %v2089 = vpop.permute.xlu0 %2088
      %2092 = vset.pattern.permute.xlu0 0
      %2093 = vperm.xlu0 %2092, %v1966
      %v2094 = vpop.permute.xlu0 %2093
      %2097 = vset.pattern.permute.xlu0 0
      %2098 = vperm.xlu0 %2097, %v1967
      %v2099 = vpop.permute.xlu0 %2098
      %2102 = vset.pattern.permute.xlu0 0
      %2103 = vperm.xlu0 %2102, %v1968
      %v2104 = vpop.permute.xlu0 %2103
      %2107 = vset.pattern.permute.xlu0 0
      %2108 = vperm.xlu0 %2107, %v1969
      %v2109 = vpop.permute.xlu0 %2108
      %2112 = vset.pattern.permute.xlu0 0
      %2113 = vperm.xlu0 %2112, %v1970
      %v2114 = vpop.permute.xlu0 %2113
      %2117 = vset.pattern.permute.xlu0 0
      %2118 = vperm.xlu0 %2117, %v1971
      %v2119 = vpop.permute.xlu0 %2118
      %2122 = vset.pattern.permute.xlu0 0
      %2123 = vperm.xlu0 %2122, %v1972
      %v2124 = vpop.permute.xlu0 %2123
      %2127 = vset.pattern.permute.xlu0 0
      %2128 = vperm.xlu0 %2127, %v1973
      %v2129 = vpop.permute.xlu0 %2128
      %2132 = vset.pattern.permute.xlu0 0
      %2133 = vperm.xlu0 %2132, %v1974
      %v2134 = vpop.permute.xlu0 %2133
      %v2136 = vperm.slane %v1975, 0
      %v2137 = vmul.f32 %v1979, %v2136
      %v2138 = vmul.f32 %v1984, %v2136
      %v2139 = vmul.f32 %v1989, %v2136
      %v2140 = vmul.f32 %v1994, %v2136
      %v2141 = vmul.f32 %v1999, %v2136
      %v2142 = vmul.f32 %v2004, %v2136
      %v2143 = vmul.f32 %v2009, %v2136
      %v2144 = vmul.f32 %v2014, %v2136
      %v2145 = vmul.f32 %v2019, %v2136
      %v2146 = vmul.f32 %v2024, %v2136
      %v2147 = vmul.f32 %v2029, %v2136
      %v2148 = vmul.f32 %v2034, %v2136
      %v2149 = vmul.f32 %v2039, %v2136
      %v2150 = vmul.f32 %v2044, %v2136
      %v2151 = vmul.f32 %v2049, %v2136
      %v2152 = vmul.f32 %v2054, %v2136
      %v2153 = vmul.f32 %v2059, %v2136
      %v2154 = vmul.f32 %v2064, %v2136
      %v2155 = vmul.f32 %v2069, %v2136
      %v2156 = vmul.f32 %v2074, %v2136
      %v2157 = vmul.f32 %v2079, %v2136
      %v2158 = vmul.f32 %v2084, %v2136
      %v2159 = vmul.f32 %v2089, %v2136
      %v2160 = vmul.f32 %v2094, %v2136
      %v2161 = vmul.f32 %v2099, %v2136
      %v2162 = vmul.f32 %v2104, %v2136
      %v2163 = vmul.f32 %v2109, %v2136
      %v2164 = vmul.f32 %v2114, %v2136
      %v2165 = vmul.f32 %v2119, %v2136
      %v2166 = vmul.f32 %v2124, %v2136
      %v2167 = vmul.f32 %v2129, %v2136
      %v2168 = vmul.f32 %v2134, %v2136
      %v2169 = vadd.f32 %v1910, %v2137
      %v2170 = vadd.f32 %v1911, %v2138
      %v2171 = vadd.f32 %v1912, %v2139
      %v2172 = vadd.f32 %v1913, %v2140
      %v2173 = vadd.f32 %v1914, %v2141
      %v2174 = vadd.f32 %v1915, %v2142
      %v2175 = vadd.f32 %v1916, %v2143
      %v2176 = vadd.f32 %v1917, %v2144
      %v2177 = vadd.f32 %v1918, %v2145
      %v2178 = vadd.f32 %v1919, %v2146
      %v2179 = vadd.f32 %v1920, %v2147
      %v2180 = vadd.f32 %v1921, %v2148
      %v2181 = vadd.f32 %v1922, %v2149
      %v2182 = vadd.f32 %v1923, %v2150
      %v2183 = vadd.f32 %v1924, %v2151
      %v2184 = vadd.f32 %v1925, %v2152
      %v2185 = vadd.f32 %v1926, %v2153
      %v2186 = vadd.f32 %v1927, %v2154
      %v2187 = vadd.f32 %v1928, %v2155
      %v2188 = vadd.f32 %v1929, %v2156
      %v2189 = vadd.f32 %v1930, %v2157
      %v2190 = vadd.f32 %v1931, %v2158
      %v2191 = vadd.f32 %v1932, %v2159
      %v2192 = vadd.f32 %v1933, %v2160
      %v2193 = vadd.f32 %v1934, %v2161
      %v2194 = vadd.f32 %v1935, %v2162
      %v2195 = vadd.f32 %v1936, %v2163
      %v2196 = vadd.f32 %v1937, %v2164
      %v2197 = vadd.f32 %v1938, %v2165
      %v2198 = vadd.f32 %v1939, %v2166
      %v2199 = vadd.f32 %v1940, %v2167
      %v2200 = vadd.f32 %v1941, %v2168
      %v2201 = vld [vmem:[%s1942 + $0x1] sm:$0xff]
      %v2202 = vld [vmem:[%s1942 + $0x9] sm:$0xff]
      %v2203 = vld [vmem:[%s1942 + $0x19] sm:$0xff]
      %v2204 = vld [vmem:[%s1942 + $0x21] sm:$0xff]
      %v2205 = vld [vmem:[%s1942 + $0x31] sm:$0xff]
      %v2206 = vld [vmem:[%s1942 + $0x39] sm:$0xff]
      %v2207 = vld [vmem:[%s1942 + $0x49] sm:$0xff]
      %v2208 = vld [vmem:[%s1942 + $0x51] sm:$0xff]
      %v2209 = vld [vmem:[%s1942 + $0x61] sm:$0xff]
      %v2210 = vld [vmem:[%s1942 + $0x69] sm:$0xff]
      %v2211 = vld [vmem:[%s1942 + $0x79] sm:$0xff]
      %v2212 = vld [vmem:[%s1942 + $0x81] sm:$0xff]
      %v2213 = vld [vmem:[%s1942 + $0x91] sm:$0xff]
      %v2214 = vld [vmem:[%s1942 + $0x99] sm:$0xff]
      %v2215 = vld [vmem:[%s1942 + $0xa9] sm:$0xff]
      %v2216 = vld [vmem:[%s1942 + $0xb1] sm:$0xff]
      %v2217 = vld [vmem:[%s1942 + $0xc1] sm:$0xff]
      %v2218 = vld [vmem:[%s1942 + $0xc9] sm:$0xff]
      %v2219 = vld [vmem:[%s1942 + $0xd9] sm:$0xff]
      %v2220 = vld [vmem:[%s1942 + $0xe1] sm:$0xff]
      %v2221 = vld [vmem:[%s1942 + $0xf1] sm:$0xff]
      %v2222 = vld [vmem:[%s1942 + $0xf9] sm:$0xff]
      %v2223 = vld [vmem:[%s1942 + $0x109] sm:$0xff]
      %v2224 = vld [vmem:[%s1942 + $0x111] sm:$0xff]
      %v2225 = vld [vmem:[%s1942 + $0x121] sm:$0xff]
      %v2226 = vld [vmem:[%s1942 + $0x129] sm:$0xff]
      %v2227 = vld [vmem:[%s1942 + $0x139] sm:$0xff]
      %v2228 = vld [vmem:[%s1942 + $0x141] sm:$0xff]
      %v2229 = vld [vmem:[%s1942 + $0x151] sm:$0xff]
      %v2230 = vld [vmem:[%s1942 + $0x159] sm:$0xff]
      %v2231 = vld [vmem:[%s1942 + $0x169] sm:$0xff]
      %v2232 = vld [vmem:[%s1942 + $0x171] sm:$0xff]
      %v2233 = vld [vmem:[%s3 + $0x7] sm:$0x1]
      %2235 = vset.pattern.permute.xlu0 0
      %2236 = vperm.xlu0 %2235, %v2201
      %v2237 = vpop.permute.xlu0 %2236
      %2240 = vset.pattern.permute.xlu0 0
      %2241 = vperm.xlu0 %2240, %v2202
      %v2242 = vpop.permute.xlu0 %2241
      %2245 = vset.pattern.permute.xlu0 0
      %2246 = vperm.xlu0 %2245, %v2203
      %v2247 = vpop.permute.xlu0 %2246
      %2250 = vset.pattern.permute.xlu0 0
      %2251 = vperm.xlu0 %2250, %v2204
      %v2252 = vpop.permute.xlu0 %2251
      %2255 = vset.pattern.permute.xlu0 0
      %2256 = vperm.xlu0 %2255, %v2205
      %v2257 = vpop.permute.xlu0 %2256
      %2260 = vset.pattern.permute.xlu0 0
      %2261 = vperm.xlu0 %2260, %v2206
      %v2262 = vpop.permute.xlu0 %2261
      %2265 = vset.pattern.permute.xlu0 0
      %2266 = vperm.xlu0 %2265, %v2207
      %v2267 = vpop.permute.xlu0 %2266
      %2270 = vset.pattern.permute.xlu0 0
      %2271 = vperm.xlu0 %2270, %v2208
      %v2272 = vpop.permute.xlu0 %2271
      %2275 = vset.pattern.permute.xlu0 0
      %2276 = vperm.xlu0 %2275, %v2209
      %v2277 = vpop.permute.xlu0 %2276
      %2280 = vset.pattern.permute.xlu0 0
      %2281 = vperm.xlu0 %2280, %v2210
      %v2282 = vpop.permute.xlu0 %2281
      %2285 = vset.pattern.permute.xlu0 0
      %2286 = vperm.xlu0 %2285, %v2211
      %v2287 = vpop.permute.xlu0 %2286
      %2290 = vset.pattern.permute.xlu0 0
      %2291 = vperm.xlu0 %2290, %v2212
      %v2292 = vpop.permute.xlu0 %2291
      %2295 = vset.pattern.permute.xlu0 0
      %2296 = vperm.xlu0 %2295, %v2213
      %v2297 = vpop.permute.xlu0 %2296
      %2300 = vset.pattern.permute.xlu0 0
      %2301 = vperm.xlu0 %2300, %v2214
      %v2302 = vpop.permute.xlu0 %2301
      %2305 = vset.pattern.permute.xlu0 0
      %2306 = vperm.xlu0 %2305, %v2215
      %v2307 = vpop.permute.xlu0 %2306
      %2310 = vset.pattern.permute.xlu0 0
      %2311 = vperm.xlu0 %2310, %v2216
      %v2312 = vpop.permute.xlu0 %2311
      %2315 = vset.pattern.permute.xlu0 0
      %2316 = vperm.xlu0 %2315, %v2217
      %v2317 = vpop.permute.xlu0 %2316
      %2320 = vset.pattern.permute.xlu0 0
      %2321 = vperm.xlu0 %2320, %v2218
      %v2322 = vpop.permute.xlu0 %2321
      %2325 = vset.pattern.permute.xlu0 0
      %2326 = vperm.xlu0 %2325, %v2219
      %v2327 = vpop.permute.xlu0 %2326
      %2330 = vset.pattern.permute.xlu0 0
      %2331 = vperm.xlu0 %2330, %v2220
      %v2332 = vpop.permute.xlu0 %2331
      %2335 = vset.pattern.permute.xlu0 0
      %2336 = vperm.xlu0 %2335, %v2221
      %v2337 = vpop.permute.xlu0 %2336
      %2340 = vset.pattern.permute.xlu0 0
      %2341 = vperm.xlu0 %2340, %v2222
      %v2342 = vpop.permute.xlu0 %2341
      %2345 = vset.pattern.permute.xlu0 0
      %2346 = vperm.xlu0 %2345, %v2223
      %v2347 = vpop.permute.xlu0 %2346
      %2350 = vset.pattern.permute.xlu0 0
      %2351 = vperm.xlu0 %2350, %v2224
      %v2352 = vpop.permute.xlu0 %2351
      %2355 = vset.pattern.permute.xlu0 0
      %2356 = vperm.xlu0 %2355, %v2225
      %v2357 = vpop.permute.xlu0 %2356
      %2360 = vset.pattern.permute.xlu0 0
      %2361 = vperm.xlu0 %2360, %v2226
      %v2362 = vpop.permute.xlu0 %2361
      %2365 = vset.pattern.permute.xlu0 0
      %2366 = vperm.xlu0 %2365, %v2227
      %v2367 = vpop.permute.xlu0 %2366
      %2370 = vset.pattern.permute.xlu0 0
      %2371 = vperm.xlu0 %2370, %v2228
      %v2372 = vpop.permute.xlu0 %2371
      %2375 = vset.pattern.permute.xlu0 0
      %2376 = vperm.xlu0 %2375, %v2229
      %v2377 = vpop.permute.xlu0 %2376
      %2380 = vset.pattern.permute.xlu0 0
      %2381 = vperm.xlu0 %2380, %v2230
      %v2382 = vpop.permute.xlu0 %2381
      %2385 = vset.pattern.permute.xlu0 0
      %2386 = vperm.xlu0 %2385, %v2231
      %v2387 = vpop.permute.xlu0 %2386
      %2390 = vset.pattern.permute.xlu0 0
      %2391 = vperm.xlu0 %2390, %v2232
      %v2392 = vpop.permute.xlu0 %2391
      %v2394 = vperm.slane %v2233, 0
      %v2395 = vmul.f32 %v2237, %v2394
      %v2396 = vmul.f32 %v2242, %v2394
      %v2397 = vmul.f32 %v2247, %v2394
      %v2398 = vmul.f32 %v2252, %v2394
      %v2399 = vmul.f32 %v2257, %v2394
      %v2400 = vmul.f32 %v2262, %v2394
      %v2401 = vmul.f32 %v2267, %v2394
      %v2402 = vmul.f32 %v2272, %v2394
      %v2403 = vmul.f32 %v2277, %v2394
      %v2404 = vmul.f32 %v2282, %v2394
      %v2405 = vmul.f32 %v2287, %v2394
      %v2406 = vmul.f32 %v2292, %v2394
      %v2407 = vmul.f32 %v2297, %v2394
      %v2408 = vmul.f32 %v2302, %v2394
      %v2409 = vmul.f32 %v2307, %v2394
      %v2410 = vmul.f32 %v2312, %v2394
      %v2411 = vmul.f32 %v2317, %v2394
      %v2412 = vmul.f32 %v2322, %v2394
      %v2413 = vmul.f32 %v2327, %v2394
      %v2414 = vmul.f32 %v2332, %v2394
      %v2415 = vmul.f32 %v2337, %v2394
      %v2416 = vmul.f32 %v2342, %v2394
      %v2417 = vmul.f32 %v2347, %v2394
      %v2418 = vmul.f32 %v2352, %v2394
      %v2419 = vmul.f32 %v2357, %v2394
      %v2420 = vmul.f32 %v2362, %v2394
      %v2421 = vmul.f32 %v2367, %v2394
      %v2422 = vmul.f32 %v2372, %v2394
      %v2423 = vmul.f32 %v2377, %v2394
      %v2424 = vmul.f32 %v2382, %v2394
      %v2425 = vmul.f32 %v2387, %v2394
      %v2426 = vmul.f32 %v2392, %v2394
      %v2427 = vadd.f32 %v2169, %v2395
      %v2428 = vadd.f32 %v2170, %v2396
      %v2429 = vadd.f32 %v2171, %v2397
      %v2430 = vadd.f32 %v2172, %v2398
      %v2431 = vadd.f32 %v2173, %v2399
      %v2432 = vadd.f32 %v2174, %v2400
      %v2433 = vadd.f32 %v2175, %v2401
      %v2434 = vadd.f32 %v2176, %v2402
      %v2435 = vadd.f32 %v2177, %v2403
      %v2436 = vadd.f32 %v2178, %v2404
      %v2437 = vadd.f32 %v2179, %v2405
      %v2438 = vadd.f32 %v2180, %v2406
      %v2439 = vadd.f32 %v2181, %v2407
      %v2440 = vadd.f32 %v2182, %v2408
      %v2441 = vadd.f32 %v2183, %v2409
      %v2442 = vadd.f32 %v2184, %v2410
      %v2443 = vadd.f32 %v2185, %v2411
      %v2444 = vadd.f32 %v2186, %v2412
      %v2445 = vadd.f32 %v2187, %v2413
      %v2446 = vadd.f32 %v2188, %v2414
      %v2447 = vadd.f32 %v2189, %v2415
      %v2448 = vadd.f32 %v2190, %v2416
      %v2449 = vadd.f32 %v2191, %v2417
      %v2450 = vadd.f32 %v2192, %v2418
      %v2451 = vadd.f32 %v2193, %v2419
      %v2452 = vadd.f32 %v2194, %v2420
      %v2453 = vadd.f32 %v2195, %v2421
      %v2454 = vadd.f32 %v2196, %v2422
      %v2455 = vadd.f32 %v2197, %v2423
      %v2456 = vadd.f32 %v2198, %v2424
      %v2457 = vadd.f32 %v2199, %v2425
      %v2458 = vadd.f32 %v2200, %v2426
      %v2459 = vld [vmem:[%s1942 + $0x2] sm:$0xff]
      %v2460 = vld [vmem:[%s1942 + $0xa] sm:$0xff]
      %v2461 = vld [vmem:[%s1942 + $0x1a] sm:$0xff]
      %v2462 = vld [vmem:[%s1942 + $0x22] sm:$0xff]
      %v2463 = vld [vmem:[%s1942 + $0x32] sm:$0xff]
      %v2464 = vld [vmem:[%s1942 + $0x3a] sm:$0xff]
      %v2465 = vld [vmem:[%s1942 + $0x4a] sm:$0xff]
      %v2466 = vld [vmem:[%s1942 + $0x52] sm:$0xff]
      %v2467 = vld [vmem:[%s1942 + $0x62] sm:$0xff]
      %v2468 = vld [vmem:[%s1942 + $0x6a] sm:$0xff]
      %v2469 = vld [vmem:[%s1942 + $0x7a] sm:$0xff]
      %v2470 = vld [vmem:[%s1942 + $0x82] sm:$0xff]
      %v2471 = vld [vmem:[%s1942 + $0x92] sm:$0xff]
      %v2472 = vld [vmem:[%s1942 + $0x9a] sm:$0xff]
      %v2473 = vld [vmem:[%s1942 + $0xaa] sm:$0xff]
      %v2474 = vld [vmem:[%s1942 + $0xb2] sm:$0xff]
      %v2475 = vld [vmem:[%s1942 + $0xc2] sm:$0xff]
      %v2476 = vld [vmem:[%s1942 + $0xca] sm:$0xff]
      %v2477 = vld [vmem:[%s1942 + $0xda] sm:$0xff]
      %v2478 = vld [vmem:[%s1942 + $0xe2] sm:$0xff]
      %v2479 = vld [vmem:[%s1942 + $0xf2] sm:$0xff]
      %v2480 = vld [vmem:[%s1942 + $0xfa] sm:$0xff]
      %v2481 = vld [vmem:[%s1942 + $0x10a] sm:$0xff]
      %v2482 = vld [vmem:[%s1942 + $0x112] sm:$0xff]
      %v2483 = vld [vmem:[%s1942 + $0x122] sm:$0xff]
      %v2484 = vld [vmem:[%s1942 + $0x12a] sm:$0xff]
      %v2485 = vld [vmem:[%s1942 + $0x13a] sm:$0xff]
      %v2486 = vld [vmem:[%s1942 + $0x142] sm:$0xff]
      %v2487 = vld [vmem:[%s1942 + $0x152] sm:$0xff]
      %v2488 = vld [vmem:[%s1942 + $0x15a] sm:$0xff]
      %v2489 = vld [vmem:[%s1942 + $0x16a] sm:$0xff]
      %v2490 = vld [vmem:[%s1942 + $0x172] sm:$0xff]
      %v2491 = vld [vmem:[%s3 + $0x8] sm:$0x1]
      %2493 = vset.pattern.permute.xlu0 0
      %2494 = vperm.xlu0 %2493, %v2459
      %v2495 = vpop.permute.xlu0 %2494
      %2498 = vset.pattern.permute.xlu0 0
      %2499 = vperm.xlu0 %2498, %v2460
      %v2500 = vpop.permute.xlu0 %2499
      %2503 = vset.pattern.permute.xlu0 0
      %2504 = vperm.xlu0 %2503, %v2461
      %v2505 = vpop.permute.xlu0 %2504
      %2508 = vset.pattern.permute.xlu0 0
      %2509 = vperm.xlu0 %2508, %v2462
      %v2510 = vpop.permute.xlu0 %2509
      %2513 = vset.pattern.permute.xlu0 0
      %2514 = vperm.xlu0 %2513, %v2463
      %v2515 = vpop.permute.xlu0 %2514
      %2518 = vset.pattern.permute.xlu0 0
      %2519 = vperm.xlu0 %2518, %v2464
      %v2520 = vpop.permute.xlu0 %2519
      %2523 = vset.pattern.permute.xlu0 0
      %2524 = vperm.xlu0 %2523, %v2465
      %v2525 = vpop.permute.xlu0 %2524
      %2528 = vset.pattern.permute.xlu0 0
      %2529 = vperm.xlu0 %2528, %v2466
      %v2530 = vpop.permute.xlu0 %2529
      %2533 = vset.pattern.permute.xlu0 0
      %2534 = vperm.xlu0 %2533, %v2467
      %v2535 = vpop.permute.xlu0 %2534
      %2538 = vset.pattern.permute.xlu0 0
      %2539 = vperm.xlu0 %2538, %v2468
      %v2540 = vpop.permute.xlu0 %2539
      %2543 = vset.pattern.permute.xlu0 0
      %2544 = vperm.xlu0 %2543, %v2469
      %v2545 = vpop.permute.xlu0 %2544
      %2548 = vset.pattern.permute.xlu0 0
      %2549 = vperm.xlu0 %2548, %v2470
      %v2550 = vpop.permute.xlu0 %2549
      %2553 = vset.pattern.permute.xlu0 0
      %2554 = vperm.xlu0 %2553, %v2471
      %v2555 = vpop.permute.xlu0 %2554
      %2558 = vset.pattern.permute.xlu0 0
      %2559 = vperm.xlu0 %2558, %v2472
      %v2560 = vpop.permute.xlu0 %2559
      %2563 = vset.pattern.permute.xlu0 0
      %2564 = vperm.xlu0 %2563, %v2473
      %v2565 = vpop.permute.xlu0 %2564
      %2568 = vset.pattern.permute.xlu0 0
      %2569 = vperm.xlu0 %2568, %v2474
      %v2570 = vpop.permute.xlu0 %2569
      %2573 = vset.pattern.permute.xlu0 0
      %2574 = vperm.xlu0 %2573, %v2475
      %v2575 = vpop.permute.xlu0 %2574
      %2578 = vset.pattern.permute.xlu0 0
      %2579 = vperm.xlu0 %2578, %v2476
      %v2580 = vpop.permute.xlu0 %2579
      %2583 = vset.pattern.permute.xlu0 0
      %2584 = vperm.xlu0 %2583, %v2477
      %v2585 = vpop.permute.xlu0 %2584
      %2588 = vset.pattern.permute.xlu0 0
      %2589 = vperm.xlu0 %2588, %v2478
      %v2590 = vpop.permute.xlu0 %2589
      %2593 = vset.pattern.permute.xlu0 0
      %2594 = vperm.xlu0 %2593, %v2479
      %v2595 = vpop.permute.xlu0 %2594
      %2598 = vset.pattern.permute.xlu0 0
      %2599 = vperm.xlu0 %2598, %v2480
      %v2600 = vpop.permute.xlu0 %2599
      %2603 = vset.pattern.permute.xlu0 0
      %2604 = vperm.xlu0 %2603, %v2481
      %v2605 = vpop.permute.xlu0 %2604
      %2608 = vset.pattern.permute.xlu0 0
      %2609 = vperm.xlu0 %2608, %v2482
      %v2610 = vpop.permute.xlu0 %2609
      %2613 = vset.pattern.permute.xlu0 0
      %2614 = vperm.xlu0 %2613, %v2483
      %v2615 = vpop.permute.xlu0 %2614
      %2618 = vset.pattern.permute.xlu0 0
      %2619 = vperm.xlu0 %2618, %v2484
      %v2620 = vpop.permute.xlu0 %2619
      %2623 = vset.pattern.permute.xlu0 0
      %2624 = vperm.xlu0 %2623, %v2485
      %v2625 = vpop.permute.xlu0 %2624
      %2628 = vset.pattern.permute.xlu0 0
      %2629 = vperm.xlu0 %2628, %v2486
      %v2630 = vpop.permute.xlu0 %2629
      %2633 = vset.pattern.permute.xlu0 0
      %2634 = vperm.xlu0 %2633, %v2487
      %v2635 = vpop.permute.xlu0 %2634
      %2638 = vset.pattern.permute.xlu0 0
      %2639 = vperm.xlu0 %2638, %v2488
      %v2640 = vpop.permute.xlu0 %2639
      %2643 = vset.pattern.permute.xlu0 0
      %2644 = vperm.xlu0 %2643, %v2489
      %v2645 = vpop.permute.xlu0 %2644
      %2648 = vset.pattern.permute.xlu0 0
      %2649 = vperm.xlu0 %2648, %v2490
      %v2650 = vpop.permute.xlu0 %2649
      %v2652 = vperm.slane %v2491, 0
      %v2653 = vmul.f32 %v2495, %v2652
      %v2654 = vmul.f32 %v2500, %v2652
      %v2655 = vmul.f32 %v2505, %v2652
      %v2656 = vmul.f32 %v2510, %v2652
      %v2657 = vmul.f32 %v2515, %v2652
      %v2658 = vmul.f32 %v2520, %v2652
      %v2659 = vmul.f32 %v2525, %v2652
      %v2660 = vmul.f32 %v2530, %v2652
      %v2661 = vmul.f32 %v2535, %v2652
      %v2662 = vmul.f32 %v2540, %v2652
      %v2663 = vmul.f32 %v2545, %v2652
      %v2664 = vmul.f32 %v2550, %v2652
      %v2665 = vmul.f32 %v2555, %v2652
      %v2666 = vmul.f32 %v2560, %v2652
      %v2667 = vmul.f32 %v2565, %v2652
      %v2668 = vmul.f32 %v2570, %v2652
      %v2669 = vmul.f32 %v2575, %v2652
      %v2670 = vmul.f32 %v2580, %v2652
      %v2671 = vmul.f32 %v2585, %v2652
      %v2672 = vmul.f32 %v2590, %v2652
      %v2673 = vmul.f32 %v2595, %v2652
      %v2674 = vmul.f32 %v2600, %v2652
      %v2675 = vmul.f32 %v2605, %v2652
      %v2676 = vmul.f32 %v2610, %v2652
      %v2677 = vmul.f32 %v2615, %v2652
      %v2678 = vmul.f32 %v2620, %v2652
      %v2679 = vmul.f32 %v2625, %v2652
      %v2680 = vmul.f32 %v2630, %v2652
      %v2681 = vmul.f32 %v2635, %v2652
      %v2682 = vmul.f32 %v2640, %v2652
      %v2683 = vmul.f32 %v2645, %v2652
      %v2684 = vmul.f32 %v2650, %v2652
      %v2685 = vadd.f32 %v2427, %v2653
      %v2686 = vadd.f32 %v2428, %v2654
      %v2687 = vadd.f32 %v2429, %v2655
      %v2688 = vadd.f32 %v2430, %v2656
      %v2689 = vadd.f32 %v2431, %v2657
      %v2690 = vadd.f32 %v2432, %v2658
      %v2691 = vadd.f32 %v2433, %v2659
      %v2692 = vadd.f32 %v2434, %v2660
      %v2693 = vadd.f32 %v2435, %v2661
      %v2694 = vadd.f32 %v2436, %v2662
      %v2695 = vadd.f32 %v2437, %v2663
      %v2696 = vadd.f32 %v2438, %v2664
      %v2697 = vadd.f32 %v2439, %v2665
      %v2698 = vadd.f32 %v2440, %v2666
      %v2699 = vadd.f32 %v2441, %v2667
      %v2700 = vadd.f32 %v2442, %v2668
      %v2701 = vadd.f32 %v2443, %v2669
      %v2702 = vadd.f32 %v2444, %v2670
      %v2703 = vadd.f32 %v2445, %v2671
      %v2704 = vadd.f32 %v2446, %v2672
      %v2705 = vadd.f32 %v2447, %v2673
      %v2706 = vadd.f32 %v2448, %v2674
      %v2707 = vadd.f32 %v2449, %v2675
      %v2708 = vadd.f32 %v2450, %v2676
      %v2709 = vadd.f32 %v2451, %v2677
      %v2710 = vadd.f32 %v2452, %v2678
      %v2711 = vadd.f32 %v2453, %v2679
      %v2712 = vadd.f32 %v2454, %v2680
      %v2713 = vadd.f32 %v2455, %v2681
      %v2714 = vadd.f32 %v2456, %v2682
      %v2715 = vadd.f32 %v2457, %v2683
      %v2716 = vadd.f32 %v2458, %v2684
      %vm2717 = vcmask 261120
      %v2718 = vsel %vm2717, %v2685, 0.0
      %v2719 = vsel %vm2717, %v2686, 0.0
      %v2720 = vadd.f32 %v2718, %v2719
      %v2721 = vsel %vm2717, %v2687, 0.0
      %v2722 = vadd.f32 %v2720, %v2721
      %v2723 = vsel %vm2717, %v2688, 0.0
      %v2724 = vadd.f32 %v2722, %v2723
      %v2725 = vsel %vm2717, %v2689, 0.0
      %v2726 = vadd.f32 %v2724, %v2725
      %v2727 = vsel %vm2717, %v2690, 0.0
      %v2728 = vadd.f32 %v2726, %v2727
      %v2729 = vsel %vm2717, %v2691, 0.0
      %v2730 = vadd.f32 %v2728, %v2729
      %v2731 = vsel %vm2717, %v2692, 0.0
      %v2732 = vadd.f32 %v2730, %v2731
      %v2733 = vsel %vm2717, %v2693, 0.0
      %v2734 = vadd.f32 %v2732, %v2733
      %v2735 = vsel %vm2717, %v2694, 0.0
      %v2736 = vadd.f32 %v2734, %v2735
      %v2737 = vsel %vm2717, %v2695, 0.0
      %v2738 = vadd.f32 %v2736, %v2737
      %v2739 = vsel %vm2717, %v2696, 0.0
      %v2740 = vadd.f32 %v2738, %v2739
      %v2741 = vsel %vm2717, %v2697, 0.0
      %v2742 = vadd.f32 %v2740, %v2741
      %v2743 = vsel %vm2717, %v2698, 0.0
      %v2744 = vadd.f32 %v2742, %v2743
      %v2745 = vsel %vm2717, %v2699, 0.0
      %v2746 = vadd.f32 %v2744, %v2745
      %v2747 = vsel %vm2717, %v2700, 0.0
      %v2748 = vadd.f32 %v2746, %v2747
      %v2749 = vsel %vm2717, %v2701, 0.0
      %v2750 = vadd.f32 %v2748, %v2749
      %v2751 = vsel %vm2717, %v2702, 0.0
      %v2752 = vadd.f32 %v2750, %v2751
      %v2753 = vsel %vm2717, %v2703, 0.0
      %v2754 = vadd.f32 %v2752, %v2753
      %v2755 = vsel %vm2717, %v2704, 0.0
      %v2756 = vadd.f32 %v2754, %v2755
      %v2757 = vsel %vm2717, %v2705, 0.0
      %v2758 = vadd.f32 %v2756, %v2757
      %v2759 = vsel %vm2717, %v2706, 0.0
      %v2760 = vadd.f32 %v2758, %v2759
      %v2761 = vsel %vm2717, %v2707, 0.0
      %v2762 = vadd.f32 %v2760, %v2761
      %v2763 = vsel %vm2717, %v2708, 0.0
      %v2764 = vadd.f32 %v2762, %v2763
      %v2765 = vsel %vm2717, %v2709, 0.0
      %v2766 = vadd.f32 %v2764, %v2765
      %v2767 = vsel %vm2717, %v2710, 0.0
      %v2768 = vadd.f32 %v2766, %v2767
      %v2769 = vsel %vm2717, %v2711, 0.0
      %v2770 = vadd.f32 %v2768, %v2769
      %v2771 = vsel %vm2717, %v2712, 0.0
      %v2772 = vadd.f32 %v2770, %v2771
      %v2773 = vsel %vm2717, %v2713, 0.0
      %v2774 = vadd.f32 %v2772, %v2773
      %v2775 = vsel %vm2717, %v2714, 0.0
      %v2776 = vadd.f32 %v2774, %v2775
      %v2777 = vsel %vm2717, %v2715, 0.0
      %v2778 = vadd.f32 %v2776, %v2777
      %v2779 = vsel %vm2717, %v2716, 0.0
      %v2780 = vadd.f32 %v2778, %v2779
      %v2781 = vrot.slane %v2780, 4
      %v2782 = vadd.f32 %v2780, %v2781
      %v2783 = vrot.slane %v2782, 2
      %v2784 = vadd.f32 %v2782, %v2783
      %v2785 = vrot.slane %v2784, 1
      %v2786 = vadd.f32 %v2784, %v2785
      %vm2787 = vcmask 253952
      %2788 = vst.msk [vmem:[%s269] sm:$0x1] %vm2787, %v2786
      %v2789 = vmul.f32 %v2685, %v2685
      %v2790 = vmul.f32 %v2686, %v2686
      %v2791 = vmul.f32 %v2687, %v2687
      %v2792 = vmul.f32 %v2688, %v2688
      %v2793 = vmul.f32 %v2689, %v2689
      %v2794 = vmul.f32 %v2690, %v2690
      %v2795 = vmul.f32 %v2691, %v2691
      %v2796 = vmul.f32 %v2692, %v2692
      %v2797 = vmul.f32 %v2693, %v2693
      %v2798 = vmul.f32 %v2694, %v2694
      %v2799 = vmul.f32 %v2695, %v2695
      %v2800 = vmul.f32 %v2696, %v2696
      %v2801 = vmul.f32 %v2697, %v2697
      %v2802 = vmul.f32 %v2698, %v2698
      %v2803 = vmul.f32 %v2699, %v2699
      %v2804 = vmul.f32 %v2700, %v2700
      %v2805 = vmul.f32 %v2701, %v2701
      %v2806 = vmul.f32 %v2702, %v2702
      %v2807 = vmul.f32 %v2703, %v2703
      %v2808 = vmul.f32 %v2704, %v2704
      %v2809 = vmul.f32 %v2705, %v2705
      %v2810 = vmul.f32 %v2706, %v2706
      %v2811 = vmul.f32 %v2707, %v2707
      %v2812 = vmul.f32 %v2708, %v2708
      %v2813 = vmul.f32 %v2709, %v2709
      %v2814 = vmul.f32 %v2710, %v2710
      %v2815 = vmul.f32 %v2711, %v2711
      %v2816 = vmul.f32 %v2712, %v2712
      %v2817 = vmul.f32 %v2713, %v2713
      %v2818 = vmul.f32 %v2714, %v2714
      %v2819 = vmul.f32 %v2715, %v2715
      %v2820 = vmul.f32 %v2716, %v2716
      %v2821 = vsel %vm2717, %v2789, 0.0
      %v2822 = vsel %vm2717, %v2790, 0.0
      %v2823 = vadd.f32 %v2821, %v2822
      %v2824 = vsel %vm2717, %v2791, 0.0
      %v2825 = vadd.f32 %v2823, %v2824
      %v2826 = vsel %vm2717, %v2792, 0.0
      %v2827 = vadd.f32 %v2825, %v2826
      %v2828 = vsel %vm2717, %v2793, 0.0
      %v2829 = vadd.f32 %v2827, %v2828
      %v2830 = vsel %vm2717, %v2794, 0.0
      %v2831 = vadd.f32 %v2829, %v2830
      %v2832 = vsel %vm2717, %v2795, 0.0
      %v2833 = vadd.f32 %v2831, %v2832
      %v2834 = vsel %vm2717, %v2796, 0.0
      %v2835 = vadd.f32 %v2833, %v2834
      %v2836 = vsel %vm2717, %v2797, 0.0
      %v2837 = vadd.f32 %v2835, %v2836
      %v2838 = vsel %vm2717, %v2798, 0.0
      %v2839 = vadd.f32 %v2837, %v2838
      %v2840 = vsel %vm2717, %v2799, 0.0
      %v2841 = vadd.f32 %v2839, %v2840
      %v2842 = vsel %vm2717, %v2800, 0.0
      %v2843 = vadd.f32 %v2841, %v2842
      %v2844 = vsel %vm2717, %v2801, 0.0
      %v2845 = vadd.f32 %v2843, %v2844
      %v2846 = vsel %vm2717, %v2802, 0.0
      %v2847 = vadd.f32 %v2845, %v2846
      %v2848 = vsel %vm2717, %v2803, 0.0
      %v2849 = vadd.f32 %v2847, %v2848
      %v2850 = vsel %vm2717, %v2804, 0.0
      %v2851 = vadd.f32 %v2849, %v2850
      %v2852 = vsel %vm2717, %v2805, 0.0
      %v2853 = vadd.f32 %v2851, %v2852
      %v2854 = vsel %vm2717, %v2806, 0.0
      %v2855 = vadd.f32 %v2853, %v2854
      %v2856 = vsel %vm2717, %v2807, 0.0
      %v2857 = vadd.f32 %v2855, %v2856
      %v2858 = vsel %vm2717, %v2808, 0.0
      %v2859 = vadd.f32 %v2857, %v2858
      %v2860 = vsel %vm2717, %v2809, 0.0
      %v2861 = vadd.f32 %v2859, %v2860
      %v2862 = vsel %vm2717, %v2810, 0.0
      %v2863 = vadd.f32 %v2861, %v2862
      %v2864 = vsel %vm2717, %v2811, 0.0
      %v2865 = vadd.f32 %v2863, %v2864
      %v2866 = vsel %vm2717, %v2812, 0.0
      %v2867 = vadd.f32 %v2865, %v2866
      %v2868 = vsel %vm2717, %v2813, 0.0
      %v2869 = vadd.f32 %v2867, %v2868
      %v2870 = vsel %vm2717, %v2814, 0.0
      %v2871 = vadd.f32 %v2869, %v2870
      %v2872 = vsel %vm2717, %v2815, 0.0
      %v2873 = vadd.f32 %v2871, %v2872
      %v2874 = vsel %vm2717, %v2816, 0.0
      %v2875 = vadd.f32 %v2873, %v2874
      %v2876 = vsel %vm2717, %v2817, 0.0
      %v2877 = vadd.f32 %v2875, %v2876
      %v2878 = vsel %vm2717, %v2818, 0.0
      %v2879 = vadd.f32 %v2877, %v2878
      %v2880 = vsel %vm2717, %v2819, 0.0
      %v2881 = vadd.f32 %v2879, %v2880
      %v2882 = vsel %vm2717, %v2820, 0.0
      %v2883 = vadd.f32 %v2881, %v2882
      %v2884 = vrot.slane %v2883, 4
      %v2885 = vadd.f32 %v2883, %v2884
      %v2886 = vrot.slane %v2885, 2
      %v2887 = vadd.f32 %v2885, %v2886
      %v2888 = vrot.slane %v2887, 1
      %v2889 = vadd.f32 %v2887, %v2888
      %2890 = vst.msk [vmem:[%s272] sm:$0x1] %vm2787, %v2889
      %2891 = vst.msk [vmem:[%s266] sm:$0xff] %vm2717, %v2685
      %2892 = vst.msk [vmem:[%s266 + $0x8] sm:$0xff] %vm2717, %v2686
      %2893 = vst.msk [vmem:[%s266 + $0x10] sm:$0xff] %vm2717, %v2687
      %2894 = vst.msk [vmem:[%s266 + $0x18] sm:$0xff] %vm2717, %v2688
      %2895 = vst.msk [vmem:[%s266 + $0x20] sm:$0xff] %vm2717, %v2689
      %2896 = vst.msk [vmem:[%s266 + $0x28] sm:$0xff] %vm2717, %v2690
      %2897 = vst.msk [vmem:[%s266 + $0x30] sm:$0xff] %vm2717, %v2691
      %2898 = vst.msk [vmem:[%s266 + $0x38] sm:$0xff] %vm2717, %v2692
      %2899 = vst.msk [vmem:[%s266 + $0x40] sm:$0xff] %vm2717, %v2693
      %2900 = vst.msk [vmem:[%s266 + $0x48] sm:$0xff] %vm2717, %v2694
      %2901 = vst.msk [vmem:[%s266 + $0x50] sm:$0xff] %vm2717, %v2695
      %2902 = vst.msk [vmem:[%s266 + $0x58] sm:$0xff] %vm2717, %v2696
      %2903 = vst.msk [vmem:[%s266 + $0x60] sm:$0xff] %vm2717, %v2697
      %2904 = vst.msk [vmem:[%s266 + $0x68] sm:$0xff] %vm2717, %v2698
      %2905 = vst.msk [vmem:[%s266 + $0x70] sm:$0xff] %vm2717, %v2699
      %2906 = vst.msk [vmem:[%s266 + $0x78] sm:$0xff] %vm2717, %v2700
      %2907 = vst.msk [vmem:[%s266 + $0x80] sm:$0xff] %vm2717, %v2701
      %2908 = vst.msk [vmem:[%s266 + $0x88] sm:$0xff] %vm2717, %v2702
      %2909 = vst.msk [vmem:[%s266 + $0x90] sm:$0xff] %vm2717, %v2703
      %2910 = vst.msk [vmem:[%s266 + $0x98] sm:$0xff] %vm2717, %v2704
      %2911 = vst.msk [vmem:[%s266 + $0xa0] sm:$0xff] %vm2717, %v2705
      %2912 = vst.msk [vmem:[%s266 + $0xa8] sm:$0xff] %vm2717, %v2706
      %2913 = vst.msk [vmem:[%s266 + $0xb0] sm:$0xff] %vm2717, %v2707
      %2914 = vst.msk [vmem:[%s266 + $0xb8] sm:$0xff] %vm2717, %v2708
      %2915 = vst.msk [vmem:[%s266 + $0xc0] sm:$0xff] %vm2717, %v2709
      %2916 = vst.msk [vmem:[%s266 + $0xc8] sm:$0xff] %vm2717, %v2710
      %2917 = vst.msk [vmem:[%s266 + $0xd0] sm:$0xff] %vm2717, %v2711
      %2918 = vst.msk [vmem:[%s266 + $0xd8] sm:$0xff] %vm2717, %v2712
      %2919 = vst.msk [vmem:[%s266 + $0xe0] sm:$0xff] %vm2717, %v2713
      %2920 = vst.msk [vmem:[%s266 + $0xe8] sm:$0xff] %vm2717, %v2714
      %2921 = vst.msk [vmem:[%s266 + $0xf0] sm:$0xff] %vm2717, %v2715
      %2922 = vst.msk [vmem:[%s266 + $0xf8] sm:$0xff] %vm2717, %v2716
      %p2923 = scmp.lt.s32.totalorder %s22, 1
      %s2924 = scalar_select %p2923, %s22, 1
      %s2925 = smul.addr %s2924, 32
      %s2926 = smul.addr %s2925, 8
      %s2927 = scalar_lea.vmem %s4, %s2926
      %p2928 = scmp.lt.s32.totalorder %s22, 1
      %s2929 = scalar_select %p2928, %s22, 1
      %s2930 = scalar_lea.vmem %s5, %s2929
      %p2931 = scmp.lt.s32.totalorder %s22, 1
      %s2932 = scalar_select %p2931, %s22, 1
      %s2933 = scalar_lea.vmem %s6, %s2932
      // Predicated region
      $region37: #{hardnet_conv_crop_forward.7} parent=35 // pred_check
        %p2934 = pneg %p129
      $region38: #{hardnet_conv_crop_forward.7} parent=35 // pred_check_branch
        %2936 = sbr.rel (%p2934) target = $region40
      $region39: #{hardnet_conv_crop_forward.7} parent=35 // pred_region
        _
      $region40: #{hardnet_conv_crop_forward.7} parent=35 // pred_fallthru
        _
      // Predicated region
      $region41: #{hardnet_conv_crop_forward.7} parent=35 // pred_check
        %p2937 = pneg %p155
      $region42: #{hardnet_conv_crop_forward.7} parent=35 // pred_check_branch
        %2939 = sbr.rel (%p2937) target = $region44
      $region43: #{hardnet_conv_crop_forward.7} parent=35 // pred_region
        _
      $region44: #{hardnet_conv_crop_forward.7} parent=35 // pred_fallthru
        _
      // Predicated region
      $region45: #{hardnet_conv_crop_forward.7} parent=35 // pred_check
        %p2940 = pneg %p181
      $region46: #{hardnet_conv_crop_forward.7} parent=35 // pred_check_branch
        %2942 = sbr.rel (%p2940) target = $region48
      $region47: #{hardnet_conv_crop_forward.7} parent=35 // pred_region
        _
      $region48: #{hardnet_conv_crop_forward.7} parent=35 // pred_fallthru
        _
    $region36: #{hardnet_conv_crop_forward.7} parent=5 // pred_fallthru
      _
    %p2943 = scmp.le.s32.totalorder 2, %s17
    // Predicated region
    $region49: #{hardnet_conv_crop_forward.7} parent=5 // pred_check
      %p2944 = pneg %p2943
    $region50: #{hardnet_conv_crop_forward.7} parent=5 // pred_check_branch
      %2946 = sbr.rel (%p2944) target = $region52
    $region51: #{hardnet_conv_crop_forward.7} parent=5 // pred_region
      %s2947 = ssub.s32 %s17, 2
      // Predicated region
      $region53: #{hardnet_conv_crop_forward.7} parent=51 // pred_check
        %p2948 = pneg %p135
      $region54: #{hardnet_conv_crop_forward.7} parent=51 // pred_check_branch
        %2950 = sbr.rel (%p2948) target = $region56
      $region55: #{hardnet_conv_crop_forward.7} parent=51 // pred_region
        %p2951 = scmp.lt.s32.totalorder %s23, 1
        %s2952 = scalar_select %p2951, %s23, 1
        %s2953 = smul.addr %s2952, 32
        %s2954 = smul.addr %s2953, 8
        %s2955 = scalar_lea.vmem %s4, %s2954
      $region56: #{hardnet_conv_crop_forward.7} parent=51 // pred_fallthru
        _
      // Predicated region
      $region57: #{hardnet_conv_crop_forward.7} parent=51 // pred_check
        %p2956 = pneg %p161
      $region58: #{hardnet_conv_crop_forward.7} parent=51 // pred_check_branch
        %2958 = sbr.rel (%p2956) target = $region60
      $region59: #{hardnet_conv_crop_forward.7} parent=51 // pred_region
        %p2959 = scmp.lt.s32.totalorder %s23, 1
        %s2960 = scalar_select %p2959, %s23, 1
        %s2961 = scalar_lea.vmem %s5, %s2960
      $region60: #{hardnet_conv_crop_forward.7} parent=51 // pred_fallthru
        _
      // Predicated region
      $region61: #{hardnet_conv_crop_forward.7} parent=51 // pred_check
        %p2962 = pneg %p187
      $region62: #{hardnet_conv_crop_forward.7} parent=51 // pred_check_branch
        %2964 = sbr.rel (%p2962) target = $region64
      $region63: #{hardnet_conv_crop_forward.7} parent=51 // pred_region
        %p2965 = scmp.lt.s32.totalorder %s23, 1
        %s2966 = scalar_select %p2965, %s23, 1
        %s2967 = scalar_lea.vmem %s6, %s2966
      $region64: #{hardnet_conv_crop_forward.7} parent=51 // pred_fallthru
        _
    $region52: #{hardnet_conv_crop_forward.7} parent=5 // pred_fallthru
      _
  $region6: #{hardnet_conv_crop_forward.7} parent=0 // loop_footer
    %s21 = sadd.s32 1, %s17
  $region7: #{hardnet_conv_crop_forward.7} parent=0 // loop_footer_branch
    %16 = sbr.rel target = $region3
  $region8: #{hardnet_conv_crop_forward.7} parent=0 // loop_exit
    _

// kernel: hardnet_conv_crop_forward.9
$region0: #{hardnet_conv_crop_forward.9}
  #allocation0 [shape = 'u32[]', space=smem, size = 0x4, offset = 0x4, fixed_abs, tag = 'smem constant byte address 0x4 - core index']
  #allocation1 [shape = 'u32[72,128]{1,0:T(1,128)}', space=vmem, size = 0x9000, scoped, tag = 'internal scratch']
  #allocation2 [shape = 'f32[18,18,32]{2,1,0:T(8,128)}', space=vmem, size = 0x36000, scoped, tag = 'scratch operand']
  %s0 = inlined_call_operand.vmem [shape: f32[2,16,16,32], index: 0, kind: input, shape index: {}]
  %s1 = inlined_call_operand.vmem [shape: f32[1,32], index: 1, kind: input, shape index: {}]
  %s2 = inlined_call_operand.vmem [shape: f32[1,32], index: 2, kind: input, shape index: {}]
  %s3 = inlined_call_operand.vmem [shape: bf16[288,64], index: 3, kind: input, shape index: {}]
  %s4 = inlined_call_operand.vmem [shape: f32[2,16,16,64], index: 4, kind: output, shape index: {0}]
  %s5 = inlined_call_operand.vmem [shape: f32[2,1,64], index: 5, kind: output, shape index: {1}]
  %s6 = inlined_call_operand.vmem [shape: f32[2,1,64], index: 6, kind: output, shape index: {2}]
  %7 = xla_tuple %s4, %s5, %s6
  %s8 = sld [smem:[#allocation0]]
  $region65: #{hardnet_conv_crop_forward.9} parent=0
    _
  %s10 = ssub.s32 1, %s8
  %s11 = scalar_select 0, %s10, %s8
  loop: start=0, step=1, limit=4
  $region2: #{hardnet_conv_crop_forward.9} parent=0 // loop_pre_header
    _
  $region3: #{hardnet_conv_crop_forward.9} parent=0 // loop_header
    %s13 = sphi 0, %s17
    %p14 = scmp.ge.s32.totalorder %s13, 4
    %s23 = sphi 0, %s25
    %s26 = sphi 0, %s23
    %s27 = sphi 0, %s26
    %s43 = sphi 0, %s27
    %s47 = sphi 0, %s47
    %s49 = sphi 0, %s47
    %s50 = sphi 0, %s49
    %s64 = sphi 0, %s50
    %s68 = sphi 0, %s68
    %s70 = sphi 0, %s68
    %s71 = sphi 0, %s70
    %s85 = sphi 0, %s71
    %s89 = sphi 0, %s89
    %s91 = sphi 0, %s89
    %s92 = sphi 0, %s91
    %s106 = sphi 0, %s92
    %s112 = sphi 0, %s114
    %s115 = sphi 0, %s112
    %s116 = sphi 0, %s115
    %s132 = sphi 0, %s116
    %s138 = sphi 0, %s140
    %s141 = sphi 0, %s138
    %s142 = sphi 0, %s141
    %s158 = sphi 0, %s142
    %s164 = sphi 0, %s166
    %s167 = sphi 0, %s164
    %s168 = sphi 0, %s167
    %s184 = sphi 0, %s168
  $region4: #{hardnet_conv_crop_forward.9} parent=0 // loop_header_branch
    %16 = sbr.rel (%p14) target = $region8
  $region5: #{hardnet_conv_crop_forward.9} parent=0 // loop_body
    %s18 = ssub.s32 %s13, 1
    %s19 = ssub.s32 %s13, 2
    %s20 = sadd.s32 %s13, 1
    %s21 = ssub.s32 %s13, %s20
    %p22 = scmp.eq.s32.totalorder %s21, 0
    %s24 = sadd.s32 %s23, 1
    %s25 = scalar_select %p22, %s23, %s24
    %p28 = pneg %p22
    %p29 = scmp.eq.s32.totalorder %s13, 1
    %p30 = por %p28, %p29
    %p31 = scmp.ne.s32.totalorder %s23, %s26
    %p32 = scmp.eq.s32.totalorder %s13, 0
    %p33 = por %p31, %p32
    %p34 = scmp.ne.s32.totalorder %s23, %s26
    %p35 = scmp.eq.s32.totalorder %s18, 1
    %p36 = por %p34, %p35
    %p37 = scmp.ne.s32.totalorder %s26, %s27
    %p38 = scmp.eq.s32.totalorder %s18, 0
    %p39 = por %p37, %p38
    %p40 = scmp.ne.s32.totalorder %s26, %s27
    %p41 = scmp.eq.s32.totalorder %s19, 1
    %p42 = por %p40, %p41
    %p44 = scmp.ne.s32.totalorder %s27, %s43
    %p45 = scmp.eq.s32.totalorder %s19, 0
    %p46 = por %p44, %p45
    %s48 = sadd.s32 %s47, 1
    %p51 = scmp.eq.s32.totalorder %s13, 1
    %p52 = scmp.ne.s32.totalorder %s47, %s49
    %p53 = scmp.eq.s32.totalorder %s13, 0
    %p54 = por %p52, %p53
    %p55 = scmp.ne.s32.totalorder %s47, %s49
    %p56 = scmp.eq.s32.totalorder %s18, 1
    %p57 = por %p55, %p56
    %p58 = scmp.ne.s32.totalorder %s49, %s50
    %p59 = scmp.eq.s32.totalorder %s18, 0
    %p60 = por %p58, %p59
    %p61 = scmp.ne.s32.totalorder %s49, %s50
    %p62 = scmp.eq.s32.totalorder %s19, 1
    %p63 = por %p61, %p62
    %p65 = scmp.ne.s32.totalorder %s50, %s64
    %p66 = scmp.eq.s32.totalorder %s19, 0
    %p67 = por %p65, %p66
    %s69 = sadd.s32 %s68, 1
    %p72 = scmp.eq.s32.totalorder %s13, 1
    %p73 = scmp.ne.s32.totalorder %s68, %s70
    %p74 = scmp.eq.s32.totalorder %s13, 0
    %p75 = por %p73, %p74
    %p76 = scmp.ne.s32.totalorder %s68, %s70
    %p77 = scmp.eq.s32.totalorder %s18, 1
    %p78 = por %p76, %p77
    %p79 = scmp.ne.s32.totalorder %s70, %s71
    %p80 = scmp.eq.s32.totalorder %s18, 0
    %p81 = por %p79, %p80
    %p82 = scmp.ne.s32.totalorder %s70, %s71
    %p83 = scmp.eq.s32.totalorder %s19, 1
    %p84 = por %p82, %p83
    %p86 = scmp.ne.s32.totalorder %s71, %s85
    %p87 = scmp.eq.s32.totalorder %s19, 0
    %p88 = por %p86, %p87
    %s90 = sadd.s32 %s89, 1
    %p93 = scmp.eq.s32.totalorder %s13, 1
    %p94 = scmp.ne.s32.totalorder %s89, %s91
    %p95 = scmp.eq.s32.totalorder %s13, 0
    %p96 = por %p94, %p95
    %p97 = scmp.ne.s32.totalorder %s89, %s91
    %p98 = scmp.eq.s32.totalorder %s18, 1
    %p99 = por %p97, %p98
    %p100 = scmp.ne.s32.totalorder %s91, %s92
    %p101 = scmp.eq.s32.totalorder %s18, 0
    %p102 = por %p100, %p101
    %p103 = scmp.ne.s32.totalorder %s91, %s92
    %p104 = scmp.eq.s32.totalorder %s19, 1
    %p105 = por %p103, %p104
    %p107 = scmp.ne.s32.totalorder %s92, %s106
    %p108 = scmp.eq.s32.totalorder %s19, 0
    %p109 = por %p107, %p108
    %s110 = ssub.s32 %s13, %s20
    %p111 = scmp.eq.s32.totalorder %s110, 0
    %s113 = sadd.s32 %s112, 1
    %s114 = scalar_select %p111, %s112, %s113
    %p117 = pneg %p111
    %p118 = scmp.eq.s32.totalorder %s13, 1
    %p119 = por %p117, %p118
    %p120 = scmp.ne.s32.totalorder %s112, %s115
    %p121 = scmp.eq.s32.totalorder %s13, 0
    %p122 = por %p120, %p121
    %p123 = scmp.ne.s32.totalorder %s112, %s115
    %p124 = scmp.eq.s32.totalorder %s18, 1
    %p125 = por %p123, %p124
    %p126 = scmp.ne.s32.totalorder %s115, %s116
    %p127 = scmp.eq.s32.totalorder %s18, 0
    %p128 = por %p126, %p127
    %p129 = scmp.ne.s32.totalorder %s115, %s116
    %p130 = scmp.eq.s32.totalorder %s19, 1
    %p131 = por %p129, %p130
    %p133 = scmp.ne.s32.totalorder %s116, %s132
    %p134 = scmp.eq.s32.totalorder %s19, 0
    %p135 = por %p133, %p134
    %s136 = ssub.s32 %s13, %s20
    %p137 = scmp.eq.s32.totalorder %s136, 0
    %s139 = sadd.s32 %s138, 1
    %s140 = scalar_select %p137, %s138, %s139
    %p143 = pneg %p137
    %p144 = scmp.eq.s32.totalorder %s13, 1
    %p145 = por %p143, %p144
    %p146 = scmp.ne.s32.totalorder %s138, %s141
    %p147 = scmp.eq.s32.totalorder %s13, 0
    %p148 = por %p146, %p147
    %p149 = scmp.ne.s32.totalorder %s138, %s141
    %p150 = scmp.eq.s32.totalorder %s18, 1
    %p151 = por %p149, %p150
    %p152 = scmp.ne.s32.totalorder %s141, %s142
    %p153 = scmp.eq.s32.totalorder %s18, 0
    %p154 = por %p152, %p153
    %p155 = scmp.ne.s32.totalorder %s141, %s142
    %p156 = scmp.eq.s32.totalorder %s19, 1
    %p157 = por %p155, %p156
    %p159 = scmp.ne.s32.totalorder %s142, %s158
    %p160 = scmp.eq.s32.totalorder %s19, 0
    %p161 = por %p159, %p160
    %s162 = ssub.s32 %s13, %s20
    %p163 = scmp.eq.s32.totalorder %s162, 0
    %s165 = sadd.s32 %s164, 1
    %s166 = scalar_select %p163, %s164, %s165
    %p169 = pneg %p163
    %p170 = scmp.eq.s32.totalorder %s13, 1
    %p171 = por %p169, %p170
    %p172 = scmp.ne.s32.totalorder %s164, %s167
    %p173 = scmp.eq.s32.totalorder %s13, 0
    %p174 = por %p172, %p173
    %p175 = scmp.ne.s32.totalorder %s164, %s167
    %p176 = scmp.eq.s32.totalorder %s18, 1
    %p177 = por %p175, %p176
    %p178 = scmp.ne.s32.totalorder %s167, %s168
    %p179 = scmp.eq.s32.totalorder %s18, 0
    %p180 = por %p178, %p179
    %p181 = scmp.ne.s32.totalorder %s167, %s168
    %p182 = scmp.eq.s32.totalorder %s19, 1
    %p183 = por %p181, %p182
    %p185 = scmp.ne.s32.totalorder %s168, %s184
    %p186 = scmp.eq.s32.totalorder %s19, 0
    %p187 = por %p185, %p186
    %p188 = scmp.le.s32.totalorder 1, %s13
    %p189 = scmp.lt.s32.totalorder %s13, 3
    %p190 = pnand %p188, %p189
    %p191 = pneg %p190
    // Predicated region
    $region9: #{hardnet_conv_crop_forward.9} parent=5 // pred_check
      _
    $region10: #{hardnet_conv_crop_forward.9} parent=5 // pred_check_branch
      %193 = sbr.rel (%p190) target = $region12
    $region11: #{hardnet_conv_crop_forward.9} parent=5 // pred_region
      %s194 = ssub.s32 %s13, 1
      // Predicated region
      $region13: #{hardnet_conv_crop_forward.9} parent=11 // pred_check
        %p195 = pneg %p60
      $region14: #{hardnet_conv_crop_forward.9} parent=11 // pred_check_branch
        %197 = sbr.rel (%p195) target = $region16
      $region15: #{hardnet_conv_crop_forward.9} parent=11 // pred_region
        _
      $region16: #{hardnet_conv_crop_forward.9} parent=11 // pred_fallthru
        _
      // Predicated region
      $region17: #{hardnet_conv_crop_forward.9} parent=11 // pred_check
        %p198 = pneg %p81
      $region18: #{hardnet_conv_crop_forward.9} parent=11 // pred_check_branch
        %200 = sbr.rel (%p198) target = $region20
      $region19: #{hardnet_conv_crop_forward.9} parent=11 // pred_region
        _
      $region20: #{hardnet_conv_crop_forward.9} parent=11 // pred_fallthru
        _
      // Predicated region
      $region21: #{hardnet_conv_crop_forward.9} parent=11 // pred_check
        %p201 = pneg %p102
      $region22: #{hardnet_conv_crop_forward.9} parent=11 // pred_check_branch
        %203 = sbr.rel (%p201) target = $region24
      $region23: #{hardnet_conv_crop_forward.9} parent=11 // pred_region
        _
      $region24: #{hardnet_conv_crop_forward.9} parent=11 // pred_fallthru
        _
    $region12: #{hardnet_conv_crop_forward.9} parent=5 // pred_fallthru
      _
    %p204 = scmp.lt.s32.totalorder %s13, 2
    // Predicated region
    $region25: #{hardnet_conv_crop_forward.9} parent=5 // pred_check
      %p205 = pneg %p204
    $region26: #{hardnet_conv_crop_forward.9} parent=5 // pred_check_branch
      %207 = sbr.rel (%p205) target = $region28
    $region27: #{hardnet_conv_crop_forward.9} parent=5 // pred_region
      // Predicated region
      $region29: #{hardnet_conv_crop_forward.9} parent=27 // pred_check
        %p208 = pneg %p33
      $region30: #{hardnet_conv_crop_forward.9} parent=27 // pred_check_branch
        %210 = sbr.rel (%p208) target = $region32
      $region31: #{hardnet_conv_crop_forward.9} parent=27 // pred_region
        %p211 = scmp.lt.s32.totalorder %s13, 1
        %s212 = scalar_select %p211, %s13, 1
        %s213 = smul.addr %s212, 32
        %s214 = smul.addr %s213, 8
        %s215 = scalar_lea.vmem %s0, %s214
      $region32: #{hardnet_conv_crop_forward.9} parent=27 // pred_fallthru
        _
    $region28: #{hardnet_conv_crop_forward.9} parent=5 // pred_fallthru
      _
    %p216 = scmp.le.s32.totalorder 1, %s13
    %p217 = scmp.lt.s32.totalorder %s13, 3
    %p218 = pnand %p216, %p217
    %p219 = pneg %p218
    // Predicated region
    $region33: #{hardnet_conv_crop_forward.9} parent=5 // pred_check
      _
    $region34: #{hardnet_conv_crop_forward.9} parent=5 // pred_check_branch
      %221 = sbr.rel (%p218) target = $region36
    $region35: #{hardnet_conv_crop_forward.9} parent=5 // pred_region
      %s222 = ssub.s32 %s13, 1
      %p223 = scmp.lt.s32.totalorder %s18, 1
      %s224 = scalar_select %p223, %s18, 1
      %s225 = smul.addr %s224, 32
      %s226 = smul.addr %s225, 8
      %s227 = scalar_lea.vmem %s0, %s226
      %p228 = pneg %p39
      %p229 = pneg %p36
      %p230 = pneg %p60
      %p231 = pneg %p57
      %p232 = pneg %p81
      %p233 = pneg %p78
      %p234 = pneg %p102
      %p235 = pneg %p99
      %p236 = pneg %p128
      %p237 = pneg %p125
      %p238 = scmp.lt.s32.totalorder %s18, 1
      %s239 = scalar_select %p238, %s18, 1
      %s240 = smul.addr %s239, 32
      %s241 = smul.addr %s240, 8
      %s242 = scalar_lea.vmem %s4, %s241
      %p243 = pneg %p154
      %p244 = pneg %p151
      %p245 = scmp.lt.s32.totalorder %s18, 1
      %s246 = scalar_select %p245, %s18, 1
      %s247 = scalar_lea.vmem %s5, %s246
      %p248 = pneg %p180
      %p249 = pneg %p177
      %p250 = scmp.lt.s32.totalorder %s18, 1
      %s251 = scalar_select %p250, %s18, 1
      %s252 = scalar_lea.vmem %s6, %s251
      %p253 = scmp.lt.s32.totalorder %s18, 1
      %s254 = scalar_select %p253, %s18, 1
      %s255 = smul.addr %s254, 32
      %s256 = smul.addr %s255, 8
      %s257 = scalar_lea.vmem %s0, %s256
      %p258 = scmp.lt.s32.totalorder %s18, 1
      %s259 = scalar_select %p258, %s18, 1
      %s260 = smul.addr %s259, 32
      %s261 = smul.addr %s260, 8
      %s262 = scalar_lea.vmem %s4, %s261
      %p263 = scmp.lt.s32.totalorder %s18, 1
      %s264 = scalar_select %p263, %s18, 1
      %s265 = scalar_lea.vmem %s5, %s264
      %p266 = scmp.lt.s32.totalorder %s18, 1
      %s267 = scalar_select %p266, %s18, 1
      %s268 = scalar_lea.vmem %s6, %s267
      %v270 = vld [vmem:[%s257] sm:$0xff]
      %v271 = vld [vmem:[%s257 + $0x8] sm:$0xff]
      %v272 = vld [vmem:[%s257 + $0x10] sm:$0xff]
      %v273 = vld [vmem:[%s257 + $0x18] sm:$0xff]
      %v274 = vld [vmem:[%s257 + $0x20] sm:$0xff]
      %v275 = vld [vmem:[%s257 + $0x28] sm:$0xff]
      %v276 = vld [vmem:[%s257 + $0x30] sm:$0xff]
      %v277 = vld [vmem:[%s257 + $0x38] sm:$0xff]
      %v278 = vld [vmem:[%s257 + $0x40] sm:$0xff]
      %v279 = vld [vmem:[%s257 + $0x48] sm:$0xff]
      %v280 = vld [vmem:[%s257 + $0x50] sm:$0xff]
      %v281 = vld [vmem:[%s257 + $0x58] sm:$0xff]
      %v282 = vld [vmem:[%s257 + $0x60] sm:$0xff]
      %v283 = vld [vmem:[%s257 + $0x68] sm:$0xff]
      %v284 = vld [vmem:[%s257 + $0x70] sm:$0xff]
      %v285 = vld [vmem:[%s257 + $0x78] sm:$0xff]
      %v286 = vld [vmem:[%s257 + $0x80] sm:$0xff]
      %v287 = vld [vmem:[%s257 + $0x88] sm:$0xff]
      %v288 = vld [vmem:[%s257 + $0x90] sm:$0xff]
      %v289 = vld [vmem:[%s257 + $0x98] sm:$0xff]
      %v290 = vld [vmem:[%s257 + $0xa0] sm:$0xff]
      %v291 = vld [vmem:[%s257 + $0xa8] sm:$0xff]
      %v292 = vld [vmem:[%s257 + $0xb0] sm:$0xff]
      %v293 = vld [vmem:[%s257 + $0xb8] sm:$0xff]
      %v294 = vld [vmem:[%s257 + $0xc0] sm:$0xff]
      %v295 = vld [vmem:[%s257 + $0xc8] sm:$0xff]
      %v296 = vld [vmem:[%s257 + $0xd0] sm:$0xff]
      %v297 = vld [vmem:[%s257 + $0xd8] sm:$0xff]
      %v298 = vld [vmem:[%s257 + $0xe0] sm:$0xff]
      %v299 = vld [vmem:[%s257 + $0xe8] sm:$0xff]
      %v300 = vld [vmem:[%s257 + $0xf0] sm:$0xff]
      %v301 = vld [vmem:[%s257 + $0xf8] sm:$0xff]
      %v302 = vld [vmem:[%s1] sm:$0x1]
      %v303 = vld [vmem:[%s2] sm:$0x1]
      %v305 = vperm.slane %v302, 0
      %v307 = vsub.f32 %v270, %v305
      %v308 = vsub.f32 %v271, %v305
      %v309 = vsub.f32 %v272, %v305
      %v310 = vsub.f32 %v273, %v305
      %v311 = vsub.f32 %v274, %v305
      %v312 = vsub.f32 %v275, %v305
      %v313 = vsub.f32 %v276, %v305
      %v314 = vsub.f32 %v277, %v305
      %v315 = vsub.f32 %v278, %v305
      %v316 = vsub.f32 %v279, %v305
      %v317 = vsub.f32 %v280, %v305
      %v318 = vsub.f32 %v281, %v305
      %v319 = vsub.f32 %v282, %v305
      %v320 = vsub.f32 %v283, %v305
      %v321 = vsub.f32 %v284, %v305
      %v322 = vsub.f32 %v285, %v305
      %v323 = vsub.f32 %v286, %v305
      %v324 = vsub.f32 %v287, %v305
      %v325 = vsub.f32 %v288, %v305
      %v326 = vsub.f32 %v289, %v305
      %v327 = vsub.f32 %v290, %v305
      %v328 = vsub.f32 %v291, %v305
      %v329 = vsub.f32 %v292, %v305
      %v330 = vsub.f32 %v293, %v305
      %v331 = vsub.f32 %v294, %v305
      %v332 = vsub.f32 %v295, %v305
      %v333 = vsub.f32 %v296, %v305
      %v334 = vsub.f32 %v297, %v305
      %v335 = vsub.f32 %v298, %v305
      %v336 = vsub.f32 %v299, %v305
      %v337 = vsub.f32 %v300, %v305
      %v338 = vsub.f32 %v301, %v305
      %v340 = vperm.slane %v303, 0
      %v342 = vmul.f32 %v307, %v340
      %v343 = vmul.f32 %v308, %v340
      %v344 = vmul.f32 %v309, %v340
      %v345 = vmul.f32 %v310, %v340
      %v346 = vmul.f32 %v311, %v340
      %v347 = vmul.f32 %v312, %v340
      %v348 = vmul.f32 %v313, %v340
      %v349 = vmul.f32 %v314, %v340
      %v350 = vmul.f32 %v315, %v340
      %v351 = vmul.f32 %v316, %v340
      %v352 = vmul.f32 %v317, %v340
      %v353 = vmul.f32 %v318, %v340
      %v354 = vmul.f32 %v319, %v340
      %v355 = vmul.f32 %v320, %v340
      %v356 = vmul.f32 %v321, %v340
      %v357 = vmul.f32 %v322, %v340
      %v358 = vmul.f32 %v323, %v340
      %v359 = vmul.f32 %v324, %v340
      %v360 = vmul.f32 %v325, %v340
      %v361 = vmul.f32 %v326, %v340
      %v362 = vmul.f32 %v327, %v340
      %v363 = vmul.f32 %v328, %v340
      %v364 = vmul.f32 %v329, %v340
      %v365 = vmul.f32 %v330, %v340
      %v366 = vmul.f32 %v331, %v340
      %v367 = vmul.f32 %v332, %v340
      %v368 = vmul.f32 %v333, %v340
      %v369 = vmul.f32 %v334, %v340
      %v370 = vmul.f32 %v335, %v340
      %v371 = vmul.f32 %v336, %v340
      %v372 = vmul.f32 %v337, %v340
      %v373 = vmul.f32 %v338, %v340
      %v374 = vmax.f32 %v342, 0.0
      %v375 = vmax.f32 %v343, 0.0
      %v376 = vmax.f32 %v344, 0.0
      %v377 = vmax.f32 %v345, 0.0
      %v378 = vmax.f32 %v346, 0.0
      %v379 = vmax.f32 %v347, 0.0
      %v380 = vmax.f32 %v348, 0.0
      %v381 = vmax.f32 %v349, 0.0
      %v382 = vmax.f32 %v350, 0.0
      %v383 = vmax.f32 %v351, 0.0
      %v384 = vmax.f32 %v352, 0.0
      %v385 = vmax.f32 %v353, 0.0
      %v386 = vmax.f32 %v354, 0.0
      %v387 = vmax.f32 %v355, 0.0
      %v388 = vmax.f32 %v356, 0.0
      %v389 = vmax.f32 %v357, 0.0
      %v390 = vmax.f32 %v358, 0.0
      %v391 = vmax.f32 %v359, 0.0
      %v392 = vmax.f32 %v360, 0.0
      %v393 = vmax.f32 %v361, 0.0
      %v394 = vmax.f32 %v362, 0.0
      %v395 = vmax.f32 %v363, 0.0
      %v396 = vmax.f32 %v364, 0.0
      %v397 = vmax.f32 %v365, 0.0
      %v398 = vmax.f32 %v366, 0.0
      %v399 = vmax.f32 %v367, 0.0
      %v400 = vmax.f32 %v368, 0.0
      %v401 = vmax.f32 %v369, 0.0
      %v402 = vmax.f32 %v370, 0.0
      %v403 = vmax.f32 %v371, 0.0
      %v404 = vmax.f32 %v372, 0.0
      %v405 = vmax.f32 %v373, 0.0
      %vm406 = vcmask 261120
      %407 = vst.msk [vmem:[#allocation2] sm:$0xff] %vm406, 0.0
      %408 = vst.msk [vmem:[#allocation2 + $0x8] sm:$0xff] %vm406, 0.0
      %vm409 = vcmask 254976
      %410 = vst.msk [vmem:[#allocation2 + $0x10] sm:$0x3] %vm409, 0.0
      %411 = vst.msk [vmem:[#allocation2 + $0x18] sm:$0xff] %vm406, 0.0
      %412 = vst.msk [vmem:[#allocation2 + $0x20] sm:$0xff] %vm406, 0.0
      %413 = vst.msk [vmem:[#allocation2 + $0x28] sm:$0x3] %vm409, 0.0
      %414 = vst.msk [vmem:[#allocation2 + $0x30] sm:$0xff] %vm406, 0.0
      %415 = vst.msk [vmem:[#allocation2 + $0x38] sm:$0xff] %vm406, 0.0
      %416 = vst.msk [vmem:[#allocation2 + $0x40] sm:$0x3] %vm409, 0.0
      %417 = vst.msk [vmem:[#allocation2 + $0x48] sm:$0xff] %vm406, 0.0
      %418 = vst.msk [vmem:[#allocation2 + $0x50] sm:$0xff] %vm406, 0.0
      %419 = vst.msk [vmem:[#allocation2 + $0x58] sm:$0x3] %vm409, 0.0
      %420 = vst.msk [vmem:[#allocation2 + $0x60] sm:$0xff] %vm406, 0.0
      %421 = vst.msk [vmem:[#allocation2 + $0x68] sm:$0xff] %vm406, 0.0
      %422 = vst.msk [vmem:[#allocation2 + $0x70] sm:$0x3] %vm409, 0.0
      %423 = vst.msk [vmem:[#allocation2 + $0x78] sm:$0xff] %vm406, 0.0
      %424 = vst.msk [vmem:[#allocation2 + $0x80] sm:$0xff] %vm406, 0.0
      %425 = vst.msk [vmem:[#allocation2 + $0x88] sm:$0x3] %vm409, 0.0
      %426 = vst.msk [vmem:[#allocation2 + $0x90] sm:$0xff] %vm406, 0.0
      %427 = vst.msk [vmem:[#allocation2 + $0x98] sm:$0xff] %vm406, 0.0
      %428 = vst.msk [vmem:[#allocation2 + $0xa0] sm:$0x3] %vm409, 0.0
      %429 = vst.msk [vmem:[#allocation2 + $0xa8] sm:$0xff] %vm406, 0.0
      %430 = vst.msk [vmem:[#allocation2 + $0xb0] sm:$0xff] %vm406, 0.0
      %431 = vst.msk [vmem:[#allocation2 + $0xb8] sm:$0x3] %vm409, 0.0
      %432 = vst.msk [vmem:[#allocation2 + $0xc0] sm:$0xff] %vm406, 0.0
      %433 = vst.msk [vmem:[#allocation2 + $0xc8] sm:$0xff] %vm406, 0.0
      %434 = vst.msk [vmem:[#allocation2 + $0xd0] sm:$0x3] %vm409, 0.0
      %435 = vst.msk [vmem:[#allocation2 + $0xd8] sm:$0xff] %vm406, 0.0
      %436 = vst.msk [vmem:[#allocation2 + $0xe0] sm:$0xff] %vm406, 0.0
      %437 = vst.msk [vmem:[#allocation2 + $0xe8] sm:$0x3] %vm409, 0.0
      %438 = vst.msk [vmem:[#allocation2 + $0xf0] sm:$0xff] %vm406, 0.0
      %439 = vst.msk [vmem:[#allocation2 + $0xf8] sm:$0xff] %vm406, 0.0
      %440 = vst.msk [vmem:[#allocation2 + $0x100] sm:$0x3] %vm409, 0.0
      %441 = vst.msk [vmem:[#allocation2 + $0x108] sm:$0xff] %vm406, 0.0
      %442 = vst.msk [vmem:[#allocation2 + $0x110] sm:$0xff] %vm406, 0.0
      %443 = vst.msk [vmem:[#allocation2 + $0x118] sm:$0x3] %vm409, 0.0
      %444 = vst.msk [vmem:[#allocation2 + $0x120] sm:$0xff] %vm406, 0.0
      %445 = vst.msk [vmem:[#allocation2 + $0x128] sm:$0xff] %vm406, 0.0
      %446 = vst.msk [vmem:[#allocation2 + $0x130] sm:$0x3] %vm409, 0.0
      %447 = vst.msk [vmem:[#allocation2 + $0x138] sm:$0xff] %vm406, 0.0
      %448 = vst.msk [vmem:[#allocation2 + $0x140] sm:$0xff] %vm406, 0.0
      %449 = vst.msk [vmem:[#allocation2 + $0x148] sm:$0x3] %vm409, 0.0
      %450 = vst.msk [vmem:[#allocation2 + $0x150] sm:$0xff] %vm406, 0.0
      %451 = vst.msk [vmem:[#allocation2 + $0x158] sm:$0xff] %vm406, 0.0
      %452 = vst.msk [vmem:[#allocation2 + $0x160] sm:$0x3] %vm409, 0.0
      %453 = vst.msk [vmem:[#allocation2 + $0x168] sm:$0xff] %vm406, 0.0
      %454 = vst.msk [vmem:[#allocation2 + $0x170] sm:$0xff] %vm406, 0.0
      %455 = vst.msk [vmem:[#allocation2 + $0x178] sm:$0x3] %vm409, 0.0
      %456 = vst.msk [vmem:[#allocation2 + $0x180] sm:$0xff] %vm406, 0.0
      %457 = vst.msk [vmem:[#allocation2 + $0x188] sm:$0xff] %vm406, 0.0
      %458 = vst.msk [vmem:[#allocation2 + $0x190] sm:$0x3] %vm409, 0.0
      %459 = vst.msk [vmem:[#allocation2 + $0x198] sm:$0xff] %vm406, 0.0
      %460 = vst.msk [vmem:[#allocation2 + $0x1a0] sm:$0xff] %vm406, 0.0
      %461 = vst.msk [vmem:[#allocation2 + $0x1a8] sm:$0x3] %vm409, 0.0
      %s462 = scalar_lea.vmem [#allocation2], 24
      %463 = vst.msk [vmem:[%s462 + $0x1] sm:$0xff] %vm406, %v374
      %464 = vst.msk [vmem:[%s462 + $0x9] sm:$0xff] %vm406, %v375
      %465 = vst.msk [vmem:[%s462 + $0x19] sm:$0xff] %vm406, %v376
      %466 = vst.msk [vmem:[%s462 + $0x21] sm:$0xff] %vm406, %v377
      %467 = vst.msk [vmem:[%s462 + $0x31] sm:$0xff] %vm406, %v378
      %468 = vst.msk [vmem:[%s462 + $0x39] sm:$0xff] %vm406, %v379
      %469 = vst.msk [vmem:[%s462 + $0x49] sm:$0xff] %vm406, %v380
      %470 = vst.msk [vmem:[%s462 + $0x51] sm:$0xff] %vm406, %v381
      %471 = vst.msk [vmem:[%s462 + $0x61] sm:$0xff] %vm406, %v382
      %472 = vst.msk [vmem:[%s462 + $0x69] sm:$0xff] %vm406, %v383
      %473 = vst.msk [vmem:[%s462 + $0x79] sm:$0xff] %vm406, %v384
      %474 = vst.msk [vmem:[%s462 + $0x81] sm:$0xff] %vm406, %v385
      %475 = vst.msk [vmem:[%s462 + $0x91] sm:$0xff] %vm406, %v386
      %476 = vst.msk [vmem:[%s462 + $0x99] sm:$0xff] %vm406, %v387
      %477 = vst.msk [vmem:[%s462 + $0xa9] sm:$0xff] %vm406, %v388
      %478 = vst.msk [vmem:[%s462 + $0xb1] sm:$0xff] %vm406, %v389
      %479 = vst.msk [vmem:[%s462 + $0xc1] sm:$0xff] %vm406, %v390
      %480 = vst.msk [vmem:[%s462 + $0xc9] sm:$0xff] %vm406, %v391
      %481 = vst.msk [vmem:[%s462 + $0xd9] sm:$0xff] %vm406, %v392
      %482 = vst.msk [vmem:[%s462 + $0xe1] sm:$0xff] %vm406, %v393
      %483 = vst.msk [vmem:[%s462 + $0xf1] sm:$0xff] %vm406, %v394
      %484 = vst.msk [vmem:[%s462 + $0xf9] sm:$0xff] %vm406, %v395
      %485 = vst.msk [vmem:[%s462 + $0x109] sm:$0xff] %vm406, %v396
      %486 = vst.msk [vmem:[%s462 + $0x111] sm:$0xff] %vm406, %v397
      %487 = vst.msk [vmem:[%s462 + $0x121] sm:$0xff] %vm406, %v398
      %488 = vst.msk [vmem:[%s462 + $0x129] sm:$0xff] %vm406, %v399
      %489 = vst.msk [vmem:[%s462 + $0x139] sm:$0xff] %vm406, %v400
      %490 = vst.msk [vmem:[%s462 + $0x141] sm:$0xff] %vm406, %v401
      %491 = vst.msk [vmem:[%s462 + $0x151] sm:$0xff] %vm406, %v402
      %492 = vst.msk [vmem:[%s462 + $0x159] sm:$0xff] %vm406, %v403
      %493 = vst.msk [vmem:[%s462 + $0x169] sm:$0xff] %vm406, %v404
      %494 = vst.msk [vmem:[%s462 + $0x171] sm:$0xff] %vm406, %v405
      %v495 = vld [vmem:[#allocation2] sm:$0xff]
      %v496 = vld [vmem:[#allocation2 + $0x8] sm:$0xff]
      %v497 = vld [vmem:[#allocation2 + $0x18] sm:$0xff]
      %v498 = vld [vmem:[#allocation2 + $0x20] sm:$0xff]
      %v499 = vld [vmem:[#allocation2 + $0x30] sm:$0xff]
      %v500 = vld [vmem:[#allocation2 + $0x38] sm:$0xff]
      %v501 = vld [vmem:[#allocation2 + $0x48] sm:$0xff]
      %v502 = vld [vmem:[#allocation2 + $0x50] sm:$0xff]
      %v503 = vld [vmem:[#allocation2 + $0x60] sm:$0xff]
      %v504 = vld [vmem:[#allocation2 + $0x68] sm:$0xff]
      %v505 = vld [vmem:[#allocation2 + $0x78] sm:$0xff]
      %v506 = vld [vmem:[#allocation2 + $0x80] sm:$0xff]
      %v507 = vld [vmem:[#allocation2 + $0x90] sm:$0xff]
      %v508 = vld [vmem:[#allocation2 + $0x98] sm:$0xff]
      %v509 = vld [vmem:[#allocation2 + $0xa8] sm:$0xff]
      %v510 = vld [vmem:[#allocation2 + $0xb0] sm:$0xff]
      %v511 = vld [vmem:[#allocation2 + $0xc0] sm:$0xff]
      %v512 = vld [vmem:[#allocation2 + $0xc8] sm:$0xff]
      %v513 = vld [vmem:[#allocation2 + $0xd8] sm:$0xff]
      %v514 = vld [vmem:[#allocation2 + $0xe0] sm:$0xff]
      %v515 = vld [vmem:[#allocation2 + $0xf0] sm:$0xff]
      %v516 = vld [vmem:[#allocation2 + $0xf8] sm:$0xff]
      %v517 = vld [vmem:[#allocation2 + $0x108] sm:$0xff]
      %v518 = vld [vmem:[#allocation2 + $0x110] sm:$0xff]
      %v519 = vld [vmem:[#allocation2 + $0x120] sm:$0xff]
      %v520 = vld [vmem:[#allocation2 + $0x128] sm:$0xff]
      %v521 = vld [vmem:[#allocation2 + $0x138] sm:$0xff]
      %v522 = vld [vmem:[#allocation2 + $0x140] sm:$0xff]
      %v523 = vld [vmem:[#allocation2 + $0x150] sm:$0xff]
      %v524 = vld [vmem:[#allocation2 + $0x158] sm:$0xff]
      %v525 = vld [vmem:[#allocation2 + $0x168] sm:$0xff]
      %v526 = vld [vmem:[#allocation2 + $0x170] sm:$0xff]
      %v527 = vld [vmem:[#allocation2 + $0x1] sm:$0xff]
      %v528 = vld [vmem:[#allocation2 + $0x9] sm:$0xff]
      %v529 = vld [vmem:[#allocation2 + $0x19] sm:$0xff]
      %v530 = vld [vmem:[#allocation2 + $0x21] sm:$0xff]
      %v531 = vld [vmem:[#allocation2 + $0x31] sm:$0xff]
      %v532 = vld [vmem:[#allocation2 + $0x39] sm:$0xff]
      %v533 = vld [vmem:[#allocation2 + $0x49] sm:$0xff]
      %v534 = vld [vmem:[#allocation2 + $0x51] sm:$0xff]
      %v535 = vld [vmem:[#allocation2 + $0x61] sm:$0xff]
      %v536 = vld [vmem:[#allocation2 + $0x69] sm:$0xff]
      %v537 = vld [vmem:[#allocation2 + $0x79] sm:$0xff]
      %v538 = vld [vmem:[#allocation2 + $0x81] sm:$0xff]
      %v539 = vld [vmem:[#allocation2 + $0x91] sm:$0xff]
      %v540 = vld [vmem:[#allocation2 + $0x99] sm:$0xff]
      %v541 = vld [vmem:[#allocation2 + $0xa9] sm:$0xff]
      %v542 = vld [vmem:[#allocation2 + $0xb1] sm:$0xff]
      %v543 = vld [vmem:[#allocation2 + $0xc1] sm:$0xff]
      %v544 = vld [vmem:[#allocation2 + $0xc9] sm:$0xff]
      %v545 = vld [vmem:[#allocation2 + $0xd9] sm:$0xff]
      %v546 = vld [vmem:[#allocation2 + $0xe1] sm:$0xff]
      %v547 = vld [vmem:[#allocation2 + $0xf1] sm:$0xff]
      %v548 = vld [vmem:[#allocation2 + $0xf9] sm:$0xff]
      %v549 = vld [vmem:[#allocation2 + $0x109] sm:$0xff]
      %v550 = vld [vmem:[#allocation2 + $0x111] sm:$0xff]
      %v551 = vld [vmem:[#allocation2 + $0x121] sm:$0xff]
      %v552 = vld [vmem:[#allocation2 + $0x129] sm:$0xff]
      %v553 = vld [vmem:[#allocation2 + $0x139] sm:$0xff]
      %v554 = vld [vmem:[#allocation2 + $0x141] sm:$0xff]
      %v555 = vld [vmem:[#allocation2 + $0x151] sm:$0xff]
      %v556 = vld [vmem:[#allocation2 + $0x159] sm:$0xff]
      %v557 = vld [vmem:[#allocation2 + $0x169] sm:$0xff]
      %v558 = vld [vmem:[#allocation2 + $0x171] sm:$0xff]
      %v559 = vld [vmem:[#allocation2 + $0x2] sm:$0xff]
      %v560 = vld [vmem:[#allocation2 + $0xa] sm:$0xff]
      %v561 = vld [vmem:[#allocation2 + $0x1a] sm:$0xff]
      %v562 = vld [vmem:[#allocation2 + $0x22] sm:$0xff]
      %v563 = vld [vmem:[#allocation2 + $0x32] sm:$0xff]
      %v564 = vld [vmem:[#allocation2 + $0x3a] sm:$0xff]
      %v565 = vld [vmem:[#allocation2 + $0x4a] sm:$0xff]
      %v566 = vld [vmem:[#allocation2 + $0x52] sm:$0xff]
      %v567 = vld [vmem:[#allocation2 + $0x62] sm:$0xff]
      %v568 = vld [vmem:[#allocation2 + $0x6a] sm:$0xff]
      %v569 = vld [vmem:[#allocation2 + $0x7a] sm:$0xff]
      %v570 = vld [vmem:[#allocation2 + $0x82] sm:$0xff]
      %v571 = vld [vmem:[#allocation2 + $0x92] sm:$0xff]
      %v572 = vld [vmem:[#allocation2 + $0x9a] sm:$0xff]
      %v573 = vld [vmem:[#allocation2 + $0xaa] sm:$0xff]
      %v574 = vld [vmem:[#allocation2 + $0xb2] sm:$0xff]
      %v575 = vld [vmem:[#allocation2 + $0xc2] sm:$0xff]
      %v576 = vld [vmem:[#allocation2 + $0xca] sm:$0xff]
      %v577 = vld [vmem:[#allocation2 + $0xda] sm:$0xff]
      %v578 = vld [vmem:[#allocation2 + $0xe2] sm:$0xff]
      %v579 = vld [vmem:[#allocation2 + $0xf2] sm:$0xff]
      %v580 = vld [vmem:[#allocation2 + $0xfa] sm:$0xff]
      %v581 = vld [vmem:[#allocation2 + $0x10a] sm:$0xff]
      %v582 = vld [vmem:[#allocation2 + $0x112] sm:$0xff]
      %v583 = vld [vmem:[#allocation2 + $0x122] sm:$0xff]
      %v584 = vld [vmem:[#allocation2 + $0x12a] sm:$0xff]
      %v585 = vld [vmem:[#allocation2 + $0x13a] sm:$0xff]
      %v586 = vld [vmem:[#allocation2 + $0x142] sm:$0xff]
      %v587 = vld [vmem:[#allocation2 + $0x152] sm:$0xff]
      %v588 = vld [vmem:[#allocation2 + $0x15a] sm:$0xff]
      %v589 = vld [vmem:[#allocation2 + $0x16a] sm:$0xff]
      %v590 = vld [vmem:[#allocation2 + $0x172] sm:$0xff]
      %v591 = vld [vmem:[%s462] sm:$0xff]
      %v592 = vld [vmem:[%s462 + $0x8] sm:$0xff]
      %v593 = vld [vmem:[%s462 + $0x18] sm:$0xff]
      %v594 = vld [vmem:[%s462 + $0x20] sm:$0xff]
      %v595 = vld [vmem:[%s462 + $0x30] sm:$0xff]
      %v596 = vld [vmem:[%s462 + $0x38] sm:$0xff]
      %v597 = vld [vmem:[%s462 + $0x48] sm:$0xff]
      %v598 = vld [vmem:[%s462 + $0x50] sm:$0xff]
      %v599 = vld [vmem:[%s462 + $0x60] sm:$0xff]
      %v600 = vld [vmem:[%s462 + $0x68] sm:$0xff]
      %v601 = vld [vmem:[%s462 + $0x78] sm:$0xff]
      %v602 = vld [vmem:[%s462 + $0x80] sm:$0xff]
      %v603 = vld [vmem:[%s462 + $0x90] sm:$0xff]
      %v604 = vld [vmem:[%s462 + $0x98] sm:$0xff]
      %v605 = vld [vmem:[%s462 + $0xa8] sm:$0xff]
      %v606 = vld [vmem:[%s462 + $0xb0] sm:$0xff]
      %v607 = vld [vmem:[%s462 + $0xc0] sm:$0xff]
      %v608 = vld [vmem:[%s462 + $0xc8] sm:$0xff]
      %v609 = vld [vmem:[%s462 + $0xd8] sm:$0xff]
      %v610 = vld [vmem:[%s462 + $0xe0] sm:$0xff]
      %v611 = vld [vmem:[%s462 + $0xf0] sm:$0xff]
      %v612 = vld [vmem:[%s462 + $0xf8] sm:$0xff]
      %v613 = vld [vmem:[%s462 + $0x108] sm:$0xff]
      %v614 = vld [vmem:[%s462 + $0x110] sm:$0xff]
      %v615 = vld [vmem:[%s462 + $0x120] sm:$0xff]
      %v616 = vld [vmem:[%s462 + $0x128] sm:$0xff]
      %v617 = vld [vmem:[%s462 + $0x138] sm:$0xff]
      %v618 = vld [vmem:[%s462 + $0x140] sm:$0xff]
      %v619 = vld [vmem:[%s462 + $0x150] sm:$0xff]
      %v620 = vld [vmem:[%s462 + $0x158] sm:$0xff]
      %v621 = vld [vmem:[%s462 + $0x168] sm:$0xff]
      %v622 = vld [vmem:[%s462 + $0x170] sm:$0xff]
      %v623 = vld [vmem:[%s462 + $0x1] sm:$0xff]
      %v624 = vld [vmem:[%s462 + $0x9] sm:$0xff]
      %v625 = vld [vmem:[%s462 + $0x19] sm:$0xff]
      %v626 = vld [vmem:[%s462 + $0x21] sm:$0xff]
      %v627 = vld [vmem:[%s462 + $0x31] sm:$0xff]
      %v628 = vld [vmem:[%s462 + $0x39] sm:$0xff]
      %v629 = vld [vmem:[%s462 + $0x49] sm:$0xff]
      %v630 = vld [vmem:[%s462 + $0x51] sm:$0xff]
      %v631 = vld [vmem:[%s462 + $0x61] sm:$0xff]
      %v632 = vld [vmem:[%s462 + $0x69] sm:$0xff]
      %v633 = vld [vmem:[%s462 + $0x79] sm:$0xff]
      %v634 = vld [vmem:[%s462 + $0x81] sm:$0xff]
      %v635 = vld [vmem:[%s462 + $0x91] sm:$0xff]
      %v636 = vld [vmem:[%s462 + $0x99] sm:$0xff]
      %v637 = vld [vmem:[%s462 + $0xa9] sm:$0xff]
      %v638 = vld [vmem:[%s462 + $0xb1] sm:$0xff]
      %v639 = vld [vmem:[%s462 + $0xc1] sm:$0xff]
      %v640 = vld [vmem:[%s462 + $0xc9] sm:$0xff]
      %v641 = vld [vmem:[%s462 + $0xd9] sm:$0xff]
      %v642 = vld [vmem:[%s462 + $0xe1] sm:$0xff]
      %v643 = vld [vmem:[%s462 + $0xf1] sm:$0xff]
      %v644 = vld [vmem:[%s462 + $0xf9] sm:$0xff]
      %v645 = vld [vmem:[%s462 + $0x109] sm:$0xff]
      %v646 = vld [vmem:[%s462 + $0x111] sm:$0xff]
      %v647 = vld [vmem:[%s462 + $0x121] sm:$0xff]
      %v648 = vld [vmem:[%s462 + $0x129] sm:$0xff]
      %v649 = vld [vmem:[%s462 + $0x139] sm:$0xff]
      %v650 = vld [vmem:[%s462 + $0x141] sm:$0xff]
      %v651 = vld [vmem:[%s462 + $0x151] sm:$0xff]
      %v652 = vld [vmem:[%s462 + $0x159] sm:$0xff]
      %v653 = vld [vmem:[%s462 + $0x169] sm:$0xff]
      %v654 = vld [vmem:[%s462 + $0x171] sm:$0xff]
      %v655 = vld [vmem:[%s462 + $0x2] sm:$0xff]
      %v656 = vld [vmem:[%s462 + $0xa] sm:$0xff]
      %v657 = vld [vmem:[%s462 + $0x1a] sm:$0xff]
      %v658 = vld [vmem:[%s462 + $0x22] sm:$0xff]
      %v659 = vld [vmem:[%s462 + $0x32] sm:$0xff]
      %v660 = vld [vmem:[%s462 + $0x3a] sm:$0xff]
      %v661 = vld [vmem:[%s462 + $0x4a] sm:$0xff]
      %v662 = vld [vmem:[%s462 + $0x52] sm:$0xff]
      %v663 = vld [vmem:[%s462 + $0x62] sm:$0xff]
      %v664 = vld [vmem:[%s462 + $0x6a] sm:$0xff]
      %v665 = vld [vmem:[%s462 + $0x7a] sm:$0xff]
      %v666 = vld [vmem:[%s462 + $0x82] sm:$0xff]
      %v667 = vld [vmem:[%s462 + $0x92] sm:$0xff]
      %v668 = vld [vmem:[%s462 + $0x9a] sm:$0xff]
      %v669 = vld [vmem:[%s462 + $0xaa] sm:$0xff]
      %v670 = vld [vmem:[%s462 + $0xb2] sm:$0xff]
      %v671 = vld [vmem:[%s462 + $0xc2] sm:$0xff]
      %v672 = vld [vmem:[%s462 + $0xca] sm:$0xff]
      %v673 = vld [vmem:[%s462 + $0xda] sm:$0xff]
      %v674 = vld [vmem:[%s462 + $0xe2] sm:$0xff]
      %v675 = vld [vmem:[%s462 + $0xf2] sm:$0xff]
      %v676 = vld [vmem:[%s462 + $0xfa] sm:$0xff]
      %v677 = vld [vmem:[%s462 + $0x10a] sm:$0xff]
      %v678 = vld [vmem:[%s462 + $0x112] sm:$0xff]
      %v679 = vld [vmem:[%s462 + $0x122] sm:$0xff]
      %v680 = vld [vmem:[%s462 + $0x12a] sm:$0xff]
      %v681 = vld [vmem:[%s462 + $0x13a] sm:$0xff]
      %v682 = vld [vmem:[%s462 + $0x142] sm:$0xff]
      %v683 = vld [vmem:[%s462 + $0x152] sm:$0xff]
      %v684 = vld [vmem:[%s462 + $0x15a] sm:$0xff]
      %v685 = vld [vmem:[%s462 + $0x16a] sm:$0xff]
      %v686 = vld [vmem:[%s462 + $0x172] sm:$0xff]
      %s687 = scalar_lea.vmem [#allocation2], 48
      %v688 = vld [vmem:[%s687] sm:$0xff]
      %v689 = vld [vmem:[%s687 + $0x8] sm:$0xff]
      %v690 = vld [vmem:[%s687 + $0x18] sm:$0xff]
      %v691 = vld [vmem:[%s687 + $0x20] sm:$0xff]
      %v692 = vld [vmem:[%s687 + $0x30] sm:$0xff]
      %v693 = vld [vmem:[%s687 + $0x38] sm:$0xff]
      %v694 = vld [vmem:[%s687 + $0x48] sm:$0xff]
      %v695 = vld [vmem:[%s687 + $0x50] sm:$0xff]
      %v696 = vld [vmem:[%s687 + $0x60] sm:$0xff]
      %v697 = vld [vmem:[%s687 + $0x68] sm:$0xff]
      %v698 = vld [vmem:[%s687 + $0x78] sm:$0xff]
      %v699 = vld [vmem:[%s687 + $0x80] sm:$0xff]
      %v700 = vld [vmem:[%s687 + $0x90] sm:$0xff]
      %v701 = vld [vmem:[%s687 + $0x98] sm:$0xff]
      %v702 = vld [vmem:[%s687 + $0xa8] sm:$0xff]
      %v703 = vld [vmem:[%s687 + $0xb0] sm:$0xff]
      %v704 = vld [vmem:[%s687 + $0xc0] sm:$0xff]
      %v705 = vld [vmem:[%s687 + $0xc8] sm:$0xff]
      %v706 = vld [vmem:[%s687 + $0xd8] sm:$0xff]
      %v707 = vld [vmem:[%s687 + $0xe0] sm:$0xff]
      %v708 = vld [vmem:[%s687 + $0xf0] sm:$0xff]
      %v709 = vld [vmem:[%s687 + $0xf8] sm:$0xff]
      %v710 = vld [vmem:[%s687 + $0x108] sm:$0xff]
      %v711 = vld [vmem:[%s687 + $0x110] sm:$0xff]
      %v712 = vld [vmem:[%s687 + $0x120] sm:$0xff]
      %v713 = vld [vmem:[%s687 + $0x128] sm:$0xff]
      %v714 = vld [vmem:[%s687 + $0x138] sm:$0xff]
      %v715 = vld [vmem:[%s687 + $0x140] sm:$0xff]
      %v716 = vld [vmem:[%s687 + $0x150] sm:$0xff]
      %v717 = vld [vmem:[%s687 + $0x158] sm:$0xff]
      %v718 = vld [vmem:[%s687 + $0x168] sm:$0xff]
      %v719 = vld [vmem:[%s687 + $0x170] sm:$0xff]
      %v720 = vld [vmem:[%s687 + $0x1] sm:$0xff]
      %v721 = vld [vmem:[%s687 + $0x9] sm:$0xff]
      %v722 = vld [vmem:[%s687 + $0x19] sm:$0xff]
      %v723 = vld [vmem:[%s687 + $0x21] sm:$0xff]
      %v724 = vld [vmem:[%s687 + $0x31] sm:$0xff]
      %v725 = vld [vmem:[%s687 + $0x39] sm:$0xff]
      %v726 = vld [vmem:[%s687 + $0x49] sm:$0xff]
      %v727 = vld [vmem:[%s687 + $0x51] sm:$0xff]
      %v728 = vld [vmem:[%s687 + $0x61] sm:$0xff]
      %v729 = vld [vmem:[%s687 + $0x69] sm:$0xff]
      %v730 = vld [vmem:[%s687 + $0x79] sm:$0xff]
      %v731 = vld [vmem:[%s687 + $0x81] sm:$0xff]
      %v732 = vld [vmem:[%s687 + $0x91] sm:$0xff]
      %v733 = vld [vmem:[%s687 + $0x99] sm:$0xff]
      %v734 = vld [vmem:[%s687 + $0xa9] sm:$0xff]
      %v735 = vld [vmem:[%s687 + $0xb1] sm:$0xff]
      %v736 = vld [vmem:[%s687 + $0xc1] sm:$0xff]
      %v737 = vld [vmem:[%s687 + $0xc9] sm:$0xff]
      %v738 = vld [vmem:[%s687 + $0xd9] sm:$0xff]
      %v739 = vld [vmem:[%s687 + $0xe1] sm:$0xff]
      %v740 = vld [vmem:[%s687 + $0xf1] sm:$0xff]
      %v741 = vld [vmem:[%s687 + $0xf9] sm:$0xff]
      %v742 = vld [vmem:[%s687 + $0x109] sm:$0xff]
      %v743 = vld [vmem:[%s687 + $0x111] sm:$0xff]
      %v744 = vld [vmem:[%s687 + $0x121] sm:$0xff]
      %v745 = vld [vmem:[%s687 + $0x129] sm:$0xff]
      %v746 = vld [vmem:[%s687 + $0x139] sm:$0xff]
      %v747 = vld [vmem:[%s687 + $0x141] sm:$0xff]
      %v748 = vld [vmem:[%s687 + $0x151] sm:$0xff]
      %v749 = vld [vmem:[%s687 + $0x159] sm:$0xff]
      %v750 = vld [vmem:[%s687 + $0x169] sm:$0xff]
      %v751 = vld [vmem:[%s687 + $0x171] sm:$0xff]
      %v752 = vld [vmem:[%s687 + $0x2] sm:$0xff]
      %v753 = vld [vmem:[%s687 + $0xa] sm:$0xff]
      %v754 = vld [vmem:[%s687 + $0x1a] sm:$0xff]
      %v755 = vld [vmem:[%s687 + $0x22] sm:$0xff]
      %v756 = vld [vmem:[%s687 + $0x32] sm:$0xff]
      %v757 = vld [vmem:[%s687 + $0x3a] sm:$0xff]
      %v758 = vld [vmem:[%s687 + $0x4a] sm:$0xff]
      %v759 = vld [vmem:[%s687 + $0x52] sm:$0xff]
      %v760 = vld [vmem:[%s687 + $0x62] sm:$0xff]
      %v761 = vld [vmem:[%s687 + $0x6a] sm:$0xff]
      %v762 = vld [vmem:[%s687 + $0x7a] sm:$0xff]
      %v763 = vld [vmem:[%s687 + $0x82] sm:$0xff]
      %v764 = vld [vmem:[%s687 + $0x92] sm:$0xff]
      %v765 = vld [vmem:[%s687 + $0x9a] sm:$0xff]
      %v766 = vld [vmem:[%s687 + $0xaa] sm:$0xff]
      %v767 = vld [vmem:[%s687 + $0xb2] sm:$0xff]
      %v768 = vld [vmem:[%s687 + $0xc2] sm:$0xff]
      %v769 = vld [vmem:[%s687 + $0xca] sm:$0xff]
      %v770 = vld [vmem:[%s687 + $0xda] sm:$0xff]
      %v771 = vld [vmem:[%s687 + $0xe2] sm:$0xff]
      %v772 = vld [vmem:[%s687 + $0xf2] sm:$0xff]
      %v773 = vld [vmem:[%s687 + $0xfa] sm:$0xff]
      %v774 = vld [vmem:[%s687 + $0x10a] sm:$0xff]
      %v775 = vld [vmem:[%s687 + $0x112] sm:$0xff]
      %v776 = vld [vmem:[%s687 + $0x122] sm:$0xff]
      %v777 = vld [vmem:[%s687 + $0x12a] sm:$0xff]
      %v778 = vld [vmem:[%s687 + $0x13a] sm:$0xff]
      %v779 = vld [vmem:[%s687 + $0x142] sm:$0xff]
      %v780 = vld [vmem:[%s687 + $0x152] sm:$0xff]
      %v781 = vld [vmem:[%s687 + $0x15a] sm:$0xff]
      %v782 = vld [vmem:[%s687 + $0x16a] sm:$0xff]
      %v783 = vld [vmem:[%s687 + $0x172] sm:$0xff]
      %816 = vrot.lane.b32.xlu0 %v527, 32
      %v817 = vpop.permute.xlu0 %816
      %818 = vrot.lane.b32.xlu0 %v528, 32
      %v819 = vpop.permute.xlu0 %818
      %820 = vrot.lane.b32.xlu0 %v529, 32
      %v821 = vpop.permute.xlu0 %820
      %822 = vrot.lane.b32.xlu0 %v530, 32
      %v823 = vpop.permute.xlu0 %822
      %824 = vrot.lane.b32.xlu0 %v531, 32
      %v825 = vpop.permute.xlu0 %824
      %826 = vrot.lane.b32.xlu0 %v532, 32
      %v827 = vpop.permute.xlu0 %826
      %828 = vrot.lane.b32.xlu0 %v533, 32
      %v829 = vpop.permute.xlu0 %828
      %830 = vrot.lane.b32.xlu0 %v534, 32
      %v831 = vpop.permute.xlu0 %830
      %832 = vrot.lane.b32.xlu0 %v535, 32
      %v833 = vpop.permute.xlu0 %832
      %834 = vrot.lane.b32.xlu0 %v536, 32
      %v835 = vpop.permute.xlu0 %834
      %836 = vrot.lane.b32.xlu0 %v537, 32
      %v837 = vpop.permute.xlu0 %836
      %838 = vrot.lane.b32.xlu0 %v538, 32
      %v839 = vpop.permute.xlu0 %838
      %840 = vrot.lane.b32.xlu0 %v539, 32
      %v841 = vpop.permute.xlu0 %840
      %842 = vrot.lane.b32.xlu0 %v540, 32
      %v843 = vpop.permute.xlu0 %842
      %844 = vrot.lane.b32.xlu0 %v541, 32
      %v845 = vpop.permute.xlu0 %844
      %846 = vrot.lane.b32.xlu0 %v542, 32
      %v847 = vpop.permute.xlu0 %846
      %848 = vrot.lane.b32.xlu0 %v543, 32
      %v849 = vpop.permute.xlu0 %848
      %850 = vrot.lane.b32.xlu0 %v544, 32
      %v851 = vpop.permute.xlu0 %850
      %852 = vrot.lane.b32.xlu0 %v545, 32
      %v853 = vpop.permute.xlu0 %852
      %854 = vrot.lane.b32.xlu0 %v546, 32
      %v855 = vpop.permute.xlu0 %854
      %856 = vrot.lane.b32.xlu0 %v547, 32
      %v857 = vpop.permute.xlu0 %856
      %858 = vrot.lane.b32.xlu0 %v548, 32
      %v859 = vpop.permute.xlu0 %858
      %860 = vrot.lane.b32.xlu0 %v549, 32
      %v861 = vpop.permute.xlu0 %860
      %862 = vrot.lane.b32.xlu0 %v550, 32
      %v863 = vpop.permute.xlu0 %862
      %864 = vrot.lane.b32.xlu0 %v551, 32
      %v865 = vpop.permute.xlu0 %864
      %866 = vrot.lane.b32.xlu0 %v552, 32
      %v867 = vpop.permute.xlu0 %866
      %868 = vrot.lane.b32.xlu0 %v553, 32
      %v869 = vpop.permute.xlu0 %868
      %870 = vrot.lane.b32.xlu0 %v554, 32
      %v871 = vpop.permute.xlu0 %870
      %872 = vrot.lane.b32.xlu0 %v555, 32
      %v873 = vpop.permute.xlu0 %872
      %874 = vrot.lane.b32.xlu0 %v556, 32
      %v875 = vpop.permute.xlu0 %874
      %876 = vrot.lane.b32.xlu0 %v557, 32
      %v877 = vpop.permute.xlu0 %876
      %878 = vrot.lane.b32.xlu0 %v558, 32
      %v879 = vpop.permute.xlu0 %878
      %944 = vrot.lane.b32.xlu0 %v559, 64
      %v945 = vpop.permute.xlu0 %944
      %946 = vrot.lane.b32.xlu0 %v560, 64
      %v947 = vpop.permute.xlu0 %946
      %948 = vrot.lane.b32.xlu0 %v561, 64
      %v949 = vpop.permute.xlu0 %948
      %950 = vrot.lane.b32.xlu0 %v562, 64
      %v951 = vpop.permute.xlu0 %950
      %952 = vrot.lane.b32.xlu0 %v563, 64
      %v953 = vpop.permute.xlu0 %952
      %954 = vrot.lane.b32.xlu0 %v564, 64
      %v955 = vpop.permute.xlu0 %954
      %956 = vrot.lane.b32.xlu0 %v565, 64
      %v957 = vpop.permute.xlu0 %956
      %958 = vrot.lane.b32.xlu0 %v566, 64
      %v959 = vpop.permute.xlu0 %958
      %960 = vrot.lane.b32.xlu0 %v567, 64
      %v961 = vpop.permute.xlu0 %960
      %962 = vrot.lane.b32.xlu0 %v568, 64
      %v963 = vpop.permute.xlu0 %962
      %964 = vrot.lane.b32.xlu0 %v569, 64
      %v965 = vpop.permute.xlu0 %964
      %966 = vrot.lane.b32.xlu0 %v570, 64
      %v967 = vpop.permute.xlu0 %966
      %968 = vrot.lane.b32.xlu0 %v571, 64
      %v969 = vpop.permute.xlu0 %968
      %970 = vrot.lane.b32.xlu0 %v572, 64
      %v971 = vpop.permute.xlu0 %970
      %972 = vrot.lane.b32.xlu0 %v573, 64
      %v973 = vpop.permute.xlu0 %972
      %974 = vrot.lane.b32.xlu0 %v574, 64
      %v975 = vpop.permute.xlu0 %974
      %976 = vrot.lane.b32.xlu0 %v575, 64
      %v977 = vpop.permute.xlu0 %976
      %978 = vrot.lane.b32.xlu0 %v576, 64
      %v979 = vpop.permute.xlu0 %978
      %980 = vrot.lane.b32.xlu0 %v577, 64
      %v981 = vpop.permute.xlu0 %980
      %982 = vrot.lane.b32.xlu0 %v578, 64
      %v983 = vpop.permute.xlu0 %982
      %984 = vrot.lane.b32.xlu0 %v579, 64
      %v985 = vpop.permute.xlu0 %984
      %986 = vrot.lane.b32.xlu0 %v580, 64
      %v987 = vpop.permute.xlu0 %986
      %988 = vrot.lane.b32.xlu0 %v581, 64
      %v989 = vpop.permute.xlu0 %988
      %990 = vrot.lane.b32.xlu0 %v582, 64
      %v991 = vpop.permute.xlu0 %990
      %992 = vrot.lane.b32.xlu0 %v583, 64
      %v993 = vpop.permute.xlu0 %992
      %994 = vrot.lane.b32.xlu0 %v584, 64
      %v995 = vpop.permute.xlu0 %994
      %996 = vrot.lane.b32.xlu0 %v585, 64
      %v997 = vpop.permute.xlu0 %996
      %998 = vrot.lane.b32.xlu0 %v586, 64
      %v999 = vpop.permute.xlu0 %998
      %1000 = vrot.lane.b32.xlu0 %v587, 64
      %v1001 = vpop.permute.xlu0 %1000
      %1002 = vrot.lane.b32.xlu0 %v588, 64
      %v1003 = vpop.permute.xlu0 %1002
      %1004 = vrot.lane.b32.xlu0 %v589, 64
      %v1005 = vpop.permute.xlu0 %1004
      %1006 = vrot.lane.b32.xlu0 %v590, 64
      %v1007 = vpop.permute.xlu0 %1006
      %1072 = vrot.lane.b32.xlu0 %v591, 96
      %v1073 = vpop.permute.xlu0 %1072
      %1074 = vrot.lane.b32.xlu0 %v592, 96
      %v1075 = vpop.permute.xlu0 %1074
      %1076 = vrot.lane.b32.xlu0 %v593, 96
      %v1077 = vpop.permute.xlu0 %1076
      %1078 = vrot.lane.b32.xlu0 %v594, 96
      %v1079 = vpop.permute.xlu0 %1078
      %1080 = vrot.lane.b32.xlu0 %v595, 96
      %v1081 = vpop.permute.xlu0 %1080
      %1082 = vrot.lane.b32.xlu0 %v596, 96
      %v1083 = vpop.permute.xlu0 %1082
      %1084 = vrot.lane.b32.xlu0 %v597, 96
      %v1085 = vpop.permute.xlu0 %1084
      %1086 = vrot.lane.b32.xlu0 %v598, 96
      %v1087 = vpop.permute.xlu0 %1086
      %1088 = vrot.lane.b32.xlu0 %v599, 96
      %v1089 = vpop.permute.xlu0 %1088
      %1090 = vrot.lane.b32.xlu0 %v600, 96
      %v1091 = vpop.permute.xlu0 %1090
      %1092 = vrot.lane.b32.xlu0 %v601, 96
      %v1093 = vpop.permute.xlu0 %1092
      %1094 = vrot.lane.b32.xlu0 %v602, 96
      %v1095 = vpop.permute.xlu0 %1094
      %1096 = vrot.lane.b32.xlu0 %v603, 96
      %v1097 = vpop.permute.xlu0 %1096
      %1098 = vrot.lane.b32.xlu0 %v604, 96
      %v1099 = vpop.permute.xlu0 %1098
      %1100 = vrot.lane.b32.xlu0 %v605, 96
      %v1101 = vpop.permute.xlu0 %1100
      %1102 = vrot.lane.b32.xlu0 %v606, 96
      %v1103 = vpop.permute.xlu0 %1102
      %1104 = vrot.lane.b32.xlu0 %v607, 96
      %v1105 = vpop.permute.xlu0 %1104
      %1106 = vrot.lane.b32.xlu0 %v608, 96
      %v1107 = vpop.permute.xlu0 %1106
      %1108 = vrot.lane.b32.xlu0 %v609, 96
      %v1109 = vpop.permute.xlu0 %1108
      %1110 = vrot.lane.b32.xlu0 %v610, 96
      %v1111 = vpop.permute.xlu0 %1110
      %1112 = vrot.lane.b32.xlu0 %v611, 96
      %v1113 = vpop.permute.xlu0 %1112
      %1114 = vrot.lane.b32.xlu0 %v612, 96
      %v1115 = vpop.permute.xlu0 %1114
      %1116 = vrot.lane.b32.xlu0 %v613, 96
      %v1117 = vpop.permute.xlu0 %1116
      %1118 = vrot.lane.b32.xlu0 %v614, 96
      %v1119 = vpop.permute.xlu0 %1118
      %1120 = vrot.lane.b32.xlu0 %v615, 96
      %v1121 = vpop.permute.xlu0 %1120
      %1122 = vrot.lane.b32.xlu0 %v616, 96
      %v1123 = vpop.permute.xlu0 %1122
      %1124 = vrot.lane.b32.xlu0 %v617, 96
      %v1125 = vpop.permute.xlu0 %1124
      %1126 = vrot.lane.b32.xlu0 %v618, 96
      %v1127 = vpop.permute.xlu0 %1126
      %1128 = vrot.lane.b32.xlu0 %v619, 96
      %v1129 = vpop.permute.xlu0 %1128
      %1130 = vrot.lane.b32.xlu0 %v620, 96
      %v1131 = vpop.permute.xlu0 %1130
      %1132 = vrot.lane.b32.xlu0 %v621, 96
      %v1133 = vpop.permute.xlu0 %1132
      %1134 = vrot.lane.b32.xlu0 %v622, 96
      %v1135 = vpop.permute.xlu0 %1134
      %1200 = vrot.lane.b32.xlu0 %v655, 32
      %v1201 = vpop.permute.xlu0 %1200
      %1202 = vrot.lane.b32.xlu0 %v656, 32
      %v1203 = vpop.permute.xlu0 %1202
      %1204 = vrot.lane.b32.xlu0 %v657, 32
      %v1205 = vpop.permute.xlu0 %1204
      %1206 = vrot.lane.b32.xlu0 %v658, 32
      %v1207 = vpop.permute.xlu0 %1206
      %1208 = vrot.lane.b32.xlu0 %v659, 32
      %v1209 = vpop.permute.xlu0 %1208
      %1210 = vrot.lane.b32.xlu0 %v660, 32
      %v1211 = vpop.permute.xlu0 %1210
      %1212 = vrot.lane.b32.xlu0 %v661, 32
      %v1213 = vpop.permute.xlu0 %1212
      %1214 = vrot.lane.b32.xlu0 %v662, 32
      %v1215 = vpop.permute.xlu0 %1214
      %1216 = vrot.lane.b32.xlu0 %v663, 32
      %v1217 = vpop.permute.xlu0 %1216
      %1218 = vrot.lane.b32.xlu0 %v664, 32
      %v1219 = vpop.permute.xlu0 %1218
      %1220 = vrot.lane.b32.xlu0 %v665, 32
      %v1221 = vpop.permute.xlu0 %1220
      %1222 = vrot.lane.b32.xlu0 %v666, 32
      %v1223 = vpop.permute.xlu0 %1222
      %1224 = vrot.lane.b32.xlu0 %v667, 32
      %v1225 = vpop.permute.xlu0 %1224
      %1226 = vrot.lane.b32.xlu0 %v668, 32
      %v1227 = vpop.permute.xlu0 %1226
      %1228 = vrot.lane.b32.xlu0 %v669, 32
      %v1229 = vpop.permute.xlu0 %1228
      %1230 = vrot.lane.b32.xlu0 %v670, 32
      %v1231 = vpop.permute.xlu0 %1230
      %1232 = vrot.lane.b32.xlu0 %v671, 32
      %v1233 = vpop.permute.xlu0 %1232
      %1234 = vrot.lane.b32.xlu0 %v672, 32
      %v1235 = vpop.permute.xlu0 %1234
      %1236 = vrot.lane.b32.xlu0 %v673, 32
      %v1237 = vpop.permute.xlu0 %1236
      %1238 = vrot.lane.b32.xlu0 %v674, 32
      %v1239 = vpop.permute.xlu0 %1238
      %1240 = vrot.lane.b32.xlu0 %v675, 32
      %v1241 = vpop.permute.xlu0 %1240
      %1242 = vrot.lane.b32.xlu0 %v676, 32
      %v1243 = vpop.permute.xlu0 %1242
      %1244 = vrot.lane.b32.xlu0 %v677, 32
      %v1245 = vpop.permute.xlu0 %1244
      %1246 = vrot.lane.b32.xlu0 %v678, 32
      %v1247 = vpop.permute.xlu0 %1246
      %1248 = vrot.lane.b32.xlu0 %v679, 32
      %v1249 = vpop.permute.xlu0 %1248
      %1250 = vrot.lane.b32.xlu0 %v680, 32
      %v1251 = vpop.permute.xlu0 %1250
      %1252 = vrot.lane.b32.xlu0 %v681, 32
      %v1253 = vpop.permute.xlu0 %1252
      %1254 = vrot.lane.b32.xlu0 %v682, 32
      %v1255 = vpop.permute.xlu0 %1254
      %1256 = vrot.lane.b32.xlu0 %v683, 32
      %v1257 = vpop.permute.xlu0 %1256
      %1258 = vrot.lane.b32.xlu0 %v684, 32
      %v1259 = vpop.permute.xlu0 %1258
      %1260 = vrot.lane.b32.xlu0 %v685, 32
      %v1261 = vpop.permute.xlu0 %1260
      %1262 = vrot.lane.b32.xlu0 %v686, 32
      %v1263 = vpop.permute.xlu0 %1262
      %1328 = vrot.lane.b32.xlu0 %v688, 64
      %v1329 = vpop.permute.xlu0 %1328
      %1330 = vrot.lane.b32.xlu0 %v689, 64
      %v1331 = vpop.permute.xlu0 %1330
      %1332 = vrot.lane.b32.xlu0 %v690, 64
      %v1333 = vpop.permute.xlu0 %1332
      %1334 = vrot.lane.b32.xlu0 %v691, 64
      %v1335 = vpop.permute.xlu0 %1334
      %1336 = vrot.lane.b32.xlu0 %v692, 64
      %v1337 = vpop.permute.xlu0 %1336
      %1338 = vrot.lane.b32.xlu0 %v693, 64
      %v1339 = vpop.permute.xlu0 %1338
      %1340 = vrot.lane.b32.xlu0 %v694, 64
      %v1341 = vpop.permute.xlu0 %1340
      %1342 = vrot.lane.b32.xlu0 %v695, 64
      %v1343 = vpop.permute.xlu0 %1342
      %1344 = vrot.lane.b32.xlu0 %v696, 64
      %v1345 = vpop.permute.xlu0 %1344
      %1346 = vrot.lane.b32.xlu0 %v697, 64
      %v1347 = vpop.permute.xlu0 %1346
      %1348 = vrot.lane.b32.xlu0 %v698, 64
      %v1349 = vpop.permute.xlu0 %1348
      %1350 = vrot.lane.b32.xlu0 %v699, 64
      %v1351 = vpop.permute.xlu0 %1350
      %1352 = vrot.lane.b32.xlu0 %v700, 64
      %v1353 = vpop.permute.xlu0 %1352
      %1354 = vrot.lane.b32.xlu0 %v701, 64
      %v1355 = vpop.permute.xlu0 %1354
      %1356 = vrot.lane.b32.xlu0 %v702, 64
      %v1357 = vpop.permute.xlu0 %1356
      %1358 = vrot.lane.b32.xlu0 %v703, 64
      %v1359 = vpop.permute.xlu0 %1358
      %1360 = vrot.lane.b32.xlu0 %v704, 64
      %v1361 = vpop.permute.xlu0 %1360
      %1362 = vrot.lane.b32.xlu0 %v705, 64
      %v1363 = vpop.permute.xlu0 %1362
      %1364 = vrot.lane.b32.xlu0 %v706, 64
      %v1365 = vpop.permute.xlu0 %1364
      %1366 = vrot.lane.b32.xlu0 %v707, 64
      %v1367 = vpop.permute.xlu0 %1366
      %1368 = vrot.lane.b32.xlu0 %v708, 64
      %v1369 = vpop.permute.xlu0 %1368
      %1370 = vrot.lane.b32.xlu0 %v709, 64
      %v1371 = vpop.permute.xlu0 %1370
      %1372 = vrot.lane.b32.xlu0 %v710, 64
      %v1373 = vpop.permute.xlu0 %1372
      %1374 = vrot.lane.b32.xlu0 %v711, 64
      %v1375 = vpop.permute.xlu0 %1374
      %1376 = vrot.lane.b32.xlu0 %v712, 64
      %v1377 = vpop.permute.xlu0 %1376
      %1378 = vrot.lane.b32.xlu0 %v713, 64
      %v1379 = vpop.permute.xlu0 %1378
      %1380 = vrot.lane.b32.xlu0 %v714, 64
      %v1381 = vpop.permute.xlu0 %1380
      %1382 = vrot.lane.b32.xlu0 %v715, 64
      %v1383 = vpop.permute.xlu0 %1382
      %1384 = vrot.lane.b32.xlu0 %v716, 64
      %v1385 = vpop.permute.xlu0 %1384
      %1386 = vrot.lane.b32.xlu0 %v717, 64
      %v1387 = vpop.permute.xlu0 %1386
      %1388 = vrot.lane.b32.xlu0 %v718, 64
      %v1389 = vpop.permute.xlu0 %1388
      %1390 = vrot.lane.b32.xlu0 %v719, 64
      %v1391 = vpop.permute.xlu0 %1390
      %1456 = vrot.lane.b32.xlu0 %v720, 96
      %v1457 = vpop.permute.xlu0 %1456
      %1458 = vrot.lane.b32.xlu0 %v721, 96
      %v1459 = vpop.permute.xlu0 %1458
      %1460 = vrot.lane.b32.xlu0 %v722, 96
      %v1461 = vpop.permute.xlu0 %1460
      %1462 = vrot.lane.b32.xlu0 %v723, 96
      %v1463 = vpop.permute.xlu0 %1462
      %1464 = vrot.lane.b32.xlu0 %v724, 96
      %v1465 = vpop.permute.xlu0 %1464
      %1466 = vrot.lane.b32.xlu0 %v725, 96
      %v1467 = vpop.permute.xlu0 %1466
      %1468 = vrot.lane.b32.xlu0 %v726, 96
      %v1469 = vpop.permute.xlu0 %1468
      %1470 = vrot.lane.b32.xlu0 %v727, 96
      %v1471 = vpop.permute.xlu0 %1470
      %1472 = vrot.lane.b32.xlu0 %v728, 96
      %v1473 = vpop.permute.xlu0 %1472
      %1474 = vrot.lane.b32.xlu0 %v729, 96
      %v1475 = vpop.permute.xlu0 %1474
      %1476 = vrot.lane.b32.xlu0 %v730, 96
      %v1477 = vpop.permute.xlu0 %1476
      %1478 = vrot.lane.b32.xlu0 %v731, 96
      %v1479 = vpop.permute.xlu0 %1478
      %1480 = vrot.lane.b32.xlu0 %v732, 96
      %v1481 = vpop.permute.xlu0 %1480
      %1482 = vrot.lane.b32.xlu0 %v733, 96
      %v1483 = vpop.permute.xlu0 %1482
      %1484 = vrot.lane.b32.xlu0 %v734, 96
      %v1485 = vpop.permute.xlu0 %1484
      %1486 = vrot.lane.b32.xlu0 %v735, 96
      %v1487 = vpop.permute.xlu0 %1486
      %1488 = vrot.lane.b32.xlu0 %v736, 96
      %v1489 = vpop.permute.xlu0 %1488
      %1490 = vrot.lane.b32.xlu0 %v737, 96
      %v1491 = vpop.permute.xlu0 %1490
      %1492 = vrot.lane.b32.xlu0 %v738, 96
      %v1493 = vpop.permute.xlu0 %1492
      %1494 = vrot.lane.b32.xlu0 %v739, 96
      %v1495 = vpop.permute.xlu0 %1494
      %1496 = vrot.lane.b32.xlu0 %v740, 96
      %v1497 = vpop.permute.xlu0 %1496
      %1498 = vrot.lane.b32.xlu0 %v741, 96
      %v1499 = vpop.permute.xlu0 %1498
      %1500 = vrot.lane.b32.xlu0 %v742, 96
      %v1501 = vpop.permute.xlu0 %1500
      %1502 = vrot.lane.b32.xlu0 %v743, 96
      %v1503 = vpop.permute.xlu0 %1502
      %1504 = vrot.lane.b32.xlu0 %v744, 96
      %v1505 = vpop.permute.xlu0 %1504
      %1506 = vrot.lane.b32.xlu0 %v745, 96
      %v1507 = vpop.permute.xlu0 %1506
      %1508 = vrot.lane.b32.xlu0 %v746, 96
      %v1509 = vpop.permute.xlu0 %1508
      %1510 = vrot.lane.b32.xlu0 %v747, 96
      %v1511 = vpop.permute.xlu0 %1510
      %1512 = vrot.lane.b32.xlu0 %v748, 96
      %v1513 = vpop.permute.xlu0 %1512
      %1514 = vrot.lane.b32.xlu0 %v749, 96
      %v1515 = vpop.permute.xlu0 %1514
      %1516 = vrot.lane.b32.xlu0 %v750, 96
      %v1517 = vpop.permute.xlu0 %1516
      %1518 = vrot.lane.b32.xlu0 %v751, 96
      %v1519 = vpop.permute.xlu0 %1518
      %v1552 = vsel %vm406, %v495, %v817
      %v1553 = vsel %vm406, %v496, %v819
      %v1554 = vsel %vm406, %v497, %v821
      %v1555 = vsel %vm406, %v498, %v823
      %v1556 = vsel %vm406, %v499, %v825
      %v1557 = vsel %vm406, %v500, %v827
      %v1558 = vsel %vm406, %v501, %v829
      %v1559 = vsel %vm406, %v502, %v831
      %v1560 = vsel %vm406, %v503, %v833
      %v1561 = vsel %vm406, %v504, %v835
      %v1562 = vsel %vm406, %v505, %v837
      %v1563 = vsel %vm406, %v506, %v839
      %v1564 = vsel %vm406, %v507, %v841
      %v1565 = vsel %vm406, %v508, %v843
      %v1566 = vsel %vm406, %v509, %v845
      %v1567 = vsel %vm406, %v510, %v847
      %v1568 = vsel %vm406, %v511, %v849
      %v1569 = vsel %vm406, %v512, %v851
      %v1570 = vsel %vm406, %v513, %v853
      %v1571 = vsel %vm406, %v514, %v855
      %v1572 = vsel %vm406, %v515, %v857
      %v1573 = vsel %vm406, %v516, %v859
      %v1574 = vsel %vm406, %v517, %v861
      %v1575 = vsel %vm406, %v518, %v863
      %v1576 = vsel %vm406, %v519, %v865
      %v1577 = vsel %vm406, %v520, %v867
      %v1578 = vsel %vm406, %v521, %v869
      %v1579 = vsel %vm406, %v522, %v871
      %v1580 = vsel %vm406, %v523, %v873
      %v1581 = vsel %vm406, %v524, %v875
      %v1582 = vsel %vm406, %v525, %v877
      %v1583 = vsel %vm406, %v526, %v879
      %vm1584 = vcmask 523264
      %v1585 = vsel %vm1584, %v1552, %v945
      %v1586 = vsel %vm1584, %v1553, %v947
      %v1587 = vsel %vm1584, %v1554, %v949
      %v1588 = vsel %vm1584, %v1555, %v951
      %v1589 = vsel %vm1584, %v1556, %v953
      %v1590 = vsel %vm1584, %v1557, %v955
      %v1591 = vsel %vm1584, %v1558, %v957
      %v1592 = vsel %vm1584, %v1559, %v959
      %v1593 = vsel %vm1584, %v1560, %v961
      %v1594 = vsel %vm1584, %v1561, %v963
      %v1595 = vsel %vm1584, %v1562, %v965
      %v1596 = vsel %vm1584, %v1563, %v967
      %v1597 = vsel %vm1584, %v1564, %v969
      %v1598 = vsel %vm1584, %v1565, %v971
      %v1599 = vsel %vm1584, %v1566, %v973
      %v1600 = vsel %vm1584, %v1567, %v975
      %v1601 = vsel %vm1584, %v1568, %v977
      %v1602 = vsel %vm1584, %v1569, %v979
      %v1603 = vsel %vm1584, %v1570, %v981
      %v1604 = vsel %vm1584, %v1571, %v983
      %v1605 = vsel %vm1584, %v1572, %v985
      %v1606 = vsel %vm1584, %v1573, %v987
      %v1607 = vsel %vm1584, %v1574, %v989
      %v1608 = vsel %vm1584, %v1575, %v991
      %v1609 = vsel %vm1584, %v1576, %v993
      %v1610 = vsel %vm1584, %v1577, %v995
      %v1611 = vsel %vm1584, %v1578, %v997
      %v1612 = vsel %vm1584, %v1579, %v999
      %v1613 = vsel %vm1584, %v1580, %v1001
      %v1614 = vsel %vm1584, %v1581, %v1003
      %v1615 = vsel %vm1584, %v1582, %v1005
      %v1616 = vsel %vm1584, %v1583, %v1007
      %vm1617 = vcmask 785408
      %v1618 = vsel %vm1617, %v1585, %v1073
      %v1619 = vsel %vm1617, %v1586, %v1075
      %v1620 = vsel %vm1617, %v1587, %v1077
      %v1621 = vsel %vm1617, %v1588, %v1079
      %v1622 = vsel %vm1617, %v1589, %v1081
      %v1623 = vsel %vm1617, %v1590, %v1083
      %v1624 = vsel %vm1617, %v1591, %v1085
      %v1625 = vsel %vm1617, %v1592, %v1087
      %v1626 = vsel %vm1617, %v1593, %v1089
      %v1627 = vsel %vm1617, %v1594, %v1091
      %v1628 = vsel %vm1617, %v1595, %v1093
      %v1629 = vsel %vm1617, %v1596, %v1095
      %v1630 = vsel %vm1617, %v1597, %v1097
      %v1631 = vsel %vm1617, %v1598, %v1099
      %v1632 = vsel %vm1617, %v1599, %v1101
      %v1633 = vsel %vm1617, %v1600, %v1103
      %v1634 = vsel %vm1617, %v1601, %v1105
      %v1635 = vsel %vm1617, %v1602, %v1107
      %v1636 = vsel %vm1617, %v1603, %v1109
      %v1637 = vsel %vm1617, %v1604, %v1111
      %v1638 = vsel %vm1617, %v1605, %v1113
      %v1639 = vsel %vm1617, %v1606, %v1115
      %v1640 = vsel %vm1617, %v1607, %v1117
      %v1641 = vsel %vm1617, %v1608, %v1119
      %v1642 = vsel %vm1617, %v1609, %v1121
      %v1643 = vsel %vm1617, %v1610, %v1123
      %v1644 = vsel %vm1617, %v1611, %v1125
      %v1645 = vsel %vm1617, %v1612, %v1127
      %v1646 = vsel %vm1617, %v1613, %v1129
      %v1647 = vsel %vm1617, %v1614, %v1131
      %v1648 = vsel %vm1617, %v1615, %v1133
      %v1649 = vsel %vm1617, %v1616, %v1135
      %v1650 = vsel %vm406, %v623, %v1201
      %v1651 = vsel %vm406, %v624, %v1203
      %v1652 = vsel %vm406, %v625, %v1205
      %v1653 = vsel %vm406, %v626, %v1207
      %v1654 = vsel %vm406, %v627, %v1209
      %v1655 = vsel %vm406, %v628, %v1211
      %v1656 = vsel %vm406, %v629, %v1213
      %v1657 = vsel %vm406, %v630, %v1215
      %v1658 = vsel %vm406, %v631, %v1217
      %v1659 = vsel %vm406, %v632, %v1219
      %v1660 = vsel %vm406, %v633, %v1221
      %v1661 = vsel %vm406, %v634, %v1223
      %v1662 = vsel %vm406, %v635, %v1225
      %v1663 = vsel %vm406, %v636, %v1227
      %v1664 = vsel %vm406, %v637, %v1229
      %v1665 = vsel %vm406, %v638, %v1231
      %v1666 = vsel %vm406, %v639, %v1233
      %v1667 = vsel %vm406, %v640, %v1235
      %v1668 = vsel %vm406, %v641, %v1237
      %v1669 = vsel %vm406, %v642, %v1239
      %v1670 = vsel %vm406, %v643, %v1241
      %v1671 = vsel %vm406, %v644, %v1243
      %v1672 = vsel %vm406, %v645, %v1245
      %v1673 = vsel %vm406, %v646, %v1247
      %v1674 = vsel %vm406, %v647, %v1249
      %v1675 = vsel %vm406, %v648, %v1251
      %v1676 = vsel %vm406, %v649, %v1253
      %v1677 = vsel %vm406, %v650, %v1255
      %v1678 = vsel %vm406, %v651, %v1257
      %v1679 = vsel %vm406, %v652, %v1259
      %v1680 = vsel %vm406, %v653, %v1261
      %v1681 = vsel %vm406, %v654, %v1263
      %v1682 = vsel %vm1584, %v1650, %v1329
      %v1683 = vsel %vm1584, %v1651, %v1331
      %v1684 = vsel %vm1584, %v1652, %v1333
      %v1685 = vsel %vm1584, %v1653, %v1335
      %v1686 = vsel %vm1584, %v1654, %v1337
      %v1687 = vsel %vm1584, %v1655, %v1339
      %v1688 = vsel %vm1584, %v1656, %v1341
      %v1689 = vsel %vm1584, %v1657, %v1343
      %v1690 = vsel %vm1584, %v1658, %v1345
      %v1691 = vsel %vm1584, %v1659, %v1347
      %v1692 = vsel %vm1584, %v1660, %v1349
      %v1693 = vsel %vm1584, %v1661, %v1351
      %v1694 = vsel %vm1584, %v1662, %v1353
      %v1695 = vsel %vm1584, %v1663, %v1355
      %v1696 = vsel %vm1584, %v1664, %v1357
      %v1697 = vsel %vm1584, %v1665, %v1359
      %v1698 = vsel %vm1584, %v1666, %v1361
      %v1699 = vsel %vm1584, %v1667, %v1363
      %v1700 = vsel %vm1584, %v1668, %v1365
      %v1701 = vsel %vm1584, %v1669, %v1367
      %v1702 = vsel %vm1584, %v1670, %v1369
      %v1703 = vsel %vm1584, %v1671, %v1371
      %v1704 = vsel %vm1584, %v1672, %v1373
      %v1705 = vsel %vm1584, %v1673, %v1375
      %v1706 = vsel %vm1584, %v1674, %v1377
      %v1707 = vsel %vm1584, %v1675, %v1379
      %v1708 = vsel %vm1584, %v1676, %v1381
      %v1709 = vsel %vm1584, %v1677, %v1383
      %v1710 = vsel %vm1584, %v1678, %v1385
      %v1711 = vsel %vm1584, %v1679, %v1387
      %v1712 = vsel %vm1584, %v1680, %v1389
      %v1713 = vsel %vm1584, %v1681, %v1391
      %v1714 = vsel %vm1617, %v1682, %v1457
      %v1715 = vsel %vm1617, %v1683, %v1459
      %v1716 = vsel %vm1617, %v1684, %v1461
      %v1717 = vsel %vm1617, %v1685, %v1463
      %v1718 = vsel %vm1617, %v1686, %v1465
      %v1719 = vsel %vm1617, %v1687, %v1467
      %v1720 = vsel %vm1617, %v1688, %v1469
      %v1721 = vsel %vm1617, %v1689, %v1471
      %v1722 = vsel %vm1617, %v1690, %v1473
      %v1723 = vsel %vm1617, %v1691, %v1475
      %v1724 = vsel %vm1617, %v1692, %v1477
      %v1725 = vsel %vm1617, %v1693, %v1479
      %v1726 = vsel %vm1617, %v1694, %v1481
      %v1727 = vsel %vm1617, %v1695, %v1483
      %v1728 = vsel %vm1617, %v1696, %v1485
      %v1729 = vsel %vm1617, %v1697, %v1487
      %v1730 = vsel %vm1617, %v1698, %v1489
      %v1731 = vsel %vm1617, %v1699, %v1491
      %v1732 = vsel %vm1617, %v1700, %v1493
      %v1733 = vsel %vm1617, %v1701, %v1495
      %v1734 = vsel %vm1617, %v1702, %v1497
      %v1735 = vsel %vm1617, %v1703, %v1499
      %v1736 = vsel %vm1617, %v1704, %v1501
      %v1737 = vsel %vm1617, %v1705, %v1503
      %v1738 = vsel %vm1617, %v1706, %v1505
      %v1739 = vsel %vm1617, %v1707, %v1507
      %v1740 = vsel %vm1617, %v1708, %v1509
      %v1741 = vsel %vm1617, %v1709, %v1511
      %v1742 = vsel %vm1617, %v1710, %v1513
      %v1743 = vsel %vm1617, %v1711, %v1515
      %v1744 = vsel %vm1617, %v1712, %v1517
      %v1745 = vsel %vm1617, %v1713, %v1519
      %v1746 = vpack.c.bf16 %v1619, %v1618
      %v1747 = vpack.c.bf16 %v1715, %v1714
      %v1748 = vpack.c.bf16 %v753, %v752
      %v1749 = vpack.c.bf16 %v1621, %v1620
      %v1750 = vpack.c.bf16 %v1717, %v1716
      %v1751 = vpack.c.bf16 %v755, %v754
      %v1752 = vpack.c.bf16 %v1623, %v1622
      %v1753 = vpack.c.bf16 %v1719, %v1718
      %v1754 = vpack.c.bf16 %v757, %v756
      %v1755 = vpack.c.bf16 %v1625, %v1624
      %v1756 = vpack.c.bf16 %v1721, %v1720
      %v1757 = vpack.c.bf16 %v759, %v758
      %v1758 = vpack.c.bf16 %v1627, %v1626
      %v1759 = vpack.c.bf16 %v1723, %v1722
      %v1760 = vpack.c.bf16 %v761, %v760
      %v1761 = vpack.c.bf16 %v1629, %v1628
      %v1762 = vpack.c.bf16 %v1725, %v1724
      %v1763 = vpack.c.bf16 %v763, %v762
      %v1764 = vpack.c.bf16 %v1631, %v1630
      %v1765 = vpack.c.bf16 %v1727, %v1726
      %v1766 = vpack.c.bf16 %v765, %v764
      %v1767 = vpack.c.bf16 %v1633, %v1632
      %v1768 = vpack.c.bf16 %v1729, %v1728
      %v1769 = vpack.c.bf16 %v767, %v766
      %v1770 = vpack.c.bf16 %v1635, %v1634
      %v1771 = vpack.c.bf16 %v1731, %v1730
      %v1772 = vpack.c.bf16 %v769, %v768
      %v1773 = vpack.c.bf16 %v1637, %v1636
      %v1774 = vpack.c.bf16 %v1733, %v1732
      %v1775 = vpack.c.bf16 %v771, %v770
      %v1776 = vpack.c.bf16 %v1639, %v1638
      %v1777 = vpack.c.bf16 %v1735, %v1734
      %v1778 = vpack.c.bf16 %v773, %v772
      %v1779 = vpack.c.bf16 %v1641, %v1640
      %v1780 = vpack.c.bf16 %v1737, %v1736
      %v1781 = vpack.c.bf16 %v775, %v774
      %v1782 = vpack.c.bf16 %v1643, %v1642
      %v1783 = vpack.c.bf16 %v1739, %v1738
      %v1784 = vpack.c.bf16 %v777, %v776
      %v1785 = vpack.c.bf16 %v1645, %v1644
      %v1786 = vpack.c.bf16 %v1741, %v1740
      %v1787 = vpack.c.bf16 %v779, %v778
      %v1788 = vpack.c.bf16 %v1647, %v1646
      %v1789 = vpack.c.bf16 %v1743, %v1742
      %v1790 = vpack.c.bf16 %v781, %v780
      %v1791 = vpack.c.bf16 %v1649, %v1648
      %v1792 = vpack.c.bf16 %v1745, %v1744
      %v1793 = vpack.c.bf16 %v783, %v782
      %v1794 = vld [vmem:[%s3] sm:$0xf]
      %v1795 = vld [vmem:[%s3 + $0x4] sm:$0xf]
      %v1796 = vld [vmem:[%s3 + $0x8] sm:$0xf]
      %v1797 = vld [vmem:[%s3 + $0xc] sm:$0xf]
      %v1798 = vld [vmem:[%s3 + $0x10] sm:$0xf]
      %v1799 = vld [vmem:[%s3 + $0x14] sm:$0xf]
      %v1800 = vld [vmem:[%s3 + $0x18] sm:$0xf]
      %v1801 = vld [vmem:[%s3 + $0x1c] sm:$0xf]
      %v1802 = vld [vmem:[%s3 + $0x20] sm:$0xf]
      %v1803 = vld [vmem:[%s3 + $0x24] sm:$0xf]
      %v1804 = vld [vmem:[%s3 + $0x28] sm:$0xf]
      %v1805 = vld [vmem:[%s3 + $0x2c] sm:$0xf]
      %v1806 = vld [vmem:[%s3 + $0x30] sm:$0xf]
      %v1807 = vld [vmem:[%s3 + $0x34] sm:$0xf]
      %v1808 = vld [vmem:[%s3 + $0x38] sm:$0xf]
      %v1809 = vld [vmem:[%s3 + $0x3c] sm:$0xf]
      %v1810 = vld [vmem:[%s3 + $0x40] sm:$0xf]
      %v1811 = vld [vmem:[%s3 + $0x44] sm:$0xf]
      %v1812 = vld [vmem:[%s3 + $0x48] sm:$0xf]
      %v1813 = vld [vmem:[%s3 + $0x4c] sm:$0xf]
      %v1814 = vld [vmem:[%s3 + $0x50] sm:$0xf]
      %v1815 = vld [vmem:[%s3 + $0x54] sm:$0xf]
      %v1816 = vld [vmem:[%s3 + $0x58] sm:$0xf]
      %v1817 = vld [vmem:[%s3 + $0x5c] sm:$0xf]
      %v1818 = vld [vmem:[%s3 + $0x60] sm:$0xf]
      %v1819 = vld [vmem:[%s3 + $0x64] sm:$0xf]
      %v1820 = vld [vmem:[%s3 + $0x68] sm:$0xf]
      %v1821 = vld [vmem:[%s3 + $0x6c] sm:$0xf]
      %v1822 = vld [vmem:[%s3 + $0x70] sm:$0xf]
      %v1823 = vld [vmem:[%s3 + $0x74] sm:$0xf]
      %v1824 = vld [vmem:[%s3 + $0x78] sm:$0xf]
      %v1825 = vld [vmem:[%s3 + $0x7c] sm:$0xf]
      %v1826 = vld [vmem:[%s3 + $0x80] sm:$0xf]
      %v1827 = vld [vmem:[%s3 + $0x84] sm:$0xf]
      %v1828 = vld [vmem:[%s3 + $0x88] sm:$0xf]
      %v1829 = vld [vmem:[%s3 + $0x8c] sm:$0xf]
      %v1866 = vunpack.c.l.b16 %v1794
      %v1867 = vunpack.c.l.b16 %v1795
      %v1868 = vunpack.c.l.b16 %v1796
      %v1869 = vunpack.c.l.b16 %v1797
      %v1870 = vunpack.c.l.b16 %v1798
      %v1871 = vunpack.c.l.b16 %v1799
      %v1872 = vunpack.c.l.b16 %v1800
      %v1873 = vunpack.c.l.b16 %v1801
      %v1874 = vunpack.c.l.b16 %v1802
      %v1875 = vunpack.c.l.b16 %v1803
      %v1876 = vunpack.c.l.b16 %v1804
      %v1877 = vunpack.c.l.b16 %v1805
      %v1878 = vunpack.c.l.b16 %v1806
      %v1879 = vunpack.c.l.b16 %v1807
      %v1880 = vunpack.c.l.b16 %v1808
      %v1881 = vunpack.c.l.b16 %v1809
      %v1882 = vunpack.c.l.b16 %v1810
      %v1883 = vunpack.c.l.b16 %v1811
      %v1884 = vunpack.c.l.b16 %v1812
      %v1885 = vunpack.c.l.b16 %v1813
      %v1886 = vunpack.c.l.b16 %v1814
      %v1887 = vunpack.c.l.b16 %v1815
      %v1888 = vunpack.c.l.b16 %v1816
      %v1889 = vunpack.c.l.b16 %v1817
      %v1890 = vunpack.c.l.b16 %v1818
      %v1891 = vunpack.c.l.b16 %v1819
      %v1892 = vunpack.c.l.b16 %v1820
      %v1893 = vunpack.c.l.b16 %v1821
      %v1894 = vunpack.c.l.b16 %v1822
      %v1895 = vunpack.c.l.b16 %v1823
      %v1896 = vunpack.c.l.b16 %v1824
      %v1897 = vunpack.c.l.b16 %v1825
      %v1898 = vunpack.c.l.b16 %v1826
      %v1899 = vunpack.c.l.b16 %v1827
      %v1900 = vunpack.c.l.b16 %v1828
      %v1901 = vunpack.c.l.b16 %v1829
      %v1902 = vpack.c.b16 %v1867, %v1866
      %v1903 = vpack.c.b16 %v1869, %v1868
      %v1904 = vpack.c.b16 %v1871, %v1870
      %v1905 = vpack.c.b16 %v1873, %v1872
      %v1906 = vpack.c.b16 %v1875, %v1874
      %v1907 = vpack.c.b16 %v1877, %v1876
      %v1908 = vpack.c.b16 %v1879, %v1878
      %v1909 = vpack.c.b16 %v1881, %v1880
      %v1910 = vpack.c.b16 %v1883, %v1882
      %v1911 = vpack.c.b16 %v1885, %v1884
      %v1912 = vpack.c.b16 %v1887, %v1886
      %v1913 = vpack.c.b16 %v1889, %v1888
      %v1914 = vpack.c.b16 %v1891, %v1890
      %v1915 = vpack.c.b16 %v1893, %v1892
      %v1916 = vpack.c.b16 %v1895, %v1894
      %v1917 = vpack.c.b16 %v1897, %v1896
      %v1918 = vpack.c.b16 %v1899, %v1898
      %v1919 = vpack.c.b16 %v1901, %v1900
      %v1939 = vsel %vm406, %v1748, 0
      %v1942 = vsel %vm406, %v1751, 0
      %v1945 = vsel %vm406, %v1754, 0
      %v1948 = vsel %vm406, %v1757, 0
      %v1951 = vsel %vm406, %v1760, 0
      %v1954 = vsel %vm406, %v1763, 0
      %v1957 = vsel %vm406, %v1766, 0
      %v1960 = vsel %vm406, %v1769, 0
      %v1963 = vsel %vm406, %v1772, 0
      %v1966 = vsel %vm406, %v1775, 0
      %v1969 = vsel %vm406, %v1778, 0
      %v1972 = vsel %vm406, %v1781, 0
      %v1975 = vsel %vm406, %v1784, 0
      %v1978 = vsel %vm406, %v1787, 0
      %v1981 = vsel %vm406, %v1790, 0
      %v1984 = vsel %vm406, %v1793, 0
      %1986 = vmatpush.bf16.msra.mxu0 %v1909
      %1987 = vmatpush.bf16.msra.mxu0 %v1908
      %1988 = vmatpush.bf16.msra.mxu0 %v1907
      %1989 = vmatpush.bf16.msra.mxu0 %v1906
      %1990 = vmatpush.bf16.msra.mxu0 %v1905
      %1991 = vmatpush.bf16.msra.mxu0 %v1904
      %1992 = vmatpush.bf16.msra.mxu0 %v1903
      %1993 = vmatpush.bf16.msra.mxu0 %v1902
      %1994 = vmatmul.bf16.gmra.mxu0 %v1746
      %v1995 = vpop.f32.mrf.mxu0
      %v1996 = vadd.f32 0.0, %v1995
      %v1997 = vpop.f32.mrf.mxu0
      %v1998 = vadd.f32 0.0, %v1997
      %1999 = vmatmul.bf16.gmra.mxu0 %v1749
      %v2000 = vpop.f32.mrf.mxu0
      %v2001 = vadd.f32 0.0, %v2000
      %v2002 = vpop.f32.mrf.mxu0
      %v2003 = vadd.f32 0.0, %v2002
      %2004 = vmatmul.bf16.gmra.mxu0 %v1752
      %v2005 = vpop.f32.mrf.mxu0
      %v2006 = vadd.f32 0.0, %v2005
      %v2007 = vpop.f32.mrf.mxu0
      %v2008 = vadd.f32 0.0, %v2007
      %2009 = vmatmul.bf16.gmra.mxu0 %v1755
      %v2010 = vpop.f32.mrf.mxu0
      %v2011 = vadd.f32 0.0, %v2010
      %v2012 = vpop.f32.mrf.mxu0
      %v2013 = vadd.f32 0.0, %v2012
      %2014 = vmatmul.bf16.gmra.mxu0 %v1758
      %v2015 = vpop.f32.mrf.mxu0
      %v2016 = vadd.f32 0.0, %v2015
      %v2017 = vpop.f32.mrf.mxu0
      %v2018 = vadd.f32 0.0, %v2017
      %2019 = vmatmul.bf16.gmra.mxu0 %v1761
      %v2020 = vpop.f32.mrf.mxu0
      %v2021 = vadd.f32 0.0, %v2020
      %v2022 = vpop.f32.mrf.mxu0
      %v2023 = vadd.f32 0.0, %v2022
      %2024 = vmatmul.bf16.gmra.mxu0 %v1764
      %v2025 = vpop.f32.mrf.mxu0
      %v2026 = vadd.f32 0.0, %v2025
      %v2027 = vpop.f32.mrf.mxu0
      %v2028 = vadd.f32 0.0, %v2027
      %2029 = vmatmul.bf16.gmra.mxu0 %v1767
      %v2030 = vpop.f32.mrf.mxu0
      %v2031 = vadd.f32 0.0, %v2030
      %v2032 = vpop.f32.mrf.mxu0
      %v2033 = vadd.f32 0.0, %v2032
      %2034 = vmatmul.bf16.gmra.mxu0 %v1770
      %v2035 = vpop.f32.mrf.mxu0
      %v2036 = vadd.f32 0.0, %v2035
      %v2037 = vpop.f32.mrf.mxu0
      %v2038 = vadd.f32 0.0, %v2037
      %2039 = vmatmul.bf16.gmra.mxu0 %v1773
      %v2040 = vpop.f32.mrf.mxu0
      %v2041 = vadd.f32 0.0, %v2040
      %v2042 = vpop.f32.mrf.mxu0
      %v2043 = vadd.f32 0.0, %v2042
      %2044 = vmatmul.bf16.gmra.mxu0 %v1776
      %v2045 = vpop.f32.mrf.mxu0
      %v2046 = vadd.f32 0.0, %v2045
      %v2047 = vpop.f32.mrf.mxu0
      %v2048 = vadd.f32 0.0, %v2047
      %2049 = vmatmul.bf16.gmra.mxu0 %v1779
      %v2050 = vpop.f32.mrf.mxu0
      %v2051 = vadd.f32 0.0, %v2050
      %v2052 = vpop.f32.mrf.mxu0
      %v2053 = vadd.f32 0.0, %v2052
      %2054 = vmatmul.bf16.gmra.mxu0 %v1782
      %v2055 = vpop.f32.mrf.mxu0
      %v2056 = vadd.f32 0.0, %v2055
      %v2057 = vpop.f32.mrf.mxu0
      %v2058 = vadd.f32 0.0, %v2057
      %2059 = vmatmul.bf16.gmra.mxu0 %v1785
      %v2060 = vpop.f32.mrf.mxu0
      %v2061 = vadd.f32 0.0, %v2060
      %v2062 = vpop.f32.mrf.mxu0
      %v2063 = vadd.f32 0.0, %v2062
      %2064 = vmatmul.bf16.gmra.mxu0 %v1788
      %v2065 = vpop.f32.mrf.mxu0
      %v2066 = vadd.f32 0.0, %v2065
      %v2067 = vpop.f32.mrf.mxu0
      %v2068 = vadd.f32 0.0, %v2067
      %2069 = vmatmul.bf16.gmra.mxu0 %v1791
      %v2070 = vpop.f32.mrf.mxu0
      %v2071 = vadd.f32 0.0, %v2070
      %v2072 = vpop.f32.mrf.mxu0
      %v2073 = vadd.f32 0.0, %v2072
      %2074 = vdwg.mxu0
      %2075 = vmatpush.bf16.msra.mxu0 %v1917
      %2076 = vmatpush.bf16.msra.mxu0 %v1916
      %2077 = vmatpush.bf16.msra.mxu0 %v1915
      %2078 = vmatpush.bf16.msra.mxu0 %v1914
      %2079 = vmatpush.bf16.msra.mxu0 %v1913
      %2080 = vmatpush.bf16.msra.mxu0 %v1912
      %2081 = vmatpush.bf16.msra.mxu0 %v1911
      %2082 = vmatpush.bf16.msra.mxu0 %v1910
      %2083 = vmatmul.bf16.gmra.mxu0 %v1747
      %v2084 = vpop.f32.mrf.mxu0
      %v2085 = vadd.f32 %v1996, %v2084
      %v2086 = vpop.f32.mrf.mxu0
      %v2087 = vadd.f32 %v1998, %v2086
      %2088 = vmatmul.bf16.gmra.mxu0 %v1750
      %v2089 = vpop.f32.mrf.mxu0
      %v2090 = vadd.f32 %v2001, %v2089
      %v2091 = vpop.f32.mrf.mxu0
      %v2092 = vadd.f32 %v2003, %v2091
      %2093 = vmatmul.bf16.gmra.mxu0 %v1753
      %v2094 = vpop.f32.mrf.mxu0
      %v2095 = vadd.f32 %v2006, %v2094
      %v2096 = vpop.f32.mrf.mxu0
      %v2097 = vadd.f32 %v2008, %v2096
      %2098 = vmatmul.bf16.gmra.mxu0 %v1756
      %v2099 = vpop.f32.mrf.mxu0
      %v2100 = vadd.f32 %v2011, %v2099
      %v2101 = vpop.f32.mrf.mxu0
      %v2102 = vadd.f32 %v2013, %v2101
      %2103 = vmatmul.bf16.gmra.mxu0 %v1759
      %v2104 = vpop.f32.mrf.mxu0
      %v2105 = vadd.f32 %v2016, %v2104
      %v2106 = vpop.f32.mrf.mxu0
      %v2107 = vadd.f32 %v2018, %v2106
      %2108 = vmatmul.bf16.gmra.mxu0 %v1762
      %v2109 = vpop.f32.mrf.mxu0
      %v2110 = vadd.f32 %v2021, %v2109
      %v2111 = vpop.f32.mrf.mxu0
      %v2112 = vadd.f32 %v2023, %v2111
      %2113 = vmatmul.bf16.gmra.mxu0 %v1765
      %v2114 = vpop.f32.mrf.mxu0
      %v2115 = vadd.f32 %v2026, %v2114
      %v2116 = vpop.f32.mrf.mxu0
      %v2117 = vadd.f32 %v2028, %v2116
      %2118 = vmatmul.bf16.gmra.mxu0 %v1768
      %v2119 = vpop.f32.mrf.mxu0
      %v2120 = vadd.f32 %v2031, %v2119
      %v2121 = vpop.f32.mrf.mxu0
      %v2122 = vadd.f32 %v2033, %v2121
      %2123 = vmatmul.bf16.gmra.mxu0 %v1771
      %v2124 = vpop.f32.mrf.mxu0
      %v2125 = vadd.f32 %v2036, %v2124
      %v2126 = vpop.f32.mrf.mxu0
      %v2127 = vadd.f32 %v2038, %v2126
      %2128 = vmatmul.bf16.gmra.mxu0 %v1774
      %v2129 = vpop.f32.mrf.mxu0
      %v2130 = vadd.f32 %v2041, %v2129
      %v2131 = vpop.f32.mrf.mxu0
      %v2132 = vadd.f32 %v2043, %v2131
      %2133 = vmatmul.bf16.gmra.mxu0 %v1777
      %v2134 = vpop.f32.mrf.mxu0
      %v2135 = vadd.f32 %v2046, %v2134
      %v2136 = vpop.f32.mrf.mxu0
      %v2137 = vadd.f32 %v2048, %v2136
      %2138 = vmatmul.bf16.gmra.mxu0 %v1780
      %v2139 = vpop.f32.mrf.mxu0
      %v2140 = vadd.f32 %v2051, %v2139
      %v2141 = vpop.f32.mrf.mxu0
      %v2142 = vadd.f32 %v2053, %v2141
      %2143 = vmatmul.bf16.gmra.mxu0 %v1783
      %v2144 = vpop.f32.mrf.mxu0
      %v2145 = vadd.f32 %v2056, %v2144
      %v2146 = vpop.f32.mrf.mxu0
      %v2147 = vadd.f32 %v2058, %v2146
      %2148 = vmatmul.bf16.gmra.mxu0 %v1786
      %v2149 = vpop.f32.mrf.mxu0
      %v2150 = vadd.f32 %v2061, %v2149
      %v2151 = vpop.f32.mrf.mxu0
      %v2152 = vadd.f32 %v2063, %v2151
      %2153 = vmatmul.bf16.gmra.mxu0 %v1789
      %v2154 = vpop.f32.mrf.mxu0
      %v2155 = vadd.f32 %v2066, %v2154
      %v2156 = vpop.f32.mrf.mxu0
      %v2157 = vadd.f32 %v2068, %v2156
      %2158 = vmatmul.bf16.gmra.mxu0 %v1792
      %v2159 = vpop.f32.mrf.mxu0
      %v2160 = vadd.f32 %v2071, %v2159
      %v2161 = vpop.f32.mrf.mxu0
      %v2162 = vadd.f32 %v2073, %v2161
      %2163 = vdwg.mxu0
      %2164 = vmatpush.bf16.msra.mxu0 0
      %2165 = vmatpush.bf16.msra.mxu0 0
      %2166 = vmatpush.bf16.msra.mxu0 0
      %2167 = vmatpush.bf16.msra.mxu0 0
      %2168 = vmatpush.bf16.msra.mxu0 0
      %2169 = vmatpush.bf16.msra.mxu0 0
      %2170 = vmatpush.bf16.msra.mxu0 %v1919
      %2171 = vmatpush.bf16.msra.mxu0 %v1918
      %2172 = vmatmul.bf16.gmra.mxu0 %v1939
      %v2173 = vpop.f32.mrf.mxu0
      %v2174 = vadd.f32 %v2085, %v2173
      %v2175 = vpop.f32.mrf.mxu0
      %v2176 = vadd.f32 %v2087, %v2175
      %2177 = vmatmul.bf16.gmra.mxu0 %v1942
      %v2178 = vpop.f32.mrf.mxu0
      %v2179 = vadd.f32 %v2090, %v2178
      %v2180 = vpop.f32.mrf.mxu0
      %v2181 = vadd.f32 %v2092, %v2180
      %2182 = vmatmul.bf16.gmra.mxu0 %v1945
      %v2183 = vpop.f32.mrf.mxu0
      %v2184 = vadd.f32 %v2095, %v2183
      %v2185 = vpop.f32.mrf.mxu0
      %v2186 = vadd.f32 %v2097, %v2185
      %2187 = vmatmul.bf16.gmra.mxu0 %v1948
      %v2188 = vpop.f32.mrf.mxu0
      %v2189 = vadd.f32 %v2100, %v2188
      %v2190 = vpop.f32.mrf.mxu0
      %v2191 = vadd.f32 %v2102, %v2190
      %2192 = vmatmul.bf16.gmra.mxu0 %v1951
      %v2193 = vpop.f32.mrf.mxu0
      %v2194 = vadd.f32 %v2105, %v2193
      %v2195 = vpop.f32.mrf.mxu0
      %v2196 = vadd.f32 %v2107, %v2195
      %2197 = vmatmul.bf16.gmra.mxu0 %v1954
      %v2198 = vpop.f32.mrf.mxu0
      %v2199 = vadd.f32 %v2110, %v2198
      %v2200 = vpop.f32.mrf.mxu0
      %v2201 = vadd.f32 %v2112, %v2200
      %2202 = vmatmul.bf16.gmra.mxu0 %v1957
      %v2203 = vpop.f32.mrf.mxu0
      %v2204 = vadd.f32 %v2115, %v2203
      %v2205 = vpop.f32.mrf.mxu0
      %v2206 = vadd.f32 %v2117, %v2205
      %2207 = vmatmul.bf16.gmra.mxu0 %v1960
      %v2208 = vpop.f32.mrf.mxu0
      %v2209 = vadd.f32 %v2120, %v2208
      %v2210 = vpop.f32.mrf.mxu0
      %v2211 = vadd.f32 %v2122, %v2210
      %2212 = vmatmul.bf16.gmra.mxu0 %v1963
      %v2213 = vpop.f32.mrf.mxu0
      %v2214 = vadd.f32 %v2125, %v2213
      %v2215 = vpop.f32.mrf.mxu0
      %v2216 = vadd.f32 %v2127, %v2215
      %2217 = vmatmul.bf16.gmra.mxu0 %v1966
      %v2218 = vpop.f32.mrf.mxu0
      %v2219 = vadd.f32 %v2130, %v2218
      %v2220 = vpop.f32.mrf.mxu0
      %v2221 = vadd.f32 %v2132, %v2220
      %2222 = vmatmul.bf16.gmra.mxu0 %v1969
      %v2223 = vpop.f32.mrf.mxu0
      %v2224 = vadd.f32 %v2135, %v2223
      %v2225 = vpop.f32.mrf.mxu0
      %v2226 = vadd.f32 %v2137, %v2225
      %2227 = vmatmul.bf16.gmra.mxu0 %v1972
      %v2228 = vpop.f32.mrf.mxu0
      %v2229 = vadd.f32 %v2140, %v2228
      %v2230 = vpop.f32.mrf.mxu0
      %v2231 = vadd.f32 %v2142, %v2230
      %2232 = vmatmul.bf16.gmra.mxu0 %v1975
      %v2233 = vpop.f32.mrf.mxu0
      %v2234 = vadd.f32 %v2145, %v2233
      %v2235 = vpop.f32.mrf.mxu0
      %v2236 = vadd.f32 %v2147, %v2235
      %2237 = vmatmul.bf16.gmra.mxu0 %v1978
      %v2238 = vpop.f32.mrf.mxu0
      %v2239 = vadd.f32 %v2150, %v2238
      %v2240 = vpop.f32.mrf.mxu0
      %v2241 = vadd.f32 %v2152, %v2240
      %2242 = vmatmul.bf16.gmra.mxu0 %v1981
      %v2243 = vpop.f32.mrf.mxu0
      %v2244 = vadd.f32 %v2155, %v2243
      %v2245 = vpop.f32.mrf.mxu0
      %v2246 = vadd.f32 %v2157, %v2245
      %2247 = vmatmul.bf16.gmra.mxu0 %v1984
      %v2248 = vpop.f32.mrf.mxu0
      %v2249 = vadd.f32 %v2160, %v2248
      %v2250 = vpop.f32.mrf.mxu0
      %v2251 = vadd.f32 %v2162, %v2250
      %2252 = vdwg.mxu0
      %v2253 = vlaneseq
      %v2254 = vshrl.u32 %v2253, 7
      %v2255 = vadd.s32 %v2254, 8
      %v2256 = vand.u32 %v2254, 1
      %v2257 = vand.u32 %v2255, 1
      %vm2258 = vcmp.eq.s32.totalorder %v2256, 0
      %vm2259 = vcmp.eq.s32.totalorder %v2257, 0
      %vm2260 = vmand 1, %vm2258
      %vm2261 = vmand 1, %vm2259
      %vm2262 = vmand 0, %vm2258
      %vm2263 = vmand 0, %vm2259
      %v2264 = vsel %vm2260, 1, 0
      %v2265 = vsel %vm2261, 1, 0
      %v2266 = vsel %vm2262, 1, 0
      %v2267 = vsel %vm2263, 1, 0
      %v2268 = vcvt.s32.f32 %v2264
      %v2269 = vcvt.s32.f32 %v2265
      %v2270 = vcvt.s32.f32 %v2266
      %v2271 = vcvt.s32.f32 %v2267
      %v2272 = vmul.f32 %v2174, %v2268
      %v2273 = vmul.f32 %v2176, %v2269
      %v2274 = vmul.f32 %v2179, %v2270
      %v2275 = vmul.f32 %v2181, %v2271
      %v2276 = vmul.f32 %v2184, %v2268
      %v2277 = vmul.f32 %v2186, %v2269
      %v2278 = vmul.f32 %v2189, %v2270
      %v2279 = vmul.f32 %v2191, %v2271
      %v2280 = vmul.f32 %v2194, %v2268
      %v2281 = vmul.f32 %v2196, %v2269
      %v2282 = vmul.f32 %v2199, %v2270
      %v2283 = vmul.f32 %v2201, %v2271
      %v2284 = vmul.f32 %v2204, %v2268
      %v2285 = vmul.f32 %v2206, %v2269
      %v2286 = vmul.f32 %v2209, %v2270
      %v2287 = vmul.f32 %v2211, %v2271
      %v2288 = vmul.f32 %v2214, %v2268
      %v2289 = vmul.f32 %v2216, %v2269
      %v2290 = vmul.f32 %v2219, %v2270
      %v2291 = vmul.f32 %v2221, %v2271
      %v2292 = vmul.f32 %v2224, %v2268
      %v2293 = vmul.f32 %v2226, %v2269
      %v2294 = vmul.f32 %v2229, %v2270
      %v2295 = vmul.f32 %v2231, %v2271
      %v2296 = vmul.f32 %v2234, %v2268
      %v2297 = vmul.f32 %v2236, %v2269
      %v2298 = vmul.f32 %v2239, %v2270
      %v2299 = vmul.f32 %v2241, %v2271
      %v2300 = vmul.f32 %v2244, %v2268
      %v2301 = vmul.f32 %v2246, %v2269
      %v2302 = vmul.f32 %v2249, %v2270
      %v2303 = vmul.f32 %v2251, %v2271
      %v2304 = vsel %vm1584, %v2272, 0.0
      %v2305 = vsel %vm1584, %v2273, 0.0
      %v2306 = vadd.f32 %v2304, %v2305
      %v2307 = vsel %vm1584, %v2274, 0.0
      %v2308 = vadd.f32 %v2306, %v2307
      %v2309 = vsel %vm1584, %v2275, 0.0
      %v2310 = vadd.f32 %v2308, %v2309
      %v2311 = vsel %vm1584, %v2276, 0.0
      %v2312 = vadd.f32 %v2310, %v2311
      %v2313 = vsel %vm1584, %v2277, 0.0
      %v2314 = vadd.f32 %v2312, %v2313
      %v2315 = vsel %vm1584, %v2278, 0.0
      %v2316 = vadd.f32 %v2314, %v2315
      %v2317 = vsel %vm1584, %v2279, 0.0
      %v2318 = vadd.f32 %v2316, %v2317
      %v2319 = vsel %vm1584, %v2280, 0.0
      %v2320 = vadd.f32 %v2318, %v2319
      %v2321 = vsel %vm1584, %v2281, 0.0
      %v2322 = vadd.f32 %v2320, %v2321
      %v2323 = vsel %vm1584, %v2282, 0.0
      %v2324 = vadd.f32 %v2322, %v2323
      %v2325 = vsel %vm1584, %v2283, 0.0
      %v2326 = vadd.f32 %v2324, %v2325
      %v2327 = vsel %vm1584, %v2284, 0.0
      %v2328 = vadd.f32 %v2326, %v2327
      %v2329 = vsel %vm1584, %v2285, 0.0
      %v2330 = vadd.f32 %v2328, %v2329
      %v2331 = vsel %vm1584, %v2286, 0.0
      %v2332 = vadd.f32 %v2330, %v2331
      %v2333 = vsel %vm1584, %v2287, 0.0
      %v2334 = vadd.f32 %v2332, %v2333
      %v2335 = vsel %vm1584, %v2288, 0.0
      %v2336 = vadd.f32 %v2334, %v2335
      %v2337 = vsel %vm1584, %v2289, 0.0
      %v2338 = vadd.f32 %v2336, %v2337
      %v2339 = vsel %vm1584, %v2290, 0.0
      %v2340 = vadd.f32 %v2338, %v2339
      %v2341 = vsel %vm1584, %v2291, 0.0
      %v2342 = vadd.f32 %v2340, %v2341
      %v2343 = vsel %vm1584, %v2292, 0.0
      %v2344 = vadd.f32 %v2342, %v2343
      %v2345 = vsel %vm1584, %v2293, 0.0
      %v2346 = vadd.f32 %v2344, %v2345
      %v2347 = vsel %vm1584, %v2294, 0.0
      %v2348 = vadd.f32 %v2346, %v2347
      %v2349 = vsel %vm1584, %v2295, 0.0
      %v2350 = vadd.f32 %v2348, %v2349
      %v2351 = vsel %vm1584, %v2296, 0.0
      %v2352 = vadd.f32 %v2350, %v2351
      %v2353 = vsel %vm1584, %v2297, 0.0
      %v2354 = vadd.f32 %v2352, %v2353
      %v2355 = vsel %vm1584, %v2298, 0.0
      %v2356 = vadd.f32 %v2354, %v2355
      %v2357 = vsel %vm1584, %v2299, 0.0
      %v2358 = vadd.f32 %v2356, %v2357
      %v2359 = vsel %vm1584, %v2300, 0.0
      %v2360 = vadd.f32 %v2358, %v2359
      %v2361 = vsel %vm1584, %v2301, 0.0
      %v2362 = vadd.f32 %v2360, %v2361
      %v2363 = vsel %vm1584, %v2302, 0.0
      %v2364 = vadd.f32 %v2362, %v2363
      %v2365 = vsel %vm1584, %v2303, 0.0
      %v2366 = vadd.f32 %v2364, %v2365
      %v2367 = vrot.slane %v2366, 4
      %v2368 = vadd.f32 %v2366, %v2367
      %v2369 = vrot.slane %v2368, 2
      %v2370 = vadd.f32 %v2368, %v2369
      %v2371 = vrot.slane %v2370, 1
      %v2372 = vadd.f32 %v2370, %v2371
      %vm2373 = vcmask 516096
      %2374 = vst.msk [vmem:[%s265] sm:$0x1] %vm2373, %v2372
      %v2375 = vmul.f32 %v2272, %v2272
      %v2376 = vmul.f32 %v2273, %v2273
      %v2377 = vmul.f32 %v2274, %v2274
      %v2378 = vmul.f32 %v2275, %v2275
      %v2379 = vmul.f32 %v2276, %v2276
      %v2380 = vmul.f32 %v2277, %v2277
      %v2381 = vmul.f32 %v2278, %v2278
      %v2382 = vmul.f32 %v2279, %v2279
      %v2383 = vmul.f32 %v2280, %v2280
      %v2384 = vmul.f32 %v2281, %v2281
      %v2385 = vmul.f32 %v2282, %v2282
      %v2386 = vmul.f32 %v2283, %v2283
      %v2387 = vmul.f32 %v2284, %v2284
      %v2388 = vmul.f32 %v2285, %v2285
      %v2389 = vmul.f32 %v2286, %v2286
      %v2390 = vmul.f32 %v2287, %v2287
      %v2391 = vmul.f32 %v2288, %v2288
      %v2392 = vmul.f32 %v2289, %v2289
      %v2393 = vmul.f32 %v2290, %v2290
      %v2394 = vmul.f32 %v2291, %v2291
      %v2395 = vmul.f32 %v2292, %v2292
      %v2396 = vmul.f32 %v2293, %v2293
      %v2397 = vmul.f32 %v2294, %v2294
      %v2398 = vmul.f32 %v2295, %v2295
      %v2399 = vmul.f32 %v2296, %v2296
      %v2400 = vmul.f32 %v2297, %v2297
      %v2401 = vmul.f32 %v2298, %v2298
      %v2402 = vmul.f32 %v2299, %v2299
      %v2403 = vmul.f32 %v2300, %v2300
      %v2404 = vmul.f32 %v2301, %v2301
      %v2405 = vmul.f32 %v2302, %v2302
      %v2406 = vmul.f32 %v2303, %v2303
      %v2407 = vsel %vm1584, %v2375, 0.0
      %v2408 = vsel %vm1584, %v2376, 0.0
      %v2409 = vadd.f32 %v2407, %v2408
      %v2410 = vsel %vm1584, %v2377, 0.0
      %v2411 = vadd.f32 %v2409, %v2410
      %v2412 = vsel %vm1584, %v2378, 0.0
      %v2413 = vadd.f32 %v2411, %v2412
      %v2414 = vsel %vm1584, %v2379, 0.0
      %v2415 = vadd.f32 %v2413, %v2414
      %v2416 = vsel %vm1584, %v2380, 0.0
      %v2417 = vadd.f32 %v2415, %v2416
      %v2418 = vsel %vm1584, %v2381, 0.0
      %v2419 = vadd.f32 %v2417, %v2418
      %v2420 = vsel %vm1584, %v2382, 0.0
      %v2421 = vadd.f32 %v2419, %v2420
      %v2422 = vsel %vm1584, %v2383, 0.0
      %v2423 = vadd.f32 %v2421, %v2422
      %v2424 = vsel %vm1584, %v2384, 0.0
      %v2425 = vadd.f32 %v2423, %v2424
      %v2426 = vsel %vm1584, %v2385, 0.0
      %v2427 = vadd.f32 %v2425, %v2426
      %v2428 = vsel %vm1584, %v2386, 0.0
      %v2429 = vadd.f32 %v2427, %v2428
      %v2430 = vsel %vm1584, %v2387, 0.0
      %v2431 = vadd.f32 %v2429, %v2430
      %v2432 = vsel %vm1584, %v2388, 0.0
      %v2433 = vadd.f32 %v2431, %v2432
      %v2434 = vsel %vm1584, %v2389, 0.0
      %v2435 = vadd.f32 %v2433, %v2434
      %v2436 = vsel %vm1584, %v2390, 0.0
      %v2437 = vadd.f32 %v2435, %v2436
      %v2438 = vsel %vm1584, %v2391, 0.0
      %v2439 = vadd.f32 %v2437, %v2438
      %v2440 = vsel %vm1584, %v2392, 0.0
      %v2441 = vadd.f32 %v2439, %v2440
      %v2442 = vsel %vm1584, %v2393, 0.0
      %v2443 = vadd.f32 %v2441, %v2442
      %v2444 = vsel %vm1584, %v2394, 0.0
      %v2445 = vadd.f32 %v2443, %v2444
      %v2446 = vsel %vm1584, %v2395, 0.0
      %v2447 = vadd.f32 %v2445, %v2446
      %v2448 = vsel %vm1584, %v2396, 0.0
      %v2449 = vadd.f32 %v2447, %v2448
      %v2450 = vsel %vm1584, %v2397, 0.0
      %v2451 = vadd.f32 %v2449, %v2450
      %v2452 = vsel %vm1584, %v2398, 0.0
      %v2453 = vadd.f32 %v2451, %v2452
      %v2454 = vsel %vm1584, %v2399, 0.0
      %v2455 = vadd.f32 %v2453, %v2454
      %v2456 = vsel %vm1584, %v2400, 0.0
      %v2457 = vadd.f32 %v2455, %v2456
      %v2458 = vsel %vm1584, %v2401, 0.0
      %v2459 = vadd.f32 %v2457, %v2458
      %v2460 = vsel %vm1584, %v2402, 0.0
      %v2461 = vadd.f32 %v2459, %v2460
      %v2462 = vsel %vm1584, %v2403, 0.0
      %v2463 = vadd.f32 %v2461, %v2462
      %v2464 = vsel %vm1584, %v2404, 0.0
      %v2465 = vadd.f32 %v2463, %v2464
      %v2466 = vsel %vm1584, %v2405, 0.0
      %v2467 = vadd.f32 %v2465, %v2466
      %v2468 = vsel %vm1584, %v2406, 0.0
      %v2469 = vadd.f32 %v2467, %v2468
      %v2470 = vrot.slane %v2469, 4
      %v2471 = vadd.f32 %v2469, %v2470
      %v2472 = vrot.slane %v2471, 2
      %v2473 = vadd.f32 %v2471, %v2472
      %v2474 = vrot.slane %v2473, 1
      %v2475 = vadd.f32 %v2473, %v2474
      %2476 = vst.msk [vmem:[%s268] sm:$0x1] %vm2373, %v2475
      %2477 = vst.msk [vmem:[%s262] sm:$0xff] %vm1584, %v2174
      %2478 = vst.msk [vmem:[%s262 + $0x8] sm:$0xff] %vm1584, %v2176
      %2479 = vst.msk [vmem:[%s262 + $0x10] sm:$0xff] %vm1584, %v2179
      %2480 = vst.msk [vmem:[%s262 + $0x18] sm:$0xff] %vm1584, %v2181
      %2481 = vst.msk [vmem:[%s262 + $0x20] sm:$0xff] %vm1584, %v2184
      %2482 = vst.msk [vmem:[%s262 + $0x28] sm:$0xff] %vm1584, %v2186
      %2483 = vst.msk [vmem:[%s262 + $0x30] sm:$0xff] %vm1584, %v2189
      %2484 = vst.msk [vmem:[%s262 + $0x38] sm:$0xff] %vm1584, %v2191
      %2485 = vst.msk [vmem:[%s262 + $0x40] sm:$0xff] %vm1584, %v2194
      %2486 = vst.msk [vmem:[%s262 + $0x48] sm:$0xff] %vm1584, %v2196
      %2487 = vst.msk [vmem:[%s262 + $0x50] sm:$0xff] %vm1584, %v2199
      %2488 = vst.msk [vmem:[%s262 + $0x58] sm:$0xff] %vm1584, %v2201
      %2489 = vst.msk [vmem:[%s262 + $0x60] sm:$0xff] %vm1584, %v2204
      %2490 = vst.msk [vmem:[%s262 + $0x68] sm:$0xff] %vm1584, %v2206
      %2491 = vst.msk [vmem:[%s262 + $0x70] sm:$0xff] %vm1584, %v2209
      %2492 = vst.msk [vmem:[%s262 + $0x78] sm:$0xff] %vm1584, %v2211
      %2493 = vst.msk [vmem:[%s262 + $0x80] sm:$0xff] %vm1584, %v2214
      %2494 = vst.msk [vmem:[%s262 + $0x88] sm:$0xff] %vm1584, %v2216
      %2495 = vst.msk [vmem:[%s262 + $0x90] sm:$0xff] %vm1584, %v2219
      %2496 = vst.msk [vmem:[%s262 + $0x98] sm:$0xff] %vm1584, %v2221
      %2497 = vst.msk [vmem:[%s262 + $0xa0] sm:$0xff] %vm1584, %v2224
      %2498 = vst.msk [vmem:[%s262 + $0xa8] sm:$0xff] %vm1584, %v2226
      %2499 = vst.msk [vmem:[%s262 + $0xb0] sm:$0xff] %vm1584, %v2229
      %2500 = vst.msk [vmem:[%s262 + $0xb8] sm:$0xff] %vm1584, %v2231
      %2501 = vst.msk [vmem:[%s262 + $0xc0] sm:$0xff] %vm1584, %v2234
      %2502 = vst.msk [vmem:[%s262 + $0xc8] sm:$0xff] %vm1584, %v2236
      %2503 = vst.msk [vmem:[%s262 + $0xd0] sm:$0xff] %vm1584, %v2239
      %2504 = vst.msk [vmem:[%s262 + $0xd8] sm:$0xff] %vm1584, %v2241
      %2505 = vst.msk [vmem:[%s262 + $0xe0] sm:$0xff] %vm1584, %v2244
      %2506 = vst.msk [vmem:[%s262 + $0xe8] sm:$0xff] %vm1584, %v2246
      %2507 = vst.msk [vmem:[%s262 + $0xf0] sm:$0xff] %vm1584, %v2249
      %2508 = vst.msk [vmem:[%s262 + $0xf8] sm:$0xff] %vm1584, %v2251
      %p2509 = scmp.lt.s32.totalorder %s18, 1
      %s2510 = scalar_select %p2509, %s18, 1
      %s2511 = smul.addr %s2510, 32
      %s2512 = smul.addr %s2511, 8
      %s2513 = scalar_lea.vmem %s4, %s2512
      %p2514 = scmp.lt.s32.totalorder %s18, 1
      %s2515 = scalar_select %p2514, %s18, 1
      %s2516 = scalar_lea.vmem %s5, %s2515
      %p2517 = scmp.lt.s32.totalorder %s18, 1
      %s2518 = scalar_select %p2517, %s18, 1
      %s2519 = scalar_lea.vmem %s6, %s2518
      // Predicated region
      $region37: #{hardnet_conv_crop_forward.9} parent=35 // pred_check
        %p2520 = pneg %p125
      $region38: #{hardnet_conv_crop_forward.9} parent=35 // pred_check_branch
        %2522 = sbr.rel (%p2520) target = $region40
      $region39: #{hardnet_conv_crop_forward.9} parent=35 // pred_region
        _
      $region40: #{hardnet_conv_crop_forward.9} parent=35 // pred_fallthru
        _
      // Predicated region
      $region41: #{hardnet_conv_crop_forward.9} parent=35 // pred_check
        %p2523 = pneg %p151
      $region42: #{hardnet_conv_crop_forward.9} parent=35 // pred_check_branch
        %2525 = sbr.rel (%p2523) target = $region44
      $region43: #{hardnet_conv_crop_forward.9} parent=35 // pred_region
        _
      $region44: #{hardnet_conv_crop_forward.9} parent=35 // pred_fallthru
        _
      // Predicated region
      $region45: #{hardnet_conv_crop_forward.9} parent=35 // pred_check
        %p2526 = pneg %p177
      $region46: #{hardnet_conv_crop_forward.9} parent=35 // pred_check_branch
        %2528 = sbr.rel (%p2526) target = $region48
      $region47: #{hardnet_conv_crop_forward.9} parent=35 // pred_region
        _
      $region48: #{hardnet_conv_crop_forward.9} parent=35 // pred_fallthru
        _
    $region36: #{hardnet_conv_crop_forward.9} parent=5 // pred_fallthru
      _
    %p2529 = scmp.le.s32.totalorder 2, %s13
    // Predicated region
    $region49: #{hardnet_conv_crop_forward.9} parent=5 // pred_check
      %p2530 = pneg %p2529
    $region50: #{hardnet_conv_crop_forward.9} parent=5 // pred_check_branch
      %2532 = sbr.rel (%p2530) target = $region52
    $region51: #{hardnet_conv_crop_forward.9} parent=5 // pred_region
      %s2533 = ssub.s32 %s13, 2
      // Predicated region
      $region53: #{hardnet_conv_crop_forward.9} parent=51 // pred_check
        %p2534 = pneg %p131
      $region54: #{hardnet_conv_crop_forward.9} parent=51 // pred_check_branch
        %2536 = sbr.rel (%p2534) target = $region56
      $region55: #{hardnet_conv_crop_forward.9} parent=51 // pred_region
        %p2537 = scmp.lt.s32.totalorder %s19, 1
        %s2538 = scalar_select %p2537, %s19, 1
        %s2539 = smul.addr %s2538, 32
        %s2540 = smul.addr %s2539, 8
        %s2541 = scalar_lea.vmem %s4, %s2540
      $region56: #{hardnet_conv_crop_forward.9} parent=51 // pred_fallthru
        _
      // Predicated region
      $region57: #{hardnet_conv_crop_forward.9} parent=51 // pred_check
        %p2542 = pneg %p157
      $region58: #{hardnet_conv_crop_forward.9} parent=51 // pred_check_branch
        %2544 = sbr.rel (%p2542) target = $region60
      $region59: #{hardnet_conv_crop_forward.9} parent=51 // pred_region
        %p2545 = scmp.lt.s32.totalorder %s19, 1
        %s2546 = scalar_select %p2545, %s19, 1
        %s2547 = scalar_lea.vmem %s5, %s2546
      $region60: #{hardnet_conv_crop_forward.9} parent=51 // pred_fallthru
        _
      // Predicated region
      $region61: #{hardnet_conv_crop_forward.9} parent=51 // pred_check
        %p2548 = pneg %p183
      $region62: #{hardnet_conv_crop_forward.9} parent=51 // pred_check_branch
        %2550 = sbr.rel (%p2548) target = $region64
      $region63: #{hardnet_conv_crop_forward.9} parent=51 // pred_region
        %p2551 = scmp.lt.s32.totalorder %s19, 1
        %s2552 = scalar_select %p2551, %s19, 1
        %s2553 = scalar_lea.vmem %s6, %s2552
      $region64: #{hardnet_conv_crop_forward.9} parent=51 // pred_fallthru
        _
    $region52: #{hardnet_conv_crop_forward.9} parent=5 // pred_fallthru
      _
  $region6: #{hardnet_conv_crop_forward.9} parent=0 // loop_footer
    %s17 = sadd.s32 1, %s13
  $region7: #{hardnet_conv_crop_forward.9} parent=0 // loop_footer_branch
    %12 = sbr.rel target = $region3
  $region8: #{hardnet_conv_crop_forward.9} parent=0 // loop_exit
    _

// kernel: hardnet_conv_crop_forward.10
$region0: #{hardnet_conv_crop_forward.10}
  #allocation0 [shape = 'u32[]', space=smem, size = 0x4, offset = 0x4, fixed_abs, tag = 'smem constant byte address 0x4 - core index']
  #allocation1 [shape = 'u32[72,128]{1,0:T(1,128)}', space=vmem, size = 0x9000, scoped, tag = 'internal scratch']
  #allocation2 [shape = 'f32[10,10,64]{2,1,0:T(8,128)}', space=vmem, size = 0x14000, scoped, tag = 'scratch operand']
  %s0 = inlined_call_operand.vmem [shape: f32[2,8,8,64], index: 0, kind: input, shape index: {}]
  %s1 = inlined_call_operand.vmem [shape: f32[1,64], index: 1, kind: input, shape index: {}]
  %s2 = inlined_call_operand.vmem [shape: f32[1,64], index: 2, kind: input, shape index: {}]
  %s3 = inlined_call_operand.vmem [shape: bf16[576,64], index: 3, kind: input, shape index: {}]
  %s4 = inlined_call_operand.vmem [shape: f32[2,8,8,64], index: 4, kind: output, shape index: {0}]
  %s5 = inlined_call_operand.vmem [shape: f32[2,1,64], index: 5, kind: output, shape index: {1}]
  %s6 = inlined_call_operand.vmem [shape: f32[2,1,64], index: 6, kind: output, shape index: {2}]
  %7 = xla_tuple %s4, %s5, %s6
  %s8 = sld [smem:[#allocation0]]
  $region65: #{hardnet_conv_crop_forward.10} parent=0
    _
  %s10 = ssub.s32 1, %s8
  %s11 = scalar_select 0, %s10, %s8
  loop: start=0, step=1, limit=4
  $region2: #{hardnet_conv_crop_forward.10} parent=0 // loop_pre_header
    _
  $region3: #{hardnet_conv_crop_forward.10} parent=0 // loop_header
    %s13 = sphi 0, %s17
    %p14 = scmp.ge.s32.totalorder %s13, 4
    %s23 = sphi 0, %s25
    %s26 = sphi 0, %s23
    %s27 = sphi 0, %s26
    %s43 = sphi 0, %s27
    %s47 = sphi 0, %s47
    %s49 = sphi 0, %s47
    %s50 = sphi 0, %s49
    %s64 = sphi 0, %s50
    %s68 = sphi 0, %s68
    %s70 = sphi 0, %s68
    %s71 = sphi 0, %s70
    %s85 = sphi 0, %s71
    %s89 = sphi 0, %s89
    %s91 = sphi 0, %s89
    %s92 = sphi 0, %s91
    %s106 = sphi 0, %s92
    %s112 = sphi 0, %s114
    %s115 = sphi 0, %s112
    %s116 = sphi 0, %s115
    %s132 = sphi 0, %s116
    %s138 = sphi 0, %s140
    %s141 = sphi 0, %s138
    %s142 = sphi 0, %s141
    %s158 = sphi 0, %s142
    %s164 = sphi 0, %s166
    %s167 = sphi 0, %s164
    %s168 = sphi 0, %s167
    %s184 = sphi 0, %s168
  $region4: #{hardnet_conv_crop_forward.10} parent=0 // loop_header_branch
    %16 = sbr.rel (%p14) target = $region8
  $region5: #{hardnet_conv_crop_forward.10} parent=0 // loop_body
    %s18 = ssub.s32 %s13, 1
    %s19 = ssub.s32 %s13, 2
    %s20 = sadd.s32 %s13, 1
    %s21 = ssub.s32 %s13, %s20
    %p22 = scmp.eq.s32.totalorder %s21, 0
    %s24 = sadd.s32 %s23, 1
    %s25 = scalar_select %p22, %s23, %s24
    %p28 = pneg %p22
    %p29 = scmp.eq.s32.totalorder %s13, 1
    %p30 = por %p28, %p29
    %p31 = scmp.ne.s32.totalorder %s23, %s26
    %p32 = scmp.eq.s32.totalorder %s13, 0
    %p33 = por %p31, %p32
    %p34 = scmp.ne.s32.totalorder %s23, %s26
    %p35 = scmp.eq.s32.totalorder %s18, 1
    %p36 = por %p34, %p35
    %p37 = scmp.ne.s32.totalorder %s26, %s27
    %p38 = scmp.eq.s32.totalorder %s18, 0
    %p39 = por %p37, %p38
    %p40 = scmp.ne.s32.totalorder %s26, %s27
    %p41 = scmp.eq.s32.totalorder %s19, 1
    %p42 = por %p40, %p41
    %p44 = scmp.ne.s32.totalorder %s27, %s43
    %p45 = scmp.eq.s32.totalorder %s19, 0
    %p46 = por %p44, %p45
    %s48 = sadd.s32 %s47, 1
    %p51 = scmp.eq.s32.totalorder %s13, 1
    %p52 = scmp.ne.s32.totalorder %s47, %s49
    %p53 = scmp.eq.s32.totalorder %s13, 0
    %p54 = por %p52, %p53
    %p55 = scmp.ne.s32.totalorder %s47, %s49
    %p56 = scmp.eq.s32.totalorder %s18, 1
    %p57 = por %p55, %p56
    %p58 = scmp.ne.s32.totalorder %s49, %s50
    %p59 = scmp.eq.s32.totalorder %s18, 0
    %p60 = por %p58, %p59
    %p61 = scmp.ne.s32.totalorder %s49, %s50
    %p62 = scmp.eq.s32.totalorder %s19, 1
    %p63 = por %p61, %p62
    %p65 = scmp.ne.s32.totalorder %s50, %s64
    %p66 = scmp.eq.s32.totalorder %s19, 0
    %p67 = por %p65, %p66
    %s69 = sadd.s32 %s68, 1
    %p72 = scmp.eq.s32.totalorder %s13, 1
    %p73 = scmp.ne.s32.totalorder %s68, %s70
    %p74 = scmp.eq.s32.totalorder %s13, 0
    %p75 = por %p73, %p74
    %p76 = scmp.ne.s32.totalorder %s68, %s70
    %p77 = scmp.eq.s32.totalorder %s18, 1
    %p78 = por %p76, %p77
    %p79 = scmp.ne.s32.totalorder %s70, %s71
    %p80 = scmp.eq.s32.totalorder %s18, 0
    %p81 = por %p79, %p80
    %p82 = scmp.ne.s32.totalorder %s70, %s71
    %p83 = scmp.eq.s32.totalorder %s19, 1
    %p84 = por %p82, %p83
    %p86 = scmp.ne.s32.totalorder %s71, %s85
    %p87 = scmp.eq.s32.totalorder %s19, 0
    %p88 = por %p86, %p87
    %s90 = sadd.s32 %s89, 1
    %p93 = scmp.eq.s32.totalorder %s13, 1
    %p94 = scmp.ne.s32.totalorder %s89, %s91
    %p95 = scmp.eq.s32.totalorder %s13, 0
    %p96 = por %p94, %p95
    %p97 = scmp.ne.s32.totalorder %s89, %s91
    %p98 = scmp.eq.s32.totalorder %s18, 1
    %p99 = por %p97, %p98
    %p100 = scmp.ne.s32.totalorder %s91, %s92
    %p101 = scmp.eq.s32.totalorder %s18, 0
    %p102 = por %p100, %p101
    %p103 = scmp.ne.s32.totalorder %s91, %s92
    %p104 = scmp.eq.s32.totalorder %s19, 1
    %p105 = por %p103, %p104
    %p107 = scmp.ne.s32.totalorder %s92, %s106
    %p108 = scmp.eq.s32.totalorder %s19, 0
    %p109 = por %p107, %p108
    %s110 = ssub.s32 %s13, %s20
    %p111 = scmp.eq.s32.totalorder %s110, 0
    %s113 = sadd.s32 %s112, 1
    %s114 = scalar_select %p111, %s112, %s113
    %p117 = pneg %p111
    %p118 = scmp.eq.s32.totalorder %s13, 1
    %p119 = por %p117, %p118
    %p120 = scmp.ne.s32.totalorder %s112, %s115
    %p121 = scmp.eq.s32.totalorder %s13, 0
    %p122 = por %p120, %p121
    %p123 = scmp.ne.s32.totalorder %s112, %s115
    %p124 = scmp.eq.s32.totalorder %s18, 1
    %p125 = por %p123, %p124
    %p126 = scmp.ne.s32.totalorder %s115, %s116
    %p127 = scmp.eq.s32.totalorder %s18, 0
    %p128 = por %p126, %p127
    %p129 = scmp.ne.s32.totalorder %s115, %s116
    %p130 = scmp.eq.s32.totalorder %s19, 1
    %p131 = por %p129, %p130
    %p133 = scmp.ne.s32.totalorder %s116, %s132
    %p134 = scmp.eq.s32.totalorder %s19, 0
    %p135 = por %p133, %p134
    %s136 = ssub.s32 %s13, %s20
    %p137 = scmp.eq.s32.totalorder %s136, 0
    %s139 = sadd.s32 %s138, 1
    %s140 = scalar_select %p137, %s138, %s139
    %p143 = pneg %p137
    %p144 = scmp.eq.s32.totalorder %s13, 1
    %p145 = por %p143, %p144
    %p146 = scmp.ne.s32.totalorder %s138, %s141
    %p147 = scmp.eq.s32.totalorder %s13, 0
    %p148 = por %p146, %p147
    %p149 = scmp.ne.s32.totalorder %s138, %s141
    %p150 = scmp.eq.s32.totalorder %s18, 1
    %p151 = por %p149, %p150
    %p152 = scmp.ne.s32.totalorder %s141, %s142
    %p153 = scmp.eq.s32.totalorder %s18, 0
    %p154 = por %p152, %p153
    %p155 = scmp.ne.s32.totalorder %s141, %s142
    %p156 = scmp.eq.s32.totalorder %s19, 1
    %p157 = por %p155, %p156
    %p159 = scmp.ne.s32.totalorder %s142, %s158
    %p160 = scmp.eq.s32.totalorder %s19, 0
    %p161 = por %p159, %p160
    %s162 = ssub.s32 %s13, %s20
    %p163 = scmp.eq.s32.totalorder %s162, 0
    %s165 = sadd.s32 %s164, 1
    %s166 = scalar_select %p163, %s164, %s165
    %p169 = pneg %p163
    %p170 = scmp.eq.s32.totalorder %s13, 1
    %p171 = por %p169, %p170
    %p172 = scmp.ne.s32.totalorder %s164, %s167
    %p173 = scmp.eq.s32.totalorder %s13, 0
    %p174 = por %p172, %p173
    %p175 = scmp.ne.s32.totalorder %s164, %s167
    %p176 = scmp.eq.s32.totalorder %s18, 1
    %p177 = por %p175, %p176
    %p178 = scmp.ne.s32.totalorder %s167, %s168
    %p179 = scmp.eq.s32.totalorder %s18, 0
    %p180 = por %p178, %p179
    %p181 = scmp.ne.s32.totalorder %s167, %s168
    %p182 = scmp.eq.s32.totalorder %s19, 1
    %p183 = por %p181, %p182
    %p185 = scmp.ne.s32.totalorder %s168, %s184
    %p186 = scmp.eq.s32.totalorder %s19, 0
    %p187 = por %p185, %p186
    %p188 = scmp.le.s32.totalorder 1, %s13
    %p189 = scmp.lt.s32.totalorder %s13, 3
    %p190 = pnand %p188, %p189
    %p191 = pneg %p190
    // Predicated region
    $region9: #{hardnet_conv_crop_forward.10} parent=5 // pred_check
      _
    $region10: #{hardnet_conv_crop_forward.10} parent=5 // pred_check_branch
      %193 = sbr.rel (%p190) target = $region12
    $region11: #{hardnet_conv_crop_forward.10} parent=5 // pred_region
      %s194 = ssub.s32 %s13, 1
      // Predicated region
      $region13: #{hardnet_conv_crop_forward.10} parent=11 // pred_check
        %p195 = pneg %p60
      $region14: #{hardnet_conv_crop_forward.10} parent=11 // pred_check_branch
        %197 = sbr.rel (%p195) target = $region16
      $region15: #{hardnet_conv_crop_forward.10} parent=11 // pred_region
        _
      $region16: #{hardnet_conv_crop_forward.10} parent=11 // pred_fallthru
        _
      // Predicated region
      $region17: #{hardnet_conv_crop_forward.10} parent=11 // pred_check
        %p198 = pneg %p81
      $region18: #{hardnet_conv_crop_forward.10} parent=11 // pred_check_branch
        %200 = sbr.rel (%p198) target = $region20
      $region19: #{hardnet_conv_crop_forward.10} parent=11 // pred_region
        _
      $region20: #{hardnet_conv_crop_forward.10} parent=11 // pred_fallthru
        _
      // Predicated region
      $region21: #{hardnet_conv_crop_forward.10} parent=11 // pred_check
        %p201 = pneg %p102
      $region22: #{hardnet_conv_crop_forward.10} parent=11 // pred_check_branch
        %203 = sbr.rel (%p201) target = $region24
      $region23: #{hardnet_conv_crop_forward.10} parent=11 // pred_region
        _
      $region24: #{hardnet_conv_crop_forward.10} parent=11 // pred_fallthru
        _
    $region12: #{hardnet_conv_crop_forward.10} parent=5 // pred_fallthru
      _
    %p204 = scmp.lt.s32.totalorder %s13, 2
    // Predicated region
    $region25: #{hardnet_conv_crop_forward.10} parent=5 // pred_check
      %p205 = pneg %p204
    $region26: #{hardnet_conv_crop_forward.10} parent=5 // pred_check_branch
      %207 = sbr.rel (%p205) target = $region28
    $region27: #{hardnet_conv_crop_forward.10} parent=5 // pred_region
      // Predicated region
      $region29: #{hardnet_conv_crop_forward.10} parent=27 // pred_check
        %p208 = pneg %p33
      $region30: #{hardnet_conv_crop_forward.10} parent=27 // pred_check_branch
        %210 = sbr.rel (%p208) target = $region32
      $region31: #{hardnet_conv_crop_forward.10} parent=27 // pred_region
        %p211 = scmp.lt.s32.totalorder %s13, 1
        %s212 = scalar_select %p211, %s13, 1
        %s213 = smul.addr %s212, 8
        %s214 = smul.addr %s213, 8
        %s215 = scalar_lea.vmem %s0, %s214
      $region32: #{hardnet_conv_crop_forward.10} parent=27 // pred_fallthru
        _
    $region28: #{hardnet_conv_crop_forward.10} parent=5 // pred_fallthru
      _
    %p216 = scmp.le.s32.totalorder 1, %s13
    %p217 = scmp.lt.s32.totalorder %s13, 3
    %p218 = pnand %p216, %p217
    %p219 = pneg %p218
    // Predicated region
    $region33: #{hardnet_conv_crop_forward.10} parent=5 // pred_check
      _
    $region34: #{hardnet_conv_crop_forward.10} parent=5 // pred_check_branch
      %221 = sbr.rel (%p218) target = $region36
    $region35: #{hardnet_conv_crop_forward.10} parent=5 // pred_region
      %s222 = ssub.s32 %s13, 1
      %p223 = scmp.lt.s32.totalorder %s18, 1
      %s224 = scalar_select %p223, %s18, 1
      %s225 = smul.addr %s224, 8
      %s226 = smul.addr %s225, 8
      %s227 = scalar_lea.vmem %s0, %s226
      %p228 = pneg %p39
      %p229 = pneg %p36
      %p230 = pneg %p60
      %p231 = pneg %p57
      %p232 = pneg %p81
      %p233 = pneg %p78
      %p234 = pneg %p102
      %p235 = pneg %p99
      %p236 = pneg %p128
      %p237 = pneg %p125
      %p238 = scmp.lt.s32.totalorder %s18, 1
      %s239 = scalar_select %p238, %s18, 1
      %s240 = smul.addr %s239, 8
      %s241 = smul.addr %s240, 8
      %s242 = scalar_lea.vmem %s4, %s241
      %p243 = pneg %p154
      %p244 = pneg %p151
      %p245 = scmp.lt.s32.totalorder %s18, 1
      %s246 = scalar_select %p245, %s18, 1
      %s247 = scalar_lea.vmem %s5, %s246
      %p248 = pneg %p180
      %p249 = pneg %p177
      %p250 = scmp.lt.s32.totalorder %s18, 1
      %s251 = scalar_select %p250, %s18, 1
      %s252 = scalar_lea.vmem %s6, %s251
      %p253 = scmp.lt.s32.totalorder %s18, 1
      %s254 = scalar_select %p253, %s18, 1
      %s255 = smul.addr %s254, 8
      %s256 = smul.addr %s255, 8
      %s257 = scalar_lea.vmem %s0, %s256
      %p258 = scmp.lt.s32.totalorder %s18, 1
      %s259 = scalar_select %p258, %s18, 1
      %s260 = smul.addr %s259, 8
      %s261 = smul.addr %s260, 8
      %s262 = scalar_lea.vmem %s4, %s261
      %p263 = scmp.lt.s32.totalorder %s18, 1
      %s264 = scalar_select %p263, %s18, 1
      %s265 = scalar_lea.vmem %s5, %s264
      %p266 = scmp.lt.s32.totalorder %s18, 1
      %s267 = scalar_select %p266, %s18, 1
      %s268 = scalar_lea.vmem %s6, %s267
      %v270 = vld [vmem:[%s257] sm:$0xff]
      %v271 = vld [vmem:[%s257 + $0x8] sm:$0xff]
      %v272 = vld [vmem:[%s257 + $0x10] sm:$0xff]
      %v273 = vld [vmem:[%s257 + $0x18] sm:$0xff]
      %v274 = vld [vmem:[%s257 + $0x20] sm:$0xff]
      %v275 = vld [vmem:[%s257 + $0x28] sm:$0xff]
      %v276 = vld [vmem:[%s257 + $0x30] sm:$0xff]
      %v277 = vld [vmem:[%s257 + $0x38] sm:$0xff]
      %v278 = vld [vmem:[%s1] sm:$0x1]
      %v279 = vld [vmem:[%s2] sm:$0x1]
      %v281 = vperm.slane %v278, 0
      %v283 = vsub.f32 %v270, %v281
      %v284 = vsub.f32 %v271, %v281
      %v285 = vsub.f32 %v272, %v281
      %v286 = vsub.f32 %v273, %v281
      %v287 = vsub.f32 %v274, %v281
      %v288 = vsub.f32 %v275, %v281
      %v289 = vsub.f32 %v276, %v281
      %v290 = vsub.f32 %v277, %v281
      %v292 = vperm.slane %v279, 0
      %v294 = vmul.f32 %v283, %v292
      %v295 = vmul.f32 %v284, %v292
      %v296 = vmul.f32 %v285, %v292
      %v297 = vmul.f32 %v286, %v292
      %v298 = vmul.f32 %v287, %v292
      %v299 = vmul.f32 %v288, %v292
      %v300 = vmul.f32 %v289, %v292
      %v301 = vmul.f32 %v290, %v292
      %v302 = vmax.f32 %v294, 0.0
      %v303 = vmax.f32 %v295, 0.0
      %v304 = vmax.f32 %v296, 0.0
      %v305 = vmax.f32 %v297, 0.0
      %v306 = vmax.f32 %v298, 0.0
      %v307 = vmax.f32 %v299, 0.0
      %v308 = vmax.f32 %v300, 0.0
      %v309 = vmax.f32 %v301, 0.0
      %vm310 = vcmask 523264
      %311 = vst.msk [vmem:[#allocation2] sm:$0xff] %vm310, 0.0
      %vm312 = vcmask 517120
      %313 = vst.msk [vmem:[#allocation2 + $0x8] sm:$0x3] %vm312, 0.0
      %314 = vst.msk [vmem:[#allocation2 + $0x10] sm:$0xff] %vm310, 0.0
      %315 = vst.msk [vmem:[#allocation2 + $0x18] sm:$0x3] %vm312, 0.0
      %316 = vst.msk [vmem:[#allocation2 + $0x20] sm:$0xff] %vm310, 0.0
      %317 = vst.msk [vmem:[#allocation2 + $0x28] sm:$0x3] %vm312, 0.0
      %318 = vst.msk [vmem:[#allocation2 + $0x30] sm:$0xff] %vm310, 0.0
      %319 = vst.msk [vmem:[#allocation2 + $0x38] sm:$0x3] %vm312, 0.0
      %320 = vst.msk [vmem:[#allocation2 + $0x40] sm:$0xff] %vm310, 0.0
      %321 = vst.msk [vmem:[#allocation2 + $0x48] sm:$0x3] %vm312, 0.0
      %322 = vst.msk [vmem:[#allocation2 + $0x50] sm:$0xff] %vm310, 0.0
      %323 = vst.msk [vmem:[#allocation2 + $0x58] sm:$0x3] %vm312, 0.0
      %324 = vst.msk [vmem:[#allocation2 + $0x60] sm:$0xff] %vm310, 0.0
      %325 = vst.msk [vmem:[#allocation2 + $0x68] sm:$0x3] %vm312, 0.0
      %326 = vst.msk [vmem:[#allocation2 + $0x70] sm:$0xff] %vm310, 0.0
      %327 = vst.msk [vmem:[#allocation2 + $0x78] sm:$0x3] %vm312, 0.0
      %328 = vst.msk [vmem:[#allocation2 + $0x80] sm:$0xff] %vm310, 0.0
      %329 = vst.msk [vmem:[#allocation2 + $0x88] sm:$0x3] %vm312, 0.0
      %330 = vst.msk [vmem:[#allocation2 + $0x90] sm:$0xff] %vm310, 0.0
      %331 = vst.msk [vmem:[#allocation2 + $0x98] sm:$0x3] %vm312, 0.0
      %s332 = scalar_lea.vmem [#allocation2], 16
      %333 = vst.msk [vmem:[%s332 + $0x1] sm:$0xff] %vm310, %v302
      %334 = vst.msk [vmem:[%s332 + $0x11] sm:$0xff] %vm310, %v303
      %335 = vst.msk [vmem:[%s332 + $0x21] sm:$0xff] %vm310, %v304
      %336 = vst.msk [vmem:[%s332 + $0x31] sm:$0xff] %vm310, %v305
      %337 = vst.msk [vmem:[%s332 + $0x41] sm:$0xff] %vm310, %v306
      %338 = vst.msk [vmem:[%s332 + $0x51] sm:$0xff] %vm310, %v307
      %339 = vst.msk [vmem:[%s332 + $0x61] sm:$0xff] %vm310, %v308
      %340 = vst.msk [vmem:[%s332 + $0x71] sm:$0xff] %vm310, %v309
      %v341 = vld [vmem:[#allocation2] sm:$0xff]
      %v342 = vld [vmem:[#allocation2 + $0x10] sm:$0xff]
      %v343 = vld [vmem:[#allocation2 + $0x20] sm:$0xff]
      %v344 = vld [vmem:[#allocation2 + $0x30] sm:$0xff]
      %v345 = vld [vmem:[#allocation2 + $0x40] sm:$0xff]
      %v346 = vld [vmem:[#allocation2 + $0x50] sm:$0xff]
      %v347 = vld [vmem:[#allocation2 + $0x60] sm:$0xff]
      %v348 = vld [vmem:[#allocation2 + $0x70] sm:$0xff]
      %v349 = vld [vmem:[#allocation2 + $0x1] sm:$0xff]
      %v350 = vld [vmem:[#allocation2 + $0x11] sm:$0xff]
      %v351 = vld [vmem:[#allocation2 + $0x21] sm:$0xff]
      %v352 = vld [vmem:[#allocation2 + $0x31] sm:$0xff]
      %v353 = vld [vmem:[#allocation2 + $0x41] sm:$0xff]
      %v354 = vld [vmem:[#allocation2 + $0x51] sm:$0xff]
      %v355 = vld [vmem:[#allocation2 + $0x61] sm:$0xff]
      %v356 = vld [vmem:[#allocation2 + $0x71] sm:$0xff]
      %v357 = vld [vmem:[#allocation2 + $0x2] sm:$0xff]
      %v358 = vld [vmem:[#allocation2 + $0x12] sm:$0xff]
      %v359 = vld [vmem:[#allocation2 + $0x22] sm:$0xff]
      %v360 = vld [vmem:[#allocation2 + $0x32] sm:$0xff]
      %v361 = vld [vmem:[#allocation2 + $0x42] sm:$0xff]
      %v362 = vld [vmem:[#allocation2 + $0x52] sm:$0xff]
      %v363 = vld [vmem:[#allocation2 + $0x62] sm:$0xff]
      %v364 = vld [vmem:[#allocation2 + $0x72] sm:$0xff]
      %v365 = vld [vmem:[%s332] sm:$0xff]
      %v366 = vld [vmem:[%s332 + $0x10] sm:$0xff]
      %v367 = vld [vmem:[%s332 + $0x20] sm:$0xff]
      %v368 = vld [vmem:[%s332 + $0x30] sm:$0xff]
      %v369 = vld [vmem:[%s332 + $0x40] sm:$0xff]
      %v370 = vld [vmem:[%s332 + $0x50] sm:$0xff]
      %v371 = vld [vmem:[%s332 + $0x60] sm:$0xff]
      %v372 = vld [vmem:[%s332 + $0x70] sm:$0xff]
      %v373 = vld [vmem:[%s332 + $0x1] sm:$0xff]
      %v374 = vld [vmem:[%s332 + $0x11] sm:$0xff]
      %v375 = vld [vmem:[%s332 + $0x21] sm:$0xff]
      %v376 = vld [vmem:[%s332 + $0x31] sm:$0xff]
      %v377 = vld [vmem:[%s332 + $0x41] sm:$0xff]
      %v378 = vld [vmem:[%s332 + $0x51] sm:$0xff]
      %v379 = vld [vmem:[%s332 + $0x61] sm:$0xff]
      %v380 = vld [vmem:[%s332 + $0x71] sm:$0xff]
      %v381 = vld [vmem:[%s332 + $0x2] sm:$0xff]
      %v382 = vld [vmem:[%s332 + $0x12] sm:$0xff]
      %v383 = vld [vmem:[%s332 + $0x22] sm:$0xff]
      %v384 = vld [vmem:[%s332 + $0x32] sm:$0xff]
      %v385 = vld [vmem:[%s332 + $0x42] sm:$0xff]
      %v386 = vld [vmem:[%s332 + $0x52] sm:$0xff]
      %v387 = vld [vmem:[%s332 + $0x62] sm:$0xff]
      %v388 = vld [vmem:[%s332 + $0x72] sm:$0xff]
      %s389 = scalar_lea.vmem [#allocation2], 32
      %v390 = vld [vmem:[%s389] sm:$0xff]
      %v391 = vld [vmem:[%s389 + $0x10] sm:$0xff]
      %v392 = vld [vmem:[%s389 + $0x20] sm:$0xff]
      %v393 = vld [vmem:[%s389 + $0x30] sm:$0xff]
      %v394 = vld [vmem:[%s389 + $0x40] sm:$0xff]
      %v395 = vld [vmem:[%s389 + $0x50] sm:$0xff]
      %v396 = vld [vmem:[%s389 + $0x60] sm:$0xff]
      %v397 = vld [vmem:[%s389 + $0x70] sm:$0xff]
      %v398 = vld [vmem:[%s389 + $0x1] sm:$0xff]
      %v399 = vld [vmem:[%s389 + $0x11] sm:$0xff]
      %v400 = vld [vmem:[%s389 + $0x21] sm:$0xff]
      %v401 = vld [vmem:[%s389 + $0x31] sm:$0xff]
      %v402 = vld [vmem:[%s389 + $0x41] sm:$0xff]
      %v403 = vld [vmem:[%s389 + $0x51] sm:$0xff]
      %v404 = vld [vmem:[%s389 + $0x61] sm:$0xff]
      %v405 = vld [vmem:[%s389 + $0x71] sm:$0xff]
      %v406 = vld [vmem:[%s389 + $0x2] sm:$0xff]
      %v407 = vld [vmem:[%s389 + $0x12] sm:$0xff]
      %v408 = vld [vmem:[%s389 + $0x22] sm:$0xff]
      %v409 = vld [vmem:[%s389 + $0x32] sm:$0xff]
      %v410 = vld [vmem:[%s389 + $0x42] sm:$0xff]
      %v411 = vld [vmem:[%s389 + $0x52] sm:$0xff]
      %v412 = vld [vmem:[%s389 + $0x62] sm:$0xff]
      %v413 = vld [vmem:[%s389 + $0x72] sm:$0xff]
      %422 = vrot.lane.b32.xlu0 %v349, 64
      %v423 = vpop.permute.xlu0 %422
      %424 = vrot.lane.b32.xlu0 %v350, 64
      %v425 = vpop.permute.xlu0 %424
      %426 = vrot.lane.b32.xlu0 %v351, 64
      %v427 = vpop.permute.xlu0 %426
      %428 = vrot.lane.b32.xlu0 %v352, 64
      %v429 = vpop.permute.xlu0 %428
      %430 = vrot.lane.b32.xlu0 %v353, 64
      %v431 = vpop.permute.xlu0 %430
      %432 = vrot.lane.b32.xlu0 %v354, 64
      %v433 = vpop.permute.xlu0 %432
      %434 = vrot.lane.b32.xlu0 %v355, 64
      %v435 = vpop.permute.xlu0 %434
      %436 = vrot.lane.b32.xlu0 %v356, 64
      %v437 = vpop.permute.xlu0 %436
      %454 = vrot.lane.b32.xlu0 %v365, 64
      %v455 = vpop.permute.xlu0 %454
      %456 = vrot.lane.b32.xlu0 %v366, 64
      %v457 = vpop.permute.xlu0 %456
      %458 = vrot.lane.b32.xlu0 %v367, 64
      %v459 = vpop.permute.xlu0 %458
      %460 = vrot.lane.b32.xlu0 %v368, 64
      %v461 = vpop.permute.xlu0 %460
      %462 = vrot.lane.b32.xlu0 %v369, 64
      %v463 = vpop.permute.xlu0 %462
      %464 = vrot.lane.b32.xlu0 %v370, 64
      %v465 = vpop.permute.xlu0 %464
      %466 = vrot.lane.b32.xlu0 %v371, 64
      %v467 = vpop.permute.xlu0 %466
      %468 = vrot.lane.b32.xlu0 %v372, 64
      %v469 = vpop.permute.xlu0 %468
      %486 = vrot.lane.b32.xlu0 %v381, 64
      %v487 = vpop.permute.xlu0 %486
      %488 = vrot.lane.b32.xlu0 %v382, 64
      %v489 = vpop.permute.xlu0 %488
      %490 = vrot.lane.b32.xlu0 %v383, 64
      %v491 = vpop.permute.xlu0 %490
      %492 = vrot.lane.b32.xlu0 %v384, 64
      %v493 = vpop.permute.xlu0 %492
      %494 = vrot.lane.b32.xlu0 %v385, 64
      %v495 = vpop.permute.xlu0 %494
      %496 = vrot.lane.b32.xlu0 %v386, 64
      %v497 = vpop.permute.xlu0 %496
      %498 = vrot.lane.b32.xlu0 %v387, 64
      %v499 = vpop.permute.xlu0 %498
      %500 = vrot.lane.b32.xlu0 %v388, 64
      %v501 = vpop.permute.xlu0 %500
      %518 = vrot.lane.b32.xlu0 %v398, 64
      %v519 = vpop.permute.xlu0 %518
      %520 = vrot.lane.b32.xlu0 %v399, 64
      %v521 = vpop.permute.xlu0 %520
      %522 = vrot.lane.b32.xlu0 %v400, 64
      %v523 = vpop.permute.xlu0 %522
      %524 = vrot.lane.b32.xlu0 %v401, 64
      %v525 = vpop.permute.xlu0 %524
      %526 = vrot.lane.b32.xlu0 %v402, 64
      %v527 = vpop.permute.xlu0 %526
      %528 = vrot.lane.b32.xlu0 %v403, 64
      %v529 = vpop.permute.xlu0 %528
      %530 = vrot.lane.b32.xlu0 %v404, 64
      %v531 = vpop.permute.xlu0 %530
      %532 = vrot.lane.b32.xlu0 %v405, 64
      %v533 = vpop.permute.xlu0 %532
      %v542 = vsel %vm310, %v341, %v423
      %v543 = vsel %vm310, %v342, %v425
      %v544 = vsel %vm310, %v343, %v427
      %v545 = vsel %vm310, %v344, %v429
      %v546 = vsel %vm310, %v345, %v431
      %v547 = vsel %vm310, %v346, %v433
      %v548 = vsel %vm310, %v347, %v435
      %v549 = vsel %vm310, %v348, %v437
      %v550 = vsel %vm310, %v357, %v455
      %v551 = vsel %vm310, %v358, %v457
      %v552 = vsel %vm310, %v359, %v459
      %v553 = vsel %vm310, %v360, %v461
      %v554 = vsel %vm310, %v361, %v463
      %v555 = vsel %vm310, %v362, %v465
      %v556 = vsel %vm310, %v363, %v467
      %v557 = vsel %vm310, %v364, %v469
      %v558 = vsel %vm310, %v373, %v487
      %v559 = vsel %vm310, %v374, %v489
      %v560 = vsel %vm310, %v375, %v491
      %v561 = vsel %vm310, %v376, %v493
      %v562 = vsel %vm310, %v377, %v495
      %v563 = vsel %vm310, %v378, %v497
      %v564 = vsel %vm310, %v379, %v499
      %v565 = vsel %vm310, %v380, %v501
      %v566 = vsel %vm310, %v390, %v519
      %v567 = vsel %vm310, %v391, %v521
      %v568 = vsel %vm310, %v392, %v523
      %v569 = vsel %vm310, %v393, %v525
      %v570 = vsel %vm310, %v394, %v527
      %v571 = vsel %vm310, %v395, %v529
      %v572 = vsel %vm310, %v396, %v531
      %v573 = vsel %vm310, %v397, %v533
      %v574 = vpack.c.bf16 %v543, %v542
      %v575 = vpack.c.bf16 %v551, %v550
      %v576 = vpack.c.bf16 %v559, %v558
      %v577 = vpack.c.bf16 %v567, %v566
      %v578 = vpack.c.bf16 %v407, %v406
      %v579 = vpack.c.bf16 %v545, %v544
      %v580 = vpack.c.bf16 %v553, %v552
      %v581 = vpack.c.bf16 %v561, %v560
      %v582 = vpack.c.bf16 %v569, %v568
      %v583 = vpack.c.bf16 %v409, %v408
      %v584 = vpack.c.bf16 %v547, %v546
      %v585 = vpack.c.bf16 %v555, %v554
      %v586 = vpack.c.bf16 %v563, %v562
      %v587 = vpack.c.bf16 %v571, %v570
      %v588 = vpack.c.bf16 %v411, %v410
      %v589 = vpack.c.bf16 %v549, %v548
      %v590 = vpack.c.bf16 %v557, %v556
      %v591 = vpack.c.bf16 %v565, %v564
      %v592 = vpack.c.bf16 %v573, %v572
      %v593 = vpack.c.bf16 %v413, %v412
      %v594 = vld [vmem:[%s3] sm:$0xf]
      %v595 = vld [vmem:[%s3 + $0x4] sm:$0xf]
      %v596 = vld [vmem:[%s3 + $0x8] sm:$0xf]
      %v597 = vld [vmem:[%s3 + $0xc] sm:$0xf]
      %v598 = vld [vmem:[%s3 + $0x10] sm:$0xf]
      %v599 = vld [vmem:[%s3 + $0x14] sm:$0xf]
      %v600 = vld [vmem:[%s3 + $0x18] sm:$0xf]
      %v601 = vld [vmem:[%s3 + $0x1c] sm:$0xf]
      %v602 = vld [vmem:[%s3 + $0x20] sm:$0xf]
      %v603 = vld [vmem:[%s3 + $0x24] sm:$0xf]
      %v604 = vld [vmem:[%s3 + $0x28] sm:$0xf]
      %v605 = vld [vmem:[%s3 + $0x2c] sm:$0xf]
      %v606 = vld [vmem:[%s3 + $0x30] sm:$0xf]
      %v607 = vld [vmem:[%s3 + $0x34] sm:$0xf]
      %v608 = vld [vmem:[%s3 + $0x38] sm:$0xf]
      %v609 = vld [vmem:[%s3 + $0x3c] sm:$0xf]
      %v610 = vld [vmem:[%s3 + $0x40] sm:$0xf]
      %v611 = vld [vmem:[%s3 + $0x44] sm:$0xf]
      %v612 = vld [vmem:[%s3 + $0x48] sm:$0xf]
      %v613 = vld [vmem:[%s3 + $0x4c] sm:$0xf]
      %v614 = vld [vmem:[%s3 + $0x50] sm:$0xf]
      %v615 = vld [vmem:[%s3 + $0x54] sm:$0xf]
      %v616 = vld [vmem:[%s3 + $0x58] sm:$0xf]
      %v617 = vld [vmem:[%s3 + $0x5c] sm:$0xf]
      %v618 = vld [vmem:[%s3 + $0x60] sm:$0xf]
      %v619 = vld [vmem:[%s3 + $0x64] sm:$0xf]
      %v620 = vld [vmem:[%s3 + $0x68] sm:$0xf]
      %v621 = vld [vmem:[%s3 + $0x6c] sm:$0xf]
      %v622 = vld [vmem:[%s3 + $0x70] sm:$0xf]
      %v623 = vld [vmem:[%s3 + $0x74] sm:$0xf]
      %v624 = vld [vmem:[%s3 + $0x78] sm:$0xf]
      %v625 = vld [vmem:[%s3 + $0x7c] sm:$0xf]
      %v626 = vld [vmem:[%s3 + $0x80] sm:$0xf]
      %v627 = vld [vmem:[%s3 + $0x84] sm:$0xf]
      %v628 = vld [vmem:[%s3 + $0x88] sm:$0xf]
      %v629 = vld [vmem:[%s3 + $0x8c] sm:$0xf]
      %v630 = vld [vmem:[%s3 + $0x90] sm:$0xf]
      %v631 = vld [vmem:[%s3 + $0x94] sm:$0xf]
      %v632 = vld [vmem:[%s3 + $0x98] sm:$0xf]
      %v633 = vld [vmem:[%s3 + $0x9c] sm:$0xf]
      %v634 = vld [vmem:[%s3 + $0xa0] sm:$0xf]
      %v635 = vld [vmem:[%s3 + $0xa4] sm:$0xf]
      %v636 = vld [vmem:[%s3 + $0xa8] sm:$0xf]
      %v637 = vld [vmem:[%s3 + $0xac] sm:$0xf]
      %v638 = vld [vmem:[%s3 + $0xb0] sm:$0xf]
      %v639 = vld [vmem:[%s3 + $0xb4] sm:$0xf]
      %v640 = vld [vmem:[%s3 + $0xb8] sm:$0xf]
      %v641 = vld [vmem:[%s3 + $0xbc] sm:$0xf]
      %v642 = vld [vmem:[%s3 + $0xc0] sm:$0xf]
      %v643 = vld [vmem:[%s3 + $0xc4] sm:$0xf]
      %v644 = vld [vmem:[%s3 + $0xc8] sm:$0xf]
      %v645 = vld [vmem:[%s3 + $0xcc] sm:$0xf]
      %v646 = vld [vmem:[%s3 + $0xd0] sm:$0xf]
      %v647 = vld [vmem:[%s3 + $0xd4] sm:$0xf]
      %v648 = vld [vmem:[%s3 + $0xd8] sm:$0xf]
      %v649 = vld [vmem:[%s3 + $0xdc] sm:$0xf]
      %v650 = vld [vmem:[%s3 + $0xe0] sm:$0xf]
      %v651 = vld [vmem:[%s3 + $0xe4] sm:$0xf]
      %v652 = vld [vmem:[%s3 + $0xe8] sm:$0xf]
      %v653 = vld [vmem:[%s3 + $0xec] sm:$0xf]
      %v654 = vld [vmem:[%s3 + $0xf0] sm:$0xf]
      %v655 = vld [vmem:[%s3 + $0xf4] sm:$0xf]
      %v656 = vld [vmem:[%s3 + $0xf8] sm:$0xf]
      %v657 = vld [vmem:[%s3 + $0xfc] sm:$0xf]
      %v658 = vld [vmem:[%s3 + $0x100] sm:$0xf]
      %v659 = vld [vmem:[%s3 + $0x104] sm:$0xf]
      %v660 = vld [vmem:[%s3 + $0x108] sm:$0xf]
      %v661 = vld [vmem:[%s3 + $0x10c] sm:$0xf]
      %v662 = vld [vmem:[%s3 + $0x110] sm:$0xf]
      %v663 = vld [vmem:[%s3 + $0x114] sm:$0xf]
      %v664 = vld [vmem:[%s3 + $0x118] sm:$0xf]
      %v665 = vld [vmem:[%s3 + $0x11c] sm:$0xf]
      %v738 = vunpack.c.l.b16 %v594
      %v739 = vunpack.c.l.b16 %v595
      %v740 = vunpack.c.l.b16 %v596
      %v741 = vunpack.c.l.b16 %v597
      %v742 = vunpack.c.l.b16 %v598
      %v743 = vunpack.c.l.b16 %v599
      %v744 = vunpack.c.l.b16 %v600
      %v745 = vunpack.c.l.b16 %v601
      %v746 = vunpack.c.l.b16 %v602
      %v747 = vunpack.c.l.b16 %v603
      %v748 = vunpack.c.l.b16 %v604
      %v749 = vunpack.c.l.b16 %v605
      %v750 = vunpack.c.l.b16 %v606
      %v751 = vunpack.c.l.b16 %v607
      %v752 = vunpack.c.l.b16 %v608
      %v753 = vunpack.c.l.b16 %v609
      %v754 = vunpack.c.l.b16 %v610
      %v755 = vunpack.c.l.b16 %v611
      %v756 = vunpack.c.l.b16 %v612
      %v757 = vunpack.c.l.b16 %v613
      %v758 = vunpack.c.l.b16 %v614
      %v759 = vunpack.c.l.b16 %v615
      %v760 = vunpack.c.l.b16 %v616
      %v761 = vunpack.c.l.b16 %v617
      %v762 = vunpack.c.l.b16 %v618
      %v763 = vunpack.c.l.b16 %v619
      %v764 = vunpack.c.l.b16 %v620
      %v765 = vunpack.c.l.b16 %v621
      %v766 = vunpack.c.l.b16 %v622
      %v767 = vunpack.c.l.b16 %v623
      %v768 = vunpack.c.l.b16 %v624
      %v769 = vunpack.c.l.b16 %v625
      %v770 = vunpack.c.l.b16 %v626
      %v771 = vunpack.c.l.b16 %v627
      %v772 = vunpack.c.l.b16 %v628
      %v773 = vunpack.c.l.b16 %v629
      %v774 = vunpack.c.l.b16 %v630
      %v775 = vunpack.c.l.b16 %v631
      %v776 = vunpack.c.l.b16 %v632
      %v777 = vunpack.c.l.b16 %v633
      %v778 = vunpack.c.l.b16 %v634
      %v779 = vunpack.c.l.b16 %v635
      %v780 = vunpack.c.l.b16 %v636
      %v781 = vunpack.c.l.b16 %v637
      %v782 = vunpack.c.l.b16 %v638
      %v783 = vunpack.c.l.b16 %v639
      %v784 = vunpack.c.l.b16 %v640
      %v785 = vunpack.c.l.b16 %v641
      %v786 = vunpack.c.l.b16 %v642
      %v787 = vunpack.c.l.b16 %v643
      %v788 = vunpack.c.l.b16 %v644
      %v789 = vunpack.c.l.b16 %v645
      %v790 = vunpack.c.l.b16 %v646
      %v791 = vunpack.c.l.b16 %v647
      %v792 = vunpack.c.l.b16 %v648
      %v793 = vunpack.c.l.b16 %v649
      %v794 = vunpack.c.l.b16 %v650
      %v795 = vunpack.c.l.b16 %v651
      %v796 = vunpack.c.l.b16 %v652
      %v797 = vunpack.c.l.b16 %v653
      %v798 = vunpack.c.l.b16 %v654
      %v799 = vunpack.c.l.b16 %v655
      %v800 = vunpack.c.l.b16 %v656
      %v801 = vunpack.c.l.b16 %v657
      %v802 = vunpack.c.l.b16 %v658
      %v803 = vunpack.c.l.b16 %v659
      %v804 = vunpack.c.l.b16 %v660
      %v805 = vunpack.c.l.b16 %v661
      %v806 = vunpack.c.l.b16 %v662
      %v807 = vunpack.c.l.b16 %v663
      %v808 = vunpack.c.l.b16 %v664
      %v809 = vunpack.c.l.b16 %v665
      %v810 = vpack.c.b16 %v739, %v738
      %v811 = vpack.c.b16 %v741, %v740
      %v812 = vpack.c.b16 %v743, %v742
      %v813 = vpack.c.b16 %v745, %v744
      %v814 = vpack.c.b16 %v747, %v746
      %v815 = vpack.c.b16 %v749, %v748
      %v816 = vpack.c.b16 %v751, %v750
      %v817 = vpack.c.b16 %v753, %v752
      %v818 = vpack.c.b16 %v755, %v754
      %v819 = vpack.c.b16 %v757, %v756
      %v820 = vpack.c.b16 %v759, %v758
      %v821 = vpack.c.b16 %v761, %v760
      %v822 = vpack.c.b16 %v763, %v762
      %v823 = vpack.c.b16 %v765, %v764
      %v824 = vpack.c.b16 %v767, %v766
      %v825 = vpack.c.b16 %v769, %v768
      %v826 = vpack.c.b16 %v771, %v770
      %v827 = vpack.c.b16 %v773, %v772
      %v828 = vpack.c.b16 %v775, %v774
      %v829 = vpack.c.b16 %v777, %v776
      %v830 = vpack.c.b16 %v779, %v778
      %v831 = vpack.c.b16 %v781, %v780
      %v832 = vpack.c.b16 %v783, %v782
      %v833 = vpack.c.b16 %v785, %v784
      %v834 = vpack.c.b16 %v787, %v786
      %v835 = vpack.c.b16 %v789, %v788
      %v836 = vpack.c.b16 %v791, %v790
      %v837 = vpack.c.b16 %v793, %v792
      %v838 = vpack.c.b16 %v795, %v794
      %v839 = vpack.c.b16 %v797, %v796
      %v840 = vpack.c.b16 %v799, %v798
      %v841 = vpack.c.b16 %v801, %v800
      %v842 = vpack.c.b16 %v803, %v802
      %v843 = vpack.c.b16 %v805, %v804
      %v844 = vpack.c.b16 %v807, %v806
      %v845 = vpack.c.b16 %v809, %v808
      %v883 = vsel %vm310, %v578, 0
      %v886 = vsel %vm310, %v583, 0
      %v889 = vsel %vm310, %v588, 0
      %v892 = vsel %vm310, %v593, 0
      %894 = vmatpush.bf16.msra.mxu0 %v817
      %895 = vmatpush.bf16.msra.mxu0 %v816
      %896 = vmatpush.bf16.msra.mxu0 %v815
      %897 = vmatpush.bf16.msra.mxu0 %v814
      %898 = vmatpush.bf16.msra.mxu0 %v813
      %899 = vmatpush.bf16.msra.mxu0 %v812
      %900 = vmatpush.bf16.msra.mxu0 %v811
      %901 = vmatpush.bf16.msra.mxu0 %v810
      %902 = vmatmul.bf16.gmra.mxu0 %v574
      %v903 = vpop.f32.mrf.mxu0
      %v904 = vadd.f32 0.0, %v903
      %v905 = vpop.f32.mrf.mxu0
      %v906 = vadd.f32 0.0, %v905
      %907 = vmatmul.bf16.gmra.mxu0 %v579
      %v908 = vpop.f32.mrf.mxu0
      %v909 = vadd.f32 0.0, %v908
      %v910 = vpop.f32.mrf.mxu0
      %v911 = vadd.f32 0.0, %v910
      %912 = vmatmul.bf16.gmra.mxu0 %v584
      %v913 = vpop.f32.mrf.mxu0
      %v914 = vadd.f32 0.0, %v913
      %v915 = vpop.f32.mrf.mxu0
      %v916 = vadd.f32 0.0, %v915
      %917 = vmatmul.bf16.gmra.mxu0 %v589
      %v918 = vpop.f32.mrf.mxu0
      %v919 = vadd.f32 0.0, %v918
      %v920 = vpop.f32.mrf.mxu0
      %v921 = vadd.f32 0.0, %v920
      %922 = vdwg.mxu0
      %923 = vmatpush.bf16.msra.mxu0 %v825
      %924 = vmatpush.bf16.msra.mxu0 %v824
      %925 = vmatpush.bf16.msra.mxu0 %v823
      %926 = vmatpush.bf16.msra.mxu0 %v822
      %927 = vmatpush.bf16.msra.mxu0 %v821
      %928 = vmatpush.bf16.msra.mxu0 %v820
      %929 = vmatpush.bf16.msra.mxu0 %v819
      %930 = vmatpush.bf16.msra.mxu0 %v818
      %931 = vmatmul.bf16.gmra.mxu0 %v575
      %v932 = vpop.f32.mrf.mxu0
      %v933 = vadd.f32 %v904, %v932
      %v934 = vpop.f32.mrf.mxu0
      %v935 = vadd.f32 %v906, %v934
      %936 = vmatmul.bf16.gmra.mxu0 %v580
      %v937 = vpop.f32.mrf.mxu0
      %v938 = vadd.f32 %v909, %v937
      %v939 = vpop.f32.mrf.mxu0
      %v940 = vadd.f32 %v911, %v939
      %941 = vmatmul.bf16.gmra.mxu0 %v585
      %v942 = vpop.f32.mrf.mxu0
      %v943 = vadd.f32 %v914, %v942
      %v944 = vpop.f32.mrf.mxu0
      %v945 = vadd.f32 %v916, %v944
      %946 = vmatmul.bf16.gmra.mxu0 %v590
      %v947 = vpop.f32.mrf.mxu0
      %v948 = vadd.f32 %v919, %v947
      %v949 = vpop.f32.mrf.mxu0
      %v950 = vadd.f32 %v921, %v949
      %951 = vdwg.mxu0
      %952 = vmatpush.bf16.msra.mxu0 %v833
      %953 = vmatpush.bf16.msra.mxu0 %v832
      %954 = vmatpush.bf16.msra.mxu0 %v831
      %955 = vmatpush.bf16.msra.mxu0 %v830
      %956 = vmatpush.bf16.msra.mxu0 %v829
      %957 = vmatpush.bf16.msra.mxu0 %v828
      %958 = vmatpush.bf16.msra.mxu0 %v827
      %959 = vmatpush.bf16.msra.mxu0 %v826
      %960 = vmatmul.bf16.gmra.mxu0 %v576
      %v961 = vpop.f32.mrf.mxu0
      %v962 = vadd.f32 %v933, %v961
      %v963 = vpop.f32.mrf.mxu0
      %v964 = vadd.f32 %v935, %v963
      %965 = vmatmul.bf16.gmra.mxu0 %v581
      %v966 = vpop.f32.mrf.mxu0
      %v967 = vadd.f32 %v938, %v966
      %v968 = vpop.f32.mrf.mxu0
      %v969 = vadd.f32 %v940, %v968
      %970 = vmatmul.bf16.gmra.mxu0 %v586
      %v971 = vpop.f32.mrf.mxu0
      %v972 = vadd.f32 %v943, %v971
      %v973 = vpop.f32.mrf.mxu0
      %v974 = vadd.f32 %v945, %v973
      %975 = vmatmul.bf16.gmra.mxu0 %v591
      %v976 = vpop.f32.mrf.mxu0
      %v977 = vadd.f32 %v948, %v976
      %v978 = vpop.f32.mrf.mxu0
      %v979 = vadd.f32 %v950, %v978
      %980 = vdwg.mxu0
      %981 = vmatpush.bf16.msra.mxu0 %v841
      %982 = vmatpush.bf16.msra.mxu0 %v840
      %983 = vmatpush.bf16.msra.mxu0 %v839
      %984 = vmatpush.bf16.msra.mxu0 %v838
      %985 = vmatpush.bf16.msra.mxu0 %v837
      %986 = vmatpush.bf16.msra.mxu0 %v836
      %987 = vmatpush.bf16.msra.mxu0 %v835
      %988 = vmatpush.bf16.msra.mxu0 %v834
      %989 = vmatmul.bf16.gmra.mxu0 %v577
      %v990 = vpop.f32.mrf.mxu0
      %v991 = vadd.f32 %v962, %v990
      %v992 = vpop.f32.mrf.mxu0
      %v993 = vadd.f32 %v964, %v992
      %994 = vmatmul.bf16.gmra.mxu0 %v582
      %v995 = vpop.f32.mrf.mxu0
      %v996 = vadd.f32 %v967, %v995
      %v997 = vpop.f32.mrf.mxu0
      %v998 = vadd.f32 %v969, %v997
      %999 = vmatmul.bf16.gmra.mxu0 %v587
      %v1000 = vpop.f32.mrf.mxu0
      %v1001 = vadd.f32 %v972, %v1000
      %v1002 = vpop.f32.mrf.mxu0
      %v1003 = vadd.f32 %v974, %v1002
      %1004 = vmatmul.bf16.gmra.mxu0 %v592
      %v1005 = vpop.f32.mrf.mxu0
      %v1006 = vadd.f32 %v977, %v1005
      %v1007 = vpop.f32.mrf.mxu0
      %v1008 = vadd.f32 %v979, %v1007
      %1009 = vdwg.mxu0
      %1010 = vmatpush.bf16.msra.mxu0 0
      %1011 = vmatpush.bf16.msra.mxu0 0
      %1012 = vmatpush.bf16.msra.mxu0 0
      %1013 = vmatpush.bf16.msra.mxu0 0
      %1014 = vmatpush.bf16.msra.mxu0 %v845
      %1015 = vmatpush.bf16.msra.mxu0 %v844
      %1016 = vmatpush.bf16.msra.mxu0 %v843
      %1017 = vmatpush.bf16.msra.mxu0 %v842
      %1018 = vmatmul.bf16.gmra.mxu0 %v883
      %v1019 = vpop.f32.mrf.mxu0
      %v1020 = vadd.f32 %v991, %v1019
      %v1021 = vpop.f32.mrf.mxu0
      %v1022 = vadd.f32 %v993, %v1021
      %1023 = vmatmul.bf16.gmra.mxu0 %v886
      %v1024 = vpop.f32.mrf.mxu0
      %v1025 = vadd.f32 %v996, %v1024
      %v1026 = vpop.f32.mrf.mxu0
      %v1027 = vadd.f32 %v998, %v1026
      %1028 = vmatmul.bf16.gmra.mxu0 %v889
      %v1029 = vpop.f32.mrf.mxu0
      %v1030 = vadd.f32 %v1001, %v1029
      %v1031 = vpop.f32.mrf.mxu0
      %v1032 = vadd.f32 %v1003, %v1031
      %1033 = vmatmul.bf16.gmra.mxu0 %v892
      %v1034 = vpop.f32.mrf.mxu0
      %v1035 = vadd.f32 %v1006, %v1034
      %v1036 = vpop.f32.mrf.mxu0
      %v1037 = vadd.f32 %v1008, %v1036
      %1038 = vdwg.mxu0
      %v1039 = vsel %vm310, %v1020, 0.0
      %v1040 = vsel %vm310, %v1022, 0.0
      %v1041 = vadd.f32 %v1039, %v1040
      %v1042 = vsel %vm310, %v1025, 0.0
      %v1043 = vadd.f32 %v1041, %v1042
      %v1044 = vsel %vm310, %v1027, 0.0
      %v1045 = vadd.f32 %v1043, %v1044
      %v1046 = vsel %vm310, %v1030, 0.0
      %v1047 = vadd.f32 %v1045, %v1046
      %v1048 = vsel %vm310, %v1032, 0.0
      %v1049 = vadd.f32 %v1047, %v1048
      %v1050 = vsel %vm310, %v1035, 0.0
      %v1051 = vadd.f32 %v1049, %v1050
      %v1052 = vsel %vm310, %v1037, 0.0
      %v1053 = vadd.f32 %v1051, %v1052
      %v1054 = vrot.slane %v1053, 4
      %v1055 = vadd.f32 %v1053, %v1054
      %v1056 = vrot.slane %v1055, 2
      %v1057 = vadd.f32 %v1055, %v1056
      %v1058 = vrot.slane %v1057, 1
      %v1059 = vadd.f32 %v1057, %v1058
      %vm1060 = vcmask 516096
      %1061 = vst.msk [vmem:[%s265] sm:$0x1] %vm1060, %v1059
      %v1062 = vmul.f32 %v1020, %v1020
      %v1063 = vmul.f32 %v1022, %v1022
      %v1064 = vmul.f32 %v1025, %v1025
      %v1065 = vmul.f32 %v1027, %v1027
      %v1066 = vmul.f32 %v1030, %v1030
      %v1067 = vmul.f32 %v1032, %v1032
      %v1068 = vmul.f32 %v1035, %v1035
      %v1069 = vmul.f32 %v1037, %v1037
      %v1070 = vsel %vm310, %v1062, 0.0
      %v1071 = vsel %vm310, %v1063, 0.0
      %v1072 = vadd.f32 %v1070, %v1071
      %v1073 = vsel %vm310, %v1064, 0.0
      %v1074 = vadd.f32 %v1072, %v1073
      %v1075 = vsel %vm310, %v1065, 0.0
      %v1076 = vadd.f32 %v1074, %v1075
      %v1077 = vsel %vm310, %v1066, 0.0
      %v1078 = vadd.f32 %v1076, %v1077
      %v1079 = vsel %vm310, %v1067, 0.0
      %v1080 = vadd.f32 %v1078, %v1079
      %v1081 = vsel %vm310, %v1068, 0.0
      %v1082 = vadd.f32 %v1080, %v1081
      %v1083 = vsel %vm310, %v1069, 0.0
      %v1084 = vadd.f32 %v1082, %v1083
      %v1085 = vrot.slane %v1084, 4
      %v1086 = vadd.f32 %v1084, %v1085
      %v1087 = vrot.slane %v1086, 2
      %v1088 = vadd.f32 %v1086, %v1087
      %v1089 = vrot.slane %v1088, 1
      %v1090 = vadd.f32 %v1088, %v1089
      %1091 = vst.msk [vmem:[%s268] sm:$0x1] %vm1060, %v1090
      %1092 = vst.msk [vmem:[%s262] sm:$0xff] %vm310, %v1020
      %1093 = vst.msk [vmem:[%s262 + $0x8] sm:$0xff] %vm310, %v1022
      %1094 = vst.msk [vmem:[%s262 + $0x10] sm:$0xff] %vm310, %v1025
      %1095 = vst.msk [vmem:[%s262 + $0x18] sm:$0xff] %vm310, %v1027
      %1096 = vst.msk [vmem:[%s262 + $0x20] sm:$0xff] %vm310, %v1030
      %1097 = vst.msk [vmem:[%s262 + $0x28] sm:$0xff] %vm310, %v1032
      %1098 = vst.msk [vmem:[%s262 + $0x30] sm:$0xff] %vm310, %v1035
      %1099 = vst.msk [vmem:[%s262 + $0x38] sm:$0xff] %vm310, %v1037
      %p1100 = scmp.lt.s32.totalorder %s18, 1
      %s1101 = scalar_select %p1100, %s18, 1
      %s1102 = smul.addr %s1101, 8
      %s1103 = smul.addr %s1102, 8
      %s1104 = scalar_lea.vmem %s4, %s1103
      %p1105 = scmp.lt.s32.totalorder %s18, 1
      %s1106 = scalar_select %p1105, %s18, 1
      %s1107 = scalar_lea.vmem %s5, %s1106
      %p1108 = scmp.lt.s32.totalorder %s18, 1
      %s1109 = scalar_select %p1108, %s18, 1
      %s1110 = scalar_lea.vmem %s6, %s1109
      // Predicated region
      $region37: #{hardnet_conv_crop_forward.10} parent=35 // pred_check
        %p1111 = pneg %p125
      $region38: #{hardnet_conv_crop_forward.10} parent=35 // pred_check_branch
        %1113 = sbr.rel (%p1111) target = $region40
      $region39: #{hardnet_conv_crop_forward.10} parent=35 // pred_region
        _
      $region40: #{hardnet_conv_crop_forward.10} parent=35 // pred_fallthru
        _
      // Predicated region
      $region41: #{hardnet_conv_crop_forward.10} parent=35 // pred_check
        %p1114 = pneg %p151
      $region42: #{hardnet_conv_crop_forward.10} parent=35 // pred_check_branch
        %1116 = sbr.rel (%p1114) target = $region44
      $region43: #{hardnet_conv_crop_forward.10} parent=35 // pred_region
        _
      $region44: #{hardnet_conv_crop_forward.10} parent=35 // pred_fallthru
        _
      // Predicated region
      $region45: #{hardnet_conv_crop_forward.10} parent=35 // pred_check
        %p1117 = pneg %p177
      $region46: #{hardnet_conv_crop_forward.10} parent=35 // pred_check_branch
        %1119 = sbr.rel (%p1117) target = $region48
      $region47: #{hardnet_conv_crop_forward.10} parent=35 // pred_region
        _
      $region48: #{hardnet_conv_crop_forward.10} parent=35 // pred_fallthru
        _
    $region36: #{hardnet_conv_crop_forward.10} parent=5 // pred_fallthru
      _
    %p1120 = scmp.le.s32.totalorder 2, %s13
    // Predicated region
    $region49: #{hardnet_conv_crop_forward.10} parent=5 // pred_check
      %p1121 = pneg %p1120
    $region50: #{hardnet_conv_crop_forward.10} parent=5 // pred_check_branch
      %1123 = sbr.rel (%p1121) target = $region52
    $region51: #{hardnet_conv_crop_forward.10} parent=5 // pred_region
      %s1124 = ssub.s32 %s13, 2
      // Predicated region
      $region53: #{hardnet_conv_crop_forward.10} parent=51 // pred_check
        %p1125 = pneg %p131
      $region54: #{hardnet_conv_crop_forward.10} parent=51 // pred_check_branch
        %1127 = sbr.rel (%p1125) target = $region56
      $region55: #{hardnet_conv_crop_forward.10} parent=51 // pred_region
        %p1128 = scmp.lt.s32.totalorder %s19, 1
        %s1129 = scalar_select %p1128, %s19, 1
        %s1130 = smul.addr %s1129, 8
        %s1131 = smul.addr %s1130, 8
        %s1132 = scalar_lea.vmem %s4, %s1131
      $region56: #{hardnet_conv_crop_forward.10} parent=51 // pred_fallthru
        _
      // Predicated region
      $region57: #{hardnet_conv_crop_forward.10} parent=51 // pred_check
        %p1133 = pneg %p157
      $region58: #{hardnet_conv_crop_forward.10} parent=51 // pred_check_branch
        %1135 = sbr.rel (%p1133) target = $region60
      $region59: #{hardnet_conv_crop_forward.10} parent=51 // pred_region
        %p1136 = scmp.lt.s32.totalorder %s19, 1
        %s1137 = scalar_select %p1136, %s19, 1
        %s1138 = scalar_lea.vmem %s5, %s1137
      $region60: #{hardnet_conv_crop_forward.10} parent=51 // pred_fallthru
        _
      // Predicated region
      $region61: #{hardnet_conv_crop_forward.10} parent=51 // pred_check
        %p1139 = pneg %p183
      $region62: #{hardnet_conv_crop_forward.10} parent=51 // pred_check_branch
        %1141 = sbr.rel (%p1139) target = $region64
      $region63: #{hardnet_conv_crop_forward.10} parent=51 // pred_region
        %p1142 = scmp.lt.s32.totalorder %s19, 1
        %s1143 = scalar_select %p1142, %s19, 1
        %s1144 = scalar_lea.vmem %s6, %s1143
      $region64: #{hardnet_conv_crop_forward.10} parent=51 // pred_fallthru
        _
    $region52: #{hardnet_conv_crop_forward.10} parent=5 // pred_fallthru
      _
  $region6: #{hardnet_conv_crop_forward.10} parent=0 // loop_footer
    %s17 = sadd.s32 1, %s13
  $region7: #{hardnet_conv_crop_forward.10} parent=0 // loop_footer_branch
    %12 = sbr.rel target = $region3
  $region8: #{hardnet_conv_crop_forward.10} parent=0 // loop_exit
    _

// kernel: hardnet_conv_crop_forward.11
$region0: #{hardnet_conv_crop_forward.11}
  #allocation0 [shape = 'u32[]', space=smem, size = 0x4, offset = 0x4, fixed_abs, tag = 'smem constant byte address 0x4 - core index']
  #allocation1 [shape = 'u32[72,128]{1,0:T(1,128)}', space=vmem, size = 0x9000, scoped, tag = 'internal scratch']
  %s0 = inlined_call_operand.vmem [shape: f32[2,8,8,64], index: 0, kind: input, shape index: {}]
  %s1 = inlined_call_operand.vmem [shape: f32[1,64], index: 1, kind: input, shape index: {}]
  %s2 = inlined_call_operand.vmem [shape: f32[1,64], index: 2, kind: input, shape index: {}]
  %s3 = inlined_call_operand.hbm [shape: f32[2,8,8,64], index: 3, kind: output, shape index: {}]
  %s4 = sld [smem:[#allocation0]]
  $region45: #{hardnet_conv_crop_forward.11} parent=0
    _
  %s6 = ssub.s32 1, %s4
  %s7 = scalar_select 0, %s6, %s4
  $region1: #{hardnet_conv_crop_forward.11} parent=0
    #allocation2 [shape = 'u8[65536]{0}', space=vmem, size = 0x10000, scoped, tag = 'output window, operand 0']
    #allocation3 [shape = 's32[2]{0}', space=sflag, size = 0x8, scoped, tag = 'scoped memory for hardnet_conv_crop_forward.11']
    %8 = vsyncpa [#allocation3], 0
    %s9 = scalar_lea.sflag [#allocation3], 1
    %10 = vsyncpa %s9, 0
    loop: start=0, step=1, limit=4
    $region2: #{hardnet_conv_crop_forward.11} parent=1 // loop_pre_header
      _
    $region3: #{hardnet_conv_crop_forward.11} parent=1 // loop_header
      %s12 = sphi 0, %s16
      %p13 = scmp.ge.s32.totalorder %s12, 4
      %s22 = sphi 0, %s24
      %s25 = sphi 0, %s22
      %s26 = sphi 0, %s25
      %s42 = sphi 0, %s26
      %s46 = sphi 0, %s46
      %s48 = sphi 0, %s46
      %s49 = sphi 0, %s48
      %s63 = sphi 0, %s49
      %s67 = sphi 0, %s67
      %s69 = sphi 0, %s67
      %s70 = sphi 0, %s69
      %s84 = sphi 0, %s70
      %s90 = sphi 0, %s92
      %s93 = sphi 0, %s90
      %s94 = sphi 0, %s93
      %s110 = sphi 0, %s94
    $region4: #{hardnet_conv_crop_forward.11} parent=1 // loop_header_branch
      %15 = sbr.rel (%p13) target = $region8
    $region5: #{hardnet_conv_crop_forward.11} parent=1 // loop_body
      %s17 = ssub.s32 %s12, 1
      %s18 = ssub.s32 %s12, 2
      %s19 = sadd.s32 %s12, 1
      %s20 = ssub.s32 %s12, %s19
      %p21 = scmp.eq.s32.totalorder %s20, 0
      %s23 = sadd.s32 %s22, 1
      %s24 = scalar_select %p21, %s22, %s23
      %p27 = pneg %p21
      %p28 = scmp.eq.s32.totalorder %s12, 1
      %p29 = por %p27, %p28
      %p30 = scmp.ne.s32.totalorder %s22, %s25
      %p31 = scmp.eq.s32.totalorder %s12, 0
      %p32 = por %p30, %p31
      %p33 = scmp.ne.s32.totalorder %s22, %s25
      %p34 = scmp.eq.s32.totalorder %s17, 1
      %p35 = por %p33, %p34
      %p36 = scmp.ne.s32.totalorder %s25, %s26
      %p37 = scmp.eq.s32.totalorder %s17, 0
      %p38 = por %p36, %p37
      %p39 = scmp.ne.s32.totalorder %s25, %s26
      %p40 = scmp.eq.s32.totalorder %s18, 1
      %p41 = por %p39, %p40
      %p43 = scmp.ne.s32.totalorder %s26, %s42
      %p44 = scmp.eq.s32.totalorder %s18, 0
      %p45 = por %p43, %p44
      %s47 = sadd.s32 %s46, 1
      %p50 = scmp.eq.s32.totalorder %s12, 1
      %p51 = scmp.ne.s32.totalorder %s46, %s48
      %p52 = scmp.eq.s32.totalorder %s12, 0
      %p53 = por %p51, %p52
      %p54 = scmp.ne.s32.totalorder %s46, %s48
      %p55 = scmp.eq.s32.totalorder %s17, 1
      %p56 = por %p54, %p55
      %p57 = scmp.ne.s32.totalorder %s48, %s49
      %p58 = scmp.eq.s32.totalorder %s17, 0
      %p59 = por %p57, %p58
      %p60 = scmp.ne.s32.totalorder %s48, %s49
      %p61 = scmp.eq.s32.totalorder %s18, 1
      %p62 = por %p60, %p61
      %p64 = scmp.ne.s32.totalorder %s49, %s63
      %p65 = scmp.eq.s32.totalorder %s18, 0
      %p66 = por %p64, %p65
      %s68 = sadd.s32 %s67, 1
      %p71 = scmp.eq.s32.totalorder %s12, 1
      %p72 = scmp.ne.s32.totalorder %s67, %s69
      %p73 = scmp.eq.s32.totalorder %s12, 0
      %p74 = por %p72, %p73
      %p75 = scmp.ne.s32.totalorder %s67, %s69
      %p76 = scmp.eq.s32.totalorder %s17, 1
      %p77 = por %p75, %p76
      %p78 = scmp.ne.s32.totalorder %s69, %s70
      %p79 = scmp.eq.s32.totalorder %s17, 0
      %p80 = por %p78, %p79
      %p81 = scmp.ne.s32.totalorder %s69, %s70
      %p82 = scmp.eq.s32.totalorder %s18, 1
      %p83 = por %p81, %p82
      %p85 = scmp.ne.s32.totalorder %s70, %s84
      %p86 = scmp.eq.s32.totalorder %s18, 0
      %p87 = por %p85, %p86
      %s88 = ssub.s32 %s12, %s19
      %p89 = scmp.eq.s32.totalorder %s88, 0
      %s91 = sadd.s32 %s90, 1
      %s92 = scalar_select %p89, %s90, %s91
      %p95 = pneg %p89
      %p96 = scmp.eq.s32.totalorder %s12, 1
      %p97 = por %p95, %p96
      %p98 = scmp.ne.s32.totalorder %s90, %s93
      %p99 = scmp.eq.s32.totalorder %s12, 0
      %p100 = por %p98, %p99
      %p101 = scmp.ne.s32.totalorder %s90, %s93
      %p102 = scmp.eq.s32.totalorder %s17, 1
      %p103 = por %p101, %p102
      %p104 = scmp.ne.s32.totalorder %s93, %s94
      %p105 = scmp.eq.s32.totalorder %s17, 0
      %p106 = por %p104, %p105
      %p107 = scmp.ne.s32.totalorder %s93, %s94
      %p108 = scmp.eq.s32.totalorder %s18, 1
      %p109 = por %p107, %p108
      %p111 = scmp.ne.s32.totalorder %s94, %s110
      %p112 = scmp.eq.s32.totalorder %s18, 0
      %p113 = por %p111, %p112
      %p114 = scmp.le.s32.totalorder 1, %s12
      %p115 = scmp.lt.s32.totalorder %s12, 3
      %p116 = pnand %p114, %p115
      %p117 = pneg %p116
      // Predicated region
      $region9: #{hardnet_conv_crop_forward.11} parent=5 // pred_check
        _
      $region10: #{hardnet_conv_crop_forward.11} parent=5 // pred_check_branch
        %119 = sbr.rel (%p116) target = $region12
      $region11: #{hardnet_conv_crop_forward.11} parent=5 // pred_region
        %s120 = ssub.s32 %s12, 1
        // Predicated region
        $region13: #{hardnet_conv_crop_forward.11} parent=11 // pred_check
          %p121 = pneg %p59
        $region14: #{hardnet_conv_crop_forward.11} parent=11 // pred_check_branch
          %123 = sbr.rel (%p121) target = $region16
        $region15: #{hardnet_conv_crop_forward.11} parent=11 // pred_region
          _
        $region16: #{hardnet_conv_crop_forward.11} parent=11 // pred_fallthru
          _
        // Predicated region
        $region17: #{hardnet_conv_crop_forward.11} parent=11 // pred_check
          %p124 = pneg %p80
        $region18: #{hardnet_conv_crop_forward.11} parent=11 // pred_check_branch
          %126 = sbr.rel (%p124) target = $region20
        $region19: #{hardnet_conv_crop_forward.11} parent=11 // pred_region
          _
        $region20: #{hardnet_conv_crop_forward.11} parent=11 // pred_fallthru
          _
      $region12: #{hardnet_conv_crop_forward.11} parent=5 // pred_fallthru
        _
      %p127 = scmp.lt.s32.totalorder %s12, 2
      // Predicated region
      $region21: #{hardnet_conv_crop_forward.11} parent=5 // pred_check
        %p128 = pneg %p127
      $region22: #{hardnet_conv_crop_forward.11} parent=5 // pred_check_branch
        %130 = sbr.rel (%p128) target = $region24
      $region23: #{hardnet_conv_crop_forward.11} parent=5 // pred_region
        // Predicated region
        $region25: #{hardnet_conv_crop_forward.11} parent=23 // pred_check
          %p131 = pneg %p32
        $region26: #{hardnet_conv_crop_forward.11} parent=23 // pred_check_branch
          %133 = sbr.rel (%p131) target = $region28
        $region27: #{hardnet_conv_crop_forward.11} parent=23 // pred_region
          %p134 = scmp.lt.s32.totalorder %s12, 1
          %s135 = scalar_select %p134, %s12, 1
          %s136 = smul.addr %s135, 8
          %s137 = smul.addr %s136, 8
          %s138 = scalar_lea.vmem %s0, %s137
        $region28: #{hardnet_conv_crop_forward.11} parent=23 // pred_fallthru
          _
      $region24: #{hardnet_conv_crop_forward.11} parent=5 // pred_fallthru
        _
      %p139 = scmp.le.s32.totalorder 1, %s12
      %p140 = scmp.lt.s32.totalorder %s12, 3
      %p141 = pnand %p139, %p140
      %p142 = pneg %p141
      // Predicated region
      $region29: #{hardnet_conv_crop_forward.11} parent=5 // pred_check
        _
      $region30: #{hardnet_conv_crop_forward.11} parent=5 // pred_check_branch
        %144 = sbr.rel (%p141) target = $region32
      $region31: #{hardnet_conv_crop_forward.11} parent=5 // pred_region
        %s145 = ssub.s32 %s12, 1
        %p146 = scmp.lt.s32.totalorder %s17, 1
        %s147 = scalar_select %p146, %s17, 1
        %s148 = smul.addr %s147, 8
        %s149 = smul.addr %s148, 8
        %s150 = scalar_lea.vmem %s0, %s149
        %p151 = pneg %p38
        %p152 = pneg %p35
        %p153 = pneg %p59
        %p154 = pneg %p56
        %p155 = pneg %p80
        %p156 = pneg %p77
        %p157 = pneg %p106
        %p158 = pneg %p103
        %s159 = sand.u32 %s93, 1
        %s160 = scalar_lea.sflag [#allocation3], %s159
        %s161 = sand.u32 %s93, 1
        %s162 = smul.addr %s161, 64
        %s163 = scalar_lea.vmem [#allocation2], %s162
        %p164 = scmp.lt.s32.totalorder %s17, 1
        %s165 = scalar_select %p164, %s17, 1
        %s166 = smul.addr %s165, 8
        %s167 = smul.addr %s166, 8
        %s168 = scalar_lea.vmem %s0, %s167
        %v169 = vld [vmem:[%s1] sm:$0x1]
        %v170 = vld [vmem:[%s2] sm:$0x1]
        %v171 = vld [vmem:[%s168] sm:$0xff]
        %v172 = vld [vmem:[%s168 + $0x8] sm:$0xff]
        %v173 = vld [vmem:[%s168 + $0x10] sm:$0xff]
        %v174 = vld [vmem:[%s168 + $0x18] sm:$0xff]
        %v175 = vld [vmem:[%s168 + $0x20] sm:$0xff]
        %v176 = vld [vmem:[%s168 + $0x28] sm:$0xff]
        %v177 = vld [vmem:[%s168 + $0x30] sm:$0xff]
        %v178 = vld [vmem:[%s168 + $0x38] sm:$0xff]
        %v180 = vperm.slane %v169, 0
        %v182 = vsub.f32 %v171, %v180
        %v183 = vsub.f32 %v172, %v180
        %v184 = vsub.f32 %v173, %v180
        %v185 = vsub.f32 %v174, %v180
        %v186 = vsub.f32 %v175, %v180
        %v187 = vsub.f32 %v176, %v180
        %v188 = vsub.f32 %v177, %v180
        %v189 = vsub.f32 %v178, %v180
        %v191 = vperm.slane %v170, 0
        %v193 = vmul.f32 %v182, %v191
        %v194 = vmul.f32 %v183, %v191
        %v195 = vmul.f32 %v184, %v191
        %v196 = vmul.f32 %v185, %v191
        %v197 = vmul.f32 %v186, %v191
        %v198 = vmul.f32 %v187, %v191
        %v199 = vmul.f32 %v188, %v191
        %v200 = vmul.f32 %v189, %v191
        %v201 = vmax.f32 %v193, 0.0
        %v202 = vmax.f32 %v194, 0.0
        %v203 = vmax.f32 %v195, 0.0
        %v204 = vmax.f32 %v196, 0.0
        %v205 = vmax.f32 %v197, 0.0
        %v206 = vmax.f32 %v198, 0.0
        %v207 = vmax.f32 %v199, 0.0
        %v208 = vmax.f32 %v200, 0.0
        %vm209 = vcmask 523264
        %210 = vst.msk [vmem:[%s163] sm:$0xff] %vm209, %v201
        %211 = vst.msk [vmem:[%s163 + $0x8] sm:$0xff] %vm209, %v202
        %212 = vst.msk [vmem:[%s163 + $0x10] sm:$0xff] %vm209, %v203
        %213 = vst.msk [vmem:[%s163 + $0x18] sm:$0xff] %vm209, %v204
        %214 = vst.msk [vmem:[%s163 + $0x20] sm:$0xff] %vm209, %v205
        %215 = vst.msk [vmem:[%s163 + $0x28] sm:$0xff] %vm209, %v206
        %216 = vst.msk [vmem:[%s163 + $0x30] sm:$0xff] %vm209, %v207
        %217 = vst.msk [vmem:[%s163 + $0x38] sm:$0xff] %vm209, %v208
        %s218 = sand.u32 %s93, 1
        %s219 = scalar_lea.sflag [#allocation3], %s218
        %s220 = sand.u32 %s93, 1
        %s221 = smul.addr %s220, 64
        %s222 = scalar_lea.vmem [#allocation2], %s221
        // Predicated region
        $region33: #{hardnet_conv_crop_forward.11} parent=31 // pred_check
          %p223 = pneg %p103
        $region34: #{hardnet_conv_crop_forward.11} parent=31 // pred_check_branch
          %225 = sbr.rel (%p223) target = $region36
        $region35: #{hardnet_conv_crop_forward.11} parent=31 // pred_region
          %227 = vsyncadd %s219, 0
          %s228 = smul.addr %s17, 8
          %s229 = smul.addr %s228, 8
          %s230 = scalar_lea.hbm %s3, %s229
          %s231 = sshll.u32 %s222, 4
          %s232 = int_to_ptr.vmem [resolvable:$true] %s231
          %s233 = sshll.u32 %s230, 4
          %s234 = int_to_ptr.hbm [resolvable:$true] %s233
          %239 = dma.vmem_to_hbm [thread:$0]  %s232, 1024, %s234, %s219, 128, 128, 8
        $region36: #{hardnet_conv_crop_forward.11} parent=31 // pred_fallthru
          _
      $region32: #{hardnet_conv_crop_forward.11} parent=5 // pred_fallthru
        _
      %p240 = scmp.le.s32.totalorder 2, %s12
      // Predicated region
      $region37: #{hardnet_conv_crop_forward.11} parent=5 // pred_check
        %p241 = pneg %p240
      $region38: #{hardnet_conv_crop_forward.11} parent=5 // pred_check_branch
        %243 = sbr.rel (%p241) target = $region40
      $region39: #{hardnet_conv_crop_forward.11} parent=5 // pred_region
        %s244 = ssub.s32 %s12, 2
        // Predicated region
        $region41: #{hardnet_conv_crop_forward.11} parent=39 // pred_check
          %p245 = pneg %p109
        $region42: #{hardnet_conv_crop_forward.11} parent=39 // pred_check_branch
          %247 = sbr.rel (%p245) target = $region44
        $region43: #{hardnet_conv_crop_forward.11} parent=39 // pred_region
          %s248 = sand.u32 %s94, 1
          %s249 = scalar_lea.sflag [#allocation3], %s248
          %s250 = sand.u32 %s94, 1
          %s251 = smul.addr %s250, 64
          %s252 = scalar_lea.vmem [#allocation2], %s251
          %254 = dma.done %s249, 1024
        $region44: #{hardnet_conv_crop_forward.11} parent=39 // pred_fallthru
          _
      $region40: #{hardnet_conv_crop_forward.11} parent=5 // pred_fallthru
        _
    $region6: #{hardnet_conv_crop_forward.11} parent=1 // loop_footer
      %s16 = sadd.s32 1, %s12
    $region7: #{hardnet_conv_crop_forward.11} parent=1 // loop_footer_branch
      %11 = sbr.rel target = $region3
    $region8: #{hardnet_conv_crop_forward.11} parent=1 // loop_exit
      _
    %255 = vsyncpa [#allocation3], 1
    %s256 = scalar_lea.sflag [#allocation3], 1
    %257 = vsyncpa %s256, 1

</llo_original>
